<compile_context>
chip_gen: v6e
topology: v6e:2x2x1
jax: 0.10.0
libtpu: 0.0.40
codegen_flags: <defaults>
</compile_context>

<pallas_src>
import jax
import jax.numpy as jnp
from jax.experimental import pallas as pl
from jax.experimental.pallas import tpu as pltpu

K = 5                      # Conv2d kernel_size=(1, 5) -> 1-D conv along W
C1, C2, C3 = 16, 32, 64    # conv channel widths
FC_H = 50                  # fc1 hidden size


def _conv_dims(H, W):
    """Static shape bookkeeping for the conv stack (floor-mode (1,2) pooling)."""
    W1 = W - K + 1;  P1 = W1 // 2
    W2 = P1 - K + 1; P2 = W2 // 2
    W3 = P2 - K + 1; P3 = W3 // 2
    return W1, P1, W2, P2, W3, P3


def cnn_forward(x, params):
    """x: (B, 1, H, W) float32, matching the PyTorch NCHW input."""
    B, Cin, H, W = x.shape
    assert Cin == 1, "module is defined for a single input channel"
    _, P1, _, P2, _, P3 = _conv_dims(H, W)
    N = B * H            # H is never mixed by (1,5)/(1,2) ops -> fold into batch
    G = H * P3           # rows of the flattened conv output per batch element

    def kernel(x_ref, w1_ref, b1_ref, w2_ref, b2_ref, w3_ref, b3_ref,
               fw1_ref, fb1_ref, fw2_ref, fb2_ref, o_ref):

        def conv_relu_pool(h, w_ref, b_ref, cin, cout):
            # h: (n, win, cin)   w_ref: (cin, K*cout)   b_ref: (1, cout)
            n, win, _ = h.shape
            wout = win - K + 1
            # single MXU matmul: per-position products for all K taps at once
            y = jnp.dot(h.reshape(n * win, cin), w_ref[...],
                        preferred_element_type=jnp.float32)      # (n*win, K*cout)
            y = y.reshape(n, win, K * cout)
            # shift-and-add the K taps (static slices, VPU adds)
            acc = y[:, 0:wout, 0:cout]
            for k in range(1, K):
                acc = acc + y[:, k:k + wout, k * cout:(k + 1) * cout]
            acc = jnp.maximum(acc + b_ref[...], 0.0)              # bias + ReLU
            # fused MaxPool2d(kernel=(1,2)), floor mode (drops odd trailing col)
            p = wout // 2
            acc = acc[:, :2 * p, :].reshape(n * p, 2, cout)
            return jnp.max(acc, axis=1).reshape(n, p, cout)       # (n, p, cout)

        h = x_ref[...]                                            # (N, W, 1)
        h = conv_relu_pool(h, w1_ref, b1_ref, 1, C1)              # (N, P1, 16)
        h = conv_relu_pool(h, w2_ref, b2_ref, C1, C2)             # (N, P2, 32)
        h = conv_relu_pool(h, w3_ref, b3_ref, C2, C3)             # (N, P3, 64)

        # ---- FC head (flatten permutation is folded into fw1's layout) ----
        xf = h.reshape(B, G, C3)                                  # (B, H*P3, C3)
        acc = jnp.zeros((B, FC_H), jnp.float32)
        for g in range(G):                                        # G tiny, unrolled
            acc = acc + jnp.dot(xf[:, g, :], fw1_ref[g],
                                preferred_element_type=jnp.float32)
        h1 = jnp.maximum(acc + fb1_ref[...], 0.0)                 # fc1 + ReLU
        y = jnp.dot(h1, fw2_ref[...],
                    preferred_element_type=jnp.float32) + fb2_ref[...]
        o_ref[...] = (1.0 / (1.0 + jnp.exp(-y))).astype(o_ref.dtype)  # sigmoid

    vmem = pl.BlockSpec(memory_space=pltpu.MemorySpace.VMEM)
    xr = x.reshape(N, W, 1)     # Cin == 1 -> pure reshape, no transpose / relayout
    return pl.pallas_call(
        kernel,
        out_shape=jax.ShapeDtypeStruct((B, 1), x.dtype),
        in_specs=[vmem] * 11,
        out_specs=vmem,
    )(xr, params["w1"], params["b1"], params["w2"], params["b2"],
      params["w3"], params["b3"], params["fw1"], params["fb1"],
      params["fw2"], params["fb2"])


def init_params(key, H, W, dtype=jnp.float32):
    """Random params in the kernel's layouts.

    Mapping from torch (for loading real checkpoints):
      conv weight (Cout, Cin, 1, K)  -> ours (Cin, K*Cout):  w[ci, k*Cout+co] = t[co, ci, 0, k]
      fc1 weight  (50, C3*H*Wp)      -> ours (H*Wp, C3, 50): fw1[g, c, o]     = t[o, c*H*Wp + g]
      fc2 weight  (1, 50)            -> ours (50, 1) transposed.
    """
    _, _, _, _, _, P3 = _conv_dims(H, W)
    G = H * P3
    ks = jax.random.split(key, 10)
    s = 0.1
    return {
        "w1": (s * jax.random.normal(ks[0], (1, K * C1))).astype(dtype),
        "b1": (s * jax.random.normal(ks[1], (1, C1))).astype(dtype),
        "w2": (s * jax.random.normal(ks[2], (C1, K * C2))).astype(dtype),
        "b2": (s * jax.random.normal(ks[3], (1, C2))).astype(dtype),
        "w3": (s * jax.random.normal(ks[4], (C2, K * C3))).astype(dtype),
        "b3": (s * jax.random.normal(ks[5], (1, C3))).astype(dtype),
        "fw1": (s * jax.random.normal(ks[6], (G, C3, FC_H))).astype(dtype),
        "fb1": (s * jax.random.normal(ks[7], (1, FC_H))).astype(dtype),
        "fw2": (s * jax.random.normal(ks[8], (FC_H, 1))).astype(dtype),
        "fb2": (s * jax.random.normal(ks[9], (1, 1))).astype(dtype),
    }


if __name__ == "__main__":
    key = jax.random.PRNGKey(0)
    k_x, k_p = jax.random.split(key)

    B, C, H, W = 2, 1, 4, 64          # small shapes consistent with the module
    x = jax.random.normal(k_x, (B, C, H, W), dtype=jnp.float32)
    params = init_params(k_p, H, W)

    out = jax.block_until_ready(cnn_forward(x, params))
    assert out.shape == (B, 1)
    assert bool(jnp.all(jnp.isfinite(out)))
    assert bool(jnp.all((out >= 0.0) & (out <= 1.0)))
    print("KERNEL_OK")
</pallas_src>

<mosaic_0001>
module attributes {stable_mosaic.version = 11 : i64} {
  func.func @kernel(%arg0: memref<8x64x1xf32, #tpu.memory_space<vmem>>, %arg1: memref<1x80xf32, #tpu.memory_space<vmem>>, %arg2: memref<1x16xf32, #tpu.memory_space<vmem>>, %arg3: memref<16x160xf32, #tpu.memory_space<vmem>>, %arg4: memref<1x32xf32, #tpu.memory_space<vmem>>, %arg5: memref<32x320xf32, #tpu.memory_space<vmem>>, %arg6: memref<1x64xf32, #tpu.memory_space<vmem>>, %arg7: memref<16x64x50xf32, #tpu.memory_space<vmem>>, %arg8: memref<1x50xf32, #tpu.memory_space<vmem>>, %arg9: memref<50x1xf32, #tpu.memory_space<vmem>>, %arg10: memref<1x1xf32, #tpu.memory_space<vmem>>, %arg11: memref<2x1xf32, #tpu.memory_space<vmem>>) attributes {dimension_semantics = [], scalar_prefetch = 0 : i64, scratch_operands = 0 : i64, tpu.core_type = #tpu.core_type<tc>} {
    %c0 = arith.constant 0 : index
    %c0_0 = arith.constant 0 : index
    %c0_1 = arith.constant 0 : index
    %0 = vector.load %arg0[%c0, %c0_0, %c0_1] : memref<8x64x1xf32, #tpu.memory_space<vmem>>, vector<8x64x1xf32>
    %1 = vector.shape_cast %0 : vector<8x64x1xf32> to vector<512x1xf32>
    %c0_2 = arith.constant 0 : index
    %c0_3 = arith.constant 0 : index
    %2 = vector.load %arg1[%c0_2, %c0_3] : memref<1x80xf32, #tpu.memory_space<vmem>>, vector<1x80xf32>
    %cst = arith.constant dense<0.000000e+00> : vector<512x80xf32>
    %3 = tpu.matmul %1, %2, %cst {dimension_numbers = #tpu.dot_dimension_numbers<[1], [0], [0], [1], [0, 0, 1, 1], [], []>} : vector<512x1xf32>, vector<1x80xf32>, vector<512x80xf32> -> vector<512x80xf32>
    %4 = vector.shape_cast %3 : vector<512x80xf32> to vector<8x64x80xf32>
    %5 = vector.extract_strided_slice %4 {offsets = [0, 0, 0], sizes = [8, 60, 16], strides = [1, 1, 1]} : vector<8x64x80xf32> to vector<8x60x16xf32>
    %6 = vector.extract_strided_slice %4 {offsets = [0, 1, 16], sizes = [8, 60, 16], strides = [1, 1, 1]} : vector<8x64x80xf32> to vector<8x60x16xf32>
    %7 = arith.addf %5, %6 : vector<8x60x16xf32>
    %8 = vector.extract_strided_slice %4 {offsets = [0, 2, 32], sizes = [8, 60, 16], strides = [1, 1, 1]} : vector<8x64x80xf32> to vector<8x60x16xf32>
    %9 = arith.addf %7, %8 : vector<8x60x16xf32>
    %10 = vector.extract_strided_slice %4 {offsets = [0, 3, 48], sizes = [8, 60, 16], strides = [1, 1, 1]} : vector<8x64x80xf32> to vector<8x60x16xf32>
    %11 = arith.addf %9, %10 : vector<8x60x16xf32>
    %12 = vector.extract_strided_slice %4 {offsets = [0, 4, 64], sizes = [8, 60, 16], strides = [1, 1, 1]} : vector<8x64x80xf32> to vector<8x60x16xf32>
    %13 = arith.addf %11, %12 : vector<8x60x16xf32>
    %c0_4 = arith.constant 0 : index
    %c0_5 = arith.constant 0 : index
    %14 = vector.load %arg2[%c0_4, %c0_5] : memref<1x16xf32, #tpu.memory_space<vmem>>, vector<1x16xf32>
    %15 = vector.shape_cast %14 : vector<1x16xf32> to vector<1x1x16xf32>
    %16 = vector.broadcast %15 : vector<1x1x16xf32> to vector<8x60x16xf32>
    %17 = arith.addf %13, %16 : vector<8x60x16xf32>
    %cst_6 = arith.constant 0.000000e+00 : f32
    %18 = vector.broadcast %cst_6 : f32 to vector<8x60x16xf32>
    %19 = arith.maximumf %17, %18 : vector<8x60x16xf32>
    %20 = vector.shape_cast %19 : vector<8x60x16xf32> to vector<240x2x16xf32>
    %cst_7 = arith.constant dense<0xFF800000> : vector<240x16xf32>
    %21 = vector.multi_reduction <maximumf>, %20, %cst_7 [1] : vector<240x2x16xf32> to vector<240x16xf32>
    %22 = vector.shape_cast %21 : vector<240x16xf32> to vector<8x30x16xf32>
    %23 = vector.shape_cast %22 : vector<8x30x16xf32> to vector<240x16xf32>
    %c0_8 = arith.constant 0 : index
    %c0_9 = arith.constant 0 : index
    %24 = vector.load %arg3[%c0_8, %c0_9] : memref<16x160xf32, #tpu.memory_space<vmem>>, vector<16x160xf32>
    %cst_10 = arith.constant dense<0.000000e+00> : vector<240x160xf32>
    %25 = tpu.matmul %23, %24, %cst_10 {dimension_numbers = #tpu.dot_dimension_numbers<[1], [0], [0], [1], [0, 0, 1, 1], [], []>} : vector<240x16xf32>, vector<16x160xf32>, vector<240x160xf32> -> vector<240x160xf32>
    %26 = vector.shape_cast %25 : vector<240x160xf32> to vector<8x30x160xf32>
    %27 = vector.extract_strided_slice %26 {offsets = [0, 0, 0], sizes = [8, 26, 32], strides = [1, 1, 1]} : vector<8x30x160xf32> to vector<8x26x32xf32>
    %28 = vector.extract_strided_slice %26 {offsets = [0, 1, 32], sizes = [8, 26, 32], strides = [1, 1, 1]} : vector<8x30x160xf32> to vector<8x26x32xf32>
    %29 = arith.addf %27, %28 : vector<8x26x32xf32>
    %30 = vector.extract_strided_slice %26 {offsets = [0, 2, 64], sizes = [8, 26, 32], strides = [1, 1, 1]} : vector<8x30x160xf32> to vector<8x26x32xf32>
    %31 = arith.addf %29, %30 : vector<8x26x32xf32>
    %32 = vector.extract_strided_slice %26 {offsets = [0, 3, 96], sizes = [8, 26, 32], strides = [1, 1, 1]} : vector<8x30x160xf32> to vector<8x26x32xf32>
    %33 = arith.addf %31, %32 : vector<8x26x32xf32>
    %34 = vector.extract_strided_slice %26 {offsets = [0, 4, 128], sizes = [8, 26, 32], strides = [1, 1, 1]} : vector<8x30x160xf32> to vector<8x26x32xf32>
    %35 = arith.addf %33, %34 : vector<8x26x32xf32>
    %c0_11 = arith.constant 0 : index
    %c0_12 = arith.constant 0 : index
    %36 = vector.load %arg4[%c0_11, %c0_12] : memref<1x32xf32, #tpu.memory_space<vmem>>, vector<1x32xf32>
    %37 = vector.shape_cast %36 : vector<1x32xf32> to vector<1x1x32xf32>
    %38 = vector.broadcast %37 : vector<1x1x32xf32> to vector<8x26x32xf32>
    %39 = arith.addf %35, %38 : vector<8x26x32xf32>
    %cst_13 = arith.constant 0.000000e+00 : f32
    %40 = vector.broadcast %cst_13 : f32 to vector<8x26x32xf32>
    %41 = arith.maximumf %39, %40 : vector<8x26x32xf32>
    %42 = vector.shape_cast %41 : vector<8x26x32xf32> to vector<104x2x32xf32>
    %cst_14 = arith.constant dense<0xFF800000> : vector<104x32xf32>
    %43 = vector.multi_reduction <maximumf>, %42, %cst_14 [1] : vector<104x2x32xf32> to vector<104x32xf32>
    %44 = vector.shape_cast %43 : vector<104x32xf32> to vector<8x13x32xf32>
    %45 = vector.shape_cast %44 : vector<8x13x32xf32> to vector<104x32xf32>
    %c0_15 = arith.constant 0 : index
    %c0_16 = arith.constant 0 : index
    %46 = vector.load %arg5[%c0_15, %c0_16] : memref<32x320xf32, #tpu.memory_space<vmem>>, vector<32x320xf32>
    %cst_17 = arith.constant dense<0.000000e+00> : vector<104x320xf32>
    %47 = tpu.matmul %45, %46, %cst_17 {dimension_numbers = #tpu.dot_dimension_numbers<[1], [0], [0], [1], [0, 0, 1, 1], [], []>} : vector<104x32xf32>, vector<32x320xf32>, vector<104x320xf32> -> vector<104x320xf32>
    %48 = vector.shape_cast %47 : vector<104x320xf32> to vector<8x13x320xf32>
    %49 = vector.extract_strided_slice %48 {offsets = [0, 0, 0], sizes = [8, 9, 64], strides = [1, 1, 1]} : vector<8x13x320xf32> to vector<8x9x64xf32>
    %50 = vector.extract_strided_slice %48 {offsets = [0, 1, 64], sizes = [8, 9, 64], strides = [1, 1, 1]} : vector<8x13x320xf32> to vector<8x9x64xf32>
    %51 = arith.addf %49, %50 : vector<8x9x64xf32>
    %52 = vector.extract_strided_slice %48 {offsets = [0, 2, 128], sizes = [8, 9, 64], strides = [1, 1, 1]} : vector<8x13x320xf32> to vector<8x9x64xf32>
    %53 = arith.addf %51, %52 : vector<8x9x64xf32>
    %54 = vector.extract_strided_slice %48 {offsets = [0, 3, 192], sizes = [8, 9, 64], strides = [1, 1, 1]} : vector<8x13x320xf32> to vector<8x9x64xf32>
    %55 = arith.addf %53, %54 : vector<8x9x64xf32>
    %56 = vector.extract_strided_slice %48 {offsets = [0, 4, 256], sizes = [8, 9, 64], strides = [1, 1, 1]} : vector<8x13x320xf32> to vector<8x9x64xf32>
    %57 = arith.addf %55, %56 : vector<8x9x64xf32>
    %c0_18 = arith.constant 0 : index
    %c0_19 = arith.constant 0 : index
    %58 = vector.load %arg6[%c0_18, %c0_19] : memref<1x64xf32, #tpu.memory_space<vmem>>, vector<1x64xf32>
    %59 = vector.shape_cast %58 : vector<1x64xf32> to vector<1x1x64xf32>
    %60 = vector.broadcast %59 : vector<1x1x64xf32> to vector<8x9x64xf32>
    %61 = arith.addf %57, %60 : vector<8x9x64xf32>
    %cst_20 = arith.constant 0.000000e+00 : f32
    %62 = vector.broadcast %cst_20 : f32 to vector<8x9x64xf32>
    %63 = arith.maximumf %61, %62 : vector<8x9x64xf32>
    %64 = vector.extract_strided_slice %63 {offsets = [0, 0, 0], sizes = [8, 8, 64], strides = [1, 1, 1]} : vector<8x9x64xf32> to vector<8x8x64xf32>
    %65 = vector.shape_cast %64 : vector<8x8x64xf32> to vector<32x2x64xf32>
    %cst_21 = arith.constant dense<0xFF800000> : vector<32x64xf32>
    %66 = vector.multi_reduction <maximumf>, %65, %cst_21 [1] : vector<32x2x64xf32> to vector<32x64xf32>
    %67 = vector.shape_cast %66 : vector<32x64xf32> to vector<8x4x64xf32>
    %68 = vector.shape_cast %67 : vector<8x4x64xf32> to vector<2x16x64xf32>
    %cst_22 = arith.constant 0.000000e+00 : f32
    %69 = vector.broadcast %cst_22 : f32 to vector<2x50xf32>
    %70 = vector.extract_strided_slice %68 {offsets = [0, 0, 0], sizes = [2, 1, 64], strides = [1, 1, 1]} : vector<2x16x64xf32> to vector<2x1x64xf32>
    %71 = vector.shape_cast %70 : vector<2x1x64xf32> to vector<2x64xf32>
    %c0_23 = arith.constant 0 : index
    %c0_24 = arith.constant 0 : index
    %c0_25 = arith.constant 0 : index
    %72 = vector.load %arg7[%c0_23, %c0_24, %c0_25] : memref<16x64x50xf32, #tpu.memory_space<vmem>>, vector<1x64x50xf32>
    %73 = vector.shape_cast %72 : vector<1x64x50xf32> to vector<64x50xf32>
    %cst_26 = arith.constant dense<0.000000e+00> : vector<2x50xf32>
    %74 = tpu.matmul %71, %73, %cst_26 {dimension_numbers = #tpu.dot_dimension_numbers<[1], [0], [0], [1], [0, 0, 1, 1], [], []>} : vector<2x64xf32>, vector<64x50xf32>, vector<2x50xf32> -> vector<2x50xf32>
    %75 = arith.addf %69, %74 : vector<2x50xf32>
    %76 = vector.extract_strided_slice %68 {offsets = [0, 1, 0], sizes = [2, 1, 64], strides = [1, 1, 1]} : vector<2x16x64xf32> to vector<2x1x64xf32>
    %77 = vector.shape_cast %76 : vector<2x1x64xf32> to vector<2x64xf32>
    %c1 = arith.constant 1 : index
    %c0_27 = arith.constant 0 : index
    %c0_28 = arith.constant 0 : index
    %78 = vector.load %arg7[%c1, %c0_27, %c0_28] : memref<16x64x50xf32, #tpu.memory_space<vmem>>, vector<1x64x50xf32>
    %79 = vector.shape_cast %78 : vector<1x64x50xf32> to vector<64x50xf32>
    %cst_29 = arith.constant dense<0.000000e+00> : vector<2x50xf32>
    %80 = tpu.matmul %77, %79, %cst_29 {dimension_numbers = #tpu.dot_dimension_numbers<[1], [0], [0], [1], [0, 0, 1, 1], [], []>} : vector<2x64xf32>, vector<64x50xf32>, vector<2x50xf32> -> vector<2x50xf32>
    %81 = arith.addf %75, %80 : vector<2x50xf32>
    %82 = vector.extract_strided_slice %68 {offsets = [0, 2, 0], sizes = [2, 1, 64], strides = [1, 1, 1]} : vector<2x16x64xf32> to vector<2x1x64xf32>
    %83 = vector.shape_cast %82 : vector<2x1x64xf32> to vector<2x64xf32>
    %c2 = arith.constant 2 : index
    %c0_30 = arith.constant 0 : index
    %c0_31 = arith.constant 0 : index
    %84 = vector.load %arg7[%c2, %c0_30, %c0_31] : memref<16x64x50xf32, #tpu.memory_space<vmem>>, vector<1x64x50xf32>
    %85 = vector.shape_cast %84 : vector<1x64x50xf32> to vector<64x50xf32>
    %cst_32 = arith.constant dense<0.000000e+00> : vector<2x50xf32>
    %86 = tpu.matmul %83, %85, %cst_32 {dimension_numbers = #tpu.dot_dimension_numbers<[1], [0], [0], [1], [0, 0, 1, 1], [], []>} : vector<2x64xf32>, vector<64x50xf32>, vector<2x50xf32> -> vector<2x50xf32>
    %87 = arith.addf %81, %86 : vector<2x50xf32>
    %88 = vector.extract_strided_slice %68 {offsets = [0, 3, 0], sizes = [2, 1, 64], strides = [1, 1, 1]} : vector<2x16x64xf32> to vector<2x1x64xf32>
    %89 = vector.shape_cast %88 : vector<2x1x64xf32> to vector<2x64xf32>
    %c3 = arith.constant 3 : index
    %c0_33 = arith.constant 0 : index
    %c0_34 = arith.constant 0 : index
    %90 = vector.load %arg7[%c3, %c0_33, %c0_34] : memref<16x64x50xf32, #tpu.memory_space<vmem>>, vector<1x64x50xf32>
    %91 = vector.shape_cast %90 : vector<1x64x50xf32> to vector<64x50xf32>
    %cst_35 = arith.constant dense<0.000000e+00> : vector<2x50xf32>
    %92 = tpu.matmul %89, %91, %cst_35 {dimension_numbers = #tpu.dot_dimension_numbers<[1], [0], [0], [1], [0, 0, 1, 1], [], []>} : vector<2x64xf32>, vector<64x50xf32>, vector<2x50xf32> -> vector<2x50xf32>
    %93 = arith.addf %87, %92 : vector<2x50xf32>
    %94 = vector.extract_strided_slice %68 {offsets = [0, 4, 0], sizes = [2, 1, 64], strides = [1, 1, 1]} : vector<2x16x64xf32> to vector<2x1x64xf32>
    %95 = vector.shape_cast %94 : vector<2x1x64xf32> to vector<2x64xf32>
    %c4 = arith.constant 4 : index
    %c0_36 = arith.constant 0 : index
    %c0_37 = arith.constant 0 : index
    %96 = vector.load %arg7[%c4, %c0_36, %c0_37] : memref<16x64x50xf32, #tpu.memory_space<vmem>>, vector<1x64x50xf32>
    %97 = vector.shape_cast %96 : vector<1x64x50xf32> to vector<64x50xf32>
    %cst_38 = arith.constant dense<0.000000e+00> : vector<2x50xf32>
    %98 = tpu.matmul %95, %97, %cst_38 {dimension_numbers = #tpu.dot_dimension_numbers<[1], [0], [0], [1], [0, 0, 1, 1], [], []>} : vector<2x64xf32>, vector<64x50xf32>, vector<2x50xf32> -> vector<2x50xf32>
    %99 = arith.addf %93, %98 : vector<2x50xf32>
    %100 = vector.extract_strided_slice %68 {offsets = [0, 5, 0], sizes = [2, 1, 64], strides = [1, 1, 1]} : vector<2x16x64xf32> to vector<2x1x64xf32>
    %101 = vector.shape_cast %100 : vector<2x1x64xf32> to vector<2x64xf32>
    %c5 = arith.constant 5 : index
    %c0_39 = arith.constant 0 : index
    %c0_40 = arith.constant 0 : index
    %102 = vector.load %arg7[%c5, %c0_39, %c0_40] : memref<16x64x50xf32, #tpu.memory_space<vmem>>, vector<1x64x50xf32>
    %103 = vector.shape_cast %102 : vector<1x64x50xf32> to vector<64x50xf32>
    %cst_41 = arith.constant dense<0.000000e+00> : vector<2x50xf32>
    %104 = tpu.matmul %101, %103, %cst_41 {dimension_numbers = #tpu.dot_dimension_numbers<[1], [0], [0], [1], [0, 0, 1, 1], [], []>} : vector<2x64xf32>, vector<64x50xf32>, vector<2x50xf32> -> vector<2x50xf32>
    %105 = arith.addf %99, %104 : vector<2x50xf32>
    %106 = vector.extract_strided_slice %68 {offsets = [0, 6, 0], sizes = [2, 1, 64], strides = [1, 1, 1]} : vector<2x16x64xf32> to vector<2x1x64xf32>
    %107 = vector.shape_cast %106 : vector<2x1x64xf32> to vector<2x64xf32>
    %c6 = arith.constant 6 : index
    %c0_42 = arith.constant 0 : index
    %c0_43 = arith.constant 0 : index
    %108 = vector.load %arg7[%c6, %c0_42, %c0_43] : memref<16x64x50xf32, #tpu.memory_space<vmem>>, vector<1x64x50xf32>
    %109 = vector.shape_cast %108 : vector<1x64x50xf32> to vector<64x50xf32>
    %cst_44 = arith.constant dense<0.000000e+00> : vector<2x50xf32>
    %110 = tpu.matmul %107, %109, %cst_44 {dimension_numbers = #tpu.dot_dimension_numbers<[1], [0], [0], [1], [0, 0, 1, 1], [], []>} : vector<2x64xf32>, vector<64x50xf32>, vector<2x50xf32> -> vector<2x50xf32>
    %111 = arith.addf %105, %110 : vector<2x50xf32>
    %112 = vector.extract_strided_slice %68 {offsets = [0, 7, 0], sizes = [2, 1, 64], strides = [1, 1, 1]} : vector<2x16x64xf32> to vector<2x1x64xf32>
    %113 = vector.shape_cast %112 : vector<2x1x64xf32> to vector<2x64xf32>
    %c7 = arith.constant 7 : index
    %c0_45 = arith.constant 0 : index
    %c0_46 = arith.constant 0 : index
    %114 = vector.load %arg7[%c7, %c0_45, %c0_46] : memref<16x64x50xf32, #tpu.memory_space<vmem>>, vector<1x64x50xf32>
    %115 = vector.shape_cast %114 : vector<1x64x50xf32> to vector<64x50xf32>
    %cst_47 = arith.constant dense<0.000000e+00> : vector<2x50xf32>
    %116 = tpu.matmul %113, %115, %cst_47 {dimension_numbers = #tpu.dot_dimension_numbers<[1], [0], [0], [1], [0, 0, 1, 1], [], []>} : vector<2x64xf32>, vector<64x50xf32>, vector<2x50xf32> -> vector<2x50xf32>
    %117 = arith.addf %111, %116 : vector<2x50xf32>
    %118 = vector.extract_strided_slice %68 {offsets = [0, 8, 0], sizes = [2, 1, 64], strides = [1, 1, 1]} : vector<2x16x64xf32> to vector<2x1x64xf32>
    %119 = vector.shape_cast %118 : vector<2x1x64xf32> to vector<2x64xf32>
    %c8 = arith.constant 8 : index
    %c0_48 = arith.constant 0 : index
    %c0_49 = arith.constant 0 : index
    %120 = vector.load %arg7[%c8, %c0_48, %c0_49] : memref<16x64x50xf32, #tpu.memory_space<vmem>>, vector<1x64x50xf32>
    %121 = vector.shape_cast %120 : vector<1x64x50xf32> to vector<64x50xf32>
    %cst_50 = arith.constant dense<0.000000e+00> : vector<2x50xf32>
    %122 = tpu.matmul %119, %121, %cst_50 {dimension_numbers = #tpu.dot_dimension_numbers<[1], [0], [0], [1], [0, 0, 1, 1], [], []>} : vector<2x64xf32>, vector<64x50xf32>, vector<2x50xf32> -> vector<2x50xf32>
    %123 = arith.addf %117, %122 : vector<2x50xf32>
    %124 = vector.extract_strided_slice %68 {offsets = [0, 9, 0], sizes = [2, 1, 64], strides = [1, 1, 1]} : vector<2x16x64xf32> to vector<2x1x64xf32>
    %125 = vector.shape_cast %124 : vector<2x1x64xf32> to vector<2x64xf32>
    %c9 = arith.constant 9 : index
    %c0_51 = arith.constant 0 : index
    %c0_52 = arith.constant 0 : index
    %126 = vector.load %arg7[%c9, %c0_51, %c0_52] : memref<16x64x50xf32, #tpu.memory_space<vmem>>, vector<1x64x50xf32>
    %127 = vector.shape_cast %126 : vector<1x64x50xf32> to vector<64x50xf32>
    %cst_53 = arith.constant dense<0.000000e+00> : vector<2x50xf32>
    %128 = tpu.matmul %125, %127, %cst_53 {dimension_numbers = #tpu.dot_dimension_numbers<[1], [0], [0], [1], [0, 0, 1, 1], [], []>} : vector<2x64xf32>, vector<64x50xf32>, vector<2x50xf32> -> vector<2x50xf32>
    %129 = arith.addf %123, %128 : vector<2x50xf32>
    %130 = vector.extract_strided_slice %68 {offsets = [0, 10, 0], sizes = [2, 1, 64], strides = [1, 1, 1]} : vector<2x16x64xf32> to vector<2x1x64xf32>
    %131 = vector.shape_cast %130 : vector<2x1x64xf32> to vector<2x64xf32>
    %c10 = arith.constant 10 : index
    %c0_54 = arith.constant 0 : index
    %c0_55 = arith.constant 0 : index
    %132 = vector.load %arg7[%c10, %c0_54, %c0_55] : memref<16x64x50xf32, #tpu.memory_space<vmem>>, vector<1x64x50xf32>
    %133 = vector.shape_cast %132 : vector<1x64x50xf32> to vector<64x50xf32>
    %cst_56 = arith.constant dense<0.000000e+00> : vector<2x50xf32>
    %134 = tpu.matmul %131, %133, %cst_56 {dimension_numbers = #tpu.dot_dimension_numbers<[1], [0], [0], [1], [0, 0, 1, 1], [], []>} : vector<2x64xf32>, vector<64x50xf32>, vector<2x50xf32> -> vector<2x50xf32>
    %135 = arith.addf %129, %134 : vector<2x50xf32>
    %136 = vector.extract_strided_slice %68 {offsets = [0, 11, 0], sizes = [2, 1, 64], strides = [1, 1, 1]} : vector<2x16x64xf32> to vector<2x1x64xf32>
    %137 = vector.shape_cast %136 : vector<2x1x64xf32> to vector<2x64xf32>
    %c11 = arith.constant 11 : index
    %c0_57 = arith.constant 0 : index
    %c0_58 = arith.constant 0 : index
    %138 = vector.load %arg7[%c11, %c0_57, %c0_58] : memref<16x64x50xf32, #tpu.memory_space<vmem>>, vector<1x64x50xf32>
    %139 = vector.shape_cast %138 : vector<1x64x50xf32> to vector<64x50xf32>
    %cst_59 = arith.constant dense<0.000000e+00> : vector<2x50xf32>
    %140 = tpu.matmul %137, %139, %cst_59 {dimension_numbers = #tpu.dot_dimension_numbers<[1], [0], [0], [1], [0, 0, 1, 1], [], []>} : vector<2x64xf32>, vector<64x50xf32>, vector<2x50xf32> -> vector<2x50xf32>
    %141 = arith.addf %135, %140 : vector<2x50xf32>
    %142 = vector.extract_strided_slice %68 {offsets = [0, 12, 0], sizes = [2, 1, 64], strides = [1, 1, 1]} : vector<2x16x64xf32> to vector<2x1x64xf32>
    %143 = vector.shape_cast %142 : vector<2x1x64xf32> to vector<2x64xf32>
    %c12 = arith.constant 12 : index
    %c0_60 = arith.constant 0 : index
    %c0_61 = arith.constant 0 : index
    %144 = vector.load %arg7[%c12, %c0_60, %c0_61] : memref<16x64x50xf32, #tpu.memory_space<vmem>>, vector<1x64x50xf32>
    %145 = vector.shape_cast %144 : vector<1x64x50xf32> to vector<64x50xf32>
    %cst_62 = arith.constant dense<0.000000e+00> : vector<2x50xf32>
    %146 = tpu.matmul %143, %145, %cst_62 {dimension_numbers = #tpu.dot_dimension_numbers<[1], [0], [0], [1], [0, 0, 1, 1], [], []>} : vector<2x64xf32>, vector<64x50xf32>, vector<2x50xf32> -> vector<2x50xf32>
    %147 = arith.addf %141, %146 : vector<2x50xf32>
    %148 = vector.extract_strided_slice %68 {offsets = [0, 13, 0], sizes = [2, 1, 64], strides = [1, 1, 1]} : vector<2x16x64xf32> to vector<2x1x64xf32>
    %149 = vector.shape_cast %148 : vector<2x1x64xf32> to vector<2x64xf32>
    %c13 = arith.constant 13 : index
    %c0_63 = arith.constant 0 : index
    %c0_64 = arith.constant 0 : index
    %150 = vector.load %arg7[%c13, %c0_63, %c0_64] : memref<16x64x50xf32, #tpu.memory_space<vmem>>, vector<1x64x50xf32>
    %151 = vector.shape_cast %150 : vector<1x64x50xf32> to vector<64x50xf32>
    %cst_65 = arith.constant dense<0.000000e+00> : vector<2x50xf32>
    %152 = tpu.matmul %149, %151, %cst_65 {dimension_numbers = #tpu.dot_dimension_numbers<[1], [0], [0], [1], [0, 0, 1, 1], [], []>} : vector<2x64xf32>, vector<64x50xf32>, vector<2x50xf32> -> vector<2x50xf32>
    %153 = arith.addf %147, %152 : vector<2x50xf32>
    %154 = vector.extract_strided_slice %68 {offsets = [0, 14, 0], sizes = [2, 1, 64], strides = [1, 1, 1]} : vector<2x16x64xf32> to vector<2x1x64xf32>
    %155 = vector.shape_cast %154 : vector<2x1x64xf32> to vector<2x64xf32>
    %c14 = arith.constant 14 : index
    %c0_66 = arith.constant 0 : index
    %c0_67 = arith.constant 0 : index
    %156 = vector.load %arg7[%c14, %c0_66, %c0_67] : memref<16x64x50xf32, #tpu.memory_space<vmem>>, vector<1x64x50xf32>
    %157 = vector.shape_cast %156 : vector<1x64x50xf32> to vector<64x50xf32>
    %cst_68 = arith.constant dense<0.000000e+00> : vector<2x50xf32>
    %158 = tpu.matmul %155, %157, %cst_68 {dimension_numbers = #tpu.dot_dimension_numbers<[1], [0], [0], [1], [0, 0, 1, 1], [], []>} : vector<2x64xf32>, vector<64x50xf32>, vector<2x50xf32> -> vector<2x50xf32>
    %159 = arith.addf %153, %158 : vector<2x50xf32>
    %160 = vector.extract_strided_slice %68 {offsets = [0, 15, 0], sizes = [2, 1, 64], strides = [1, 1, 1]} : vector<2x16x64xf32> to vector<2x1x64xf32>
    %161 = vector.shape_cast %160 : vector<2x1x64xf32> to vector<2x64xf32>
    %c15 = arith.constant 15 : index
    %c0_69 = arith.constant 0 : index
    %c0_70 = arith.constant 0 : index
    %162 = vector.load %arg7[%c15, %c0_69, %c0_70] : memref<16x64x50xf32, #tpu.memory_space<vmem>>, vector<1x64x50xf32>
    %163 = vector.shape_cast %162 : vector<1x64x50xf32> to vector<64x50xf32>
    %cst_71 = arith.constant dense<0.000000e+00> : vector<2x50xf32>
    %164 = tpu.matmul %161, %163, %cst_71 {dimension_numbers = #tpu.dot_dimension_numbers<[1], [0], [0], [1], [0, 0, 1, 1], [], []>} : vector<2x64xf32>, vector<64x50xf32>, vector<2x50xf32> -> vector<2x50xf32>
    %165 = arith.addf %159, %164 : vector<2x50xf32>
    %c0_72 = arith.constant 0 : index
    %c0_73 = arith.constant 0 : index
    %166 = vector.load %arg8[%c0_72, %c0_73] : memref<1x50xf32, #tpu.memory_space<vmem>>, vector<1x50xf32>
    %167 = vector.broadcast %166 : vector<1x50xf32> to vector<2x50xf32>
    %168 = arith.addf %165, %167 : vector<2x50xf32>
    %cst_74 = arith.constant 0.000000e+00 : f32
    %169 = vector.broadcast %cst_74 : f32 to vector<2x50xf32>
    %170 = arith.maximumf %168, %169 : vector<2x50xf32>
    %c0_75 = arith.constant 0 : index
    %c0_76 = arith.constant 0 : index
    %171 = vector.load %arg9[%c0_75, %c0_76] : memref<50x1xf32, #tpu.memory_space<vmem>>, vector<50x1xf32>
    %cst_77 = arith.constant dense<0.000000e+00> : vector<2x1xf32>
    %172 = tpu.matmul %170, %171, %cst_77 {dimension_numbers = #tpu.dot_dimension_numbers<[1], [0], [0], [1], [0, 0, 1, 1], [], []>} : vector<2x50xf32>, vector<50x1xf32>, vector<2x1xf32> -> vector<2x1xf32>
    %c0_78 = arith.constant 0 : index
    %c0_79 = arith.constant 0 : index
    %173 = vector.load %arg10[%c0_78, %c0_79] : memref<1x1xf32, #tpu.memory_space<vmem>>, vector<1x1xf32>
    %174 = vector.broadcast %173 : vector<1x1xf32> to vector<2x1xf32>
    %175 = arith.addf %172, %174 : vector<2x1xf32>
    %cst_80 = arith.constant 0.000000e+00 : f32
    %176 = vector.broadcast %cst_80 : f32 to vector<2x1xf32>
    %177 = arith.subf %176, %175 : vector<2x1xf32>
    %178 = math.exp %177 : vector<2x1xf32>
    %cst_81 = arith.constant 1.000000e+00 : f32
    %179 = vector.broadcast %cst_81 : f32 to vector<2x1xf32>
    %180 = arith.addf %179, %178 : vector<2x1xf32>
    %cst_82 = arith.constant 1.000000e+00 : f32
    %181 = vector.broadcast %cst_82 : f32 to vector<2x1xf32>
    %182 = arith.divf %181, %180 : vector<2x1xf32>
    %c0_83 = arith.constant 0 : index
    %c0_84 = arith.constant 0 : index
    %183 = vector.load %arg11[%c0_83, %c0_84] : memref<2x1xf32, #tpu.memory_space<vmem>>, vector<2x1xf32>
    tpu.vector_store %arg11[%c0_83, %c0_84], %182 {strides = array<i32>} : memref<2x1xf32, #tpu.memory_space<vmem>>, vector<2x1xf32>,
    return
  }
}

</mosaic_0001>

<llo_original>
// kernel: tpu_custom_call.1
$region0: #{tpu_custom_call.1}
  #allocation0 [shape = 'u32[]', space=smem, size = 0x4, offset = 0x4, fixed_abs, tag = 'smem constant byte address 0x4 - core index']
  #allocation1 [shape = 'u32[144,128]{1,0:T(1,128)}', space=vmem, size = 0x12000, scoped, tag = 'internal scratch']
  #allocation2 [shape = 'f32[1,1]{1,0:T(1,128)S(1)}', space=vmem, size = 0x200, scoped, tag = 'scoped memory for tpu_custom_call.1']
  %s0 = inlined_call_operand.vmem [shape: f32[8,64,1], index: 0, kind: input, shape index: {}]
  %s1 = inlined_call_operand.vmem [shape: f32[1,80], index: 1, kind: input, shape index: {}]
  %s2 = inlined_call_operand.vmem [shape: f32[1,16], index: 2, kind: input, shape index: {}]
  %s3 = inlined_call_operand.vmem [shape: f32[16,160], index: 3, kind: input, shape index: {}]
  %s4 = inlined_call_operand.vmem [shape: f32[1,32], index: 4, kind: input, shape index: {}]
  %s5 = inlined_call_operand.vmem [shape: f32[32,320], index: 5, kind: input, shape index: {}]
  %s6 = inlined_call_operand.vmem [shape: f32[1,64], index: 6, kind: input, shape index: {}]
  %s7 = inlined_call_operand.vmem [shape: f32[16,64,50], index: 7, kind: input, shape index: {}]
  %s8 = inlined_call_operand.vmem [shape: f32[1,50], index: 8, kind: input, shape index: {}]
  %s9 = inlined_call_operand.vmem [shape: f32[50,1], index: 9, kind: input, shape index: {}]
  %s10 = inlined_call_operand.<no memory space> [shape: f32[1,1], index: 10, kind: input, shape index: {}]
  %s11 = inlined_call_operand.vmem [shape: f32[2,1], index: 11, kind: output, shape index: {}]
  %s12 = sld [smem:[#allocation0]]
  $region54: #{tpu_custom_call.1} parent=0
    _
  %s14 = ssub.s32 1, %s12
  %s15 = scalar_select 0, %s14, %s12
  %v16 = vstv %s10
  %17 = vst [vmem:[#allocation2] sm:$0x1] %v16
  // Predicated region
  $region2: #{tpu_custom_call.1} parent=0 // pred_check
    _
  $region3: #{tpu_custom_call.1} parent=0 // pred_check_branch
    %19 = sbr.rel (0) target = $region5
  $region4: #{tpu_custom_call.1} parent=0 // pred_region
    _
  $region5: #{tpu_custom_call.1} parent=0 // pred_fallthru
    _
  // Predicated region
  $region6: #{tpu_custom_call.1} parent=0 // pred_check
    _
  $region7: #{tpu_custom_call.1} parent=0 // pred_check_branch
    %21 = sbr.rel (0) target = $region9
  $region8: #{tpu_custom_call.1} parent=0 // pred_region
    _
  $region9: #{tpu_custom_call.1} parent=0 // pred_fallthru
    _
  // Predicated region
  $region10: #{tpu_custom_call.1} parent=0 // pred_check
    _
  $region11: #{tpu_custom_call.1} parent=0 // pred_check_branch
    %23 = sbr.rel (0) target = $region13
  $region12: #{tpu_custom_call.1} parent=0 // pred_region
    _
  $region13: #{tpu_custom_call.1} parent=0 // pred_fallthru
    _
  // Predicated region
  $region14: #{tpu_custom_call.1} parent=0 // pred_check
    _
  $region15: #{tpu_custom_call.1} parent=0 // pred_check_branch
    %25 = sbr.rel (0) target = $region17
  $region16: #{tpu_custom_call.1} parent=0 // pred_region
    _
  $region17: #{tpu_custom_call.1} parent=0 // pred_fallthru
    _
  // Predicated region
  $region18: #{tpu_custom_call.1} parent=0 // pred_check
    _
  $region19: #{tpu_custom_call.1} parent=0 // pred_check_branch
    %27 = sbr.rel (0) target = $region21
  $region20: #{tpu_custom_call.1} parent=0 // pred_region
    _
  $region21: #{tpu_custom_call.1} parent=0 // pred_fallthru
    _
  // Predicated region
  $region22: #{tpu_custom_call.1} parent=0 // pred_check
    _
  $region23: #{tpu_custom_call.1} parent=0 // pred_check_branch
    %29 = sbr.rel (0) target = $region25
  $region24: #{tpu_custom_call.1} parent=0 // pred_region
    _
  $region25: #{tpu_custom_call.1} parent=0 // pred_fallthru
    _
  // Predicated region
  $region26: #{tpu_custom_call.1} parent=0 // pred_check
    _
  $region27: #{tpu_custom_call.1} parent=0 // pred_check_branch
    %31 = sbr.rel (0) target = $region29
  $region28: #{tpu_custom_call.1} parent=0 // pred_region
    _
  $region29: #{tpu_custom_call.1} parent=0 // pred_fallthru
    _
  // Predicated region
  $region30: #{tpu_custom_call.1} parent=0 // pred_check
    _
  $region31: #{tpu_custom_call.1} parent=0 // pred_check_branch
    %33 = sbr.rel (0) target = $region33
  $region32: #{tpu_custom_call.1} parent=0 // pred_region
    _
  $region33: #{tpu_custom_call.1} parent=0 // pred_fallthru
    _
  // Predicated region
  $region34: #{tpu_custom_call.1} parent=0 // pred_check
    _
  $region35: #{tpu_custom_call.1} parent=0 // pred_check_branch
    %35 = sbr.rel (0) target = $region37
  $region36: #{tpu_custom_call.1} parent=0 // pred_region
    _
  $region37: #{tpu_custom_call.1} parent=0 // pred_fallthru
    _
  // Predicated region
  $region38: #{tpu_custom_call.1} parent=0 // pred_check
    _
  $region39: #{tpu_custom_call.1} parent=0 // pred_check_branch
    %37 = sbr.rel (0) target = $region41
  $region40: #{tpu_custom_call.1} parent=0 // pred_region
    _
  $region41: #{tpu_custom_call.1} parent=0 // pred_fallthru
    _
  // Predicated region
  $region42: #{tpu_custom_call.1} parent=0 // pred_check
    _
  $region43: #{tpu_custom_call.1} parent=0 // pred_check_branch
    %39 = sbr.rel (0) target = $region45
  $region44: #{tpu_custom_call.1} parent=0 // pred_region
    _
  $region45: #{tpu_custom_call.1} parent=0 // pred_fallthru
    _
  %v40 = vld [vmem:[%s0] sm:$0xff]
  %v41 = vld [vmem:[%s0 + $0x8] sm:$0xff]
  %v42 = vld [vmem:[%s0 + $0x10] sm:$0xff]
  %v43 = vld [vmem:[%s0 + $0x18] sm:$0xff]
  %v44 = vld [vmem:[%s0 + $0x20] sm:$0xff]
  %v45 = vld [vmem:[%s0 + $0x28] sm:$0xff]
  %v46 = vld [vmem:[%s0 + $0x30] sm:$0xff]
  %v47 = vld [vmem:[%s0 + $0x38] sm:$0xff]
  %v48 = vld [vmem:[%s0 + $0x40] sm:$0xff]
  %v49 = vld [vmem:[%s0 + $0x48] sm:$0xff]
  %v50 = vld [vmem:[%s0 + $0x50] sm:$0xff]
  %v51 = vld [vmem:[%s0 + $0x58] sm:$0xff]
  %v52 = vld [vmem:[%s0 + $0x60] sm:$0xff]
  %v53 = vld [vmem:[%s0 + $0x68] sm:$0xff]
  %v54 = vld [vmem:[%s0 + $0x70] sm:$0xff]
  %v55 = vld [vmem:[%s0 + $0x78] sm:$0xff]
  %v56 = vld [vmem:[%s0 + $0x80] sm:$0xff]
  %v57 = vld [vmem:[%s0 + $0x88] sm:$0xff]
  %v58 = vld [vmem:[%s0 + $0x90] sm:$0xff]
  %v59 = vld [vmem:[%s0 + $0x98] sm:$0xff]
  %v60 = vld [vmem:[%s0 + $0xa0] sm:$0xff]
  %v61 = vld [vmem:[%s0 + $0xa8] sm:$0xff]
  %v62 = vld [vmem:[%s0 + $0xb0] sm:$0xff]
  %v63 = vld [vmem:[%s0 + $0xb8] sm:$0xff]
  %v64 = vld [vmem:[%s0 + $0xc0] sm:$0xff]
  %v65 = vld [vmem:[%s0 + $0xc8] sm:$0xff]
  %v66 = vld [vmem:[%s0 + $0xd0] sm:$0xff]
  %v67 = vld [vmem:[%s0 + $0xd8] sm:$0xff]
  %v68 = vld [vmem:[%s0 + $0xe0] sm:$0xff]
  %v69 = vld [vmem:[%s0 + $0xe8] sm:$0xff]
  %v70 = vld [vmem:[%s0 + $0xf0] sm:$0xff]
  %v71 = vld [vmem:[%s0 + $0xf8] sm:$0xff]
  %v72 = vld [vmem:[%s0 + $0x100] sm:$0xff]
  %v73 = vld [vmem:[%s0 + $0x108] sm:$0xff]
  %v74 = vld [vmem:[%s0 + $0x110] sm:$0xff]
  %v75 = vld [vmem:[%s0 + $0x118] sm:$0xff]
  %v76 = vld [vmem:[%s0 + $0x120] sm:$0xff]
  %v77 = vld [vmem:[%s0 + $0x128] sm:$0xff]
  %v78 = vld [vmem:[%s0 + $0x130] sm:$0xff]
  %v79 = vld [vmem:[%s0 + $0x138] sm:$0xff]
  %v80 = vld [vmem:[%s0 + $0x140] sm:$0xff]
  %v81 = vld [vmem:[%s0 + $0x148] sm:$0xff]
  %v82 = vld [vmem:[%s0 + $0x150] sm:$0xff]
  %v83 = vld [vmem:[%s0 + $0x158] sm:$0xff]
  %v84 = vld [vmem:[%s0 + $0x160] sm:$0xff]
  %v85 = vld [vmem:[%s0 + $0x168] sm:$0xff]
  %v86 = vld [vmem:[%s0 + $0x170] sm:$0xff]
  %v87 = vld [vmem:[%s0 + $0x178] sm:$0xff]
  %v88 = vld [vmem:[%s0 + $0x180] sm:$0xff]
  %v89 = vld [vmem:[%s0 + $0x188] sm:$0xff]
  %v90 = vld [vmem:[%s0 + $0x190] sm:$0xff]
  %v91 = vld [vmem:[%s0 + $0x198] sm:$0xff]
  %v92 = vld [vmem:[%s0 + $0x1a0] sm:$0xff]
  %v93 = vld [vmem:[%s0 + $0x1a8] sm:$0xff]
  %v94 = vld [vmem:[%s0 + $0x1b0] sm:$0xff]
  %v95 = vld [vmem:[%s0 + $0x1b8] sm:$0xff]
  %v96 = vld [vmem:[%s0 + $0x1c0] sm:$0xff]
  %v97 = vld [vmem:[%s0 + $0x1c8] sm:$0xff]
  %v98 = vld [vmem:[%s0 + $0x1d0] sm:$0xff]
  %v99 = vld [vmem:[%s0 + $0x1d8] sm:$0xff]
  %v100 = vld [vmem:[%s0 + $0x1e0] sm:$0xff]
  %v101 = vld [vmem:[%s0 + $0x1e8] sm:$0xff]
  %v102 = vld [vmem:[%s0 + $0x1f0] sm:$0xff]
  %v103 = vld [vmem:[%s0 + $0x1f8] sm:$0xff]
  %v104 = vld [vmem:[%s1] sm:$0x1]
  %vm105 = vcmask 7168
  %v107 = vsel %vm105, %v40, 0
  %v110 = vsel %vm105, %v41, 0
  %v113 = vsel %vm105, %v42, 0
  %v116 = vsel %vm105, %v43, 0
  %v119 = vsel %vm105, %v44, 0
  %v122 = vsel %vm105, %v45, 0
  %v125 = vsel %vm105, %v46, 0
  %v128 = vsel %vm105, %v47, 0
  %v131 = vsel %vm105, %v48, 0
  %v134 = vsel %vm105, %v49, 0
  %v137 = vsel %vm105, %v50, 0
  %v140 = vsel %vm105, %v51, 0
  %v143 = vsel %vm105, %v52, 0
  %v146 = vsel %vm105, %v53, 0
  %v149 = vsel %vm105, %v54, 0
  %v152 = vsel %vm105, %v55, 0
  %v155 = vsel %vm105, %v56, 0
  %v158 = vsel %vm105, %v57, 0
  %v161 = vsel %vm105, %v58, 0
  %v164 = vsel %vm105, %v59, 0
  %v167 = vsel %vm105, %v60, 0
  %v170 = vsel %vm105, %v61, 0
  %v173 = vsel %vm105, %v62, 0
  %v176 = vsel %vm105, %v63, 0
  %v179 = vsel %vm105, %v64, 0
  %v182 = vsel %vm105, %v65, 0
  %v185 = vsel %vm105, %v66, 0
  %v188 = vsel %vm105, %v67, 0
  %v191 = vsel %vm105, %v68, 0
  %v194 = vsel %vm105, %v69, 0
  %v197 = vsel %vm105, %v70, 0
  %v200 = vsel %vm105, %v71, 0
  %v203 = vsel %vm105, %v72, 0
  %v206 = vsel %vm105, %v73, 0
  %v209 = vsel %vm105, %v74, 0
  %v212 = vsel %vm105, %v75, 0
  %v215 = vsel %vm105, %v76, 0
  %v218 = vsel %vm105, %v77, 0
  %v221 = vsel %vm105, %v78, 0
  %v224 = vsel %vm105, %v79, 0
  %v227 = vsel %vm105, %v80, 0
  %v230 = vsel %vm105, %v81, 0
  %v233 = vsel %vm105, %v82, 0
  %v236 = vsel %vm105, %v83, 0
  %v239 = vsel %vm105, %v84, 0
  %v242 = vsel %vm105, %v85, 0
  %v245 = vsel %vm105, %v86, 0
  %v248 = vsel %vm105, %v87, 0
  %v251 = vsel %vm105, %v88, 0
  %v254 = vsel %vm105, %v89, 0
  %v257 = vsel %vm105, %v90, 0
  %v260 = vsel %vm105, %v91, 0
  %v263 = vsel %vm105, %v92, 0
  %v266 = vsel %vm105, %v93, 0
  %v269 = vsel %vm105, %v94, 0
  %v272 = vsel %vm105, %v95, 0
  %v275 = vsel %vm105, %v96, 0
  %v278 = vsel %vm105, %v97, 0
  %v281 = vsel %vm105, %v98, 0
  %v284 = vsel %vm105, %v99, 0
  %v287 = vsel %vm105, %v100, 0
  %v290 = vsel %vm105, %v101, 0
  %v293 = vsel %vm105, %v102, 0
  %v296 = vsel %vm105, %v103, 0
  %vm298 = vcmask 1040384
  %v300 = vsel %vm298, %v104, 0
  %302 = vmatprep.subr.mxu0 0.0
  %303 = vmatpush1.msra.mxu0 0.0
  %304 = vmatprep.subr.mxu0 0.0
  %305 = vmatpush1.msra.mxu0 0.0
  %306 = vmatprep.subr.mxu0 0.0
  %307 = vmatpush1.msra.mxu0 0.0
  %308 = vmatprep.subr.mxu0 0.0
  %309 = vmatpush1.msra.mxu0 0.0
  %310 = vmatprep.subr.mxu0 0.0
  %311 = vmatpush1.msra.mxu0 0.0
  %312 = vmatprep.subr.mxu0 0.0
  %313 = vmatpush1.msra.mxu0 0.0
  %314 = vmatprep.subr.mxu0 0.0
  %315 = vmatpush1.msra.mxu0 0.0
  %316 = vmatprep.subr.mxu0 0.0
  %317 = vmatpush1.msra.mxu0 0.0
  %318 = vmatprep.subr.mxu0 0.0
  %319 = vmatpush1.msra.mxu0 0.0
  %320 = vmatprep.subr.mxu0 0.0
  %321 = vmatpush1.msra.mxu0 0.0
  %322 = vmatprep.subr.mxu0 0.0
  %323 = vmatpush1.msra.mxu0 0.0
  %324 = vmatprep.subr.mxu0 0.0
  %325 = vmatpush1.msra.mxu0 0.0
  %326 = vmatprep.subr.mxu0 0.0
  %327 = vmatpush1.msra.mxu0 0.0
  %328 = vmatprep.subr.mxu0 0.0
  %329 = vmatpush1.msra.mxu0 0.0
  %330 = vmatprep.subr.mxu0 0.0
  %331 = vmatpush1.msra.mxu0 0.0
  %332 = vmatprep.subr.mxu0 0.0
  %333 = vmatpush1.msra.mxu0 %v300
  %334 = vmatprep.subr.mxu0 0.0
  %335 = vmatpush2.msra.mxu0 0.0
  %336 = vmatprep.subr.mxu0 0.0
  %337 = vmatpush2.msra.mxu0 0.0
  %338 = vmatprep.subr.mxu0 0.0
  %339 = vmatpush2.msra.mxu0 0.0
  %340 = vmatprep.subr.mxu0 0.0
  %341 = vmatpush2.msra.mxu0 0.0
  %342 = vmatprep.subr.mxu0 0.0
  %343 = vmatpush2.msra.mxu0 0.0
  %344 = vmatprep.subr.mxu0 0.0
  %345 = vmatpush2.msra.mxu0 0.0
  %346 = vmatprep.subr.mxu0 0.0
  %347 = vmatpush2.msra.mxu0 0.0
  %348 = vmatprep.subr.mxu0 0.0
  %349 = vmatpush2.msra.mxu0 0.0
  %350 = vmatprep.subr.mxu0 0.0
  %351 = vmatpush2.msra.mxu0 0.0
  %352 = vmatprep.subr.mxu0 0.0
  %353 = vmatpush2.msra.mxu0 0.0
  %354 = vmatprep.subr.mxu0 0.0
  %355 = vmatpush2.msra.mxu0 0.0
  %356 = vmatprep.subr.mxu0 0.0
  %357 = vmatpush2.msra.mxu0 0.0
  %358 = vmatprep.subr.mxu0 0.0
  %359 = vmatpush2.msra.mxu0 0.0
  %360 = vmatprep.subr.mxu0 0.0
  %361 = vmatpush2.msra.mxu0 0.0
  %362 = vmatprep.subr.mxu0 0.0
  %363 = vmatpush2.msra.mxu0 0.0
  %364 = vmatprep.subr.mxu0 0.0
  %365 = vmatpush2.msra.mxu0 0.0
  %366 = vmatprep.mubr.f32.mxu0 0.0
  %367 = vmatmul.mubr.f32.gmra.mxu0 %v107
  %v368 = vpop.f32.mrf.mxu0
  %v369 = vadd.f32 0.0, %v368
  %v370 = vpop.f32.mrf.mxu0
  %371 = vmatprep.mubr.f32.mxu0 0.0
  %372 = vmatmul.mubr.f32.gmra.mxu0 %v110
  %v373 = vpop.f32.mrf.mxu0
  %v374 = vadd.f32 0.0, %v373
  %v375 = vpop.f32.mrf.mxu0
  %376 = vmatprep.mubr.f32.mxu0 0.0
  %377 = vmatmul.mubr.f32.gmra.mxu0 %v113
  %v378 = vpop.f32.mrf.mxu0
  %v379 = vadd.f32 0.0, %v378
  %v380 = vpop.f32.mrf.mxu0
  %381 = vmatprep.mubr.f32.mxu0 0.0
  %382 = vmatmul.mubr.f32.gmra.mxu0 %v116
  %v383 = vpop.f32.mrf.mxu0
  %v384 = vadd.f32 0.0, %v383
  %v385 = vpop.f32.mrf.mxu0
  %386 = vmatprep.mubr.f32.mxu0 0.0
  %387 = vmatmul.mubr.f32.gmra.mxu0 %v119
  %v388 = vpop.f32.mrf.mxu0
  %v389 = vadd.f32 0.0, %v388
  %v390 = vpop.f32.mrf.mxu0
  %391 = vmatprep.mubr.f32.mxu0 0.0
  %392 = vmatmul.mubr.f32.gmra.mxu0 %v122
  %v393 = vpop.f32.mrf.mxu0
  %v394 = vadd.f32 0.0, %v393
  %v395 = vpop.f32.mrf.mxu0
  %396 = vmatprep.mubr.f32.mxu0 0.0
  %397 = vmatmul.mubr.f32.gmra.mxu0 %v125
  %v398 = vpop.f32.mrf.mxu0
  %v399 = vadd.f32 0.0, %v398
  %v400 = vpop.f32.mrf.mxu0
  %401 = vmatprep.mubr.f32.mxu0 0.0
  %402 = vmatmul.mubr.f32.gmra.mxu0 %v128
  %v403 = vpop.f32.mrf.mxu0
  %v404 = vadd.f32 0.0, %v403
  %v405 = vpop.f32.mrf.mxu0
  %406 = vmatprep.mubr.f32.mxu0 0.0
  %407 = vmatmul.mubr.f32.gmra.mxu0 %v131
  %v408 = vpop.f32.mrf.mxu0
  %v409 = vadd.f32 0.0, %v408
  %v410 = vpop.f32.mrf.mxu0
  %411 = vmatprep.mubr.f32.mxu0 0.0
  %412 = vmatmul.mubr.f32.gmra.mxu0 %v134
  %v413 = vpop.f32.mrf.mxu0
  %v414 = vadd.f32 0.0, %v413
  %v415 = vpop.f32.mrf.mxu0
  %416 = vmatprep.mubr.f32.mxu0 0.0
  %417 = vmatmul.mubr.f32.gmra.mxu0 %v137
  %v418 = vpop.f32.mrf.mxu0
  %v419 = vadd.f32 0.0, %v418
  %v420 = vpop.f32.mrf.mxu0
  %421 = vmatprep.mubr.f32.mxu0 0.0
  %422 = vmatmul.mubr.f32.gmra.mxu0 %v140
  %v423 = vpop.f32.mrf.mxu0
  %v424 = vadd.f32 0.0, %v423
  %v425 = vpop.f32.mrf.mxu0
  %426 = vmatprep.mubr.f32.mxu0 0.0
  %427 = vmatmul.mubr.f32.gmra.mxu0 %v143
  %v428 = vpop.f32.mrf.mxu0
  %v429 = vadd.f32 0.0, %v428
  %v430 = vpop.f32.mrf.mxu0
  %431 = vmatprep.mubr.f32.mxu0 0.0
  %432 = vmatmul.mubr.f32.gmra.mxu0 %v146
  %v433 = vpop.f32.mrf.mxu0
  %v434 = vadd.f32 0.0, %v433
  %v435 = vpop.f32.mrf.mxu0
  %436 = vmatprep.mubr.f32.mxu0 0.0
  %437 = vmatmul.mubr.f32.gmra.mxu0 %v149
  %v438 = vpop.f32.mrf.mxu0
  %v439 = vadd.f32 0.0, %v438
  %v440 = vpop.f32.mrf.mxu0
  %441 = vmatprep.mubr.f32.mxu0 0.0
  %442 = vmatmul.mubr.f32.gmra.mxu0 %v152
  %v443 = vpop.f32.mrf.mxu0
  %v444 = vadd.f32 0.0, %v443
  %v445 = vpop.f32.mrf.mxu0
  %446 = vmatprep.mubr.f32.mxu0 0.0
  %447 = vmatmul.mubr.f32.gmra.mxu0 %v155
  %v448 = vpop.f32.mrf.mxu0
  %v449 = vadd.f32 0.0, %v448
  %v450 = vpop.f32.mrf.mxu0
  %451 = vmatprep.mubr.f32.mxu0 0.0
  %452 = vmatmul.mubr.f32.gmra.mxu0 %v158
  %v453 = vpop.f32.mrf.mxu0
  %v454 = vadd.f32 0.0, %v453
  %v455 = vpop.f32.mrf.mxu0
  %456 = vmatprep.mubr.f32.mxu0 0.0
  %457 = vmatmul.mubr.f32.gmra.mxu0 %v161
  %v458 = vpop.f32.mrf.mxu0
  %v459 = vadd.f32 0.0, %v458
  %v460 = vpop.f32.mrf.mxu0
  %461 = vmatprep.mubr.f32.mxu0 0.0
  %462 = vmatmul.mubr.f32.gmra.mxu0 %v164
  %v463 = vpop.f32.mrf.mxu0
  %v464 = vadd.f32 0.0, %v463
  %v465 = vpop.f32.mrf.mxu0
  %466 = vmatprep.mubr.f32.mxu0 0.0
  %467 = vmatmul.mubr.f32.gmra.mxu0 %v167
  %v468 = vpop.f32.mrf.mxu0
  %v469 = vadd.f32 0.0, %v468
  %v470 = vpop.f32.mrf.mxu0
  %471 = vmatprep.mubr.f32.mxu0 0.0
  %472 = vmatmul.mubr.f32.gmra.mxu0 %v170
  %v473 = vpop.f32.mrf.mxu0
  %v474 = vadd.f32 0.0, %v473
  %v475 = vpop.f32.mrf.mxu0
  %476 = vmatprep.mubr.f32.mxu0 0.0
  %477 = vmatmul.mubr.f32.gmra.mxu0 %v173
  %v478 = vpop.f32.mrf.mxu0
  %v479 = vadd.f32 0.0, %v478
  %v480 = vpop.f32.mrf.mxu0
  %481 = vmatprep.mubr.f32.mxu0 0.0
  %482 = vmatmul.mubr.f32.gmra.mxu0 %v176
  %v483 = vpop.f32.mrf.mxu0
  %v484 = vadd.f32 0.0, %v483
  %v485 = vpop.f32.mrf.mxu0
  %486 = vmatprep.mubr.f32.mxu0 0.0
  %487 = vmatmul.mubr.f32.gmra.mxu0 %v179
  %v488 = vpop.f32.mrf.mxu0
  %v489 = vadd.f32 0.0, %v488
  %v490 = vpop.f32.mrf.mxu0
  %491 = vmatprep.mubr.f32.mxu0 0.0
  %492 = vmatmul.mubr.f32.gmra.mxu0 %v182
  %v493 = vpop.f32.mrf.mxu0
  %v494 = vadd.f32 0.0, %v493
  %v495 = vpop.f32.mrf.mxu0
  %496 = vmatprep.mubr.f32.mxu0 0.0
  %497 = vmatmul.mubr.f32.gmra.mxu0 %v185
  %v498 = vpop.f32.mrf.mxu0
  %v499 = vadd.f32 0.0, %v498
  %v500 = vpop.f32.mrf.mxu0
  %501 = vmatprep.mubr.f32.mxu0 0.0
  %502 = vmatmul.mubr.f32.gmra.mxu0 %v188
  %v503 = vpop.f32.mrf.mxu0
  %v504 = vadd.f32 0.0, %v503
  %v505 = vpop.f32.mrf.mxu0
  %506 = vmatprep.mubr.f32.mxu0 0.0
  %507 = vmatmul.mubr.f32.gmra.mxu0 %v191
  %v508 = vpop.f32.mrf.mxu0
  %v509 = vadd.f32 0.0, %v508
  %v510 = vpop.f32.mrf.mxu0
  %511 = vmatprep.mubr.f32.mxu0 0.0
  %512 = vmatmul.mubr.f32.gmra.mxu0 %v194
  %v513 = vpop.f32.mrf.mxu0
  %v514 = vadd.f32 0.0, %v513
  %v515 = vpop.f32.mrf.mxu0
  %516 = vmatprep.mubr.f32.mxu0 0.0
  %517 = vmatmul.mubr.f32.gmra.mxu0 %v197
  %v518 = vpop.f32.mrf.mxu0
  %v519 = vadd.f32 0.0, %v518
  %v520 = vpop.f32.mrf.mxu0
  %521 = vmatprep.mubr.f32.mxu0 0.0
  %522 = vmatmul.mubr.f32.gmra.mxu0 %v200
  %v523 = vpop.f32.mrf.mxu0
  %v524 = vadd.f32 0.0, %v523
  %v525 = vpop.f32.mrf.mxu0
  %526 = vmatprep.mubr.f32.mxu0 0.0
  %527 = vmatmul.mubr.f32.gmra.mxu0 %v203
  %v528 = vpop.f32.mrf.mxu0
  %v529 = vadd.f32 0.0, %v528
  %v530 = vpop.f32.mrf.mxu0
  %531 = vmatprep.mubr.f32.mxu0 0.0
  %532 = vmatmul.mubr.f32.gmra.mxu0 %v206
  %v533 = vpop.f32.mrf.mxu0
  %v534 = vadd.f32 0.0, %v533
  %v535 = vpop.f32.mrf.mxu0
  %536 = vmatprep.mubr.f32.mxu0 0.0
  %537 = vmatmul.mubr.f32.gmra.mxu0 %v209
  %v538 = vpop.f32.mrf.mxu0
  %v539 = vadd.f32 0.0, %v538
  %v540 = vpop.f32.mrf.mxu0
  %541 = vmatprep.mubr.f32.mxu0 0.0
  %542 = vmatmul.mubr.f32.gmra.mxu0 %v212
  %v543 = vpop.f32.mrf.mxu0
  %v544 = vadd.f32 0.0, %v543
  %v545 = vpop.f32.mrf.mxu0
  %546 = vmatprep.mubr.f32.mxu0 0.0
  %547 = vmatmul.mubr.f32.gmra.mxu0 %v215
  %v548 = vpop.f32.mrf.mxu0
  %v549 = vadd.f32 0.0, %v548
  %v550 = vpop.f32.mrf.mxu0
  %551 = vmatprep.mubr.f32.mxu0 0.0
  %552 = vmatmul.mubr.f32.gmra.mxu0 %v218
  %v553 = vpop.f32.mrf.mxu0
  %v554 = vadd.f32 0.0, %v553
  %v555 = vpop.f32.mrf.mxu0
  %556 = vmatprep.mubr.f32.mxu0 0.0
  %557 = vmatmul.mubr.f32.gmra.mxu0 %v221
  %v558 = vpop.f32.mrf.mxu0
  %v559 = vadd.f32 0.0, %v558
  %v560 = vpop.f32.mrf.mxu0
  %561 = vmatprep.mubr.f32.mxu0 0.0
  %562 = vmatmul.mubr.f32.gmra.mxu0 %v224
  %v563 = vpop.f32.mrf.mxu0
  %v564 = vadd.f32 0.0, %v563
  %v565 = vpop.f32.mrf.mxu0
  %566 = vmatprep.mubr.f32.mxu0 0.0
  %567 = vmatmul.mubr.f32.gmra.mxu0 %v227
  %v568 = vpop.f32.mrf.mxu0
  %v569 = vadd.f32 0.0, %v568
  %v570 = vpop.f32.mrf.mxu0
  %571 = vmatprep.mubr.f32.mxu0 0.0
  %572 = vmatmul.mubr.f32.gmra.mxu0 %v230
  %v573 = vpop.f32.mrf.mxu0
  %v574 = vadd.f32 0.0, %v573
  %v575 = vpop.f32.mrf.mxu0
  %576 = vmatprep.mubr.f32.mxu0 0.0
  %577 = vmatmul.mubr.f32.gmra.mxu0 %v233
  %v578 = vpop.f32.mrf.mxu0
  %v579 = vadd.f32 0.0, %v578
  %v580 = vpop.f32.mrf.mxu0
  %581 = vmatprep.mubr.f32.mxu0 0.0
  %582 = vmatmul.mubr.f32.gmra.mxu0 %v236
  %v583 = vpop.f32.mrf.mxu0
  %v584 = vadd.f32 0.0, %v583
  %v585 = vpop.f32.mrf.mxu0
  %586 = vmatprep.mubr.f32.mxu0 0.0
  %587 = vmatmul.mubr.f32.gmra.mxu0 %v239
  %v588 = vpop.f32.mrf.mxu0
  %v589 = vadd.f32 0.0, %v588
  %v590 = vpop.f32.mrf.mxu0
  %591 = vmatprep.mubr.f32.mxu0 0.0
  %592 = vmatmul.mubr.f32.gmra.mxu0 %v242
  %v593 = vpop.f32.mrf.mxu0
  %v594 = vadd.f32 0.0, %v593
  %v595 = vpop.f32.mrf.mxu0
  %596 = vmatprep.mubr.f32.mxu0 0.0
  %597 = vmatmul.mubr.f32.gmra.mxu0 %v245
  %v598 = vpop.f32.mrf.mxu0
  %v599 = vadd.f32 0.0, %v598
  %v600 = vpop.f32.mrf.mxu0
  %601 = vmatprep.mubr.f32.mxu0 0.0
  %602 = vmatmul.mubr.f32.gmra.mxu0 %v248
  %v603 = vpop.f32.mrf.mxu0
  %v604 = vadd.f32 0.0, %v603
  %v605 = vpop.f32.mrf.mxu0
  %606 = vmatprep.mubr.f32.mxu0 0.0
  %607 = vmatmul.mubr.f32.gmra.mxu0 %v251
  %v608 = vpop.f32.mrf.mxu0
  %v609 = vadd.f32 0.0, %v608
  %v610 = vpop.f32.mrf.mxu0
  %611 = vmatprep.mubr.f32.mxu0 0.0
  %612 = vmatmul.mubr.f32.gmra.mxu0 %v254
  %v613 = vpop.f32.mrf.mxu0
  %v614 = vadd.f32 0.0, %v613
  %v615 = vpop.f32.mrf.mxu0
  %616 = vmatprep.mubr.f32.mxu0 0.0
  %617 = vmatmul.mubr.f32.gmra.mxu0 %v257
  %v618 = vpop.f32.mrf.mxu0
  %v619 = vadd.f32 0.0, %v618
  %v620 = vpop.f32.mrf.mxu0
  %621 = vmatprep.mubr.f32.mxu0 0.0
  %622 = vmatmul.mubr.f32.gmra.mxu0 %v260
  %v623 = vpop.f32.mrf.mxu0
  %v624 = vadd.f32 0.0, %v623
  %v625 = vpop.f32.mrf.mxu0
  %626 = vmatprep.mubr.f32.mxu0 0.0
  %627 = vmatmul.mubr.f32.gmra.mxu0 %v263
  %v628 = vpop.f32.mrf.mxu0
  %v629 = vadd.f32 0.0, %v628
  %v630 = vpop.f32.mrf.mxu0
  %631 = vmatprep.mubr.f32.mxu0 0.0
  %632 = vmatmul.mubr.f32.gmra.mxu0 %v266
  %v633 = vpop.f32.mrf.mxu0
  %v634 = vadd.f32 0.0, %v633
  %v635 = vpop.f32.mrf.mxu0
  %636 = vmatprep.mubr.f32.mxu0 0.0
  %637 = vmatmul.mubr.f32.gmra.mxu0 %v269
  %v638 = vpop.f32.mrf.mxu0
  %v639 = vadd.f32 0.0, %v638
  %v640 = vpop.f32.mrf.mxu0
  %641 = vmatprep.mubr.f32.mxu0 0.0
  %642 = vmatmul.mubr.f32.gmra.mxu0 %v272
  %v643 = vpop.f32.mrf.mxu0
  %v644 = vadd.f32 0.0, %v643
  %v645 = vpop.f32.mrf.mxu0
  %646 = vmatprep.mubr.f32.mxu0 0.0
  %647 = vmatmul.mubr.f32.gmra.mxu0 %v275
  %v648 = vpop.f32.mrf.mxu0
  %v649 = vadd.f32 0.0, %v648
  %v650 = vpop.f32.mrf.mxu0
  %651 = vmatprep.mubr.f32.mxu0 0.0
  %652 = vmatmul.mubr.f32.gmra.mxu0 %v278
  %v653 = vpop.f32.mrf.mxu0
  %v654 = vadd.f32 0.0, %v653
  %v655 = vpop.f32.mrf.mxu0
  %656 = vmatprep.mubr.f32.mxu0 0.0
  %657 = vmatmul.mubr.f32.gmra.mxu0 %v281
  %v658 = vpop.f32.mrf.mxu0
  %v659 = vadd.f32 0.0, %v658
  %v660 = vpop.f32.mrf.mxu0
  %661 = vmatprep.mubr.f32.mxu0 0.0
  %662 = vmatmul.mubr.f32.gmra.mxu0 %v284
  %v663 = vpop.f32.mrf.mxu0
  %v664 = vadd.f32 0.0, %v663
  %v665 = vpop.f32.mrf.mxu0
  %666 = vmatprep.mubr.f32.mxu0 0.0
  %667 = vmatmul.mubr.f32.gmra.mxu0 %v287
  %v668 = vpop.f32.mrf.mxu0
  %v669 = vadd.f32 0.0, %v668
  %v670 = vpop.f32.mrf.mxu0
  %671 = vmatprep.mubr.f32.mxu0 0.0
  %672 = vmatmul.mubr.f32.gmra.mxu0 %v290
  %v673 = vpop.f32.mrf.mxu0
  %v674 = vadd.f32 0.0, %v673
  %v675 = vpop.f32.mrf.mxu0
  %676 = vmatprep.mubr.f32.mxu0 0.0
  %677 = vmatmul.mubr.f32.gmra.mxu0 %v293
  %v678 = vpop.f32.mrf.mxu0
  %v679 = vadd.f32 0.0, %v678
  %v680 = vpop.f32.mrf.mxu0
  %681 = vmatprep.mubr.f32.mxu0 0.0
  %682 = vmatmul.mubr.f32.gmra.mxu0 %v296
  %v683 = vpop.f32.mrf.mxu0
  %v684 = vadd.f32 0.0, %v683
  %v685 = vpop.f32.mrf.mxu0
  %686 = vdwg.mxu0
  %vm751 = vcmask 1046528
  %v752 = vrot.slane %v369, 1
  %v753 = vrot.slane %v374, 1
  %v754 = vsel %vm751, %v752, %v753
  %v755 = vrot.slane %v379, 1
  %v756 = vsel %vm751, %v753, %v755
  %v757 = vrot.slane %v384, 1
  %v758 = vsel %vm751, %v755, %v757
  %v759 = vrot.slane %v389, 1
  %v760 = vsel %vm751, %v757, %v759
  %v761 = vrot.slane %v394, 1
  %v762 = vsel %vm751, %v759, %v761
  %v763 = vrot.slane %v399, 1
  %v764 = vsel %vm751, %v761, %v763
  %v765 = vrot.slane %v404, 1
  %v766 = vsel %vm751, %v763, %v765
  %v767 = vrot.slane %v409, 1
  %v768 = vrot.slane %v414, 1
  %v769 = vsel %vm751, %v767, %v768
  %v770 = vrot.slane %v419, 1
  %v771 = vsel %vm751, %v768, %v770
  %v772 = vrot.slane %v424, 1
  %v773 = vsel %vm751, %v770, %v772
  %v774 = vrot.slane %v429, 1
  %v775 = vsel %vm751, %v772, %v774
  %v776 = vrot.slane %v434, 1
  %v777 = vsel %vm751, %v774, %v776
  %v778 = vrot.slane %v439, 1
  %v779 = vsel %vm751, %v776, %v778
  %v780 = vrot.slane %v444, 1
  %v781 = vsel %vm751, %v778, %v780
  %v782 = vrot.slane %v449, 1
  %v783 = vrot.slane %v454, 1
  %v784 = vsel %vm751, %v782, %v783
  %v785 = vrot.slane %v459, 1
  %v786 = vsel %vm751, %v783, %v785
  %v787 = vrot.slane %v464, 1
  %v788 = vsel %vm751, %v785, %v787
  %v789 = vrot.slane %v469, 1
  %v790 = vsel %vm751, %v787, %v789
  %v791 = vrot.slane %v474, 1
  %v792 = vsel %vm751, %v789, %v791
  %v793 = vrot.slane %v479, 1
  %v794 = vsel %vm751, %v791, %v793
  %v795 = vrot.slane %v484, 1
  %v796 = vsel %vm751, %v793, %v795
  %v797 = vrot.slane %v489, 1
  %v798 = vrot.slane %v494, 1
  %v799 = vsel %vm751, %v797, %v798
  %v800 = vrot.slane %v499, 1
  %v801 = vsel %vm751, %v798, %v800
  %v802 = vrot.slane %v504, 1
  %v803 = vsel %vm751, %v800, %v802
  %v804 = vrot.slane %v509, 1
  %v805 = vsel %vm751, %v802, %v804
  %v806 = vrot.slane %v514, 1
  %v807 = vsel %vm751, %v804, %v806
  %v808 = vrot.slane %v519, 1
  %v809 = vsel %vm751, %v806, %v808
  %v810 = vrot.slane %v524, 1
  %v811 = vsel %vm751, %v808, %v810
  %v812 = vrot.slane %v529, 1
  %v813 = vrot.slane %v534, 1
  %v814 = vsel %vm751, %v812, %v813
  %v815 = vrot.slane %v539, 1
  %v816 = vsel %vm751, %v813, %v815
  %v817 = vrot.slane %v544, 1
  %v818 = vsel %vm751, %v815, %v817
  %v819 = vrot.slane %v549, 1
  %v820 = vsel %vm751, %v817, %v819
  %v821 = vrot.slane %v554, 1
  %v822 = vsel %vm751, %v819, %v821
  %v823 = vrot.slane %v559, 1
  %v824 = vsel %vm751, %v821, %v823
  %v825 = vrot.slane %v564, 1
  %v826 = vsel %vm751, %v823, %v825
  %v827 = vrot.slane %v569, 1
  %v828 = vrot.slane %v574, 1
  %v829 = vsel %vm751, %v827, %v828
  %v830 = vrot.slane %v579, 1
  %v831 = vsel %vm751, %v828, %v830
  %v832 = vrot.slane %v584, 1
  %v833 = vsel %vm751, %v830, %v832
  %v834 = vrot.slane %v589, 1
  %v835 = vsel %vm751, %v832, %v834
  %v836 = vrot.slane %v594, 1
  %v837 = vsel %vm751, %v834, %v836
  %v838 = vrot.slane %v599, 1
  %v839 = vsel %vm751, %v836, %v838
  %v840 = vrot.slane %v604, 1
  %v841 = vsel %vm751, %v838, %v840
  %v842 = vrot.slane %v609, 1
  %v843 = vrot.slane %v614, 1
  %v844 = vsel %vm751, %v842, %v843
  %v845 = vrot.slane %v619, 1
  %v846 = vsel %vm751, %v843, %v845
  %v847 = vrot.slane %v624, 1
  %v848 = vsel %vm751, %v845, %v847
  %v849 = vrot.slane %v629, 1
  %v850 = vsel %vm751, %v847, %v849
  %v851 = vrot.slane %v634, 1
  %v852 = vsel %vm751, %v849, %v851
  %v853 = vrot.slane %v639, 1
  %v854 = vsel %vm751, %v851, %v853
  %v855 = vrot.slane %v644, 1
  %v856 = vsel %vm751, %v853, %v855
  %v857 = vrot.slane %v649, 1
  %v858 = vrot.slane %v654, 1
  %v859 = vsel %vm751, %v857, %v858
  %v860 = vrot.slane %v659, 1
  %v861 = vsel %vm751, %v858, %v860
  %v862 = vrot.slane %v664, 1
  %v863 = vsel %vm751, %v860, %v862
  %v864 = vrot.slane %v669, 1
  %v865 = vsel %vm751, %v862, %v864
  %v866 = vrot.slane %v674, 1
  %v867 = vsel %vm751, %v864, %v866
  %v868 = vrot.slane %v679, 1
  %v869 = vsel %vm751, %v866, %v868
  %v870 = vrot.slane %v684, 1
  %v871 = vsel %vm751, %v868, %v870
  %872 = vrot.lane.b32.xlu0 %v754, 112
  %v873 = vpop.permute.xlu0 %872
  %874 = vrot.lane.b32.xlu0 %v756, 112
  %v875 = vpop.permute.xlu0 %874
  %876 = vrot.lane.b32.xlu0 %v758, 112
  %v877 = vpop.permute.xlu0 %876
  %878 = vrot.lane.b32.xlu0 %v760, 112
  %v879 = vpop.permute.xlu0 %878
  %880 = vrot.lane.b32.xlu0 %v762, 112
  %v881 = vpop.permute.xlu0 %880
  %882 = vrot.lane.b32.xlu0 %v764, 112
  %v883 = vpop.permute.xlu0 %882
  %884 = vrot.lane.b32.xlu0 %v766, 112
  %v885 = vpop.permute.xlu0 %884
  %886 = vrot.lane.b32.xlu0 %v765, 112
  %v887 = vpop.permute.xlu0 %886
  %888 = vrot.lane.b32.xlu0 %v769, 112
  %v889 = vpop.permute.xlu0 %888
  %890 = vrot.lane.b32.xlu0 %v771, 112
  %v891 = vpop.permute.xlu0 %890
  %892 = vrot.lane.b32.xlu0 %v773, 112
  %v893 = vpop.permute.xlu0 %892
  %894 = vrot.lane.b32.xlu0 %v775, 112
  %v895 = vpop.permute.xlu0 %894
  %896 = vrot.lane.b32.xlu0 %v777, 112
  %v897 = vpop.permute.xlu0 %896
  %898 = vrot.lane.b32.xlu0 %v779, 112
  %v899 = vpop.permute.xlu0 %898
  %900 = vrot.lane.b32.xlu0 %v781, 112
  %v901 = vpop.permute.xlu0 %900
  %902 = vrot.lane.b32.xlu0 %v780, 112
  %v903 = vpop.permute.xlu0 %902
  %904 = vrot.lane.b32.xlu0 %v784, 112
  %v905 = vpop.permute.xlu0 %904
  %906 = vrot.lane.b32.xlu0 %v786, 112
  %v907 = vpop.permute.xlu0 %906
  %908 = vrot.lane.b32.xlu0 %v788, 112
  %v909 = vpop.permute.xlu0 %908
  %910 = vrot.lane.b32.xlu0 %v790, 112
  %v911 = vpop.permute.xlu0 %910
  %912 = vrot.lane.b32.xlu0 %v792, 112
  %v913 = vpop.permute.xlu0 %912
  %914 = vrot.lane.b32.xlu0 %v794, 112
  %v915 = vpop.permute.xlu0 %914
  %916 = vrot.lane.b32.xlu0 %v796, 112
  %v917 = vpop.permute.xlu0 %916
  %918 = vrot.lane.b32.xlu0 %v795, 112
  %v919 = vpop.permute.xlu0 %918
  %920 = vrot.lane.b32.xlu0 %v799, 112
  %v921 = vpop.permute.xlu0 %920
  %922 = vrot.lane.b32.xlu0 %v801, 112
  %v923 = vpop.permute.xlu0 %922
  %924 = vrot.lane.b32.xlu0 %v803, 112
  %v925 = vpop.permute.xlu0 %924
  %926 = vrot.lane.b32.xlu0 %v805, 112
  %v927 = vpop.permute.xlu0 %926
  %928 = vrot.lane.b32.xlu0 %v807, 112
  %v929 = vpop.permute.xlu0 %928
  %930 = vrot.lane.b32.xlu0 %v809, 112
  %v931 = vpop.permute.xlu0 %930
  %932 = vrot.lane.b32.xlu0 %v811, 112
  %v933 = vpop.permute.xlu0 %932
  %934 = vrot.lane.b32.xlu0 %v810, 112
  %v935 = vpop.permute.xlu0 %934
  %936 = vrot.lane.b32.xlu0 %v814, 112
  %v937 = vpop.permute.xlu0 %936
  %938 = vrot.lane.b32.xlu0 %v816, 112
  %v939 = vpop.permute.xlu0 %938
  %940 = vrot.lane.b32.xlu0 %v818, 112
  %v941 = vpop.permute.xlu0 %940
  %942 = vrot.lane.b32.xlu0 %v820, 112
  %v943 = vpop.permute.xlu0 %942
  %944 = vrot.lane.b32.xlu0 %v822, 112
  %v945 = vpop.permute.xlu0 %944
  %946 = vrot.lane.b32.xlu0 %v824, 112
  %v947 = vpop.permute.xlu0 %946
  %948 = vrot.lane.b32.xlu0 %v826, 112
  %v949 = vpop.permute.xlu0 %948
  %950 = vrot.lane.b32.xlu0 %v825, 112
  %v951 = vpop.permute.xlu0 %950
  %952 = vrot.lane.b32.xlu0 %v829, 112
  %v953 = vpop.permute.xlu0 %952
  %954 = vrot.lane.b32.xlu0 %v831, 112
  %v955 = vpop.permute.xlu0 %954
  %956 = vrot.lane.b32.xlu0 %v833, 112
  %v957 = vpop.permute.xlu0 %956
  %958 = vrot.lane.b32.xlu0 %v835, 112
  %v959 = vpop.permute.xlu0 %958
  %960 = vrot.lane.b32.xlu0 %v837, 112
  %v961 = vpop.permute.xlu0 %960
  %962 = vrot.lane.b32.xlu0 %v839, 112
  %v963 = vpop.permute.xlu0 %962
  %964 = vrot.lane.b32.xlu0 %v841, 112
  %v965 = vpop.permute.xlu0 %964
  %966 = vrot.lane.b32.xlu0 %v840, 112
  %v967 = vpop.permute.xlu0 %966
  %968 = vrot.lane.b32.xlu0 %v844, 112
  %v969 = vpop.permute.xlu0 %968
  %970 = vrot.lane.b32.xlu0 %v846, 112
  %v971 = vpop.permute.xlu0 %970
  %972 = vrot.lane.b32.xlu0 %v848, 112
  %v973 = vpop.permute.xlu0 %972
  %974 = vrot.lane.b32.xlu0 %v850, 112
  %v975 = vpop.permute.xlu0 %974
  %976 = vrot.lane.b32.xlu0 %v852, 112
  %v977 = vpop.permute.xlu0 %976
  %978 = vrot.lane.b32.xlu0 %v854, 112
  %v979 = vpop.permute.xlu0 %978
  %980 = vrot.lane.b32.xlu0 %v856, 112
  %v981 = vpop.permute.xlu0 %980
  %982 = vrot.lane.b32.xlu0 %v855, 112
  %v983 = vpop.permute.xlu0 %982
  %984 = vrot.lane.b32.xlu0 %v859, 112
  %v985 = vpop.permute.xlu0 %984
  %986 = vrot.lane.b32.xlu0 %v861, 112
  %v987 = vpop.permute.xlu0 %986
  %988 = vrot.lane.b32.xlu0 %v863, 112
  %v989 = vpop.permute.xlu0 %988
  %990 = vrot.lane.b32.xlu0 %v865, 112
  %v991 = vpop.permute.xlu0 %990
  %992 = vrot.lane.b32.xlu0 %v867, 112
  %v993 = vpop.permute.xlu0 %992
  %994 = vrot.lane.b32.xlu0 %v869, 112
  %v995 = vpop.permute.xlu0 %994
  %996 = vrot.lane.b32.xlu0 %v871, 112
  %v997 = vpop.permute.xlu0 %996
  %998 = vrot.lane.b32.xlu0 %v870, 112
  %v999 = vpop.permute.xlu0 %998
  %v1064 = vadd.f32 %v369, %v873
  %v1065 = vadd.f32 %v374, %v875
  %v1066 = vadd.f32 %v379, %v877
  %v1067 = vadd.f32 %v384, %v879
  %v1068 = vadd.f32 %v389, %v881
  %v1069 = vadd.f32 %v394, %v883
  %v1070 = vadd.f32 %v399, %v885
  %v1071 = vadd.f32 %v404, %v887
  %v1072 = vadd.f32 %v409, %v889
  %v1073 = vadd.f32 %v414, %v891
  %v1074 = vadd.f32 %v419, %v893
  %v1075 = vadd.f32 %v424, %v895
  %v1076 = vadd.f32 %v429, %v897
  %v1077 = vadd.f32 %v434, %v899
  %v1078 = vadd.f32 %v439, %v901
  %v1079 = vadd.f32 %v444, %v903
  %v1080 = vadd.f32 %v449, %v905
  %v1081 = vadd.f32 %v454, %v907
  %v1082 = vadd.f32 %v459, %v909
  %v1083 = vadd.f32 %v464, %v911
  %v1084 = vadd.f32 %v469, %v913
  %v1085 = vadd.f32 %v474, %v915
  %v1086 = vadd.f32 %v479, %v917
  %v1087 = vadd.f32 %v484, %v919
  %v1088 = vadd.f32 %v489, %v921
  %v1089 = vadd.f32 %v494, %v923
  %v1090 = vadd.f32 %v499, %v925
  %v1091 = vadd.f32 %v504, %v927
  %v1092 = vadd.f32 %v509, %v929
  %v1093 = vadd.f32 %v514, %v931
  %v1094 = vadd.f32 %v519, %v933
  %v1095 = vadd.f32 %v524, %v935
  %v1096 = vadd.f32 %v529, %v937
  %v1097 = vadd.f32 %v534, %v939
  %v1098 = vadd.f32 %v539, %v941
  %v1099 = vadd.f32 %v544, %v943
  %v1100 = vadd.f32 %v549, %v945
  %v1101 = vadd.f32 %v554, %v947
  %v1102 = vadd.f32 %v559, %v949
  %v1103 = vadd.f32 %v564, %v951
  %v1104 = vadd.f32 %v569, %v953
  %v1105 = vadd.f32 %v574, %v955
  %v1106 = vadd.f32 %v579, %v957
  %v1107 = vadd.f32 %v584, %v959
  %v1108 = vadd.f32 %v589, %v961
  %v1109 = vadd.f32 %v594, %v963
  %v1110 = vadd.f32 %v599, %v965
  %v1111 = vadd.f32 %v604, %v967
  %v1112 = vadd.f32 %v609, %v969
  %v1113 = vadd.f32 %v614, %v971
  %v1114 = vadd.f32 %v619, %v973
  %v1115 = vadd.f32 %v624, %v975
  %v1116 = vadd.f32 %v629, %v977
  %v1117 = vadd.f32 %v634, %v979
  %v1118 = vadd.f32 %v639, %v981
  %v1119 = vadd.f32 %v644, %v983
  %v1120 = vadd.f32 %v649, %v985
  %v1121 = vadd.f32 %v654, %v987
  %v1122 = vadd.f32 %v659, %v989
  %v1123 = vadd.f32 %v664, %v991
  %v1124 = vadd.f32 %v669, %v993
  %v1125 = vadd.f32 %v674, %v995
  %v1126 = vadd.f32 %v679, %v997
  %v1127 = vadd.f32 %v684, %v999
  %vm1128 = vcmask 1045504
  %v1129 = vrot.slane %v369, 2
  %v1130 = vrot.slane %v374, 2
  %v1131 = vsel %vm1128, %v1129, %v1130
  %v1132 = vrot.slane %v379, 2
  %v1133 = vsel %vm1128, %v1130, %v1132
  %v1134 = vrot.slane %v384, 2
  %v1135 = vsel %vm1128, %v1132, %v1134
  %v1136 = vrot.slane %v389, 2
  %v1137 = vsel %vm1128, %v1134, %v1136
  %v1138 = vrot.slane %v394, 2
  %v1139 = vsel %vm1128, %v1136, %v1138
  %v1140 = vrot.slane %v399, 2
  %v1141 = vsel %vm1128, %v1138, %v1140
  %v1142 = vrot.slane %v404, 2
  %v1143 = vsel %vm1128, %v1140, %v1142
  %v1144 = vrot.slane %v409, 2
  %v1145 = vrot.slane %v414, 2
  %v1146 = vsel %vm1128, %v1144, %v1145
  %v1147 = vrot.slane %v419, 2
  %v1148 = vsel %vm1128, %v1145, %v1147
  %v1149 = vrot.slane %v424, 2
  %v1150 = vsel %vm1128, %v1147, %v1149
  %v1151 = vrot.slane %v429, 2
  %v1152 = vsel %vm1128, %v1149, %v1151
  %v1153 = vrot.slane %v434, 2
  %v1154 = vsel %vm1128, %v1151, %v1153
  %v1155 = vrot.slane %v439, 2
  %v1156 = vsel %vm1128, %v1153, %v1155
  %v1157 = vrot.slane %v444, 2
  %v1158 = vsel %vm1128, %v1155, %v1157
  %v1159 = vrot.slane %v449, 2
  %v1160 = vrot.slane %v454, 2
  %v1161 = vsel %vm1128, %v1159, %v1160
  %v1162 = vrot.slane %v459, 2
  %v1163 = vsel %vm1128, %v1160, %v1162
  %v1164 = vrot.slane %v464, 2
  %v1165 = vsel %vm1128, %v1162, %v1164
  %v1166 = vrot.slane %v469, 2
  %v1167 = vsel %vm1128, %v1164, %v1166
  %v1168 = vrot.slane %v474, 2
  %v1169 = vsel %vm1128, %v1166, %v1168
  %v1170 = vrot.slane %v479, 2
  %v1171 = vsel %vm1128, %v1168, %v1170
  %v1172 = vrot.slane %v484, 2
  %v1173 = vsel %vm1128, %v1170, %v1172
  %v1174 = vrot.slane %v489, 2
  %v1175 = vrot.slane %v494, 2
  %v1176 = vsel %vm1128, %v1174, %v1175
  %v1177 = vrot.slane %v499, 2
  %v1178 = vsel %vm1128, %v1175, %v1177
  %v1179 = vrot.slane %v504, 2
  %v1180 = vsel %vm1128, %v1177, %v1179
  %v1181 = vrot.slane %v509, 2
  %v1182 = vsel %vm1128, %v1179, %v1181
  %v1183 = vrot.slane %v514, 2
  %v1184 = vsel %vm1128, %v1181, %v1183
  %v1185 = vrot.slane %v519, 2
  %v1186 = vsel %vm1128, %v1183, %v1185
  %v1187 = vrot.slane %v524, 2
  %v1188 = vsel %vm1128, %v1185, %v1187
  %v1189 = vrot.slane %v529, 2
  %v1190 = vrot.slane %v534, 2
  %v1191 = vsel %vm1128, %v1189, %v1190
  %v1192 = vrot.slane %v539, 2
  %v1193 = vsel %vm1128, %v1190, %v1192
  %v1194 = vrot.slane %v544, 2
  %v1195 = vsel %vm1128, %v1192, %v1194
  %v1196 = vrot.slane %v549, 2
  %v1197 = vsel %vm1128, %v1194, %v1196
  %v1198 = vrot.slane %v554, 2
  %v1199 = vsel %vm1128, %v1196, %v1198
  %v1200 = vrot.slane %v559, 2
  %v1201 = vsel %vm1128, %v1198, %v1200
  %v1202 = vrot.slane %v564, 2
  %v1203 = vsel %vm1128, %v1200, %v1202
  %v1204 = vrot.slane %v569, 2
  %v1205 = vrot.slane %v574, 2
  %v1206 = vsel %vm1128, %v1204, %v1205
  %v1207 = vrot.slane %v579, 2
  %v1208 = vsel %vm1128, %v1205, %v1207
  %v1209 = vrot.slane %v584, 2
  %v1210 = vsel %vm1128, %v1207, %v1209
  %v1211 = vrot.slane %v589, 2
  %v1212 = vsel %vm1128, %v1209, %v1211
  %v1213 = vrot.slane %v594, 2
  %v1214 = vsel %vm1128, %v1211, %v1213
  %v1215 = vrot.slane %v599, 2
  %v1216 = vsel %vm1128, %v1213, %v1215
  %v1217 = vrot.slane %v604, 2
  %v1218 = vsel %vm1128, %v1215, %v1217
  %v1219 = vrot.slane %v609, 2
  %v1220 = vrot.slane %v614, 2
  %v1221 = vsel %vm1128, %v1219, %v1220
  %v1222 = vrot.slane %v619, 2
  %v1223 = vsel %vm1128, %v1220, %v1222
  %v1224 = vrot.slane %v624, 2
  %v1225 = vsel %vm1128, %v1222, %v1224
  %v1226 = vrot.slane %v629, 2
  %v1227 = vsel %vm1128, %v1224, %v1226
  %v1228 = vrot.slane %v634, 2
  %v1229 = vsel %vm1128, %v1226, %v1228
  %v1230 = vrot.slane %v639, 2
  %v1231 = vsel %vm1128, %v1228, %v1230
  %v1232 = vrot.slane %v644, 2
  %v1233 = vsel %vm1128, %v1230, %v1232
  %v1234 = vrot.slane %v649, 2
  %v1235 = vrot.slane %v654, 2
  %v1236 = vsel %vm1128, %v1234, %v1235
  %v1237 = vrot.slane %v659, 2
  %v1238 = vsel %vm1128, %v1235, %v1237
  %v1239 = vrot.slane %v664, 2
  %v1240 = vsel %vm1128, %v1237, %v1239
  %v1241 = vrot.slane %v669, 2
  %v1242 = vsel %vm1128, %v1239, %v1241
  %v1243 = vrot.slane %v674, 2
  %v1244 = vsel %vm1128, %v1241, %v1243
  %v1245 = vrot.slane %v679, 2
  %v1246 = vsel %vm1128, %v1243, %v1245
  %v1247 = vrot.slane %v684, 2
  %v1248 = vsel %vm1128, %v1245, %v1247
  %1249 = vrot.lane.b32.xlu0 %v1131, 96
  %v1250 = vpop.permute.xlu0 %1249
  %1251 = vrot.lane.b32.xlu0 %v1133, 96
  %v1252 = vpop.permute.xlu0 %1251
  %1253 = vrot.lane.b32.xlu0 %v1135, 96
  %v1254 = vpop.permute.xlu0 %1253
  %1255 = vrot.lane.b32.xlu0 %v1137, 96
  %v1256 = vpop.permute.xlu0 %1255
  %1257 = vrot.lane.b32.xlu0 %v1139, 96
  %v1258 = vpop.permute.xlu0 %1257
  %1259 = vrot.lane.b32.xlu0 %v1141, 96
  %v1260 = vpop.permute.xlu0 %1259
  %1261 = vrot.lane.b32.xlu0 %v1143, 96
  %v1262 = vpop.permute.xlu0 %1261
  %1263 = vrot.lane.b32.xlu0 %v1142, 96
  %v1264 = vpop.permute.xlu0 %1263
  %1265 = vrot.lane.b32.xlu0 %v1146, 96
  %v1266 = vpop.permute.xlu0 %1265
  %1267 = vrot.lane.b32.xlu0 %v1148, 96
  %v1268 = vpop.permute.xlu0 %1267
  %1269 = vrot.lane.b32.xlu0 %v1150, 96
  %v1270 = vpop.permute.xlu0 %1269
  %1271 = vrot.lane.b32.xlu0 %v1152, 96
  %v1272 = vpop.permute.xlu0 %1271
  %1273 = vrot.lane.b32.xlu0 %v1154, 96
  %v1274 = vpop.permute.xlu0 %1273
  %1275 = vrot.lane.b32.xlu0 %v1156, 96
  %v1276 = vpop.permute.xlu0 %1275
  %1277 = vrot.lane.b32.xlu0 %v1158, 96
  %v1278 = vpop.permute.xlu0 %1277
  %1279 = vrot.lane.b32.xlu0 %v1157, 96
  %v1280 = vpop.permute.xlu0 %1279
  %1281 = vrot.lane.b32.xlu0 %v1161, 96
  %v1282 = vpop.permute.xlu0 %1281
  %1283 = vrot.lane.b32.xlu0 %v1163, 96
  %v1284 = vpop.permute.xlu0 %1283
  %1285 = vrot.lane.b32.xlu0 %v1165, 96
  %v1286 = vpop.permute.xlu0 %1285
  %1287 = vrot.lane.b32.xlu0 %v1167, 96
  %v1288 = vpop.permute.xlu0 %1287
  %1289 = vrot.lane.b32.xlu0 %v1169, 96
  %v1290 = vpop.permute.xlu0 %1289
  %1291 = vrot.lane.b32.xlu0 %v1171, 96
  %v1292 = vpop.permute.xlu0 %1291
  %1293 = vrot.lane.b32.xlu0 %v1173, 96
  %v1294 = vpop.permute.xlu0 %1293
  %1295 = vrot.lane.b32.xlu0 %v1172, 96
  %v1296 = vpop.permute.xlu0 %1295
  %1297 = vrot.lane.b32.xlu0 %v1176, 96
  %v1298 = vpop.permute.xlu0 %1297
  %1299 = vrot.lane.b32.xlu0 %v1178, 96
  %v1300 = vpop.permute.xlu0 %1299
  %1301 = vrot.lane.b32.xlu0 %v1180, 96
  %v1302 = vpop.permute.xlu0 %1301
  %1303 = vrot.lane.b32.xlu0 %v1182, 96
  %v1304 = vpop.permute.xlu0 %1303
  %1305 = vrot.lane.b32.xlu0 %v1184, 96
  %v1306 = vpop.permute.xlu0 %1305
  %1307 = vrot.lane.b32.xlu0 %v1186, 96
  %v1308 = vpop.permute.xlu0 %1307
  %1309 = vrot.lane.b32.xlu0 %v1188, 96
  %v1310 = vpop.permute.xlu0 %1309
  %1311 = vrot.lane.b32.xlu0 %v1187, 96
  %v1312 = vpop.permute.xlu0 %1311
  %1313 = vrot.lane.b32.xlu0 %v1191, 96
  %v1314 = vpop.permute.xlu0 %1313
  %1315 = vrot.lane.b32.xlu0 %v1193, 96
  %v1316 = vpop.permute.xlu0 %1315
  %1317 = vrot.lane.b32.xlu0 %v1195, 96
  %v1318 = vpop.permute.xlu0 %1317
  %1319 = vrot.lane.b32.xlu0 %v1197, 96
  %v1320 = vpop.permute.xlu0 %1319
  %1321 = vrot.lane.b32.xlu0 %v1199, 96
  %v1322 = vpop.permute.xlu0 %1321
  %1323 = vrot.lane.b32.xlu0 %v1201, 96
  %v1324 = vpop.permute.xlu0 %1323
  %1325 = vrot.lane.b32.xlu0 %v1203, 96
  %v1326 = vpop.permute.xlu0 %1325
  %1327 = vrot.lane.b32.xlu0 %v1202, 96
  %v1328 = vpop.permute.xlu0 %1327
  %1329 = vrot.lane.b32.xlu0 %v1206, 96
  %v1330 = vpop.permute.xlu0 %1329
  %1331 = vrot.lane.b32.xlu0 %v1208, 96
  %v1332 = vpop.permute.xlu0 %1331
  %1333 = vrot.lane.b32.xlu0 %v1210, 96
  %v1334 = vpop.permute.xlu0 %1333
  %1335 = vrot.lane.b32.xlu0 %v1212, 96
  %v1336 = vpop.permute.xlu0 %1335
  %1337 = vrot.lane.b32.xlu0 %v1214, 96
  %v1338 = vpop.permute.xlu0 %1337
  %1339 = vrot.lane.b32.xlu0 %v1216, 96
  %v1340 = vpop.permute.xlu0 %1339
  %1341 = vrot.lane.b32.xlu0 %v1218, 96
  %v1342 = vpop.permute.xlu0 %1341
  %1343 = vrot.lane.b32.xlu0 %v1217, 96
  %v1344 = vpop.permute.xlu0 %1343
  %1345 = vrot.lane.b32.xlu0 %v1221, 96
  %v1346 = vpop.permute.xlu0 %1345
  %1347 = vrot.lane.b32.xlu0 %v1223, 96
  %v1348 = vpop.permute.xlu0 %1347
  %1349 = vrot.lane.b32.xlu0 %v1225, 96
  %v1350 = vpop.permute.xlu0 %1349
  %1351 = vrot.lane.b32.xlu0 %v1227, 96
  %v1352 = vpop.permute.xlu0 %1351
  %1353 = vrot.lane.b32.xlu0 %v1229, 96
  %v1354 = vpop.permute.xlu0 %1353
  %1355 = vrot.lane.b32.xlu0 %v1231, 96
  %v1356 = vpop.permute.xlu0 %1355
  %1357 = vrot.lane.b32.xlu0 %v1233, 96
  %v1358 = vpop.permute.xlu0 %1357
  %1359 = vrot.lane.b32.xlu0 %v1232, 96
  %v1360 = vpop.permute.xlu0 %1359
  %1361 = vrot.lane.b32.xlu0 %v1236, 96
  %v1362 = vpop.permute.xlu0 %1361
  %1363 = vrot.lane.b32.xlu0 %v1238, 96
  %v1364 = vpop.permute.xlu0 %1363
  %1365 = vrot.lane.b32.xlu0 %v1240, 96
  %v1366 = vpop.permute.xlu0 %1365
  %1367 = vrot.lane.b32.xlu0 %v1242, 96
  %v1368 = vpop.permute.xlu0 %1367
  %1369 = vrot.lane.b32.xlu0 %v1244, 96
  %v1370 = vpop.permute.xlu0 %1369
  %1371 = vrot.lane.b32.xlu0 %v1246, 96
  %v1372 = vpop.permute.xlu0 %1371
  %1373 = vrot.lane.b32.xlu0 %v1248, 96
  %v1374 = vpop.permute.xlu0 %1373
  %1375 = vrot.lane.b32.xlu0 %v1247, 96
  %v1376 = vpop.permute.xlu0 %1375
  %v1441 = vadd.f32 %v1064, %v1250
  %v1442 = vadd.f32 %v1065, %v1252
  %v1443 = vadd.f32 %v1066, %v1254
  %v1444 = vadd.f32 %v1067, %v1256
  %v1445 = vadd.f32 %v1068, %v1258
  %v1446 = vadd.f32 %v1069, %v1260
  %v1447 = vadd.f32 %v1070, %v1262
  %v1448 = vadd.f32 %v1071, %v1264
  %v1449 = vadd.f32 %v1072, %v1266
  %v1450 = vadd.f32 %v1073, %v1268
  %v1451 = vadd.f32 %v1074, %v1270
  %v1452 = vadd.f32 %v1075, %v1272
  %v1453 = vadd.f32 %v1076, %v1274
  %v1454 = vadd.f32 %v1077, %v1276
  %v1455 = vadd.f32 %v1078, %v1278
  %v1456 = vadd.f32 %v1079, %v1280
  %v1457 = vadd.f32 %v1080, %v1282
  %v1458 = vadd.f32 %v1081, %v1284
  %v1459 = vadd.f32 %v1082, %v1286
  %v1460 = vadd.f32 %v1083, %v1288
  %v1461 = vadd.f32 %v1084, %v1290
  %v1462 = vadd.f32 %v1085, %v1292
  %v1463 = vadd.f32 %v1086, %v1294
  %v1464 = vadd.f32 %v1087, %v1296
  %v1465 = vadd.f32 %v1088, %v1298
  %v1466 = vadd.f32 %v1089, %v1300
  %v1467 = vadd.f32 %v1090, %v1302
  %v1468 = vadd.f32 %v1091, %v1304
  %v1469 = vadd.f32 %v1092, %v1306
  %v1470 = vadd.f32 %v1093, %v1308
  %v1471 = vadd.f32 %v1094, %v1310
  %v1472 = vadd.f32 %v1095, %v1312
  %v1473 = vadd.f32 %v1096, %v1314
  %v1474 = vadd.f32 %v1097, %v1316
  %v1475 = vadd.f32 %v1098, %v1318
  %v1476 = vadd.f32 %v1099, %v1320
  %v1477 = vadd.f32 %v1100, %v1322
  %v1478 = vadd.f32 %v1101, %v1324
  %v1479 = vadd.f32 %v1102, %v1326
  %v1480 = vadd.f32 %v1103, %v1328
  %v1481 = vadd.f32 %v1104, %v1330
  %v1482 = vadd.f32 %v1105, %v1332
  %v1483 = vadd.f32 %v1106, %v1334
  %v1484 = vadd.f32 %v1107, %v1336
  %v1485 = vadd.f32 %v1108, %v1338
  %v1486 = vadd.f32 %v1109, %v1340
  %v1487 = vadd.f32 %v1110, %v1342
  %v1488 = vadd.f32 %v1111, %v1344
  %v1489 = vadd.f32 %v1112, %v1346
  %v1490 = vadd.f32 %v1113, %v1348
  %v1491 = vadd.f32 %v1114, %v1350
  %v1492 = vadd.f32 %v1115, %v1352
  %v1493 = vadd.f32 %v1116, %v1354
  %v1494 = vadd.f32 %v1117, %v1356
  %v1495 = vadd.f32 %v1118, %v1358
  %v1496 = vadd.f32 %v1119, %v1360
  %v1497 = vadd.f32 %v1120, %v1362
  %v1498 = vadd.f32 %v1121, %v1364
  %v1499 = vadd.f32 %v1122, %v1366
  %v1500 = vadd.f32 %v1123, %v1368
  %v1501 = vadd.f32 %v1124, %v1370
  %v1502 = vadd.f32 %v1125, %v1372
  %v1503 = vadd.f32 %v1126, %v1374
  %v1504 = vadd.f32 %v1127, %v1376
  %vm1505 = vcmask 1044480
  %v1506 = vrot.slane %v369, 3
  %v1507 = vrot.slane %v374, 3
  %v1508 = vsel %vm1505, %v1506, %v1507
  %v1509 = vrot.slane %v379, 3
  %v1510 = vsel %vm1505, %v1507, %v1509
  %v1511 = vrot.slane %v384, 3
  %v1512 = vsel %vm1505, %v1509, %v1511
  %v1513 = vrot.slane %v389, 3
  %v1514 = vsel %vm1505, %v1511, %v1513
  %v1515 = vrot.slane %v394, 3
  %v1516 = vsel %vm1505, %v1513, %v1515
  %v1517 = vrot.slane %v399, 3
  %v1518 = vsel %vm1505, %v1515, %v1517
  %v1519 = vrot.slane %v404, 3
  %v1520 = vsel %vm1505, %v1517, %v1519
  %v1521 = vrot.slane %v409, 3
  %v1522 = vrot.slane %v414, 3
  %v1523 = vsel %vm1505, %v1521, %v1522
  %v1524 = vrot.slane %v419, 3
  %v1525 = vsel %vm1505, %v1522, %v1524
  %v1526 = vrot.slane %v424, 3
  %v1527 = vsel %vm1505, %v1524, %v1526
  %v1528 = vrot.slane %v429, 3
  %v1529 = vsel %vm1505, %v1526, %v1528
  %v1530 = vrot.slane %v434, 3
  %v1531 = vsel %vm1505, %v1528, %v1530
  %v1532 = vrot.slane %v439, 3
  %v1533 = vsel %vm1505, %v1530, %v1532
  %v1534 = vrot.slane %v444, 3
  %v1535 = vsel %vm1505, %v1532, %v1534
  %v1536 = vrot.slane %v449, 3
  %v1537 = vrot.slane %v454, 3
  %v1538 = vsel %vm1505, %v1536, %v1537
  %v1539 = vrot.slane %v459, 3
  %v1540 = vsel %vm1505, %v1537, %v1539
  %v1541 = vrot.slane %v464, 3
  %v1542 = vsel %vm1505, %v1539, %v1541
  %v1543 = vrot.slane %v469, 3
  %v1544 = vsel %vm1505, %v1541, %v1543
  %v1545 = vrot.slane %v474, 3
  %v1546 = vsel %vm1505, %v1543, %v1545
  %v1547 = vrot.slane %v479, 3
  %v1548 = vsel %vm1505, %v1545, %v1547
  %v1549 = vrot.slane %v484, 3
  %v1550 = vsel %vm1505, %v1547, %v1549
  %v1551 = vrot.slane %v489, 3
  %v1552 = vrot.slane %v494, 3
  %v1553 = vsel %vm1505, %v1551, %v1552
  %v1554 = vrot.slane %v499, 3
  %v1555 = vsel %vm1505, %v1552, %v1554
  %v1556 = vrot.slane %v504, 3
  %v1557 = vsel %vm1505, %v1554, %v1556
  %v1558 = vrot.slane %v509, 3
  %v1559 = vsel %vm1505, %v1556, %v1558
  %v1560 = vrot.slane %v514, 3
  %v1561 = vsel %vm1505, %v1558, %v1560
  %v1562 = vrot.slane %v519, 3
  %v1563 = vsel %vm1505, %v1560, %v1562
  %v1564 = vrot.slane %v524, 3
  %v1565 = vsel %vm1505, %v1562, %v1564
  %v1566 = vrot.slane %v529, 3
  %v1567 = vrot.slane %v534, 3
  %v1568 = vsel %vm1505, %v1566, %v1567
  %v1569 = vrot.slane %v539, 3
  %v1570 = vsel %vm1505, %v1567, %v1569
  %v1571 = vrot.slane %v544, 3
  %v1572 = vsel %vm1505, %v1569, %v1571
  %v1573 = vrot.slane %v549, 3
  %v1574 = vsel %vm1505, %v1571, %v1573
  %v1575 = vrot.slane %v554, 3
  %v1576 = vsel %vm1505, %v1573, %v1575
  %v1577 = vrot.slane %v559, 3
  %v1578 = vsel %vm1505, %v1575, %v1577
  %v1579 = vrot.slane %v564, 3
  %v1580 = vsel %vm1505, %v1577, %v1579
  %v1581 = vrot.slane %v569, 3
  %v1582 = vrot.slane %v574, 3
  %v1583 = vsel %vm1505, %v1581, %v1582
  %v1584 = vrot.slane %v579, 3
  %v1585 = vsel %vm1505, %v1582, %v1584
  %v1586 = vrot.slane %v584, 3
  %v1587 = vsel %vm1505, %v1584, %v1586
  %v1588 = vrot.slane %v589, 3
  %v1589 = vsel %vm1505, %v1586, %v1588
  %v1590 = vrot.slane %v594, 3
  %v1591 = vsel %vm1505, %v1588, %v1590
  %v1592 = vrot.slane %v599, 3
  %v1593 = vsel %vm1505, %v1590, %v1592
  %v1594 = vrot.slane %v604, 3
  %v1595 = vsel %vm1505, %v1592, %v1594
  %v1596 = vrot.slane %v609, 3
  %v1597 = vrot.slane %v614, 3
  %v1598 = vsel %vm1505, %v1596, %v1597
  %v1599 = vrot.slane %v619, 3
  %v1600 = vsel %vm1505, %v1597, %v1599
  %v1601 = vrot.slane %v624, 3
  %v1602 = vsel %vm1505, %v1599, %v1601
  %v1603 = vrot.slane %v629, 3
  %v1604 = vsel %vm1505, %v1601, %v1603
  %v1605 = vrot.slane %v634, 3
  %v1606 = vsel %vm1505, %v1603, %v1605
  %v1607 = vrot.slane %v639, 3
  %v1608 = vsel %vm1505, %v1605, %v1607
  %v1609 = vrot.slane %v644, 3
  %v1610 = vsel %vm1505, %v1607, %v1609
  %v1611 = vrot.slane %v649, 3
  %v1612 = vrot.slane %v654, 3
  %v1613 = vsel %vm1505, %v1611, %v1612
  %v1614 = vrot.slane %v659, 3
  %v1615 = vsel %vm1505, %v1612, %v1614
  %v1616 = vrot.slane %v664, 3
  %v1617 = vsel %vm1505, %v1614, %v1616
  %v1618 = vrot.slane %v669, 3
  %v1619 = vsel %vm1505, %v1616, %v1618
  %v1620 = vrot.slane %v674, 3
  %v1621 = vsel %vm1505, %v1618, %v1620
  %v1622 = vrot.slane %v679, 3
  %v1623 = vsel %vm1505, %v1620, %v1622
  %v1624 = vrot.slane %v684, 3
  %v1625 = vsel %vm1505, %v1622, %v1624
  %1626 = vrot.lane.b32.xlu0 %v1508, 80
  %v1627 = vpop.permute.xlu0 %1626
  %1628 = vrot.lane.b32.xlu0 %v1510, 80
  %v1629 = vpop.permute.xlu0 %1628
  %1630 = vrot.lane.b32.xlu0 %v1512, 80
  %v1631 = vpop.permute.xlu0 %1630
  %1632 = vrot.lane.b32.xlu0 %v1514, 80
  %v1633 = vpop.permute.xlu0 %1632
  %1634 = vrot.lane.b32.xlu0 %v1516, 80
  %v1635 = vpop.permute.xlu0 %1634
  %1636 = vrot.lane.b32.xlu0 %v1518, 80
  %v1637 = vpop.permute.xlu0 %1636
  %1638 = vrot.lane.b32.xlu0 %v1520, 80
  %v1639 = vpop.permute.xlu0 %1638
  %1640 = vrot.lane.b32.xlu0 %v1519, 80
  %v1641 = vpop.permute.xlu0 %1640
  %1642 = vrot.lane.b32.xlu0 %v1523, 80
  %v1643 = vpop.permute.xlu0 %1642
  %1644 = vrot.lane.b32.xlu0 %v1525, 80
  %v1645 = vpop.permute.xlu0 %1644
  %1646 = vrot.lane.b32.xlu0 %v1527, 80
  %v1647 = vpop.permute.xlu0 %1646
  %1648 = vrot.lane.b32.xlu0 %v1529, 80
  %v1649 = vpop.permute.xlu0 %1648
  %1650 = vrot.lane.b32.xlu0 %v1531, 80
  %v1651 = vpop.permute.xlu0 %1650
  %1652 = vrot.lane.b32.xlu0 %v1533, 80
  %v1653 = vpop.permute.xlu0 %1652
  %1654 = vrot.lane.b32.xlu0 %v1535, 80
  %v1655 = vpop.permute.xlu0 %1654
  %1656 = vrot.lane.b32.xlu0 %v1534, 80
  %v1657 = vpop.permute.xlu0 %1656
  %1658 = vrot.lane.b32.xlu0 %v1538, 80
  %v1659 = vpop.permute.xlu0 %1658
  %1660 = vrot.lane.b32.xlu0 %v1540, 80
  %v1661 = vpop.permute.xlu0 %1660
  %1662 = vrot.lane.b32.xlu0 %v1542, 80
  %v1663 = vpop.permute.xlu0 %1662
  %1664 = vrot.lane.b32.xlu0 %v1544, 80
  %v1665 = vpop.permute.xlu0 %1664
  %1666 = vrot.lane.b32.xlu0 %v1546, 80
  %v1667 = vpop.permute.xlu0 %1666
  %1668 = vrot.lane.b32.xlu0 %v1548, 80
  %v1669 = vpop.permute.xlu0 %1668
  %1670 = vrot.lane.b32.xlu0 %v1550, 80
  %v1671 = vpop.permute.xlu0 %1670
  %1672 = vrot.lane.b32.xlu0 %v1549, 80
  %v1673 = vpop.permute.xlu0 %1672
  %1674 = vrot.lane.b32.xlu0 %v1553, 80
  %v1675 = vpop.permute.xlu0 %1674
  %1676 = vrot.lane.b32.xlu0 %v1555, 80
  %v1677 = vpop.permute.xlu0 %1676
  %1678 = vrot.lane.b32.xlu0 %v1557, 80
  %v1679 = vpop.permute.xlu0 %1678
  %1680 = vrot.lane.b32.xlu0 %v1559, 80
  %v1681 = vpop.permute.xlu0 %1680
  %1682 = vrot.lane.b32.xlu0 %v1561, 80
  %v1683 = vpop.permute.xlu0 %1682
  %1684 = vrot.lane.b32.xlu0 %v1563, 80
  %v1685 = vpop.permute.xlu0 %1684
  %1686 = vrot.lane.b32.xlu0 %v1565, 80
  %v1687 = vpop.permute.xlu0 %1686
  %1688 = vrot.lane.b32.xlu0 %v1564, 80
  %v1689 = vpop.permute.xlu0 %1688
  %1690 = vrot.lane.b32.xlu0 %v1568, 80
  %v1691 = vpop.permute.xlu0 %1690
  %1692 = vrot.lane.b32.xlu0 %v1570, 80
  %v1693 = vpop.permute.xlu0 %1692
  %1694 = vrot.lane.b32.xlu0 %v1572, 80
  %v1695 = vpop.permute.xlu0 %1694
  %1696 = vrot.lane.b32.xlu0 %v1574, 80
  %v1697 = vpop.permute.xlu0 %1696
  %1698 = vrot.lane.b32.xlu0 %v1576, 80
  %v1699 = vpop.permute.xlu0 %1698
  %1700 = vrot.lane.b32.xlu0 %v1578, 80
  %v1701 = vpop.permute.xlu0 %1700
  %1702 = vrot.lane.b32.xlu0 %v1580, 80
  %v1703 = vpop.permute.xlu0 %1702
  %1704 = vrot.lane.b32.xlu0 %v1579, 80
  %v1705 = vpop.permute.xlu0 %1704
  %1706 = vrot.lane.b32.xlu0 %v1583, 80
  %v1707 = vpop.permute.xlu0 %1706
  %1708 = vrot.lane.b32.xlu0 %v1585, 80
  %v1709 = vpop.permute.xlu0 %1708
  %1710 = vrot.lane.b32.xlu0 %v1587, 80
  %v1711 = vpop.permute.xlu0 %1710
  %1712 = vrot.lane.b32.xlu0 %v1589, 80
  %v1713 = vpop.permute.xlu0 %1712
  %1714 = vrot.lane.b32.xlu0 %v1591, 80
  %v1715 = vpop.permute.xlu0 %1714
  %1716 = vrot.lane.b32.xlu0 %v1593, 80
  %v1717 = vpop.permute.xlu0 %1716
  %1718 = vrot.lane.b32.xlu0 %v1595, 80
  %v1719 = vpop.permute.xlu0 %1718
  %1720 = vrot.lane.b32.xlu0 %v1594, 80
  %v1721 = vpop.permute.xlu0 %1720
  %1722 = vrot.lane.b32.xlu0 %v1598, 80
  %v1723 = vpop.permute.xlu0 %1722
  %1724 = vrot.lane.b32.xlu0 %v1600, 80
  %v1725 = vpop.permute.xlu0 %1724
  %1726 = vrot.lane.b32.xlu0 %v1602, 80
  %v1727 = vpop.permute.xlu0 %1726
  %1728 = vrot.lane.b32.xlu0 %v1604, 80
  %v1729 = vpop.permute.xlu0 %1728
  %1730 = vrot.lane.b32.xlu0 %v1606, 80
  %v1731 = vpop.permute.xlu0 %1730
  %1732 = vrot.lane.b32.xlu0 %v1608, 80
  %v1733 = vpop.permute.xlu0 %1732
  %1734 = vrot.lane.b32.xlu0 %v1610, 80
  %v1735 = vpop.permute.xlu0 %1734
  %1736 = vrot.lane.b32.xlu0 %v1609, 80
  %v1737 = vpop.permute.xlu0 %1736
  %1738 = vrot.lane.b32.xlu0 %v1613, 80
  %v1739 = vpop.permute.xlu0 %1738
  %1740 = vrot.lane.b32.xlu0 %v1615, 80
  %v1741 = vpop.permute.xlu0 %1740
  %1742 = vrot.lane.b32.xlu0 %v1617, 80
  %v1743 = vpop.permute.xlu0 %1742
  %1744 = vrot.lane.b32.xlu0 %v1619, 80
  %v1745 = vpop.permute.xlu0 %1744
  %1746 = vrot.lane.b32.xlu0 %v1621, 80
  %v1747 = vpop.permute.xlu0 %1746
  %1748 = vrot.lane.b32.xlu0 %v1623, 80
  %v1749 = vpop.permute.xlu0 %1748
  %1750 = vrot.lane.b32.xlu0 %v1625, 80
  %v1751 = vpop.permute.xlu0 %1750
  %1752 = vrot.lane.b32.xlu0 %v1624, 80
  %v1753 = vpop.permute.xlu0 %1752
  %v1818 = vadd.f32 %v1441, %v1627
  %v1819 = vadd.f32 %v1442, %v1629
  %v1820 = vadd.f32 %v1443, %v1631
  %v1821 = vadd.f32 %v1444, %v1633
  %v1822 = vadd.f32 %v1445, %v1635
  %v1823 = vadd.f32 %v1446, %v1637
  %v1824 = vadd.f32 %v1447, %v1639
  %v1825 = vadd.f32 %v1448, %v1641
  %v1826 = vadd.f32 %v1449, %v1643
  %v1827 = vadd.f32 %v1450, %v1645
  %v1828 = vadd.f32 %v1451, %v1647
  %v1829 = vadd.f32 %v1452, %v1649
  %v1830 = vadd.f32 %v1453, %v1651
  %v1831 = vadd.f32 %v1454, %v1653
  %v1832 = vadd.f32 %v1455, %v1655
  %v1833 = vadd.f32 %v1456, %v1657
  %v1834 = vadd.f32 %v1457, %v1659
  %v1835 = vadd.f32 %v1458, %v1661
  %v1836 = vadd.f32 %v1459, %v1663
  %v1837 = vadd.f32 %v1460, %v1665
  %v1838 = vadd.f32 %v1461, %v1667
  %v1839 = vadd.f32 %v1462, %v1669
  %v1840 = vadd.f32 %v1463, %v1671
  %v1841 = vadd.f32 %v1464, %v1673
  %v1842 = vadd.f32 %v1465, %v1675
  %v1843 = vadd.f32 %v1466, %v1677
  %v1844 = vadd.f32 %v1467, %v1679
  %v1845 = vadd.f32 %v1468, %v1681
  %v1846 = vadd.f32 %v1469, %v1683
  %v1847 = vadd.f32 %v1470, %v1685
  %v1848 = vadd.f32 %v1471, %v1687
  %v1849 = vadd.f32 %v1472, %v1689
  %v1850 = vadd.f32 %v1473, %v1691
  %v1851 = vadd.f32 %v1474, %v1693
  %v1852 = vadd.f32 %v1475, %v1695
  %v1853 = vadd.f32 %v1476, %v1697
  %v1854 = vadd.f32 %v1477, %v1699
  %v1855 = vadd.f32 %v1478, %v1701
  %v1856 = vadd.f32 %v1479, %v1703
  %v1857 = vadd.f32 %v1480, %v1705
  %v1858 = vadd.f32 %v1481, %v1707
  %v1859 = vadd.f32 %v1482, %v1709
  %v1860 = vadd.f32 %v1483, %v1711
  %v1861 = vadd.f32 %v1484, %v1713
  %v1862 = vadd.f32 %v1485, %v1715
  %v1863 = vadd.f32 %v1486, %v1717
  %v1864 = vadd.f32 %v1487, %v1719
  %v1865 = vadd.f32 %v1488, %v1721
  %v1866 = vadd.f32 %v1489, %v1723
  %v1867 = vadd.f32 %v1490, %v1725
  %v1868 = vadd.f32 %v1491, %v1727
  %v1869 = vadd.f32 %v1492, %v1729
  %v1870 = vadd.f32 %v1493, %v1731
  %v1871 = vadd.f32 %v1494, %v1733
  %v1872 = vadd.f32 %v1495, %v1735
  %v1873 = vadd.f32 %v1496, %v1737
  %v1874 = vadd.f32 %v1497, %v1739
  %v1875 = vadd.f32 %v1498, %v1741
  %v1876 = vadd.f32 %v1499, %v1743
  %v1877 = vadd.f32 %v1500, %v1745
  %v1878 = vadd.f32 %v1501, %v1747
  %v1879 = vadd.f32 %v1502, %v1749
  %v1880 = vadd.f32 %v1503, %v1751
  %v1881 = vadd.f32 %v1504, %v1753
  %vm1882 = vcmask 1043456
  %v1883 = vrot.slane %v369, 4
  %v1884 = vrot.slane %v374, 4
  %v1885 = vsel %vm1882, %v1883, %v1884
  %v1886 = vrot.slane %v379, 4
  %v1887 = vsel %vm1882, %v1884, %v1886
  %v1888 = vrot.slane %v384, 4
  %v1889 = vsel %vm1882, %v1886, %v1888
  %v1890 = vrot.slane %v389, 4
  %v1891 = vsel %vm1882, %v1888, %v1890
  %v1892 = vrot.slane %v394, 4
  %v1893 = vsel %vm1882, %v1890, %v1892
  %v1894 = vrot.slane %v399, 4
  %v1895 = vsel %vm1882, %v1892, %v1894
  %v1896 = vrot.slane %v404, 4
  %v1897 = vsel %vm1882, %v1894, %v1896
  %v1898 = vrot.slane %v409, 4
  %v1899 = vrot.slane %v414, 4
  %v1900 = vsel %vm1882, %v1898, %v1899
  %v1901 = vrot.slane %v419, 4
  %v1902 = vsel %vm1882, %v1899, %v1901
  %v1903 = vrot.slane %v424, 4
  %v1904 = vsel %vm1882, %v1901, %v1903
  %v1905 = vrot.slane %v429, 4
  %v1906 = vsel %vm1882, %v1903, %v1905
  %v1907 = vrot.slane %v434, 4
  %v1908 = vsel %vm1882, %v1905, %v1907
  %v1909 = vrot.slane %v439, 4
  %v1910 = vsel %vm1882, %v1907, %v1909
  %v1911 = vrot.slane %v444, 4
  %v1912 = vsel %vm1882, %v1909, %v1911
  %v1913 = vrot.slane %v449, 4
  %v1914 = vrot.slane %v454, 4
  %v1915 = vsel %vm1882, %v1913, %v1914
  %v1916 = vrot.slane %v459, 4
  %v1917 = vsel %vm1882, %v1914, %v1916
  %v1918 = vrot.slane %v464, 4
  %v1919 = vsel %vm1882, %v1916, %v1918
  %v1920 = vrot.slane %v469, 4
  %v1921 = vsel %vm1882, %v1918, %v1920
  %v1922 = vrot.slane %v474, 4
  %v1923 = vsel %vm1882, %v1920, %v1922
  %v1924 = vrot.slane %v479, 4
  %v1925 = vsel %vm1882, %v1922, %v1924
  %v1926 = vrot.slane %v484, 4
  %v1927 = vsel %vm1882, %v1924, %v1926
  %v1928 = vrot.slane %v489, 4
  %v1929 = vrot.slane %v494, 4
  %v1930 = vsel %vm1882, %v1928, %v1929
  %v1931 = vrot.slane %v499, 4
  %v1932 = vsel %vm1882, %v1929, %v1931
  %v1933 = vrot.slane %v504, 4
  %v1934 = vsel %vm1882, %v1931, %v1933
  %v1935 = vrot.slane %v509, 4
  %v1936 = vsel %vm1882, %v1933, %v1935
  %v1937 = vrot.slane %v514, 4
  %v1938 = vsel %vm1882, %v1935, %v1937
  %v1939 = vrot.slane %v519, 4
  %v1940 = vsel %vm1882, %v1937, %v1939
  %v1941 = vrot.slane %v524, 4
  %v1942 = vsel %vm1882, %v1939, %v1941
  %v1943 = vrot.slane %v529, 4
  %v1944 = vrot.slane %v534, 4
  %v1945 = vsel %vm1882, %v1943, %v1944
  %v1946 = vrot.slane %v539, 4
  %v1947 = vsel %vm1882, %v1944, %v1946
  %v1948 = vrot.slane %v544, 4
  %v1949 = vsel %vm1882, %v1946, %v1948
  %v1950 = vrot.slane %v549, 4
  %v1951 = vsel %vm1882, %v1948, %v1950
  %v1952 = vrot.slane %v554, 4
  %v1953 = vsel %vm1882, %v1950, %v1952
  %v1954 = vrot.slane %v559, 4
  %v1955 = vsel %vm1882, %v1952, %v1954
  %v1956 = vrot.slane %v564, 4
  %v1957 = vsel %vm1882, %v1954, %v1956
  %v1958 = vrot.slane %v569, 4
  %v1959 = vrot.slane %v574, 4
  %v1960 = vsel %vm1882, %v1958, %v1959
  %v1961 = vrot.slane %v579, 4
  %v1962 = vsel %vm1882, %v1959, %v1961
  %v1963 = vrot.slane %v584, 4
  %v1964 = vsel %vm1882, %v1961, %v1963
  %v1965 = vrot.slane %v589, 4
  %v1966 = vsel %vm1882, %v1963, %v1965
  %v1967 = vrot.slane %v594, 4
  %v1968 = vsel %vm1882, %v1965, %v1967
  %v1969 = vrot.slane %v599, 4
  %v1970 = vsel %vm1882, %v1967, %v1969
  %v1971 = vrot.slane %v604, 4
  %v1972 = vsel %vm1882, %v1969, %v1971
  %v1973 = vrot.slane %v609, 4
  %v1974 = vrot.slane %v614, 4
  %v1975 = vsel %vm1882, %v1973, %v1974
  %v1976 = vrot.slane %v619, 4
  %v1977 = vsel %vm1882, %v1974, %v1976
  %v1978 = vrot.slane %v624, 4
  %v1979 = vsel %vm1882, %v1976, %v1978
  %v1980 = vrot.slane %v629, 4
  %v1981 = vsel %vm1882, %v1978, %v1980
  %v1982 = vrot.slane %v634, 4
  %v1983 = vsel %vm1882, %v1980, %v1982
  %v1984 = vrot.slane %v639, 4
  %v1985 = vsel %vm1882, %v1982, %v1984
  %v1986 = vrot.slane %v644, 4
  %v1987 = vsel %vm1882, %v1984, %v1986
  %v1988 = vrot.slane %v649, 4
  %v1989 = vrot.slane %v654, 4
  %v1990 = vsel %vm1882, %v1988, %v1989
  %v1991 = vrot.slane %v659, 4
  %v1992 = vsel %vm1882, %v1989, %v1991
  %v1993 = vrot.slane %v664, 4
  %v1994 = vsel %vm1882, %v1991, %v1993
  %v1995 = vrot.slane %v669, 4
  %v1996 = vsel %vm1882, %v1993, %v1995
  %v1997 = vrot.slane %v674, 4
  %v1998 = vsel %vm1882, %v1995, %v1997
  %v1999 = vrot.slane %v679, 4
  %v2000 = vsel %vm1882, %v1997, %v1999
  %v2001 = vrot.slane %v684, 4
  %v2002 = vsel %vm1882, %v1999, %v2001
  %2003 = vrot.lane.b32.xlu0 %v1885, 64
  %v2004 = vpop.permute.xlu0 %2003
  %2005 = vrot.lane.b32.xlu0 %v1887, 64
  %v2006 = vpop.permute.xlu0 %2005
  %2007 = vrot.lane.b32.xlu0 %v1889, 64
  %v2008 = vpop.permute.xlu0 %2007
  %2009 = vrot.lane.b32.xlu0 %v1891, 64
  %v2010 = vpop.permute.xlu0 %2009
  %2011 = vrot.lane.b32.xlu0 %v1893, 64
  %v2012 = vpop.permute.xlu0 %2011
  %2013 = vrot.lane.b32.xlu0 %v1895, 64
  %v2014 = vpop.permute.xlu0 %2013
  %2015 = vrot.lane.b32.xlu0 %v1897, 64
  %v2016 = vpop.permute.xlu0 %2015
  %2017 = vrot.lane.b32.xlu0 %v1896, 64
  %v2018 = vpop.permute.xlu0 %2017
  %2019 = vrot.lane.b32.xlu0 %v1900, 64
  %v2020 = vpop.permute.xlu0 %2019
  %2021 = vrot.lane.b32.xlu0 %v1902, 64
  %v2022 = vpop.permute.xlu0 %2021
  %2023 = vrot.lane.b32.xlu0 %v1904, 64
  %v2024 = vpop.permute.xlu0 %2023
  %2025 = vrot.lane.b32.xlu0 %v1906, 64
  %v2026 = vpop.permute.xlu0 %2025
  %2027 = vrot.lane.b32.xlu0 %v1908, 64
  %v2028 = vpop.permute.xlu0 %2027
  %2029 = vrot.lane.b32.xlu0 %v1910, 64
  %v2030 = vpop.permute.xlu0 %2029
  %2031 = vrot.lane.b32.xlu0 %v1912, 64
  %v2032 = vpop.permute.xlu0 %2031
  %2033 = vrot.lane.b32.xlu0 %v1911, 64
  %v2034 = vpop.permute.xlu0 %2033
  %2035 = vrot.lane.b32.xlu0 %v1915, 64
  %v2036 = vpop.permute.xlu0 %2035
  %2037 = vrot.lane.b32.xlu0 %v1917, 64
  %v2038 = vpop.permute.xlu0 %2037
  %2039 = vrot.lane.b32.xlu0 %v1919, 64
  %v2040 = vpop.permute.xlu0 %2039
  %2041 = vrot.lane.b32.xlu0 %v1921, 64
  %v2042 = vpop.permute.xlu0 %2041
  %2043 = vrot.lane.b32.xlu0 %v1923, 64
  %v2044 = vpop.permute.xlu0 %2043
  %2045 = vrot.lane.b32.xlu0 %v1925, 64
  %v2046 = vpop.permute.xlu0 %2045
  %2047 = vrot.lane.b32.xlu0 %v1927, 64
  %v2048 = vpop.permute.xlu0 %2047
  %2049 = vrot.lane.b32.xlu0 %v1926, 64
  %v2050 = vpop.permute.xlu0 %2049
  %2051 = vrot.lane.b32.xlu0 %v1930, 64
  %v2052 = vpop.permute.xlu0 %2051
  %2053 = vrot.lane.b32.xlu0 %v1932, 64
  %v2054 = vpop.permute.xlu0 %2053
  %2055 = vrot.lane.b32.xlu0 %v1934, 64
  %v2056 = vpop.permute.xlu0 %2055
  %2057 = vrot.lane.b32.xlu0 %v1936, 64
  %v2058 = vpop.permute.xlu0 %2057
  %2059 = vrot.lane.b32.xlu0 %v1938, 64
  %v2060 = vpop.permute.xlu0 %2059
  %2061 = vrot.lane.b32.xlu0 %v1940, 64
  %v2062 = vpop.permute.xlu0 %2061
  %2063 = vrot.lane.b32.xlu0 %v1942, 64
  %v2064 = vpop.permute.xlu0 %2063
  %2065 = vrot.lane.b32.xlu0 %v1941, 64
  %v2066 = vpop.permute.xlu0 %2065
  %2067 = vrot.lane.b32.xlu0 %v1945, 64
  %v2068 = vpop.permute.xlu0 %2067
  %2069 = vrot.lane.b32.xlu0 %v1947, 64
  %v2070 = vpop.permute.xlu0 %2069
  %2071 = vrot.lane.b32.xlu0 %v1949, 64
  %v2072 = vpop.permute.xlu0 %2071
  %2073 = vrot.lane.b32.xlu0 %v1951, 64
  %v2074 = vpop.permute.xlu0 %2073
  %2075 = vrot.lane.b32.xlu0 %v1953, 64
  %v2076 = vpop.permute.xlu0 %2075
  %2077 = vrot.lane.b32.xlu0 %v1955, 64
  %v2078 = vpop.permute.xlu0 %2077
  %2079 = vrot.lane.b32.xlu0 %v1957, 64
  %v2080 = vpop.permute.xlu0 %2079
  %2081 = vrot.lane.b32.xlu0 %v1956, 64
  %v2082 = vpop.permute.xlu0 %2081
  %2083 = vrot.lane.b32.xlu0 %v1960, 64
  %v2084 = vpop.permute.xlu0 %2083
  %2085 = vrot.lane.b32.xlu0 %v1962, 64
  %v2086 = vpop.permute.xlu0 %2085
  %2087 = vrot.lane.b32.xlu0 %v1964, 64
  %v2088 = vpop.permute.xlu0 %2087
  %2089 = vrot.lane.b32.xlu0 %v1966, 64
  %v2090 = vpop.permute.xlu0 %2089
  %2091 = vrot.lane.b32.xlu0 %v1968, 64
  %v2092 = vpop.permute.xlu0 %2091
  %2093 = vrot.lane.b32.xlu0 %v1970, 64
  %v2094 = vpop.permute.xlu0 %2093
  %2095 = vrot.lane.b32.xlu0 %v1972, 64
  %v2096 = vpop.permute.xlu0 %2095
  %2097 = vrot.lane.b32.xlu0 %v1971, 64
  %v2098 = vpop.permute.xlu0 %2097
  %2099 = vrot.lane.b32.xlu0 %v1975, 64
  %v2100 = vpop.permute.xlu0 %2099
  %2101 = vrot.lane.b32.xlu0 %v1977, 64
  %v2102 = vpop.permute.xlu0 %2101
  %2103 = vrot.lane.b32.xlu0 %v1979, 64
  %v2104 = vpop.permute.xlu0 %2103
  %2105 = vrot.lane.b32.xlu0 %v1981, 64
  %v2106 = vpop.permute.xlu0 %2105
  %2107 = vrot.lane.b32.xlu0 %v1983, 64
  %v2108 = vpop.permute.xlu0 %2107
  %2109 = vrot.lane.b32.xlu0 %v1985, 64
  %v2110 = vpop.permute.xlu0 %2109
  %2111 = vrot.lane.b32.xlu0 %v1987, 64
  %v2112 = vpop.permute.xlu0 %2111
  %2113 = vrot.lane.b32.xlu0 %v1986, 64
  %v2114 = vpop.permute.xlu0 %2113
  %2115 = vrot.lane.b32.xlu0 %v1990, 64
  %v2116 = vpop.permute.xlu0 %2115
  %2117 = vrot.lane.b32.xlu0 %v1992, 64
  %v2118 = vpop.permute.xlu0 %2117
  %2119 = vrot.lane.b32.xlu0 %v1994, 64
  %v2120 = vpop.permute.xlu0 %2119
  %2121 = vrot.lane.b32.xlu0 %v1996, 64
  %v2122 = vpop.permute.xlu0 %2121
  %2123 = vrot.lane.b32.xlu0 %v1998, 64
  %v2124 = vpop.permute.xlu0 %2123
  %2125 = vrot.lane.b32.xlu0 %v2000, 64
  %v2126 = vpop.permute.xlu0 %2125
  %2127 = vrot.lane.b32.xlu0 %v2002, 64
  %v2128 = vpop.permute.xlu0 %2127
  %2129 = vrot.lane.b32.xlu0 %v2001, 64
  %v2130 = vpop.permute.xlu0 %2129
  %v2195 = vadd.f32 %v1818, %v2004
  %v2196 = vadd.f32 %v1819, %v2006
  %v2197 = vadd.f32 %v1820, %v2008
  %v2198 = vadd.f32 %v1821, %v2010
  %v2199 = vadd.f32 %v1822, %v2012
  %v2200 = vadd.f32 %v1823, %v2014
  %v2201 = vadd.f32 %v1824, %v2016
  %v2202 = vadd.f32 %v1825, %v2018
  %v2203 = vadd.f32 %v1826, %v2020
  %v2204 = vadd.f32 %v1827, %v2022
  %v2205 = vadd.f32 %v1828, %v2024
  %v2206 = vadd.f32 %v1829, %v2026
  %v2207 = vadd.f32 %v1830, %v2028
  %v2208 = vadd.f32 %v1831, %v2030
  %v2209 = vadd.f32 %v1832, %v2032
  %v2210 = vadd.f32 %v1833, %v2034
  %v2211 = vadd.f32 %v1834, %v2036
  %v2212 = vadd.f32 %v1835, %v2038
  %v2213 = vadd.f32 %v1836, %v2040
  %v2214 = vadd.f32 %v1837, %v2042
  %v2215 = vadd.f32 %v1838, %v2044
  %v2216 = vadd.f32 %v1839, %v2046
  %v2217 = vadd.f32 %v1840, %v2048
  %v2218 = vadd.f32 %v1841, %v2050
  %v2219 = vadd.f32 %v1842, %v2052
  %v2220 = vadd.f32 %v1843, %v2054
  %v2221 = vadd.f32 %v1844, %v2056
  %v2222 = vadd.f32 %v1845, %v2058
  %v2223 = vadd.f32 %v1846, %v2060
  %v2224 = vadd.f32 %v1847, %v2062
  %v2225 = vadd.f32 %v1848, %v2064
  %v2226 = vadd.f32 %v1849, %v2066
  %v2227 = vadd.f32 %v1850, %v2068
  %v2228 = vadd.f32 %v1851, %v2070
  %v2229 = vadd.f32 %v1852, %v2072
  %v2230 = vadd.f32 %v1853, %v2074
  %v2231 = vadd.f32 %v1854, %v2076
  %v2232 = vadd.f32 %v1855, %v2078
  %v2233 = vadd.f32 %v1856, %v2080
  %v2234 = vadd.f32 %v1857, %v2082
  %v2235 = vadd.f32 %v1858, %v2084
  %v2236 = vadd.f32 %v1859, %v2086
  %v2237 = vadd.f32 %v1860, %v2088
  %v2238 = vadd.f32 %v1861, %v2090
  %v2239 = vadd.f32 %v1862, %v2092
  %v2240 = vadd.f32 %v1863, %v2094
  %v2241 = vadd.f32 %v1864, %v2096
  %v2242 = vadd.f32 %v1865, %v2098
  %v2243 = vadd.f32 %v1866, %v2100
  %v2244 = vadd.f32 %v1867, %v2102
  %v2245 = vadd.f32 %v1868, %v2104
  %v2246 = vadd.f32 %v1869, %v2106
  %v2247 = vadd.f32 %v1870, %v2108
  %v2248 = vadd.f32 %v1871, %v2110
  %v2249 = vadd.f32 %v1872, %v2112
  %v2250 = vadd.f32 %v1873, %v2114
  %v2251 = vadd.f32 %v1874, %v2116
  %v2252 = vadd.f32 %v1875, %v2118
  %v2253 = vadd.f32 %v1876, %v2120
  %v2254 = vadd.f32 %v1877, %v2122
  %v2255 = vadd.f32 %v1878, %v2124
  %v2256 = vadd.f32 %v1879, %v2126
  %v2257 = vadd.f32 %v1880, %v2128
  %v2258 = vadd.f32 %v1881, %v2130
  %v2259 = vld [vmem:[%s2] sm:$0x1]
  %v2261 = vlaneseq
  %v2262 = vshrl.u32 %v2261, 7
  %v2263 = vsub.s32 0, %v2262
  %v2264 = vrot.slane %v2259, %v2263
  %v2266 = vadd.f32 %v2195, %v2264
  %v2267 = vadd.f32 %v2196, %v2264
  %v2268 = vadd.f32 %v2197, %v2264
  %v2269 = vadd.f32 %v2198, %v2264
  %v2270 = vadd.f32 %v2199, %v2264
  %v2271 = vadd.f32 %v2200, %v2264
  %v2272 = vadd.f32 %v2201, %v2264
  %v2273 = vadd.f32 %v2202, %v2264
  %v2274 = vadd.f32 %v2203, %v2264
  %v2275 = vadd.f32 %v2204, %v2264
  %v2276 = vadd.f32 %v2205, %v2264
  %v2277 = vadd.f32 %v2206, %v2264
  %v2278 = vadd.f32 %v2207, %v2264
  %v2279 = vadd.f32 %v2208, %v2264
  %v2280 = vadd.f32 %v2209, %v2264
  %v2281 = vadd.f32 %v2210, %v2264
  %v2282 = vadd.f32 %v2211, %v2264
  %v2283 = vadd.f32 %v2212, %v2264
  %v2284 = vadd.f32 %v2213, %v2264
  %v2285 = vadd.f32 %v2214, %v2264
  %v2286 = vadd.f32 %v2215, %v2264
  %v2287 = vadd.f32 %v2216, %v2264
  %v2288 = vadd.f32 %v2217, %v2264
  %v2289 = vadd.f32 %v2218, %v2264
  %v2290 = vadd.f32 %v2219, %v2264
  %v2291 = vadd.f32 %v2220, %v2264
  %v2292 = vadd.f32 %v2221, %v2264
  %v2293 = vadd.f32 %v2222, %v2264
  %v2294 = vadd.f32 %v2223, %v2264
  %v2295 = vadd.f32 %v2224, %v2264
  %v2296 = vadd.f32 %v2225, %v2264
  %v2297 = vadd.f32 %v2226, %v2264
  %v2298 = vadd.f32 %v2227, %v2264
  %v2299 = vadd.f32 %v2228, %v2264
  %v2300 = vadd.f32 %v2229, %v2264
  %v2301 = vadd.f32 %v2230, %v2264
  %v2302 = vadd.f32 %v2231, %v2264
  %v2303 = vadd.f32 %v2232, %v2264
  %v2304 = vadd.f32 %v2233, %v2264
  %v2305 = vadd.f32 %v2234, %v2264
  %v2306 = vadd.f32 %v2235, %v2264
  %v2307 = vadd.f32 %v2236, %v2264
  %v2308 = vadd.f32 %v2237, %v2264
  %v2309 = vadd.f32 %v2238, %v2264
  %v2310 = vadd.f32 %v2239, %v2264
  %v2311 = vadd.f32 %v2240, %v2264
  %v2312 = vadd.f32 %v2241, %v2264
  %v2313 = vadd.f32 %v2242, %v2264
  %v2314 = vadd.f32 %v2243, %v2264
  %v2315 = vadd.f32 %v2244, %v2264
  %v2316 = vadd.f32 %v2245, %v2264
  %v2317 = vadd.f32 %v2246, %v2264
  %v2318 = vadd.f32 %v2247, %v2264
  %v2319 = vadd.f32 %v2248, %v2264
  %v2320 = vadd.f32 %v2249, %v2264
  %v2321 = vadd.f32 %v2250, %v2264
  %v2322 = vadd.f32 %v2251, %v2264
  %v2323 = vadd.f32 %v2252, %v2264
  %v2324 = vadd.f32 %v2253, %v2264
  %v2325 = vadd.f32 %v2254, %v2264
  %v2326 = vadd.f32 %v2255, %v2264
  %v2327 = vadd.f32 %v2256, %v2264
  %v2328 = vadd.f32 %v2257, %v2264
  %v2329 = vadd.f32 %v2258, %v2264
  %v2330 = vmax.f32 %v2266, 0.0
  %v2331 = vmax.f32 %v2267, 0.0
  %v2332 = vmax.f32 %v2268, 0.0
  %v2333 = vmax.f32 %v2269, 0.0
  %v2334 = vmax.f32 %v2270, 0.0
  %v2335 = vmax.f32 %v2271, 0.0
  %v2336 = vmax.f32 %v2272, 0.0
  %v2337 = vmax.f32 %v2273, 0.0
  %v2338 = vmax.f32 %v2274, 0.0
  %v2339 = vmax.f32 %v2275, 0.0
  %v2340 = vmax.f32 %v2276, 0.0
  %v2341 = vmax.f32 %v2277, 0.0
  %v2342 = vmax.f32 %v2278, 0.0
  %v2343 = vmax.f32 %v2279, 0.0
  %v2344 = vmax.f32 %v2280, 0.0
  %v2345 = vmax.f32 %v2281, 0.0
  %v2346 = vmax.f32 %v2282, 0.0
  %v2347 = vmax.f32 %v2283, 0.0
  %v2348 = vmax.f32 %v2284, 0.0
  %v2349 = vmax.f32 %v2285, 0.0
  %v2350 = vmax.f32 %v2286, 0.0
  %v2351 = vmax.f32 %v2287, 0.0
  %v2352 = vmax.f32 %v2288, 0.0
  %v2353 = vmax.f32 %v2289, 0.0
  %v2354 = vmax.f32 %v2290, 0.0
  %v2355 = vmax.f32 %v2291, 0.0
  %v2356 = vmax.f32 %v2292, 0.0
  %v2357 = vmax.f32 %v2293, 0.0
  %v2358 = vmax.f32 %v2294, 0.0
  %v2359 = vmax.f32 %v2295, 0.0
  %v2360 = vmax.f32 %v2296, 0.0
  %v2361 = vmax.f32 %v2297, 0.0
  %v2362 = vmax.f32 %v2298, 0.0
  %v2363 = vmax.f32 %v2299, 0.0
  %v2364 = vmax.f32 %v2300, 0.0
  %v2365 = vmax.f32 %v2301, 0.0
  %v2366 = vmax.f32 %v2302, 0.0
  %v2367 = vmax.f32 %v2303, 0.0
  %v2368 = vmax.f32 %v2304, 0.0
  %v2369 = vmax.f32 %v2305, 0.0
  %v2370 = vmax.f32 %v2306, 0.0
  %v2371 = vmax.f32 %v2307, 0.0
  %v2372 = vmax.f32 %v2308, 0.0
  %v2373 = vmax.f32 %v2309, 0.0
  %v2374 = vmax.f32 %v2310, 0.0
  %v2375 = vmax.f32 %v2311, 0.0
  %v2376 = vmax.f32 %v2312, 0.0
  %v2377 = vmax.f32 %v2313, 0.0
  %v2378 = vmax.f32 %v2314, 0.0
  %v2379 = vmax.f32 %v2315, 0.0
  %v2380 = vmax.f32 %v2316, 0.0
  %v2381 = vmax.f32 %v2317, 0.0
  %v2382 = vmax.f32 %v2318, 0.0
  %v2383 = vmax.f32 %v2319, 0.0
  %v2384 = vmax.f32 %v2320, 0.0
  %v2385 = vmax.f32 %v2321, 0.0
  %v2386 = vmax.f32 %v2322, 0.0
  %v2387 = vmax.f32 %v2323, 0.0
  %v2388 = vmax.f32 %v2324, 0.0
  %v2389 = vmax.f32 %v2325, 0.0
  %v2390 = vmax.f32 %v2326, 0.0
  %v2391 = vmax.f32 %v2327, 0.0
  %v2392 = vmax.f32 %v2328, 0.0
  %v2393 = vmax.f32 %v2329, 0.0
  %v2458 = vcombine.high %v2330, %v2330
  %v2460 = vunpack.c.l.s4 1983009808
  %v2461 = vunpack.c.0.s8 %v2460
  %v2462 = vlaneseq
  %v2463 = vshrl.u32 %v2462, 7
  %v2464 = vsub.s32 %v2461, %v2463
  %v2465 = vrot.slane %v2330, %v2464
  %v2467 = vunpack.c.l.s4 1983009808
  %v2468 = vunpack.c.0.s8 %v2467
  %v2469 = vlaneseq
  %v2470 = vshrl.u32 %v2469, 7
  %v2471 = vsub.s32 %v2468, %v2470
  %v2472 = vrot.slane %v2458, %v2471
  %v2473 = vcombine.high %v2465, %v2465
  %v2474 = vcombine.high %v2472, %v2472
  %v2475 = vcombine.high %v2331, %v2331
  %v2477 = vunpack.c.l.s4 1983009808
  %v2478 = vunpack.c.0.s8 %v2477
  %v2479 = vlaneseq
  %v2480 = vshrl.u32 %v2479, 7
  %v2481 = vsub.s32 %v2478, %v2480
  %v2482 = vrot.slane %v2331, %v2481
  %v2484 = vunpack.c.l.s4 1983009808
  %v2485 = vunpack.c.0.s8 %v2484
  %v2486 = vlaneseq
  %v2487 = vshrl.u32 %v2486, 7
  %v2488 = vsub.s32 %v2485, %v2487
  %v2489 = vrot.slane %v2475, %v2488
  %v2490 = vcombine.high %v2482, %v2482
  %v2491 = vcombine.high %v2489, %v2489
  %v2492 = vcombine.high %v2332, %v2332
  %v2494 = vunpack.c.l.s4 1983009808
  %v2495 = vunpack.c.0.s8 %v2494
  %v2496 = vlaneseq
  %v2497 = vshrl.u32 %v2496, 7
  %v2498 = vsub.s32 %v2495, %v2497
  %v2499 = vrot.slane %v2332, %v2498
  %v2501 = vunpack.c.l.s4 1983009808
  %v2502 = vunpack.c.0.s8 %v2501
  %v2503 = vlaneseq
  %v2504 = vshrl.u32 %v2503, 7
  %v2505 = vsub.s32 %v2502, %v2504
  %v2506 = vrot.slane %v2492, %v2505
  %v2507 = vcombine.high %v2499, %v2499
  %v2508 = vcombine.high %v2506, %v2506
  %v2509 = vcombine.high %v2333, %v2333
  %v2511 = vunpack.c.l.s4 1983009808
  %v2512 = vunpack.c.0.s8 %v2511
  %v2513 = vlaneseq
  %v2514 = vshrl.u32 %v2513, 7
  %v2515 = vsub.s32 %v2512, %v2514
  %v2516 = vrot.slane %v2333, %v2515
  %v2518 = vunpack.c.l.s4 1983009808
  %v2519 = vunpack.c.0.s8 %v2518
  %v2520 = vlaneseq
  %v2521 = vshrl.u32 %v2520, 7
  %v2522 = vsub.s32 %v2519, %v2521
  %v2523 = vrot.slane %v2509, %v2522
  %v2524 = vcombine.high %v2516, %v2516
  %v2525 = vcombine.high %v2523, %v2523
  %v2526 = vcombine.high %v2334, %v2334
  %v2528 = vunpack.c.l.s4 1983009808
  %v2529 = vunpack.c.0.s8 %v2528
  %v2530 = vlaneseq
  %v2531 = vshrl.u32 %v2530, 7
  %v2532 = vsub.s32 %v2529, %v2531
  %v2533 = vrot.slane %v2334, %v2532
  %v2535 = vunpack.c.l.s4 1983009808
  %v2536 = vunpack.c.0.s8 %v2535
  %v2537 = vlaneseq
  %v2538 = vshrl.u32 %v2537, 7
  %v2539 = vsub.s32 %v2536, %v2538
  %v2540 = vrot.slane %v2526, %v2539
  %v2541 = vcombine.high %v2533, %v2533
  %v2542 = vcombine.high %v2540, %v2540
  %v2543 = vcombine.high %v2335, %v2335
  %v2545 = vunpack.c.l.s4 1983009808
  %v2546 = vunpack.c.0.s8 %v2545
  %v2547 = vlaneseq
  %v2548 = vshrl.u32 %v2547, 7
  %v2549 = vsub.s32 %v2546, %v2548
  %v2550 = vrot.slane %v2335, %v2549
  %v2552 = vunpack.c.l.s4 1983009808
  %v2553 = vunpack.c.0.s8 %v2552
  %v2554 = vlaneseq
  %v2555 = vshrl.u32 %v2554, 7
  %v2556 = vsub.s32 %v2553, %v2555
  %v2557 = vrot.slane %v2543, %v2556
  %v2558 = vcombine.high %v2550, %v2550
  %v2559 = vcombine.high %v2557, %v2557
  %v2560 = vcombine.high %v2336, %v2336
  %v2562 = vunpack.c.l.s4 1983009808
  %v2563 = vunpack.c.0.s8 %v2562
  %v2564 = vlaneseq
  %v2565 = vshrl.u32 %v2564, 7
  %v2566 = vsub.s32 %v2563, %v2565
  %v2567 = vrot.slane %v2336, %v2566
  %v2569 = vunpack.c.l.s4 1983009808
  %v2570 = vunpack.c.0.s8 %v2569
  %v2571 = vlaneseq
  %v2572 = vshrl.u32 %v2571, 7
  %v2573 = vsub.s32 %v2570, %v2572
  %v2574 = vrot.slane %v2560, %v2573
  %v2575 = vcombine.high %v2567, %v2567
  %v2576 = vcombine.high %v2574, %v2574
  %v2578 = vunpack.c.l.s4 1983009808
  %v2579 = vunpack.c.0.s8 %v2578
  %v2580 = vlaneseq
  %v2581 = vshrl.u32 %v2580, 7
  %v2582 = vsub.s32 %v2579, %v2581
  %v2583 = vrot.slane %v2337, %v2582
  %v2584 = vcombine.high %v2583, %v2583
  %v2585 = vcombine.high %v2338, %v2338
  %v2587 = vunpack.c.l.s4 1983009808
  %v2588 = vunpack.c.0.s8 %v2587
  %v2589 = vlaneseq
  %v2590 = vshrl.u32 %v2589, 7
  %v2591 = vsub.s32 %v2588, %v2590
  %v2592 = vrot.slane %v2338, %v2591
  %v2594 = vunpack.c.l.s4 1983009808
  %v2595 = vunpack.c.0.s8 %v2594
  %v2596 = vlaneseq
  %v2597 = vshrl.u32 %v2596, 7
  %v2598 = vsub.s32 %v2595, %v2597
  %v2599 = vrot.slane %v2585, %v2598
  %v2600 = vcombine.high %v2592, %v2592
  %v2601 = vcombine.high %v2599, %v2599
  %v2602 = vcombine.high %v2339, %v2339
  %v2604 = vunpack.c.l.s4 1983009808
  %v2605 = vunpack.c.0.s8 %v2604
  %v2606 = vlaneseq
  %v2607 = vshrl.u32 %v2606, 7
  %v2608 = vsub.s32 %v2605, %v2607
  %v2609 = vrot.slane %v2339, %v2608
  %v2611 = vunpack.c.l.s4 1983009808
  %v2612 = vunpack.c.0.s8 %v2611
  %v2613 = vlaneseq
  %v2614 = vshrl.u32 %v2613, 7
  %v2615 = vsub.s32 %v2612, %v2614
  %v2616 = vrot.slane %v2602, %v2615
  %v2617 = vcombine.high %v2609, %v2609
  %v2618 = vcombine.high %v2616, %v2616
  %v2619 = vcombine.high %v2340, %v2340
  %v2621 = vunpack.c.l.s4 1983009808
  %v2622 = vunpack.c.0.s8 %v2621
  %v2623 = vlaneseq
  %v2624 = vshrl.u32 %v2623, 7
  %v2625 = vsub.s32 %v2622, %v2624
  %v2626 = vrot.slane %v2340, %v2625
  %v2628 = vunpack.c.l.s4 1983009808
  %v2629 = vunpack.c.0.s8 %v2628
  %v2630 = vlaneseq
  %v2631 = vshrl.u32 %v2630, 7
  %v2632 = vsub.s32 %v2629, %v2631
  %v2633 = vrot.slane %v2619, %v2632
  %v2634 = vcombine.high %v2626, %v2626
  %v2635 = vcombine.high %v2633, %v2633
  %v2636 = vcombine.high %v2341, %v2341
  %v2638 = vunpack.c.l.s4 1983009808
  %v2639 = vunpack.c.0.s8 %v2638
  %v2640 = vlaneseq
  %v2641 = vshrl.u32 %v2640, 7
  %v2642 = vsub.s32 %v2639, %v2641
  %v2643 = vrot.slane %v2341, %v2642
  %v2645 = vunpack.c.l.s4 1983009808
  %v2646 = vunpack.c.0.s8 %v2645
  %v2647 = vlaneseq
  %v2648 = vshrl.u32 %v2647, 7
  %v2649 = vsub.s32 %v2646, %v2648
  %v2650 = vrot.slane %v2636, %v2649
  %v2651 = vcombine.high %v2643, %v2643
  %v2652 = vcombine.high %v2650, %v2650
  %v2653 = vcombine.high %v2342, %v2342
  %v2655 = vunpack.c.l.s4 1983009808
  %v2656 = vunpack.c.0.s8 %v2655
  %v2657 = vlaneseq
  %v2658 = vshrl.u32 %v2657, 7
  %v2659 = vsub.s32 %v2656, %v2658
  %v2660 = vrot.slane %v2342, %v2659
  %v2662 = vunpack.c.l.s4 1983009808
  %v2663 = vunpack.c.0.s8 %v2662
  %v2664 = vlaneseq
  %v2665 = vshrl.u32 %v2664, 7
  %v2666 = vsub.s32 %v2663, %v2665
  %v2667 = vrot.slane %v2653, %v2666
  %v2668 = vcombine.high %v2660, %v2660
  %v2669 = vcombine.high %v2667, %v2667
  %v2670 = vcombine.high %v2343, %v2343
  %v2672 = vunpack.c.l.s4 1983009808
  %v2673 = vunpack.c.0.s8 %v2672
  %v2674 = vlaneseq
  %v2675 = vshrl.u32 %v2674, 7
  %v2676 = vsub.s32 %v2673, %v2675
  %v2677 = vrot.slane %v2343, %v2676
  %v2679 = vunpack.c.l.s4 1983009808
  %v2680 = vunpack.c.0.s8 %v2679
  %v2681 = vlaneseq
  %v2682 = vshrl.u32 %v2681, 7
  %v2683 = vsub.s32 %v2680, %v2682
  %v2684 = vrot.slane %v2670, %v2683
  %v2685 = vcombine.high %v2677, %v2677
  %v2686 = vcombine.high %v2684, %v2684
  %v2687 = vcombine.high %v2344, %v2344
  %v2689 = vunpack.c.l.s4 1983009808
  %v2690 = vunpack.c.0.s8 %v2689
  %v2691 = vlaneseq
  %v2692 = vshrl.u32 %v2691, 7
  %v2693 = vsub.s32 %v2690, %v2692
  %v2694 = vrot.slane %v2344, %v2693
  %v2696 = vunpack.c.l.s4 1983009808
  %v2697 = vunpack.c.0.s8 %v2696
  %v2698 = vlaneseq
  %v2699 = vshrl.u32 %v2698, 7
  %v2700 = vsub.s32 %v2697, %v2699
  %v2701 = vrot.slane %v2687, %v2700
  %v2702 = vcombine.high %v2694, %v2694
  %v2703 = vcombine.high %v2701, %v2701
  %v2705 = vunpack.c.l.s4 1983009808
  %v2706 = vunpack.c.0.s8 %v2705
  %v2707 = vlaneseq
  %v2708 = vshrl.u32 %v2707, 7
  %v2709 = vsub.s32 %v2706, %v2708
  %v2710 = vrot.slane %v2345, %v2709
  %v2711 = vcombine.high %v2710, %v2710
  %v2712 = vcombine.high %v2346, %v2346
  %v2714 = vunpack.c.l.s4 1983009808
  %v2715 = vunpack.c.0.s8 %v2714
  %v2716 = vlaneseq
  %v2717 = vshrl.u32 %v2716, 7
  %v2718 = vsub.s32 %v2715, %v2717
  %v2719 = vrot.slane %v2346, %v2718
  %v2721 = vunpack.c.l.s4 1983009808
  %v2722 = vunpack.c.0.s8 %v2721
  %v2723 = vlaneseq
  %v2724 = vshrl.u32 %v2723, 7
  %v2725 = vsub.s32 %v2722, %v2724
  %v2726 = vrot.slane %v2712, %v2725
  %v2727 = vcombine.high %v2719, %v2719
  %v2728 = vcombine.high %v2726, %v2726
  %v2729 = vcombine.high %v2347, %v2347
  %v2731 = vunpack.c.l.s4 1983009808
  %v2732 = vunpack.c.0.s8 %v2731
  %v2733 = vlaneseq
  %v2734 = vshrl.u32 %v2733, 7
  %v2735 = vsub.s32 %v2732, %v2734
  %v2736 = vrot.slane %v2347, %v2735
  %v2738 = vunpack.c.l.s4 1983009808
  %v2739 = vunpack.c.0.s8 %v2738
  %v2740 = vlaneseq
  %v2741 = vshrl.u32 %v2740, 7
  %v2742 = vsub.s32 %v2739, %v2741
  %v2743 = vrot.slane %v2729, %v2742
  %v2744 = vcombine.high %v2736, %v2736
  %v2745 = vcombine.high %v2743, %v2743
  %v2746 = vcombine.high %v2348, %v2348
  %v2748 = vunpack.c.l.s4 1983009808
  %v2749 = vunpack.c.0.s8 %v2748
  %v2750 = vlaneseq
  %v2751 = vshrl.u32 %v2750, 7
  %v2752 = vsub.s32 %v2749, %v2751
  %v2753 = vrot.slane %v2348, %v2752
  %v2755 = vunpack.c.l.s4 1983009808
  %v2756 = vunpack.c.0.s8 %v2755
  %v2757 = vlaneseq
  %v2758 = vshrl.u32 %v2757, 7
  %v2759 = vsub.s32 %v2756, %v2758
  %v2760 = vrot.slane %v2746, %v2759
  %v2761 = vcombine.high %v2753, %v2753
  %v2762 = vcombine.high %v2760, %v2760
  %v2763 = vcombine.high %v2349, %v2349
  %v2765 = vunpack.c.l.s4 1983009808
  %v2766 = vunpack.c.0.s8 %v2765
  %v2767 = vlaneseq
  %v2768 = vshrl.u32 %v2767, 7
  %v2769 = vsub.s32 %v2766, %v2768
  %v2770 = vrot.slane %v2349, %v2769
  %v2772 = vunpack.c.l.s4 1983009808
  %v2773 = vunpack.c.0.s8 %v2772
  %v2774 = vlaneseq
  %v2775 = vshrl.u32 %v2774, 7
  %v2776 = vsub.s32 %v2773, %v2775
  %v2777 = vrot.slane %v2763, %v2776
  %v2778 = vcombine.high %v2770, %v2770
  %v2779 = vcombine.high %v2777, %v2777
  %v2780 = vcombine.high %v2350, %v2350
  %v2782 = vunpack.c.l.s4 1983009808
  %v2783 = vunpack.c.0.s8 %v2782
  %v2784 = vlaneseq
  %v2785 = vshrl.u32 %v2784, 7
  %v2786 = vsub.s32 %v2783, %v2785
  %v2787 = vrot.slane %v2350, %v2786
  %v2789 = vunpack.c.l.s4 1983009808
  %v2790 = vunpack.c.0.s8 %v2789
  %v2791 = vlaneseq
  %v2792 = vshrl.u32 %v2791, 7
  %v2793 = vsub.s32 %v2790, %v2792
  %v2794 = vrot.slane %v2780, %v2793
  %v2795 = vcombine.high %v2787, %v2787
  %v2796 = vcombine.high %v2794, %v2794
  %v2797 = vcombine.high %v2351, %v2351
  %v2799 = vunpack.c.l.s4 1983009808
  %v2800 = vunpack.c.0.s8 %v2799
  %v2801 = vlaneseq
  %v2802 = vshrl.u32 %v2801, 7
  %v2803 = vsub.s32 %v2800, %v2802
  %v2804 = vrot.slane %v2351, %v2803
  %v2806 = vunpack.c.l.s4 1983009808
  %v2807 = vunpack.c.0.s8 %v2806
  %v2808 = vlaneseq
  %v2809 = vshrl.u32 %v2808, 7
  %v2810 = vsub.s32 %v2807, %v2809
  %v2811 = vrot.slane %v2797, %v2810
  %v2812 = vcombine.high %v2804, %v2804
  %v2813 = vcombine.high %v2811, %v2811
  %v2814 = vcombine.high %v2352, %v2352
  %v2816 = vunpack.c.l.s4 1983009808
  %v2817 = vunpack.c.0.s8 %v2816
  %v2818 = vlaneseq
  %v2819 = vshrl.u32 %v2818, 7
  %v2820 = vsub.s32 %v2817, %v2819
  %v2821 = vrot.slane %v2352, %v2820
  %v2823 = vunpack.c.l.s4 1983009808
  %v2824 = vunpack.c.0.s8 %v2823
  %v2825 = vlaneseq
  %v2826 = vshrl.u32 %v2825, 7
  %v2827 = vsub.s32 %v2824, %v2826
  %v2828 = vrot.slane %v2814, %v2827
  %v2829 = vcombine.high %v2821, %v2821
  %v2830 = vcombine.high %v2828, %v2828
  %v2832 = vunpack.c.l.s4 1983009808
  %v2833 = vunpack.c.0.s8 %v2832
  %v2834 = vlaneseq
  %v2835 = vshrl.u32 %v2834, 7
  %v2836 = vsub.s32 %v2833, %v2835
  %v2837 = vrot.slane %v2353, %v2836
  %v2838 = vcombine.high %v2837, %v2837
  %v2839 = vcombine.high %v2354, %v2354
  %v2841 = vunpack.c.l.s4 1983009808
  %v2842 = vunpack.c.0.s8 %v2841
  %v2843 = vlaneseq
  %v2844 = vshrl.u32 %v2843, 7
  %v2845 = vsub.s32 %v2842, %v2844
  %v2846 = vrot.slane %v2354, %v2845
  %v2848 = vunpack.c.l.s4 1983009808
  %v2849 = vunpack.c.0.s8 %v2848
  %v2850 = vlaneseq
  %v2851 = vshrl.u32 %v2850, 7
  %v2852 = vsub.s32 %v2849, %v2851
  %v2853 = vrot.slane %v2839, %v2852
  %v2854 = vcombine.high %v2846, %v2846
  %v2855 = vcombine.high %v2853, %v2853
  %v2856 = vcombine.high %v2355, %v2355
  %v2858 = vunpack.c.l.s4 1983009808
  %v2859 = vunpack.c.0.s8 %v2858
  %v2860 = vlaneseq
  %v2861 = vshrl.u32 %v2860, 7
  %v2862 = vsub.s32 %v2859, %v2861
  %v2863 = vrot.slane %v2355, %v2862
  %v2865 = vunpack.c.l.s4 1983009808
  %v2866 = vunpack.c.0.s8 %v2865
  %v2867 = vlaneseq
  %v2868 = vshrl.u32 %v2867, 7
  %v2869 = vsub.s32 %v2866, %v2868
  %v2870 = vrot.slane %v2856, %v2869
  %v2871 = vcombine.high %v2863, %v2863
  %v2872 = vcombine.high %v2870, %v2870
  %v2873 = vcombine.high %v2356, %v2356
  %v2875 = vunpack.c.l.s4 1983009808
  %v2876 = vunpack.c.0.s8 %v2875
  %v2877 = vlaneseq
  %v2878 = vshrl.u32 %v2877, 7
  %v2879 = vsub.s32 %v2876, %v2878
  %v2880 = vrot.slane %v2356, %v2879
  %v2882 = vunpack.c.l.s4 1983009808
  %v2883 = vunpack.c.0.s8 %v2882
  %v2884 = vlaneseq
  %v2885 = vshrl.u32 %v2884, 7
  %v2886 = vsub.s32 %v2883, %v2885
  %v2887 = vrot.slane %v2873, %v2886
  %v2888 = vcombine.high %v2880, %v2880
  %v2889 = vcombine.high %v2887, %v2887
  %v2890 = vcombine.high %v2357, %v2357
  %v2892 = vunpack.c.l.s4 1983009808
  %v2893 = vunpack.c.0.s8 %v2892
  %v2894 = vlaneseq
  %v2895 = vshrl.u32 %v2894, 7
  %v2896 = vsub.s32 %v2893, %v2895
  %v2897 = vrot.slane %v2357, %v2896
  %v2899 = vunpack.c.l.s4 1983009808
  %v2900 = vunpack.c.0.s8 %v2899
  %v2901 = vlaneseq
  %v2902 = vshrl.u32 %v2901, 7
  %v2903 = vsub.s32 %v2900, %v2902
  %v2904 = vrot.slane %v2890, %v2903
  %v2905 = vcombine.high %v2897, %v2897
  %v2906 = vcombine.high %v2904, %v2904
  %v2907 = vcombine.high %v2358, %v2358
  %v2909 = vunpack.c.l.s4 1983009808
  %v2910 = vunpack.c.0.s8 %v2909
  %v2911 = vlaneseq
  %v2912 = vshrl.u32 %v2911, 7
  %v2913 = vsub.s32 %v2910, %v2912
  %v2914 = vrot.slane %v2358, %v2913
  %v2916 = vunpack.c.l.s4 1983009808
  %v2917 = vunpack.c.0.s8 %v2916
  %v2918 = vlaneseq
  %v2919 = vshrl.u32 %v2918, 7
  %v2920 = vsub.s32 %v2917, %v2919
  %v2921 = vrot.slane %v2907, %v2920
  %v2922 = vcombine.high %v2914, %v2914
  %v2923 = vcombine.high %v2921, %v2921
  %v2924 = vcombine.high %v2359, %v2359
  %v2926 = vunpack.c.l.s4 1983009808
  %v2927 = vunpack.c.0.s8 %v2926
  %v2928 = vlaneseq
  %v2929 = vshrl.u32 %v2928, 7
  %v2930 = vsub.s32 %v2927, %v2929
  %v2931 = vrot.slane %v2359, %v2930
  %v2933 = vunpack.c.l.s4 1983009808
  %v2934 = vunpack.c.0.s8 %v2933
  %v2935 = vlaneseq
  %v2936 = vshrl.u32 %v2935, 7
  %v2937 = vsub.s32 %v2934, %v2936
  %v2938 = vrot.slane %v2924, %v2937
  %v2939 = vcombine.high %v2931, %v2931
  %v2940 = vcombine.high %v2938, %v2938
  %v2941 = vcombine.high %v2360, %v2360
  %v2943 = vunpack.c.l.s4 1983009808
  %v2944 = vunpack.c.0.s8 %v2943
  %v2945 = vlaneseq
  %v2946 = vshrl.u32 %v2945, 7
  %v2947 = vsub.s32 %v2944, %v2946
  %v2948 = vrot.slane %v2360, %v2947
  %v2950 = vunpack.c.l.s4 1983009808
  %v2951 = vunpack.c.0.s8 %v2950
  %v2952 = vlaneseq
  %v2953 = vshrl.u32 %v2952, 7
  %v2954 = vsub.s32 %v2951, %v2953
  %v2955 = vrot.slane %v2941, %v2954
  %v2956 = vcombine.high %v2948, %v2948
  %v2957 = vcombine.high %v2955, %v2955
  %v2959 = vunpack.c.l.s4 1983009808
  %v2960 = vunpack.c.0.s8 %v2959
  %v2961 = vlaneseq
  %v2962 = vshrl.u32 %v2961, 7
  %v2963 = vsub.s32 %v2960, %v2962
  %v2964 = vrot.slane %v2361, %v2963
  %v2965 = vcombine.high %v2964, %v2964
  %v2966 = vcombine.high %v2362, %v2362
  %v2968 = vunpack.c.l.s4 1983009808
  %v2969 = vunpack.c.0.s8 %v2968
  %v2970 = vlaneseq
  %v2971 = vshrl.u32 %v2970, 7
  %v2972 = vsub.s32 %v2969, %v2971
  %v2973 = vrot.slane %v2362, %v2972
  %v2975 = vunpack.c.l.s4 1983009808
  %v2976 = vunpack.c.0.s8 %v2975
  %v2977 = vlaneseq
  %v2978 = vshrl.u32 %v2977, 7
  %v2979 = vsub.s32 %v2976, %v2978
  %v2980 = vrot.slane %v2966, %v2979
  %v2981 = vcombine.high %v2973, %v2973
  %v2982 = vcombine.high %v2980, %v2980
  %v2983 = vcombine.high %v2363, %v2363
  %v2985 = vunpack.c.l.s4 1983009808
  %v2986 = vunpack.c.0.s8 %v2985
  %v2987 = vlaneseq
  %v2988 = vshrl.u32 %v2987, 7
  %v2989 = vsub.s32 %v2986, %v2988
  %v2990 = vrot.slane %v2363, %v2989
  %v2992 = vunpack.c.l.s4 1983009808
  %v2993 = vunpack.c.0.s8 %v2992
  %v2994 = vlaneseq
  %v2995 = vshrl.u32 %v2994, 7
  %v2996 = vsub.s32 %v2993, %v2995
  %v2997 = vrot.slane %v2983, %v2996
  %v2998 = vcombine.high %v2990, %v2990
  %v2999 = vcombine.high %v2997, %v2997
  %v3000 = vcombine.high %v2364, %v2364
  %v3002 = vunpack.c.l.s4 1983009808
  %v3003 = vunpack.c.0.s8 %v3002
  %v3004 = vlaneseq
  %v3005 = vshrl.u32 %v3004, 7
  %v3006 = vsub.s32 %v3003, %v3005
  %v3007 = vrot.slane %v2364, %v3006
  %v3009 = vunpack.c.l.s4 1983009808
  %v3010 = vunpack.c.0.s8 %v3009
  %v3011 = vlaneseq
  %v3012 = vshrl.u32 %v3011, 7
  %v3013 = vsub.s32 %v3010, %v3012
  %v3014 = vrot.slane %v3000, %v3013
  %v3015 = vcombine.high %v3007, %v3007
  %v3016 = vcombine.high %v3014, %v3014
  %v3017 = vcombine.high %v2365, %v2365
  %v3019 = vunpack.c.l.s4 1983009808
  %v3020 = vunpack.c.0.s8 %v3019
  %v3021 = vlaneseq
  %v3022 = vshrl.u32 %v3021, 7
  %v3023 = vsub.s32 %v3020, %v3022
  %v3024 = vrot.slane %v2365, %v3023
  %v3026 = vunpack.c.l.s4 1983009808
  %v3027 = vunpack.c.0.s8 %v3026
  %v3028 = vlaneseq
  %v3029 = vshrl.u32 %v3028, 7
  %v3030 = vsub.s32 %v3027, %v3029
  %v3031 = vrot.slane %v3017, %v3030
  %v3032 = vcombine.high %v3024, %v3024
  %v3033 = vcombine.high %v3031, %v3031
  %v3034 = vcombine.high %v2366, %v2366
  %v3036 = vunpack.c.l.s4 1983009808
  %v3037 = vunpack.c.0.s8 %v3036
  %v3038 = vlaneseq
  %v3039 = vshrl.u32 %v3038, 7
  %v3040 = vsub.s32 %v3037, %v3039
  %v3041 = vrot.slane %v2366, %v3040
  %v3043 = vunpack.c.l.s4 1983009808
  %v3044 = vunpack.c.0.s8 %v3043
  %v3045 = vlaneseq
  %v3046 = vshrl.u32 %v3045, 7
  %v3047 = vsub.s32 %v3044, %v3046
  %v3048 = vrot.slane %v3034, %v3047
  %v3049 = vcombine.high %v3041, %v3041
  %v3050 = vcombine.high %v3048, %v3048
  %v3051 = vcombine.high %v2367, %v2367
  %v3053 = vunpack.c.l.s4 1983009808
  %v3054 = vunpack.c.0.s8 %v3053
  %v3055 = vlaneseq
  %v3056 = vshrl.u32 %v3055, 7
  %v3057 = vsub.s32 %v3054, %v3056
  %v3058 = vrot.slane %v2367, %v3057
  %v3060 = vunpack.c.l.s4 1983009808
  %v3061 = vunpack.c.0.s8 %v3060
  %v3062 = vlaneseq
  %v3063 = vshrl.u32 %v3062, 7
  %v3064 = vsub.s32 %v3061, %v3063
  %v3065 = vrot.slane %v3051, %v3064
  %v3066 = vcombine.high %v3058, %v3058
  %v3067 = vcombine.high %v3065, %v3065
  %v3068 = vcombine.high %v2368, %v2368
  %v3070 = vunpack.c.l.s4 1983009808
  %v3071 = vunpack.c.0.s8 %v3070
  %v3072 = vlaneseq
  %v3073 = vshrl.u32 %v3072, 7
  %v3074 = vsub.s32 %v3071, %v3073
  %v3075 = vrot.slane %v2368, %v3074
  %v3077 = vunpack.c.l.s4 1983009808
  %v3078 = vunpack.c.0.s8 %v3077
  %v3079 = vlaneseq
  %v3080 = vshrl.u32 %v3079, 7
  %v3081 = vsub.s32 %v3078, %v3080
  %v3082 = vrot.slane %v3068, %v3081
  %v3083 = vcombine.high %v3075, %v3075
  %v3084 = vcombine.high %v3082, %v3082
  %v3086 = vunpack.c.l.s4 1983009808
  %v3087 = vunpack.c.0.s8 %v3086
  %v3088 = vlaneseq
  %v3089 = vshrl.u32 %v3088, 7
  %v3090 = vsub.s32 %v3087, %v3089
  %v3091 = vrot.slane %v2369, %v3090
  %v3092 = vcombine.high %v3091, %v3091
  %v3093 = vcombine.high %v2370, %v2370
  %v3095 = vunpack.c.l.s4 1983009808
  %v3096 = vunpack.c.0.s8 %v3095
  %v3097 = vlaneseq
  %v3098 = vshrl.u32 %v3097, 7
  %v3099 = vsub.s32 %v3096, %v3098
  %v3100 = vrot.slane %v2370, %v3099
  %v3102 = vunpack.c.l.s4 1983009808
  %v3103 = vunpack.c.0.s8 %v3102
  %v3104 = vlaneseq
  %v3105 = vshrl.u32 %v3104, 7
  %v3106 = vsub.s32 %v3103, %v3105
  %v3107 = vrot.slane %v3093, %v3106
  %v3108 = vcombine.high %v3100, %v3100
  %v3109 = vcombine.high %v3107, %v3107
  %v3110 = vcombine.high %v2371, %v2371
  %v3112 = vunpack.c.l.s4 1983009808
  %v3113 = vunpack.c.0.s8 %v3112
  %v3114 = vlaneseq
  %v3115 = vshrl.u32 %v3114, 7
  %v3116 = vsub.s32 %v3113, %v3115
  %v3117 = vrot.slane %v2371, %v3116
  %v3119 = vunpack.c.l.s4 1983009808
  %v3120 = vunpack.c.0.s8 %v3119
  %v3121 = vlaneseq
  %v3122 = vshrl.u32 %v3121, 7
  %v3123 = vsub.s32 %v3120, %v3122
  %v3124 = vrot.slane %v3110, %v3123
  %v3125 = vcombine.high %v3117, %v3117
  %v3126 = vcombine.high %v3124, %v3124
  %v3127 = vcombine.high %v2372, %v2372
  %v3129 = vunpack.c.l.s4 1983009808
  %v3130 = vunpack.c.0.s8 %v3129
  %v3131 = vlaneseq
  %v3132 = vshrl.u32 %v3131, 7
  %v3133 = vsub.s32 %v3130, %v3132
  %v3134 = vrot.slane %v2372, %v3133
  %v3136 = vunpack.c.l.s4 1983009808
  %v3137 = vunpack.c.0.s8 %v3136
  %v3138 = vlaneseq
  %v3139 = vshrl.u32 %v3138, 7
  %v3140 = vsub.s32 %v3137, %v3139
  %v3141 = vrot.slane %v3127, %v3140
  %v3142 = vcombine.high %v3134, %v3134
  %v3143 = vcombine.high %v3141, %v3141
  %v3144 = vcombine.high %v2373, %v2373
  %v3146 = vunpack.c.l.s4 1983009808
  %v3147 = vunpack.c.0.s8 %v3146
  %v3148 = vlaneseq
  %v3149 = vshrl.u32 %v3148, 7
  %v3150 = vsub.s32 %v3147, %v3149
  %v3151 = vrot.slane %v2373, %v3150
  %v3153 = vunpack.c.l.s4 1983009808
  %v3154 = vunpack.c.0.s8 %v3153
  %v3155 = vlaneseq
  %v3156 = vshrl.u32 %v3155, 7
  %v3157 = vsub.s32 %v3154, %v3156
  %v3158 = vrot.slane %v3144, %v3157
  %v3159 = vcombine.high %v3151, %v3151
  %v3160 = vcombine.high %v3158, %v3158
  %v3161 = vcombine.high %v2374, %v2374
  %v3163 = vunpack.c.l.s4 1983009808
  %v3164 = vunpack.c.0.s8 %v3163
  %v3165 = vlaneseq
  %v3166 = vshrl.u32 %v3165, 7
  %v3167 = vsub.s32 %v3164, %v3166
  %v3168 = vrot.slane %v2374, %v3167
  %v3170 = vunpack.c.l.s4 1983009808
  %v3171 = vunpack.c.0.s8 %v3170
  %v3172 = vlaneseq
  %v3173 = vshrl.u32 %v3172, 7
  %v3174 = vsub.s32 %v3171, %v3173
  %v3175 = vrot.slane %v3161, %v3174
  %v3176 = vcombine.high %v3168, %v3168
  %v3177 = vcombine.high %v3175, %v3175
  %v3178 = vcombine.high %v2375, %v2375
  %v3180 = vunpack.c.l.s4 1983009808
  %v3181 = vunpack.c.0.s8 %v3180
  %v3182 = vlaneseq
  %v3183 = vshrl.u32 %v3182, 7
  %v3184 = vsub.s32 %v3181, %v3183
  %v3185 = vrot.slane %v2375, %v3184
  %v3187 = vunpack.c.l.s4 1983009808
  %v3188 = vunpack.c.0.s8 %v3187
  %v3189 = vlaneseq
  %v3190 = vshrl.u32 %v3189, 7
  %v3191 = vsub.s32 %v3188, %v3190
  %v3192 = vrot.slane %v3178, %v3191
  %v3193 = vcombine.high %v3185, %v3185
  %v3194 = vcombine.high %v3192, %v3192
  %v3195 = vcombine.high %v2376, %v2376
  %v3197 = vunpack.c.l.s4 1983009808
  %v3198 = vunpack.c.0.s8 %v3197
  %v3199 = vlaneseq
  %v3200 = vshrl.u32 %v3199, 7
  %v3201 = vsub.s32 %v3198, %v3200
  %v3202 = vrot.slane %v2376, %v3201
  %v3204 = vunpack.c.l.s4 1983009808
  %v3205 = vunpack.c.0.s8 %v3204
  %v3206 = vlaneseq
  %v3207 = vshrl.u32 %v3206, 7
  %v3208 = vsub.s32 %v3205, %v3207
  %v3209 = vrot.slane %v3195, %v3208
  %v3210 = vcombine.high %v3202, %v3202
  %v3211 = vcombine.high %v3209, %v3209
  %v3213 = vunpack.c.l.s4 1983009808
  %v3214 = vunpack.c.0.s8 %v3213
  %v3215 = vlaneseq
  %v3216 = vshrl.u32 %v3215, 7
  %v3217 = vsub.s32 %v3214, %v3216
  %v3218 = vrot.slane %v2377, %v3217
  %v3219 = vcombine.high %v3218, %v3218
  %v3220 = vcombine.high %v2378, %v2378
  %v3222 = vunpack.c.l.s4 1983009808
  %v3223 = vunpack.c.0.s8 %v3222
  %v3224 = vlaneseq
  %v3225 = vshrl.u32 %v3224, 7
  %v3226 = vsub.s32 %v3223, %v3225
  %v3227 = vrot.slane %v2378, %v3226
  %v3229 = vunpack.c.l.s4 1983009808
  %v3230 = vunpack.c.0.s8 %v3229
  %v3231 = vlaneseq
  %v3232 = vshrl.u32 %v3231, 7
  %v3233 = vsub.s32 %v3230, %v3232
  %v3234 = vrot.slane %v3220, %v3233
  %v3235 = vcombine.high %v3227, %v3227
  %v3236 = vcombine.high %v3234, %v3234
  %v3237 = vcombine.high %v2379, %v2379
  %v3239 = vunpack.c.l.s4 1983009808
  %v3240 = vunpack.c.0.s8 %v3239
  %v3241 = vlaneseq
  %v3242 = vshrl.u32 %v3241, 7
  %v3243 = vsub.s32 %v3240, %v3242
  %v3244 = vrot.slane %v2379, %v3243
  %v3246 = vunpack.c.l.s4 1983009808
  %v3247 = vunpack.c.0.s8 %v3246
  %v3248 = vlaneseq
  %v3249 = vshrl.u32 %v3248, 7
  %v3250 = vsub.s32 %v3247, %v3249
  %v3251 = vrot.slane %v3237, %v3250
  %v3252 = vcombine.high %v3244, %v3244
  %v3253 = vcombine.high %v3251, %v3251
  %v3254 = vcombine.high %v2380, %v2380
  %v3256 = vunpack.c.l.s4 1983009808
  %v3257 = vunpack.c.0.s8 %v3256
  %v3258 = vlaneseq
  %v3259 = vshrl.u32 %v3258, 7
  %v3260 = vsub.s32 %v3257, %v3259
  %v3261 = vrot.slane %v2380, %v3260
  %v3263 = vunpack.c.l.s4 1983009808
  %v3264 = vunpack.c.0.s8 %v3263
  %v3265 = vlaneseq
  %v3266 = vshrl.u32 %v3265, 7
  %v3267 = vsub.s32 %v3264, %v3266
  %v3268 = vrot.slane %v3254, %v3267
  %v3269 = vcombine.high %v3261, %v3261
  %v3270 = vcombine.high %v3268, %v3268
  %v3271 = vcombine.high %v2381, %v2381
  %v3273 = vunpack.c.l.s4 1983009808
  %v3274 = vunpack.c.0.s8 %v3273
  %v3275 = vlaneseq
  %v3276 = vshrl.u32 %v3275, 7
  %v3277 = vsub.s32 %v3274, %v3276
  %v3278 = vrot.slane %v2381, %v3277
  %v3280 = vunpack.c.l.s4 1983009808
  %v3281 = vunpack.c.0.s8 %v3280
  %v3282 = vlaneseq
  %v3283 = vshrl.u32 %v3282, 7
  %v3284 = vsub.s32 %v3281, %v3283
  %v3285 = vrot.slane %v3271, %v3284
  %v3286 = vcombine.high %v3278, %v3278
  %v3287 = vcombine.high %v3285, %v3285
  %v3288 = vcombine.high %v2382, %v2382
  %v3290 = vunpack.c.l.s4 1983009808
  %v3291 = vunpack.c.0.s8 %v3290
  %v3292 = vlaneseq
  %v3293 = vshrl.u32 %v3292, 7
  %v3294 = vsub.s32 %v3291, %v3293
  %v3295 = vrot.slane %v2382, %v3294
  %v3297 = vunpack.c.l.s4 1983009808
  %v3298 = vunpack.c.0.s8 %v3297
  %v3299 = vlaneseq
  %v3300 = vshrl.u32 %v3299, 7
  %v3301 = vsub.s32 %v3298, %v3300
  %v3302 = vrot.slane %v3288, %v3301
  %v3303 = vcombine.high %v3295, %v3295
  %v3304 = vcombine.high %v3302, %v3302
  %v3305 = vcombine.high %v2383, %v2383
  %v3307 = vunpack.c.l.s4 1983009808
  %v3308 = vunpack.c.0.s8 %v3307
  %v3309 = vlaneseq
  %v3310 = vshrl.u32 %v3309, 7
  %v3311 = vsub.s32 %v3308, %v3310
  %v3312 = vrot.slane %v2383, %v3311
  %v3314 = vunpack.c.l.s4 1983009808
  %v3315 = vunpack.c.0.s8 %v3314
  %v3316 = vlaneseq
  %v3317 = vshrl.u32 %v3316, 7
  %v3318 = vsub.s32 %v3315, %v3317
  %v3319 = vrot.slane %v3305, %v3318
  %v3320 = vcombine.high %v3312, %v3312
  %v3321 = vcombine.high %v3319, %v3319
  %v3322 = vcombine.high %v2384, %v2384
  %v3324 = vunpack.c.l.s4 1983009808
  %v3325 = vunpack.c.0.s8 %v3324
  %v3326 = vlaneseq
  %v3327 = vshrl.u32 %v3326, 7
  %v3328 = vsub.s32 %v3325, %v3327
  %v3329 = vrot.slane %v2384, %v3328
  %v3331 = vunpack.c.l.s4 1983009808
  %v3332 = vunpack.c.0.s8 %v3331
  %v3333 = vlaneseq
  %v3334 = vshrl.u32 %v3333, 7
  %v3335 = vsub.s32 %v3332, %v3334
  %v3336 = vrot.slane %v3322, %v3335
  %v3337 = vcombine.high %v3329, %v3329
  %v3338 = vcombine.high %v3336, %v3336
  %v3340 = vunpack.c.l.s4 1983009808
  %v3341 = vunpack.c.0.s8 %v3340
  %v3342 = vlaneseq
  %v3343 = vshrl.u32 %v3342, 7
  %v3344 = vsub.s32 %v3341, %v3343
  %v3345 = vrot.slane %v2385, %v3344
  %v3346 = vcombine.high %v3345, %v3345
  %v3347 = vcombine.high %v2386, %v2386
  %v3349 = vunpack.c.l.s4 1983009808
  %v3350 = vunpack.c.0.s8 %v3349
  %v3351 = vlaneseq
  %v3352 = vshrl.u32 %v3351, 7
  %v3353 = vsub.s32 %v3350, %v3352
  %v3354 = vrot.slane %v2386, %v3353
  %v3356 = vunpack.c.l.s4 1983009808
  %v3357 = vunpack.c.0.s8 %v3356
  %v3358 = vlaneseq
  %v3359 = vshrl.u32 %v3358, 7
  %v3360 = vsub.s32 %v3357, %v3359
  %v3361 = vrot.slane %v3347, %v3360
  %v3362 = vcombine.high %v3354, %v3354
  %v3363 = vcombine.high %v3361, %v3361
  %v3364 = vcombine.high %v2387, %v2387
  %v3366 = vunpack.c.l.s4 1983009808
  %v3367 = vunpack.c.0.s8 %v3366
  %v3368 = vlaneseq
  %v3369 = vshrl.u32 %v3368, 7
  %v3370 = vsub.s32 %v3367, %v3369
  %v3371 = vrot.slane %v2387, %v3370
  %v3373 = vunpack.c.l.s4 1983009808
  %v3374 = vunpack.c.0.s8 %v3373
  %v3375 = vlaneseq
  %v3376 = vshrl.u32 %v3375, 7
  %v3377 = vsub.s32 %v3374, %v3376
  %v3378 = vrot.slane %v3364, %v3377
  %v3379 = vcombine.high %v3371, %v3371
  %v3380 = vcombine.high %v3378, %v3378
  %v3381 = vcombine.high %v2388, %v2388
  %v3383 = vunpack.c.l.s4 1983009808
  %v3384 = vunpack.c.0.s8 %v3383
  %v3385 = vlaneseq
  %v3386 = vshrl.u32 %v3385, 7
  %v3387 = vsub.s32 %v3384, %v3386
  %v3388 = vrot.slane %v2388, %v3387
  %v3390 = vunpack.c.l.s4 1983009808
  %v3391 = vunpack.c.0.s8 %v3390
  %v3392 = vlaneseq
  %v3393 = vshrl.u32 %v3392, 7
  %v3394 = vsub.s32 %v3391, %v3393
  %v3395 = vrot.slane %v3381, %v3394
  %v3396 = vcombine.high %v3388, %v3388
  %v3397 = vcombine.high %v3395, %v3395
  %v3398 = vcombine.high %v2389, %v2389
  %v3400 = vunpack.c.l.s4 1983009808
  %v3401 = vunpack.c.0.s8 %v3400
  %v3402 = vlaneseq
  %v3403 = vshrl.u32 %v3402, 7
  %v3404 = vsub.s32 %v3401, %v3403
  %v3405 = vrot.slane %v2389, %v3404
  %v3407 = vunpack.c.l.s4 1983009808
  %v3408 = vunpack.c.0.s8 %v3407
  %v3409 = vlaneseq
  %v3410 = vshrl.u32 %v3409, 7
  %v3411 = vsub.s32 %v3408, %v3410
  %v3412 = vrot.slane %v3398, %v3411
  %v3413 = vcombine.high %v3405, %v3405
  %v3414 = vcombine.high %v3412, %v3412
  %v3415 = vcombine.high %v2390, %v2390
  %v3417 = vunpack.c.l.s4 1983009808
  %v3418 = vunpack.c.0.s8 %v3417
  %v3419 = vlaneseq
  %v3420 = vshrl.u32 %v3419, 7
  %v3421 = vsub.s32 %v3418, %v3420
  %v3422 = vrot.slane %v2390, %v3421
  %v3424 = vunpack.c.l.s4 1983009808
  %v3425 = vunpack.c.0.s8 %v3424
  %v3426 = vlaneseq
  %v3427 = vshrl.u32 %v3426, 7
  %v3428 = vsub.s32 %v3425, %v3427
  %v3429 = vrot.slane %v3415, %v3428
  %v3430 = vcombine.high %v3422, %v3422
  %v3431 = vcombine.high %v3429, %v3429
  %v3432 = vcombine.high %v2391, %v2391
  %v3434 = vunpack.c.l.s4 1983009808
  %v3435 = vunpack.c.0.s8 %v3434
  %v3436 = vlaneseq
  %v3437 = vshrl.u32 %v3436, 7
  %v3438 = vsub.s32 %v3435, %v3437
  %v3439 = vrot.slane %v2391, %v3438
  %v3441 = vunpack.c.l.s4 1983009808
  %v3442 = vunpack.c.0.s8 %v3441
  %v3443 = vlaneseq
  %v3444 = vshrl.u32 %v3443, 7
  %v3445 = vsub.s32 %v3442, %v3444
  %v3446 = vrot.slane %v3432, %v3445
  %v3447 = vcombine.high %v3439, %v3439
  %v3448 = vcombine.high %v3446, %v3446
  %v3449 = vcombine.high %v2392, %v2392
  %v3451 = vunpack.c.l.s4 1983009808
  %v3452 = vunpack.c.0.s8 %v3451
  %v3453 = vlaneseq
  %v3454 = vshrl.u32 %v3453, 7
  %v3455 = vsub.s32 %v3452, %v3454
  %v3456 = vrot.slane %v2392, %v3455
  %v3458 = vunpack.c.l.s4 1983009808
  %v3459 = vunpack.c.0.s8 %v3458
  %v3460 = vlaneseq
  %v3461 = vshrl.u32 %v3460, 7
  %v3462 = vsub.s32 %v3459, %v3461
  %v3463 = vrot.slane %v3449, %v3462
  %v3464 = vcombine.high %v3456, %v3456
  %v3465 = vcombine.high %v3463, %v3463
  %v3467 = vunpack.c.l.s4 1983009808
  %v3468 = vunpack.c.0.s8 %v3467
  %v3469 = vlaneseq
  %v3470 = vshrl.u32 %v3469, 7
  %v3471 = vsub.s32 %v3468, %v3470
  %v3472 = vrot.slane %v2393, %v3471
  %v3473 = vcombine.high %v3472, %v3472
  %vm3714 = vcmask 123904
  %v3715 = vsel %vm3714, %v2465, -inf
  %v3716 = vrot.slane %v3715, 4
  %v3717 = vmax.f32 %v3715, %v3716
  %v3718 = vrot.slane %v3717, 2
  %v3719 = vmax.f32 %v3717, %v3718
  %v3720 = vrot.slane %v3719, 1
  %v3721 = vmax.f32 %v3719, %v3720
  %v3722 = vsel %vm3714, %v2473, -inf
  %v3723 = vrot.slane %v3722, 4
  %v3724 = vmax.f32 %v3722, %v3723
  %v3725 = vrot.slane %v3724, 2
  %v3726 = vmax.f32 %v3724, %v3725
  %v3727 = vrot.slane %v3726, 1
  %v3728 = vmax.f32 %v3726, %v3727
  %v3729 = vsel %vm3714, %v2472, -inf
  %v3730 = vrot.slane %v3729, 4
  %v3731 = vmax.f32 %v3729, %v3730
  %v3732 = vrot.slane %v3731, 2
  %v3733 = vmax.f32 %v3731, %v3732
  %v3734 = vrot.slane %v3733, 1
  %v3735 = vmax.f32 %v3733, %v3734
  %v3736 = vsel %vm3714, %v2474, -inf
  %v3737 = vrot.slane %v3736, 4
  %v3738 = vmax.f32 %v3736, %v3737
  %v3739 = vrot.slane %v3738, 2
  %v3740 = vmax.f32 %v3738, %v3739
  %v3741 = vrot.slane %v3740, 1
  %v3742 = vmax.f32 %v3740, %v3741
  %v3743 = vsel %vm3714, %v2482, -inf
  %v3744 = vrot.slane %v3743, 4
  %v3745 = vmax.f32 %v3743, %v3744
  %v3746 = vrot.slane %v3745, 2
  %v3747 = vmax.f32 %v3745, %v3746
  %v3748 = vrot.slane %v3747, 1
  %v3749 = vmax.f32 %v3747, %v3748
  %v3750 = vsel %vm3714, %v2490, -inf
  %v3751 = vrot.slane %v3750, 4
  %v3752 = vmax.f32 %v3750, %v3751
  %v3753 = vrot.slane %v3752, 2
  %v3754 = vmax.f32 %v3752, %v3753
  %v3755 = vrot.slane %v3754, 1
  %v3756 = vmax.f32 %v3754, %v3755
  %v3757 = vsel %vm3714, %v2489, -inf
  %v3758 = vrot.slane %v3757, 4
  %v3759 = vmax.f32 %v3757, %v3758
  %v3760 = vrot.slane %v3759, 2
  %v3761 = vmax.f32 %v3759, %v3760
  %v3762 = vrot.slane %v3761, 1
  %v3763 = vmax.f32 %v3761, %v3762
  %v3764 = vsel %vm3714, %v2491, -inf
  %v3765 = vrot.slane %v3764, 4
  %v3766 = vmax.f32 %v3764, %v3765
  %v3767 = vrot.slane %v3766, 2
  %v3768 = vmax.f32 %v3766, %v3767
  %v3769 = vrot.slane %v3768, 1
  %v3770 = vmax.f32 %v3768, %v3769
  %v3771 = vsel %vm3714, %v2499, -inf
  %v3772 = vrot.slane %v3771, 4
  %v3773 = vmax.f32 %v3771, %v3772
  %v3774 = vrot.slane %v3773, 2
  %v3775 = vmax.f32 %v3773, %v3774
  %v3776 = vrot.slane %v3775, 1
  %v3777 = vmax.f32 %v3775, %v3776
  %v3778 = vsel %vm3714, %v2507, -inf
  %v3779 = vrot.slane %v3778, 4
  %v3780 = vmax.f32 %v3778, %v3779
  %v3781 = vrot.slane %v3780, 2
  %v3782 = vmax.f32 %v3780, %v3781
  %v3783 = vrot.slane %v3782, 1
  %v3784 = vmax.f32 %v3782, %v3783
  %v3785 = vsel %vm3714, %v2506, -inf
  %v3786 = vrot.slane %v3785, 4
  %v3787 = vmax.f32 %v3785, %v3786
  %v3788 = vrot.slane %v3787, 2
  %v3789 = vmax.f32 %v3787, %v3788
  %v3790 = vrot.slane %v3789, 1
  %v3791 = vmax.f32 %v3789, %v3790
  %v3792 = vsel %vm3714, %v2508, -inf
  %v3793 = vrot.slane %v3792, 4
  %v3794 = vmax.f32 %v3792, %v3793
  %v3795 = vrot.slane %v3794, 2
  %v3796 = vmax.f32 %v3794, %v3795
  %v3797 = vrot.slane %v3796, 1
  %v3798 = vmax.f32 %v3796, %v3797
  %v3799 = vsel %vm3714, %v2516, -inf
  %v3800 = vrot.slane %v3799, 4
  %v3801 = vmax.f32 %v3799, %v3800
  %v3802 = vrot.slane %v3801, 2
  %v3803 = vmax.f32 %v3801, %v3802
  %v3804 = vrot.slane %v3803, 1
  %v3805 = vmax.f32 %v3803, %v3804
  %v3806 = vsel %vm3714, %v2524, -inf
  %v3807 = vrot.slane %v3806, 4
  %v3808 = vmax.f32 %v3806, %v3807
  %v3809 = vrot.slane %v3808, 2
  %v3810 = vmax.f32 %v3808, %v3809
  %v3811 = vrot.slane %v3810, 1
  %v3812 = vmax.f32 %v3810, %v3811
  %v3813 = vsel %vm3714, %v2523, -inf
  %v3814 = vrot.slane %v3813, 4
  %v3815 = vmax.f32 %v3813, %v3814
  %v3816 = vrot.slane %v3815, 2
  %v3817 = vmax.f32 %v3815, %v3816
  %v3818 = vrot.slane %v3817, 1
  %v3819 = vmax.f32 %v3817, %v3818
  %v3820 = vsel %vm3714, %v2525, -inf
  %v3821 = vrot.slane %v3820, 4
  %v3822 = vmax.f32 %v3820, %v3821
  %v3823 = vrot.slane %v3822, 2
  %v3824 = vmax.f32 %v3822, %v3823
  %v3825 = vrot.slane %v3824, 1
  %v3826 = vmax.f32 %v3824, %v3825
  %v3827 = vsel %vm3714, %v2533, -inf
  %v3828 = vrot.slane %v3827, 4
  %v3829 = vmax.f32 %v3827, %v3828
  %v3830 = vrot.slane %v3829, 2
  %v3831 = vmax.f32 %v3829, %v3830
  %v3832 = vrot.slane %v3831, 1
  %v3833 = vmax.f32 %v3831, %v3832
  %v3834 = vsel %vm3714, %v2541, -inf
  %v3835 = vrot.slane %v3834, 4
  %v3836 = vmax.f32 %v3834, %v3835
  %v3837 = vrot.slane %v3836, 2
  %v3838 = vmax.f32 %v3836, %v3837
  %v3839 = vrot.slane %v3838, 1
  %v3840 = vmax.f32 %v3838, %v3839
  %v3841 = vsel %vm3714, %v2540, -inf
  %v3842 = vrot.slane %v3841, 4
  %v3843 = vmax.f32 %v3841, %v3842
  %v3844 = vrot.slane %v3843, 2
  %v3845 = vmax.f32 %v3843, %v3844
  %v3846 = vrot.slane %v3845, 1
  %v3847 = vmax.f32 %v3845, %v3846
  %v3848 = vsel %vm3714, %v2542, -inf
  %v3849 = vrot.slane %v3848, 4
  %v3850 = vmax.f32 %v3848, %v3849
  %v3851 = vrot.slane %v3850, 2
  %v3852 = vmax.f32 %v3850, %v3851
  %v3853 = vrot.slane %v3852, 1
  %v3854 = vmax.f32 %v3852, %v3853
  %v3855 = vsel %vm3714, %v2550, -inf
  %v3856 = vrot.slane %v3855, 4
  %v3857 = vmax.f32 %v3855, %v3856
  %v3858 = vrot.slane %v3857, 2
  %v3859 = vmax.f32 %v3857, %v3858
  %v3860 = vrot.slane %v3859, 1
  %v3861 = vmax.f32 %v3859, %v3860
  %v3862 = vsel %vm3714, %v2558, -inf
  %v3863 = vrot.slane %v3862, 4
  %v3864 = vmax.f32 %v3862, %v3863
  %v3865 = vrot.slane %v3864, 2
  %v3866 = vmax.f32 %v3864, %v3865
  %v3867 = vrot.slane %v3866, 1
  %v3868 = vmax.f32 %v3866, %v3867
  %v3869 = vsel %vm3714, %v2557, -inf
  %v3870 = vrot.slane %v3869, 4
  %v3871 = vmax.f32 %v3869, %v3870
  %v3872 = vrot.slane %v3871, 2
  %v3873 = vmax.f32 %v3871, %v3872
  %v3874 = vrot.slane %v3873, 1
  %v3875 = vmax.f32 %v3873, %v3874
  %v3876 = vsel %vm3714, %v2559, -inf
  %v3877 = vrot.slane %v3876, 4
  %v3878 = vmax.f32 %v3876, %v3877
  %v3879 = vrot.slane %v3878, 2
  %v3880 = vmax.f32 %v3878, %v3879
  %v3881 = vrot.slane %v3880, 1
  %v3882 = vmax.f32 %v3880, %v3881
  %v3883 = vsel %vm3714, %v2567, -inf
  %v3884 = vrot.slane %v3883, 4
  %v3885 = vmax.f32 %v3883, %v3884
  %v3886 = vrot.slane %v3885, 2
  %v3887 = vmax.f32 %v3885, %v3886
  %v3888 = vrot.slane %v3887, 1
  %v3889 = vmax.f32 %v3887, %v3888
  %v3890 = vsel %vm3714, %v2575, -inf
  %v3891 = vrot.slane %v3890, 4
  %v3892 = vmax.f32 %v3890, %v3891
  %v3893 = vrot.slane %v3892, 2
  %v3894 = vmax.f32 %v3892, %v3893
  %v3895 = vrot.slane %v3894, 1
  %v3896 = vmax.f32 %v3894, %v3895
  %v3897 = vsel %vm3714, %v2574, -inf
  %v3898 = vrot.slane %v3897, 4
  %v3899 = vmax.f32 %v3897, %v3898
  %v3900 = vrot.slane %v3899, 2
  %v3901 = vmax.f32 %v3899, %v3900
  %v3902 = vrot.slane %v3901, 1
  %v3903 = vmax.f32 %v3901, %v3902
  %v3904 = vsel %vm3714, %v2576, -inf
  %v3905 = vrot.slane %v3904, 4
  %v3906 = vmax.f32 %v3904, %v3905
  %v3907 = vrot.slane %v3906, 2
  %v3908 = vmax.f32 %v3906, %v3907
  %v3909 = vrot.slane %v3908, 1
  %v3910 = vmax.f32 %v3908, %v3909
  %v3911 = vsel %vm3714, %v2583, -inf
  %v3912 = vrot.slane %v3911, 4
  %v3913 = vmax.f32 %v3911, %v3912
  %v3914 = vrot.slane %v3913, 2
  %v3915 = vmax.f32 %v3913, %v3914
  %v3916 = vrot.slane %v3915, 1
  %v3917 = vmax.f32 %v3915, %v3916
  %v3918 = vsel %vm3714, %v2584, -inf
  %v3919 = vrot.slane %v3918, 4
  %v3920 = vmax.f32 %v3918, %v3919
  %v3921 = vrot.slane %v3920, 2
  %v3922 = vmax.f32 %v3920, %v3921
  %v3923 = vrot.slane %v3922, 1
  %v3924 = vmax.f32 %v3922, %v3923
  %v3925 = vsel %vm3714, %v2592, -inf
  %v3926 = vrot.slane %v3925, 4
  %v3927 = vmax.f32 %v3925, %v3926
  %v3928 = vrot.slane %v3927, 2
  %v3929 = vmax.f32 %v3927, %v3928
  %v3930 = vrot.slane %v3929, 1
  %v3931 = vmax.f32 %v3929, %v3930
  %v3932 = vsel %vm3714, %v2600, -inf
  %v3933 = vrot.slane %v3932, 4
  %v3934 = vmax.f32 %v3932, %v3933
  %v3935 = vrot.slane %v3934, 2
  %v3936 = vmax.f32 %v3934, %v3935
  %v3937 = vrot.slane %v3936, 1
  %v3938 = vmax.f32 %v3936, %v3937
  %v3939 = vsel %vm3714, %v2599, -inf
  %v3940 = vrot.slane %v3939, 4
  %v3941 = vmax.f32 %v3939, %v3940
  %v3942 = vrot.slane %v3941, 2
  %v3943 = vmax.f32 %v3941, %v3942
  %v3944 = vrot.slane %v3943, 1
  %v3945 = vmax.f32 %v3943, %v3944
  %v3946 = vsel %vm3714, %v2601, -inf
  %v3947 = vrot.slane %v3946, 4
  %v3948 = vmax.f32 %v3946, %v3947
  %v3949 = vrot.slane %v3948, 2
  %v3950 = vmax.f32 %v3948, %v3949
  %v3951 = vrot.slane %v3950, 1
  %v3952 = vmax.f32 %v3950, %v3951
  %v3953 = vsel %vm3714, %v2609, -inf
  %v3954 = vrot.slane %v3953, 4
  %v3955 = vmax.f32 %v3953, %v3954
  %v3956 = vrot.slane %v3955, 2
  %v3957 = vmax.f32 %v3955, %v3956
  %v3958 = vrot.slane %v3957, 1
  %v3959 = vmax.f32 %v3957, %v3958
  %v3960 = vsel %vm3714, %v2617, -inf
  %v3961 = vrot.slane %v3960, 4
  %v3962 = vmax.f32 %v3960, %v3961
  %v3963 = vrot.slane %v3962, 2
  %v3964 = vmax.f32 %v3962, %v3963
  %v3965 = vrot.slane %v3964, 1
  %v3966 = vmax.f32 %v3964, %v3965
  %v3967 = vsel %vm3714, %v2616, -inf
  %v3968 = vrot.slane %v3967, 4
  %v3969 = vmax.f32 %v3967, %v3968
  %v3970 = vrot.slane %v3969, 2
  %v3971 = vmax.f32 %v3969, %v3970
  %v3972 = vrot.slane %v3971, 1
  %v3973 = vmax.f32 %v3971, %v3972
  %v3974 = vsel %vm3714, %v2618, -inf
  %v3975 = vrot.slane %v3974, 4
  %v3976 = vmax.f32 %v3974, %v3975
  %v3977 = vrot.slane %v3976, 2
  %v3978 = vmax.f32 %v3976, %v3977
  %v3979 = vrot.slane %v3978, 1
  %v3980 = vmax.f32 %v3978, %v3979
  %v3981 = vsel %vm3714, %v2626, -inf
  %v3982 = vrot.slane %v3981, 4
  %v3983 = vmax.f32 %v3981, %v3982
  %v3984 = vrot.slane %v3983, 2
  %v3985 = vmax.f32 %v3983, %v3984
  %v3986 = vrot.slane %v3985, 1
  %v3987 = vmax.f32 %v3985, %v3986
  %v3988 = vsel %vm3714, %v2634, -inf
  %v3989 = vrot.slane %v3988, 4
  %v3990 = vmax.f32 %v3988, %v3989
  %v3991 = vrot.slane %v3990, 2
  %v3992 = vmax.f32 %v3990, %v3991
  %v3993 = vrot.slane %v3992, 1
  %v3994 = vmax.f32 %v3992, %v3993
  %v3995 = vsel %vm3714, %v2633, -inf
  %v3996 = vrot.slane %v3995, 4
  %v3997 = vmax.f32 %v3995, %v3996
  %v3998 = vrot.slane %v3997, 2
  %v3999 = vmax.f32 %v3997, %v3998
  %v4000 = vrot.slane %v3999, 1
  %v4001 = vmax.f32 %v3999, %v4000
  %v4002 = vsel %vm3714, %v2635, -inf
  %v4003 = vrot.slane %v4002, 4
  %v4004 = vmax.f32 %v4002, %v4003
  %v4005 = vrot.slane %v4004, 2
  %v4006 = vmax.f32 %v4004, %v4005
  %v4007 = vrot.slane %v4006, 1
  %v4008 = vmax.f32 %v4006, %v4007
  %v4009 = vsel %vm3714, %v2643, -inf
  %v4010 = vrot.slane %v4009, 4
  %v4011 = vmax.f32 %v4009, %v4010
  %v4012 = vrot.slane %v4011, 2
  %v4013 = vmax.f32 %v4011, %v4012
  %v4014 = vrot.slane %v4013, 1
  %v4015 = vmax.f32 %v4013, %v4014
  %v4016 = vsel %vm3714, %v2651, -inf
  %v4017 = vrot.slane %v4016, 4
  %v4018 = vmax.f32 %v4016, %v4017
  %v4019 = vrot.slane %v4018, 2
  %v4020 = vmax.f32 %v4018, %v4019
  %v4021 = vrot.slane %v4020, 1
  %v4022 = vmax.f32 %v4020, %v4021
  %v4023 = vsel %vm3714, %v2650, -inf
  %v4024 = vrot.slane %v4023, 4
  %v4025 = vmax.f32 %v4023, %v4024
  %v4026 = vrot.slane %v4025, 2
  %v4027 = vmax.f32 %v4025, %v4026
  %v4028 = vrot.slane %v4027, 1
  %v4029 = vmax.f32 %v4027, %v4028
  %v4030 = vsel %vm3714, %v2652, -inf
  %v4031 = vrot.slane %v4030, 4
  %v4032 = vmax.f32 %v4030, %v4031
  %v4033 = vrot.slane %v4032, 2
  %v4034 = vmax.f32 %v4032, %v4033
  %v4035 = vrot.slane %v4034, 1
  %v4036 = vmax.f32 %v4034, %v4035
  %v4037 = vsel %vm3714, %v2660, -inf
  %v4038 = vrot.slane %v4037, 4
  %v4039 = vmax.f32 %v4037, %v4038
  %v4040 = vrot.slane %v4039, 2
  %v4041 = vmax.f32 %v4039, %v4040
  %v4042 = vrot.slane %v4041, 1
  %v4043 = vmax.f32 %v4041, %v4042
  %v4044 = vsel %vm3714, %v2668, -inf
  %v4045 = vrot.slane %v4044, 4
  %v4046 = vmax.f32 %v4044, %v4045
  %v4047 = vrot.slane %v4046, 2
  %v4048 = vmax.f32 %v4046, %v4047
  %v4049 = vrot.slane %v4048, 1
  %v4050 = vmax.f32 %v4048, %v4049
  %v4051 = vsel %vm3714, %v2667, -inf
  %v4052 = vrot.slane %v4051, 4
  %v4053 = vmax.f32 %v4051, %v4052
  %v4054 = vrot.slane %v4053, 2
  %v4055 = vmax.f32 %v4053, %v4054
  %v4056 = vrot.slane %v4055, 1
  %v4057 = vmax.f32 %v4055, %v4056
  %v4058 = vsel %vm3714, %v2669, -inf
  %v4059 = vrot.slane %v4058, 4
  %v4060 = vmax.f32 %v4058, %v4059
  %v4061 = vrot.slane %v4060, 2
  %v4062 = vmax.f32 %v4060, %v4061
  %v4063 = vrot.slane %v4062, 1
  %v4064 = vmax.f32 %v4062, %v4063
  %v4065 = vsel %vm3714, %v2677, -inf
  %v4066 = vrot.slane %v4065, 4
  %v4067 = vmax.f32 %v4065, %v4066
  %v4068 = vrot.slane %v4067, 2
  %v4069 = vmax.f32 %v4067, %v4068
  %v4070 = vrot.slane %v4069, 1
  %v4071 = vmax.f32 %v4069, %v4070
  %v4072 = vsel %vm3714, %v2685, -inf
  %v4073 = vrot.slane %v4072, 4
  %v4074 = vmax.f32 %v4072, %v4073
  %v4075 = vrot.slane %v4074, 2
  %v4076 = vmax.f32 %v4074, %v4075
  %v4077 = vrot.slane %v4076, 1
  %v4078 = vmax.f32 %v4076, %v4077
  %v4079 = vsel %vm3714, %v2684, -inf
  %v4080 = vrot.slane %v4079, 4
  %v4081 = vmax.f32 %v4079, %v4080
  %v4082 = vrot.slane %v4081, 2
  %v4083 = vmax.f32 %v4081, %v4082
  %v4084 = vrot.slane %v4083, 1
  %v4085 = vmax.f32 %v4083, %v4084
  %v4086 = vsel %vm3714, %v2686, -inf
  %v4087 = vrot.slane %v4086, 4
  %v4088 = vmax.f32 %v4086, %v4087
  %v4089 = vrot.slane %v4088, 2
  %v4090 = vmax.f32 %v4088, %v4089
  %v4091 = vrot.slane %v4090, 1
  %v4092 = vmax.f32 %v4090, %v4091
  %v4093 = vsel %vm3714, %v2694, -inf
  %v4094 = vrot.slane %v4093, 4
  %v4095 = vmax.f32 %v4093, %v4094
  %v4096 = vrot.slane %v4095, 2
  %v4097 = vmax.f32 %v4095, %v4096
  %v4098 = vrot.slane %v4097, 1
  %v4099 = vmax.f32 %v4097, %v4098
  %v4100 = vsel %vm3714, %v2702, -inf
  %v4101 = vrot.slane %v4100, 4
  %v4102 = vmax.f32 %v4100, %v4101
  %v4103 = vrot.slane %v4102, 2
  %v4104 = vmax.f32 %v4102, %v4103
  %v4105 = vrot.slane %v4104, 1
  %v4106 = vmax.f32 %v4104, %v4105
  %v4107 = vsel %vm3714, %v2701, -inf
  %v4108 = vrot.slane %v4107, 4
  %v4109 = vmax.f32 %v4107, %v4108
  %v4110 = vrot.slane %v4109, 2
  %v4111 = vmax.f32 %v4109, %v4110
  %v4112 = vrot.slane %v4111, 1
  %v4113 = vmax.f32 %v4111, %v4112
  %v4114 = vsel %vm3714, %v2703, -inf
  %v4115 = vrot.slane %v4114, 4
  %v4116 = vmax.f32 %v4114, %v4115
  %v4117 = vrot.slane %v4116, 2
  %v4118 = vmax.f32 %v4116, %v4117
  %v4119 = vrot.slane %v4118, 1
  %v4120 = vmax.f32 %v4118, %v4119
  %v4121 = vsel %vm3714, %v2710, -inf
  %v4122 = vrot.slane %v4121, 4
  %v4123 = vmax.f32 %v4121, %v4122
  %v4124 = vrot.slane %v4123, 2
  %v4125 = vmax.f32 %v4123, %v4124
  %v4126 = vrot.slane %v4125, 1
  %v4127 = vmax.f32 %v4125, %v4126
  %v4128 = vsel %vm3714, %v2711, -inf
  %v4129 = vrot.slane %v4128, 4
  %v4130 = vmax.f32 %v4128, %v4129
  %v4131 = vrot.slane %v4130, 2
  %v4132 = vmax.f32 %v4130, %v4131
  %v4133 = vrot.slane %v4132, 1
  %v4134 = vmax.f32 %v4132, %v4133
  %v4135 = vsel %vm3714, %v2719, -inf
  %v4136 = vrot.slane %v4135, 4
  %v4137 = vmax.f32 %v4135, %v4136
  %v4138 = vrot.slane %v4137, 2
  %v4139 = vmax.f32 %v4137, %v4138
  %v4140 = vrot.slane %v4139, 1
  %v4141 = vmax.f32 %v4139, %v4140
  %v4142 = vsel %vm3714, %v2727, -inf
  %v4143 = vrot.slane %v4142, 4
  %v4144 = vmax.f32 %v4142, %v4143
  %v4145 = vrot.slane %v4144, 2
  %v4146 = vmax.f32 %v4144, %v4145
  %v4147 = vrot.slane %v4146, 1
  %v4148 = vmax.f32 %v4146, %v4147
  %v4149 = vsel %vm3714, %v2726, -inf
  %v4150 = vrot.slane %v4149, 4
  %v4151 = vmax.f32 %v4149, %v4150
  %v4152 = vrot.slane %v4151, 2
  %v4153 = vmax.f32 %v4151, %v4152
  %v4154 = vrot.slane %v4153, 1
  %v4155 = vmax.f32 %v4153, %v4154
  %v4156 = vsel %vm3714, %v2728, -inf
  %v4157 = vrot.slane %v4156, 4
  %v4158 = vmax.f32 %v4156, %v4157
  %v4159 = vrot.slane %v4158, 2
  %v4160 = vmax.f32 %v4158, %v4159
  %v4161 = vrot.slane %v4160, 1
  %v4162 = vmax.f32 %v4160, %v4161
  %v4163 = vsel %vm3714, %v2736, -inf
  %v4164 = vrot.slane %v4163, 4
  %v4165 = vmax.f32 %v4163, %v4164
  %v4166 = vrot.slane %v4165, 2
  %v4167 = vmax.f32 %v4165, %v4166
  %v4168 = vrot.slane %v4167, 1
  %v4169 = vmax.f32 %v4167, %v4168
  %v4170 = vsel %vm3714, %v2744, -inf
  %v4171 = vrot.slane %v4170, 4
  %v4172 = vmax.f32 %v4170, %v4171
  %v4173 = vrot.slane %v4172, 2
  %v4174 = vmax.f32 %v4172, %v4173
  %v4175 = vrot.slane %v4174, 1
  %v4176 = vmax.f32 %v4174, %v4175
  %v4177 = vsel %vm3714, %v2743, -inf
  %v4178 = vrot.slane %v4177, 4
  %v4179 = vmax.f32 %v4177, %v4178
  %v4180 = vrot.slane %v4179, 2
  %v4181 = vmax.f32 %v4179, %v4180
  %v4182 = vrot.slane %v4181, 1
  %v4183 = vmax.f32 %v4181, %v4182
  %v4184 = vsel %vm3714, %v2745, -inf
  %v4185 = vrot.slane %v4184, 4
  %v4186 = vmax.f32 %v4184, %v4185
  %v4187 = vrot.slane %v4186, 2
  %v4188 = vmax.f32 %v4186, %v4187
  %v4189 = vrot.slane %v4188, 1
  %v4190 = vmax.f32 %v4188, %v4189
  %v4191 = vsel %vm3714, %v2753, -inf
  %v4192 = vrot.slane %v4191, 4
  %v4193 = vmax.f32 %v4191, %v4192
  %v4194 = vrot.slane %v4193, 2
  %v4195 = vmax.f32 %v4193, %v4194
  %v4196 = vrot.slane %v4195, 1
  %v4197 = vmax.f32 %v4195, %v4196
  %v4198 = vsel %vm3714, %v2761, -inf
  %v4199 = vrot.slane %v4198, 4
  %v4200 = vmax.f32 %v4198, %v4199
  %v4201 = vrot.slane %v4200, 2
  %v4202 = vmax.f32 %v4200, %v4201
  %v4203 = vrot.slane %v4202, 1
  %v4204 = vmax.f32 %v4202, %v4203
  %v4205 = vsel %vm3714, %v2760, -inf
  %v4206 = vrot.slane %v4205, 4
  %v4207 = vmax.f32 %v4205, %v4206
  %v4208 = vrot.slane %v4207, 2
  %v4209 = vmax.f32 %v4207, %v4208
  %v4210 = vrot.slane %v4209, 1
  %v4211 = vmax.f32 %v4209, %v4210
  %v4212 = vsel %vm3714, %v2762, -inf
  %v4213 = vrot.slane %v4212, 4
  %v4214 = vmax.f32 %v4212, %v4213
  %v4215 = vrot.slane %v4214, 2
  %v4216 = vmax.f32 %v4214, %v4215
  %v4217 = vrot.slane %v4216, 1
  %v4218 = vmax.f32 %v4216, %v4217
  %v4219 = vsel %vm3714, %v2770, -inf
  %v4220 = vrot.slane %v4219, 4
  %v4221 = vmax.f32 %v4219, %v4220
  %v4222 = vrot.slane %v4221, 2
  %v4223 = vmax.f32 %v4221, %v4222
  %v4224 = vrot.slane %v4223, 1
  %v4225 = vmax.f32 %v4223, %v4224
  %v4226 = vsel %vm3714, %v2778, -inf
  %v4227 = vrot.slane %v4226, 4
  %v4228 = vmax.f32 %v4226, %v4227
  %v4229 = vrot.slane %v4228, 2
  %v4230 = vmax.f32 %v4228, %v4229
  %v4231 = vrot.slane %v4230, 1
  %v4232 = vmax.f32 %v4230, %v4231
  %v4233 = vsel %vm3714, %v2777, -inf
  %v4234 = vrot.slane %v4233, 4
  %v4235 = vmax.f32 %v4233, %v4234
  %v4236 = vrot.slane %v4235, 2
  %v4237 = vmax.f32 %v4235, %v4236
  %v4238 = vrot.slane %v4237, 1
  %v4239 = vmax.f32 %v4237, %v4238
  %v4240 = vsel %vm3714, %v2779, -inf
  %v4241 = vrot.slane %v4240, 4
  %v4242 = vmax.f32 %v4240, %v4241
  %v4243 = vrot.slane %v4242, 2
  %v4244 = vmax.f32 %v4242, %v4243
  %v4245 = vrot.slane %v4244, 1
  %v4246 = vmax.f32 %v4244, %v4245
  %v4247 = vsel %vm3714, %v2787, -inf
  %v4248 = vrot.slane %v4247, 4
  %v4249 = vmax.f32 %v4247, %v4248
  %v4250 = vrot.slane %v4249, 2
  %v4251 = vmax.f32 %v4249, %v4250
  %v4252 = vrot.slane %v4251, 1
  %v4253 = vmax.f32 %v4251, %v4252
  %v4254 = vsel %vm3714, %v2795, -inf
  %v4255 = vrot.slane %v4254, 4
  %v4256 = vmax.f32 %v4254, %v4255
  %v4257 = vrot.slane %v4256, 2
  %v4258 = vmax.f32 %v4256, %v4257
  %v4259 = vrot.slane %v4258, 1
  %v4260 = vmax.f32 %v4258, %v4259
  %v4261 = vsel %vm3714, %v2794, -inf
  %v4262 = vrot.slane %v4261, 4
  %v4263 = vmax.f32 %v4261, %v4262
  %v4264 = vrot.slane %v4263, 2
  %v4265 = vmax.f32 %v4263, %v4264
  %v4266 = vrot.slane %v4265, 1
  %v4267 = vmax.f32 %v4265, %v4266
  %v4268 = vsel %vm3714, %v2796, -inf
  %v4269 = vrot.slane %v4268, 4
  %v4270 = vmax.f32 %v4268, %v4269
  %v4271 = vrot.slane %v4270, 2
  %v4272 = vmax.f32 %v4270, %v4271
  %v4273 = vrot.slane %v4272, 1
  %v4274 = vmax.f32 %v4272, %v4273
  %v4275 = vsel %vm3714, %v2804, -inf
  %v4276 = vrot.slane %v4275, 4
  %v4277 = vmax.f32 %v4275, %v4276
  %v4278 = vrot.slane %v4277, 2
  %v4279 = vmax.f32 %v4277, %v4278
  %v4280 = vrot.slane %v4279, 1
  %v4281 = vmax.f32 %v4279, %v4280
  %v4282 = vsel %vm3714, %v2812, -inf
  %v4283 = vrot.slane %v4282, 4
  %v4284 = vmax.f32 %v4282, %v4283
  %v4285 = vrot.slane %v4284, 2
  %v4286 = vmax.f32 %v4284, %v4285
  %v4287 = vrot.slane %v4286, 1
  %v4288 = vmax.f32 %v4286, %v4287
  %v4289 = vsel %vm3714, %v2811, -inf
  %v4290 = vrot.slane %v4289, 4
  %v4291 = vmax.f32 %v4289, %v4290
  %v4292 = vrot.slane %v4291, 2
  %v4293 = vmax.f32 %v4291, %v4292
  %v4294 = vrot.slane %v4293, 1
  %v4295 = vmax.f32 %v4293, %v4294
  %v4296 = vsel %vm3714, %v2813, -inf
  %v4297 = vrot.slane %v4296, 4
  %v4298 = vmax.f32 %v4296, %v4297
  %v4299 = vrot.slane %v4298, 2
  %v4300 = vmax.f32 %v4298, %v4299
  %v4301 = vrot.slane %v4300, 1
  %v4302 = vmax.f32 %v4300, %v4301
  %v4303 = vsel %vm3714, %v2821, -inf
  %v4304 = vrot.slane %v4303, 4
  %v4305 = vmax.f32 %v4303, %v4304
  %v4306 = vrot.slane %v4305, 2
  %v4307 = vmax.f32 %v4305, %v4306
  %v4308 = vrot.slane %v4307, 1
  %v4309 = vmax.f32 %v4307, %v4308
  %v4310 = vsel %vm3714, %v2829, -inf
  %v4311 = vrot.slane %v4310, 4
  %v4312 = vmax.f32 %v4310, %v4311
  %v4313 = vrot.slane %v4312, 2
  %v4314 = vmax.f32 %v4312, %v4313
  %v4315 = vrot.slane %v4314, 1
  %v4316 = vmax.f32 %v4314, %v4315
  %v4317 = vsel %vm3714, %v2828, -inf
  %v4318 = vrot.slane %v4317, 4
  %v4319 = vmax.f32 %v4317, %v4318
  %v4320 = vrot.slane %v4319, 2
  %v4321 = vmax.f32 %v4319, %v4320
  %v4322 = vrot.slane %v4321, 1
  %v4323 = vmax.f32 %v4321, %v4322
  %v4324 = vsel %vm3714, %v2830, -inf
  %v4325 = vrot.slane %v4324, 4
  %v4326 = vmax.f32 %v4324, %v4325
  %v4327 = vrot.slane %v4326, 2
  %v4328 = vmax.f32 %v4326, %v4327
  %v4329 = vrot.slane %v4328, 1
  %v4330 = vmax.f32 %v4328, %v4329
  %v4331 = vsel %vm3714, %v2837, -inf
  %v4332 = vrot.slane %v4331, 4
  %v4333 = vmax.f32 %v4331, %v4332
  %v4334 = vrot.slane %v4333, 2
  %v4335 = vmax.f32 %v4333, %v4334
  %v4336 = vrot.slane %v4335, 1
  %v4337 = vmax.f32 %v4335, %v4336
  %v4338 = vsel %vm3714, %v2838, -inf
  %v4339 = vrot.slane %v4338, 4
  %v4340 = vmax.f32 %v4338, %v4339
  %v4341 = vrot.slane %v4340, 2
  %v4342 = vmax.f32 %v4340, %v4341
  %v4343 = vrot.slane %v4342, 1
  %v4344 = vmax.f32 %v4342, %v4343
  %v4345 = vsel %vm3714, %v2846, -inf
  %v4346 = vrot.slane %v4345, 4
  %v4347 = vmax.f32 %v4345, %v4346
  %v4348 = vrot.slane %v4347, 2
  %v4349 = vmax.f32 %v4347, %v4348
  %v4350 = vrot.slane %v4349, 1
  %v4351 = vmax.f32 %v4349, %v4350
  %v4352 = vsel %vm3714, %v2854, -inf
  %v4353 = vrot.slane %v4352, 4
  %v4354 = vmax.f32 %v4352, %v4353
  %v4355 = vrot.slane %v4354, 2
  %v4356 = vmax.f32 %v4354, %v4355
  %v4357 = vrot.slane %v4356, 1
  %v4358 = vmax.f32 %v4356, %v4357
  %v4359 = vsel %vm3714, %v2853, -inf
  %v4360 = vrot.slane %v4359, 4
  %v4361 = vmax.f32 %v4359, %v4360
  %v4362 = vrot.slane %v4361, 2
  %v4363 = vmax.f32 %v4361, %v4362
  %v4364 = vrot.slane %v4363, 1
  %v4365 = vmax.f32 %v4363, %v4364
  %v4366 = vsel %vm3714, %v2855, -inf
  %v4367 = vrot.slane %v4366, 4
  %v4368 = vmax.f32 %v4366, %v4367
  %v4369 = vrot.slane %v4368, 2
  %v4370 = vmax.f32 %v4368, %v4369
  %v4371 = vrot.slane %v4370, 1
  %v4372 = vmax.f32 %v4370, %v4371
  %v4373 = vsel %vm3714, %v2863, -inf
  %v4374 = vrot.slane %v4373, 4
  %v4375 = vmax.f32 %v4373, %v4374
  %v4376 = vrot.slane %v4375, 2
  %v4377 = vmax.f32 %v4375, %v4376
  %v4378 = vrot.slane %v4377, 1
  %v4379 = vmax.f32 %v4377, %v4378
  %v4380 = vsel %vm3714, %v2871, -inf
  %v4381 = vrot.slane %v4380, 4
  %v4382 = vmax.f32 %v4380, %v4381
  %v4383 = vrot.slane %v4382, 2
  %v4384 = vmax.f32 %v4382, %v4383
  %v4385 = vrot.slane %v4384, 1
  %v4386 = vmax.f32 %v4384, %v4385
  %v4387 = vsel %vm3714, %v2870, -inf
  %v4388 = vrot.slane %v4387, 4
  %v4389 = vmax.f32 %v4387, %v4388
  %v4390 = vrot.slane %v4389, 2
  %v4391 = vmax.f32 %v4389, %v4390
  %v4392 = vrot.slane %v4391, 1
  %v4393 = vmax.f32 %v4391, %v4392
  %v4394 = vsel %vm3714, %v2872, -inf
  %v4395 = vrot.slane %v4394, 4
  %v4396 = vmax.f32 %v4394, %v4395
  %v4397 = vrot.slane %v4396, 2
  %v4398 = vmax.f32 %v4396, %v4397
  %v4399 = vrot.slane %v4398, 1
  %v4400 = vmax.f32 %v4398, %v4399
  %v4401 = vsel %vm3714, %v2880, -inf
  %v4402 = vrot.slane %v4401, 4
  %v4403 = vmax.f32 %v4401, %v4402
  %v4404 = vrot.slane %v4403, 2
  %v4405 = vmax.f32 %v4403, %v4404
  %v4406 = vrot.slane %v4405, 1
  %v4407 = vmax.f32 %v4405, %v4406
  %v4408 = vsel %vm3714, %v2888, -inf
  %v4409 = vrot.slane %v4408, 4
  %v4410 = vmax.f32 %v4408, %v4409
  %v4411 = vrot.slane %v4410, 2
  %v4412 = vmax.f32 %v4410, %v4411
  %v4413 = vrot.slane %v4412, 1
  %v4414 = vmax.f32 %v4412, %v4413
  %v4415 = vsel %vm3714, %v2887, -inf
  %v4416 = vrot.slane %v4415, 4
  %v4417 = vmax.f32 %v4415, %v4416
  %v4418 = vrot.slane %v4417, 2
  %v4419 = vmax.f32 %v4417, %v4418
  %v4420 = vrot.slane %v4419, 1
  %v4421 = vmax.f32 %v4419, %v4420
  %v4422 = vsel %vm3714, %v2889, -inf
  %v4423 = vrot.slane %v4422, 4
  %v4424 = vmax.f32 %v4422, %v4423
  %v4425 = vrot.slane %v4424, 2
  %v4426 = vmax.f32 %v4424, %v4425
  %v4427 = vrot.slane %v4426, 1
  %v4428 = vmax.f32 %v4426, %v4427
  %v4429 = vsel %vm3714, %v2897, -inf
  %v4430 = vrot.slane %v4429, 4
  %v4431 = vmax.f32 %v4429, %v4430
  %v4432 = vrot.slane %v4431, 2
  %v4433 = vmax.f32 %v4431, %v4432
  %v4434 = vrot.slane %v4433, 1
  %v4435 = vmax.f32 %v4433, %v4434
  %v4436 = vsel %vm3714, %v2905, -inf
  %v4437 = vrot.slane %v4436, 4
  %v4438 = vmax.f32 %v4436, %v4437
  %v4439 = vrot.slane %v4438, 2
  %v4440 = vmax.f32 %v4438, %v4439
  %v4441 = vrot.slane %v4440, 1
  %v4442 = vmax.f32 %v4440, %v4441
  %v4443 = vsel %vm3714, %v2904, -inf
  %v4444 = vrot.slane %v4443, 4
  %v4445 = vmax.f32 %v4443, %v4444
  %v4446 = vrot.slane %v4445, 2
  %v4447 = vmax.f32 %v4445, %v4446
  %v4448 = vrot.slane %v4447, 1
  %v4449 = vmax.f32 %v4447, %v4448
  %v4450 = vsel %vm3714, %v2906, -inf
  %v4451 = vrot.slane %v4450, 4
  %v4452 = vmax.f32 %v4450, %v4451
  %v4453 = vrot.slane %v4452, 2
  %v4454 = vmax.f32 %v4452, %v4453
  %v4455 = vrot.slane %v4454, 1
  %v4456 = vmax.f32 %v4454, %v4455
  %v4457 = vsel %vm3714, %v2914, -inf
  %v4458 = vrot.slane %v4457, 4
  %v4459 = vmax.f32 %v4457, %v4458
  %v4460 = vrot.slane %v4459, 2
  %v4461 = vmax.f32 %v4459, %v4460
  %v4462 = vrot.slane %v4461, 1
  %v4463 = vmax.f32 %v4461, %v4462
  %v4464 = vsel %vm3714, %v2922, -inf
  %v4465 = vrot.slane %v4464, 4
  %v4466 = vmax.f32 %v4464, %v4465
  %v4467 = vrot.slane %v4466, 2
  %v4468 = vmax.f32 %v4466, %v4467
  %v4469 = vrot.slane %v4468, 1
  %v4470 = vmax.f32 %v4468, %v4469
  %v4471 = vsel %vm3714, %v2921, -inf
  %v4472 = vrot.slane %v4471, 4
  %v4473 = vmax.f32 %v4471, %v4472
  %v4474 = vrot.slane %v4473, 2
  %v4475 = vmax.f32 %v4473, %v4474
  %v4476 = vrot.slane %v4475, 1
  %v4477 = vmax.f32 %v4475, %v4476
  %v4478 = vsel %vm3714, %v2923, -inf
  %v4479 = vrot.slane %v4478, 4
  %v4480 = vmax.f32 %v4478, %v4479
  %v4481 = vrot.slane %v4480, 2
  %v4482 = vmax.f32 %v4480, %v4481
  %v4483 = vrot.slane %v4482, 1
  %v4484 = vmax.f32 %v4482, %v4483
  %v4485 = vsel %vm3714, %v2931, -inf
  %v4486 = vrot.slane %v4485, 4
  %v4487 = vmax.f32 %v4485, %v4486
  %v4488 = vrot.slane %v4487, 2
  %v4489 = vmax.f32 %v4487, %v4488
  %v4490 = vrot.slane %v4489, 1
  %v4491 = vmax.f32 %v4489, %v4490
  %v4492 = vsel %vm3714, %v2939, -inf
  %v4493 = vrot.slane %v4492, 4
  %v4494 = vmax.f32 %v4492, %v4493
  %v4495 = vrot.slane %v4494, 2
  %v4496 = vmax.f32 %v4494, %v4495
  %v4497 = vrot.slane %v4496, 1
  %v4498 = vmax.f32 %v4496, %v4497
  %v4499 = vsel %vm3714, %v2938, -inf
  %v4500 = vrot.slane %v4499, 4
  %v4501 = vmax.f32 %v4499, %v4500
  %v4502 = vrot.slane %v4501, 2
  %v4503 = vmax.f32 %v4501, %v4502
  %v4504 = vrot.slane %v4503, 1
  %v4505 = vmax.f32 %v4503, %v4504
  %v4506 = vsel %vm3714, %v2940, -inf
  %v4507 = vrot.slane %v4506, 4
  %v4508 = vmax.f32 %v4506, %v4507
  %v4509 = vrot.slane %v4508, 2
  %v4510 = vmax.f32 %v4508, %v4509
  %v4511 = vrot.slane %v4510, 1
  %v4512 = vmax.f32 %v4510, %v4511
  %v4513 = vsel %vm3714, %v2948, -inf
  %v4514 = vrot.slane %v4513, 4
  %v4515 = vmax.f32 %v4513, %v4514
  %v4516 = vrot.slane %v4515, 2
  %v4517 = vmax.f32 %v4515, %v4516
  %v4518 = vrot.slane %v4517, 1
  %v4519 = vmax.f32 %v4517, %v4518
  %v4520 = vsel %vm3714, %v2956, -inf
  %v4521 = vrot.slane %v4520, 4
  %v4522 = vmax.f32 %v4520, %v4521
  %v4523 = vrot.slane %v4522, 2
  %v4524 = vmax.f32 %v4522, %v4523
  %v4525 = vrot.slane %v4524, 1
  %v4526 = vmax.f32 %v4524, %v4525
  %v4527 = vsel %vm3714, %v2955, -inf
  %v4528 = vrot.slane %v4527, 4
  %v4529 = vmax.f32 %v4527, %v4528
  %v4530 = vrot.slane %v4529, 2
  %v4531 = vmax.f32 %v4529, %v4530
  %v4532 = vrot.slane %v4531, 1
  %v4533 = vmax.f32 %v4531, %v4532
  %v4534 = vsel %vm3714, %v2957, -inf
  %v4535 = vrot.slane %v4534, 4
  %v4536 = vmax.f32 %v4534, %v4535
  %v4537 = vrot.slane %v4536, 2
  %v4538 = vmax.f32 %v4536, %v4537
  %v4539 = vrot.slane %v4538, 1
  %v4540 = vmax.f32 %v4538, %v4539
  %v4541 = vsel %vm3714, %v2964, -inf
  %v4542 = vrot.slane %v4541, 4
  %v4543 = vmax.f32 %v4541, %v4542
  %v4544 = vrot.slane %v4543, 2
  %v4545 = vmax.f32 %v4543, %v4544
  %v4546 = vrot.slane %v4545, 1
  %v4547 = vmax.f32 %v4545, %v4546
  %v4548 = vsel %vm3714, %v2965, -inf
  %v4549 = vrot.slane %v4548, 4
  %v4550 = vmax.f32 %v4548, %v4549
  %v4551 = vrot.slane %v4550, 2
  %v4552 = vmax.f32 %v4550, %v4551
  %v4553 = vrot.slane %v4552, 1
  %v4554 = vmax.f32 %v4552, %v4553
  %v4555 = vsel %vm3714, %v2973, -inf
  %v4556 = vrot.slane %v4555, 4
  %v4557 = vmax.f32 %v4555, %v4556
  %v4558 = vrot.slane %v4557, 2
  %v4559 = vmax.f32 %v4557, %v4558
  %v4560 = vrot.slane %v4559, 1
  %v4561 = vmax.f32 %v4559, %v4560
  %v4562 = vsel %vm3714, %v2981, -inf
  %v4563 = vrot.slane %v4562, 4
  %v4564 = vmax.f32 %v4562, %v4563
  %v4565 = vrot.slane %v4564, 2
  %v4566 = vmax.f32 %v4564, %v4565
  %v4567 = vrot.slane %v4566, 1
  %v4568 = vmax.f32 %v4566, %v4567
  %v4569 = vsel %vm3714, %v2980, -inf
  %v4570 = vrot.slane %v4569, 4
  %v4571 = vmax.f32 %v4569, %v4570
  %v4572 = vrot.slane %v4571, 2
  %v4573 = vmax.f32 %v4571, %v4572
  %v4574 = vrot.slane %v4573, 1
  %v4575 = vmax.f32 %v4573, %v4574
  %v4576 = vsel %vm3714, %v2982, -inf
  %v4577 = vrot.slane %v4576, 4
  %v4578 = vmax.f32 %v4576, %v4577
  %v4579 = vrot.slane %v4578, 2
  %v4580 = vmax.f32 %v4578, %v4579
  %v4581 = vrot.slane %v4580, 1
  %v4582 = vmax.f32 %v4580, %v4581
  %v4583 = vsel %vm3714, %v2990, -inf
  %v4584 = vrot.slane %v4583, 4
  %v4585 = vmax.f32 %v4583, %v4584
  %v4586 = vrot.slane %v4585, 2
  %v4587 = vmax.f32 %v4585, %v4586
  %v4588 = vrot.slane %v4587, 1
  %v4589 = vmax.f32 %v4587, %v4588
  %v4590 = vsel %vm3714, %v2998, -inf
  %v4591 = vrot.slane %v4590, 4
  %v4592 = vmax.f32 %v4590, %v4591
  %v4593 = vrot.slane %v4592, 2
  %v4594 = vmax.f32 %v4592, %v4593
  %v4595 = vrot.slane %v4594, 1
  %v4596 = vmax.f32 %v4594, %v4595
  %v4597 = vsel %vm3714, %v2997, -inf
  %v4598 = vrot.slane %v4597, 4
  %v4599 = vmax.f32 %v4597, %v4598
  %v4600 = vrot.slane %v4599, 2
  %v4601 = vmax.f32 %v4599, %v4600
  %v4602 = vrot.slane %v4601, 1
  %v4603 = vmax.f32 %v4601, %v4602
  %v4604 = vsel %vm3714, %v2999, -inf
  %v4605 = vrot.slane %v4604, 4
  %v4606 = vmax.f32 %v4604, %v4605
  %v4607 = vrot.slane %v4606, 2
  %v4608 = vmax.f32 %v4606, %v4607
  %v4609 = vrot.slane %v4608, 1
  %v4610 = vmax.f32 %v4608, %v4609
  %v4611 = vsel %vm3714, %v3007, -inf
  %v4612 = vrot.slane %v4611, 4
  %v4613 = vmax.f32 %v4611, %v4612
  %v4614 = vrot.slane %v4613, 2
  %v4615 = vmax.f32 %v4613, %v4614
  %v4616 = vrot.slane %v4615, 1
  %v4617 = vmax.f32 %v4615, %v4616
  %v4618 = vsel %vm3714, %v3015, -inf
  %v4619 = vrot.slane %v4618, 4
  %v4620 = vmax.f32 %v4618, %v4619
  %v4621 = vrot.slane %v4620, 2
  %v4622 = vmax.f32 %v4620, %v4621
  %v4623 = vrot.slane %v4622, 1
  %v4624 = vmax.f32 %v4622, %v4623
  %v4625 = vsel %vm3714, %v3014, -inf
  %v4626 = vrot.slane %v4625, 4
  %v4627 = vmax.f32 %v4625, %v4626
  %v4628 = vrot.slane %v4627, 2
  %v4629 = vmax.f32 %v4627, %v4628
  %v4630 = vrot.slane %v4629, 1
  %v4631 = vmax.f32 %v4629, %v4630
  %v4632 = vsel %vm3714, %v3016, -inf
  %v4633 = vrot.slane %v4632, 4
  %v4634 = vmax.f32 %v4632, %v4633
  %v4635 = vrot.slane %v4634, 2
  %v4636 = vmax.f32 %v4634, %v4635
  %v4637 = vrot.slane %v4636, 1
  %v4638 = vmax.f32 %v4636, %v4637
  %v4639 = vsel %vm3714, %v3024, -inf
  %v4640 = vrot.slane %v4639, 4
  %v4641 = vmax.f32 %v4639, %v4640
  %v4642 = vrot.slane %v4641, 2
  %v4643 = vmax.f32 %v4641, %v4642
  %v4644 = vrot.slane %v4643, 1
  %v4645 = vmax.f32 %v4643, %v4644
  %v4646 = vsel %vm3714, %v3032, -inf
  %v4647 = vrot.slane %v4646, 4
  %v4648 = vmax.f32 %v4646, %v4647
  %v4649 = vrot.slane %v4648, 2
  %v4650 = vmax.f32 %v4648, %v4649
  %v4651 = vrot.slane %v4650, 1
  %v4652 = vmax.f32 %v4650, %v4651
  %v4653 = vsel %vm3714, %v3031, -inf
  %v4654 = vrot.slane %v4653, 4
  %v4655 = vmax.f32 %v4653, %v4654
  %v4656 = vrot.slane %v4655, 2
  %v4657 = vmax.f32 %v4655, %v4656
  %v4658 = vrot.slane %v4657, 1
  %v4659 = vmax.f32 %v4657, %v4658
  %v4660 = vsel %vm3714, %v3033, -inf
  %v4661 = vrot.slane %v4660, 4
  %v4662 = vmax.f32 %v4660, %v4661
  %v4663 = vrot.slane %v4662, 2
  %v4664 = vmax.f32 %v4662, %v4663
  %v4665 = vrot.slane %v4664, 1
  %v4666 = vmax.f32 %v4664, %v4665
  %v4667 = vsel %vm3714, %v3041, -inf
  %v4668 = vrot.slane %v4667, 4
  %v4669 = vmax.f32 %v4667, %v4668
  %v4670 = vrot.slane %v4669, 2
  %v4671 = vmax.f32 %v4669, %v4670
  %v4672 = vrot.slane %v4671, 1
  %v4673 = vmax.f32 %v4671, %v4672
  %v4674 = vsel %vm3714, %v3049, -inf
  %v4675 = vrot.slane %v4674, 4
  %v4676 = vmax.f32 %v4674, %v4675
  %v4677 = vrot.slane %v4676, 2
  %v4678 = vmax.f32 %v4676, %v4677
  %v4679 = vrot.slane %v4678, 1
  %v4680 = vmax.f32 %v4678, %v4679
  %v4681 = vsel %vm3714, %v3048, -inf
  %v4682 = vrot.slane %v4681, 4
  %v4683 = vmax.f32 %v4681, %v4682
  %v4684 = vrot.slane %v4683, 2
  %v4685 = vmax.f32 %v4683, %v4684
  %v4686 = vrot.slane %v4685, 1
  %v4687 = vmax.f32 %v4685, %v4686
  %v4688 = vsel %vm3714, %v3050, -inf
  %v4689 = vrot.slane %v4688, 4
  %v4690 = vmax.f32 %v4688, %v4689
  %v4691 = vrot.slane %v4690, 2
  %v4692 = vmax.f32 %v4690, %v4691
  %v4693 = vrot.slane %v4692, 1
  %v4694 = vmax.f32 %v4692, %v4693
  %v4695 = vsel %vm3714, %v3058, -inf
  %v4696 = vrot.slane %v4695, 4
  %v4697 = vmax.f32 %v4695, %v4696
  %v4698 = vrot.slane %v4697, 2
  %v4699 = vmax.f32 %v4697, %v4698
  %v4700 = vrot.slane %v4699, 1
  %v4701 = vmax.f32 %v4699, %v4700
  %v4702 = vsel %vm3714, %v3066, -inf
  %v4703 = vrot.slane %v4702, 4
  %v4704 = vmax.f32 %v4702, %v4703
  %v4705 = vrot.slane %v4704, 2
  %v4706 = vmax.f32 %v4704, %v4705
  %v4707 = vrot.slane %v4706, 1
  %v4708 = vmax.f32 %v4706, %v4707
  %v4709 = vsel %vm3714, %v3065, -inf
  %v4710 = vrot.slane %v4709, 4
  %v4711 = vmax.f32 %v4709, %v4710
  %v4712 = vrot.slane %v4711, 2
  %v4713 = vmax.f32 %v4711, %v4712
  %v4714 = vrot.slane %v4713, 1
  %v4715 = vmax.f32 %v4713, %v4714
  %v4716 = vsel %vm3714, %v3067, -inf
  %v4717 = vrot.slane %v4716, 4
  %v4718 = vmax.f32 %v4716, %v4717
  %v4719 = vrot.slane %v4718, 2
  %v4720 = vmax.f32 %v4718, %v4719
  %v4721 = vrot.slane %v4720, 1
  %v4722 = vmax.f32 %v4720, %v4721
  %v4723 = vsel %vm3714, %v3075, -inf
  %v4724 = vrot.slane %v4723, 4
  %v4725 = vmax.f32 %v4723, %v4724
  %v4726 = vrot.slane %v4725, 2
  %v4727 = vmax.f32 %v4725, %v4726
  %v4728 = vrot.slane %v4727, 1
  %v4729 = vmax.f32 %v4727, %v4728
  %v4730 = vsel %vm3714, %v3083, -inf
  %v4731 = vrot.slane %v4730, 4
  %v4732 = vmax.f32 %v4730, %v4731
  %v4733 = vrot.slane %v4732, 2
  %v4734 = vmax.f32 %v4732, %v4733
  %v4735 = vrot.slane %v4734, 1
  %v4736 = vmax.f32 %v4734, %v4735
  %v4737 = vsel %vm3714, %v3082, -inf
  %v4738 = vrot.slane %v4737, 4
  %v4739 = vmax.f32 %v4737, %v4738
  %v4740 = vrot.slane %v4739, 2
  %v4741 = vmax.f32 %v4739, %v4740
  %v4742 = vrot.slane %v4741, 1
  %v4743 = vmax.f32 %v4741, %v4742
  %v4744 = vsel %vm3714, %v3084, -inf
  %v4745 = vrot.slane %v4744, 4
  %v4746 = vmax.f32 %v4744, %v4745
  %v4747 = vrot.slane %v4746, 2
  %v4748 = vmax.f32 %v4746, %v4747
  %v4749 = vrot.slane %v4748, 1
  %v4750 = vmax.f32 %v4748, %v4749
  %v4751 = vsel %vm3714, %v3091, -inf
  %v4752 = vrot.slane %v4751, 4
  %v4753 = vmax.f32 %v4751, %v4752
  %v4754 = vrot.slane %v4753, 2
  %v4755 = vmax.f32 %v4753, %v4754
  %v4756 = vrot.slane %v4755, 1
  %v4757 = vmax.f32 %v4755, %v4756
  %v4758 = vsel %vm3714, %v3092, -inf
  %v4759 = vrot.slane %v4758, 4
  %v4760 = vmax.f32 %v4758, %v4759
  %v4761 = vrot.slane %v4760, 2
  %v4762 = vmax.f32 %v4760, %v4761
  %v4763 = vrot.slane %v4762, 1
  %v4764 = vmax.f32 %v4762, %v4763
  %v4765 = vsel %vm3714, %v3100, -inf
  %v4766 = vrot.slane %v4765, 4
  %v4767 = vmax.f32 %v4765, %v4766
  %v4768 = vrot.slane %v4767, 2
  %v4769 = vmax.f32 %v4767, %v4768
  %v4770 = vrot.slane %v4769, 1
  %v4771 = vmax.f32 %v4769, %v4770
  %v4772 = vsel %vm3714, %v3108, -inf
  %v4773 = vrot.slane %v4772, 4
  %v4774 = vmax.f32 %v4772, %v4773
  %v4775 = vrot.slane %v4774, 2
  %v4776 = vmax.f32 %v4774, %v4775
  %v4777 = vrot.slane %v4776, 1
  %v4778 = vmax.f32 %v4776, %v4777
  %v4779 = vsel %vm3714, %v3107, -inf
  %v4780 = vrot.slane %v4779, 4
  %v4781 = vmax.f32 %v4779, %v4780
  %v4782 = vrot.slane %v4781, 2
  %v4783 = vmax.f32 %v4781, %v4782
  %v4784 = vrot.slane %v4783, 1
  %v4785 = vmax.f32 %v4783, %v4784
  %v4786 = vsel %vm3714, %v3109, -inf
  %v4787 = vrot.slane %v4786, 4
  %v4788 = vmax.f32 %v4786, %v4787
  %v4789 = vrot.slane %v4788, 2
  %v4790 = vmax.f32 %v4788, %v4789
  %v4791 = vrot.slane %v4790, 1
  %v4792 = vmax.f32 %v4790, %v4791
  %v4793 = vsel %vm3714, %v3117, -inf
  %v4794 = vrot.slane %v4793, 4
  %v4795 = vmax.f32 %v4793, %v4794
  %v4796 = vrot.slane %v4795, 2
  %v4797 = vmax.f32 %v4795, %v4796
  %v4798 = vrot.slane %v4797, 1
  %v4799 = vmax.f32 %v4797, %v4798
  %v4800 = vsel %vm3714, %v3125, -inf
  %v4801 = vrot.slane %v4800, 4
  %v4802 = vmax.f32 %v4800, %v4801
  %v4803 = vrot.slane %v4802, 2
  %v4804 = vmax.f32 %v4802, %v4803
  %v4805 = vrot.slane %v4804, 1
  %v4806 = vmax.f32 %v4804, %v4805
  %v4807 = vsel %vm3714, %v3124, -inf
  %v4808 = vrot.slane %v4807, 4
  %v4809 = vmax.f32 %v4807, %v4808
  %v4810 = vrot.slane %v4809, 2
  %v4811 = vmax.f32 %v4809, %v4810
  %v4812 = vrot.slane %v4811, 1
  %v4813 = vmax.f32 %v4811, %v4812
  %v4814 = vsel %vm3714, %v3126, -inf
  %v4815 = vrot.slane %v4814, 4
  %v4816 = vmax.f32 %v4814, %v4815
  %v4817 = vrot.slane %v4816, 2
  %v4818 = vmax.f32 %v4816, %v4817
  %v4819 = vrot.slane %v4818, 1
  %v4820 = vmax.f32 %v4818, %v4819
  %v4821 = vsel %vm3714, %v3134, -inf
  %v4822 = vrot.slane %v4821, 4
  %v4823 = vmax.f32 %v4821, %v4822
  %v4824 = vrot.slane %v4823, 2
  %v4825 = vmax.f32 %v4823, %v4824
  %v4826 = vrot.slane %v4825, 1
  %v4827 = vmax.f32 %v4825, %v4826
  %v4828 = vsel %vm3714, %v3142, -inf
  %v4829 = vrot.slane %v4828, 4
  %v4830 = vmax.f32 %v4828, %v4829
  %v4831 = vrot.slane %v4830, 2
  %v4832 = vmax.f32 %v4830, %v4831
  %v4833 = vrot.slane %v4832, 1
  %v4834 = vmax.f32 %v4832, %v4833
  %v4835 = vsel %vm3714, %v3141, -inf
  %v4836 = vrot.slane %v4835, 4
  %v4837 = vmax.f32 %v4835, %v4836
  %v4838 = vrot.slane %v4837, 2
  %v4839 = vmax.f32 %v4837, %v4838
  %v4840 = vrot.slane %v4839, 1
  %v4841 = vmax.f32 %v4839, %v4840
  %v4842 = vsel %vm3714, %v3143, -inf
  %v4843 = vrot.slane %v4842, 4
  %v4844 = vmax.f32 %v4842, %v4843
  %v4845 = vrot.slane %v4844, 2
  %v4846 = vmax.f32 %v4844, %v4845
  %v4847 = vrot.slane %v4846, 1
  %v4848 = vmax.f32 %v4846, %v4847
  %v4849 = vsel %vm3714, %v3151, -inf
  %v4850 = vrot.slane %v4849, 4
  %v4851 = vmax.f32 %v4849, %v4850
  %v4852 = vrot.slane %v4851, 2
  %v4853 = vmax.f32 %v4851, %v4852
  %v4854 = vrot.slane %v4853, 1
  %v4855 = vmax.f32 %v4853, %v4854
  %v4856 = vsel %vm3714, %v3159, -inf
  %v4857 = vrot.slane %v4856, 4
  %v4858 = vmax.f32 %v4856, %v4857
  %v4859 = vrot.slane %v4858, 2
  %v4860 = vmax.f32 %v4858, %v4859
  %v4861 = vrot.slane %v4860, 1
  %v4862 = vmax.f32 %v4860, %v4861
  %v4863 = vsel %vm3714, %v3158, -inf
  %v4864 = vrot.slane %v4863, 4
  %v4865 = vmax.f32 %v4863, %v4864
  %v4866 = vrot.slane %v4865, 2
  %v4867 = vmax.f32 %v4865, %v4866
  %v4868 = vrot.slane %v4867, 1
  %v4869 = vmax.f32 %v4867, %v4868
  %v4870 = vsel %vm3714, %v3160, -inf
  %v4871 = vrot.slane %v4870, 4
  %v4872 = vmax.f32 %v4870, %v4871
  %v4873 = vrot.slane %v4872, 2
  %v4874 = vmax.f32 %v4872, %v4873
  %v4875 = vrot.slane %v4874, 1
  %v4876 = vmax.f32 %v4874, %v4875
  %v4877 = vsel %vm3714, %v3168, -inf
  %v4878 = vrot.slane %v4877, 4
  %v4879 = vmax.f32 %v4877, %v4878
  %v4880 = vrot.slane %v4879, 2
  %v4881 = vmax.f32 %v4879, %v4880
  %v4882 = vrot.slane %v4881, 1
  %v4883 = vmax.f32 %v4881, %v4882
  %v4884 = vsel %vm3714, %v3176, -inf
  %v4885 = vrot.slane %v4884, 4
  %v4886 = vmax.f32 %v4884, %v4885
  %v4887 = vrot.slane %v4886, 2
  %v4888 = vmax.f32 %v4886, %v4887
  %v4889 = vrot.slane %v4888, 1
  %v4890 = vmax.f32 %v4888, %v4889
  %v4891 = vsel %vm3714, %v3175, -inf
  %v4892 = vrot.slane %v4891, 4
  %v4893 = vmax.f32 %v4891, %v4892
  %v4894 = vrot.slane %v4893, 2
  %v4895 = vmax.f32 %v4893, %v4894
  %v4896 = vrot.slane %v4895, 1
  %v4897 = vmax.f32 %v4895, %v4896
  %v4898 = vsel %vm3714, %v3177, -inf
  %v4899 = vrot.slane %v4898, 4
  %v4900 = vmax.f32 %v4898, %v4899
  %v4901 = vrot.slane %v4900, 2
  %v4902 = vmax.f32 %v4900, %v4901
  %v4903 = vrot.slane %v4902, 1
  %v4904 = vmax.f32 %v4902, %v4903
  %v4905 = vsel %vm3714, %v3185, -inf
  %v4906 = vrot.slane %v4905, 4
  %v4907 = vmax.f32 %v4905, %v4906
  %v4908 = vrot.slane %v4907, 2
  %v4909 = vmax.f32 %v4907, %v4908
  %v4910 = vrot.slane %v4909, 1
  %v4911 = vmax.f32 %v4909, %v4910
  %v4912 = vsel %vm3714, %v3193, -inf
  %v4913 = vrot.slane %v4912, 4
  %v4914 = vmax.f32 %v4912, %v4913
  %v4915 = vrot.slane %v4914, 2
  %v4916 = vmax.f32 %v4914, %v4915
  %v4917 = vrot.slane %v4916, 1
  %v4918 = vmax.f32 %v4916, %v4917
  %v4919 = vsel %vm3714, %v3192, -inf
  %v4920 = vrot.slane %v4919, 4
  %v4921 = vmax.f32 %v4919, %v4920
  %v4922 = vrot.slane %v4921, 2
  %v4923 = vmax.f32 %v4921, %v4922
  %v4924 = vrot.slane %v4923, 1
  %v4925 = vmax.f32 %v4923, %v4924
  %v4926 = vsel %vm3714, %v3194, -inf
  %v4927 = vrot.slane %v4926, 4
  %v4928 = vmax.f32 %v4926, %v4927
  %v4929 = vrot.slane %v4928, 2
  %v4930 = vmax.f32 %v4928, %v4929
  %v4931 = vrot.slane %v4930, 1
  %v4932 = vmax.f32 %v4930, %v4931
  %v4933 = vsel %vm3714, %v3202, -inf
  %v4934 = vrot.slane %v4933, 4
  %v4935 = vmax.f32 %v4933, %v4934
  %v4936 = vrot.slane %v4935, 2
  %v4937 = vmax.f32 %v4935, %v4936
  %v4938 = vrot.slane %v4937, 1
  %v4939 = vmax.f32 %v4937, %v4938
  %v4940 = vsel %vm3714, %v3210, -inf
  %v4941 = vrot.slane %v4940, 4
  %v4942 = vmax.f32 %v4940, %v4941
  %v4943 = vrot.slane %v4942, 2
  %v4944 = vmax.f32 %v4942, %v4943
  %v4945 = vrot.slane %v4944, 1
  %v4946 = vmax.f32 %v4944, %v4945
  %v4947 = vsel %vm3714, %v3209, -inf
  %v4948 = vrot.slane %v4947, 4
  %v4949 = vmax.f32 %v4947, %v4948
  %v4950 = vrot.slane %v4949, 2
  %v4951 = vmax.f32 %v4949, %v4950
  %v4952 = vrot.slane %v4951, 1
  %v4953 = vmax.f32 %v4951, %v4952
  %v4954 = vsel %vm3714, %v3211, -inf
  %v4955 = vrot.slane %v4954, 4
  %v4956 = vmax.f32 %v4954, %v4955
  %v4957 = vrot.slane %v4956, 2
  %v4958 = vmax.f32 %v4956, %v4957
  %v4959 = vrot.slane %v4958, 1
  %v4960 = vmax.f32 %v4958, %v4959
  %v4961 = vsel %vm3714, %v3218, -inf
  %v4962 = vrot.slane %v4961, 4
  %v4963 = vmax.f32 %v4961, %v4962
  %v4964 = vrot.slane %v4963, 2
  %v4965 = vmax.f32 %v4963, %v4964
  %v4966 = vrot.slane %v4965, 1
  %v4967 = vmax.f32 %v4965, %v4966
  %v4968 = vsel %vm3714, %v3219, -inf
  %v4969 = vrot.slane %v4968, 4
  %v4970 = vmax.f32 %v4968, %v4969
  %v4971 = vrot.slane %v4970, 2
  %v4972 = vmax.f32 %v4970, %v4971
  %v4973 = vrot.slane %v4972, 1
  %v4974 = vmax.f32 %v4972, %v4973
  %v4975 = vsel %vm3714, %v3227, -inf
  %v4976 = vrot.slane %v4975, 4
  %v4977 = vmax.f32 %v4975, %v4976
  %v4978 = vrot.slane %v4977, 2
  %v4979 = vmax.f32 %v4977, %v4978
  %v4980 = vrot.slane %v4979, 1
  %v4981 = vmax.f32 %v4979, %v4980
  %v4982 = vsel %vm3714, %v3235, -inf
  %v4983 = vrot.slane %v4982, 4
  %v4984 = vmax.f32 %v4982, %v4983
  %v4985 = vrot.slane %v4984, 2
  %v4986 = vmax.f32 %v4984, %v4985
  %v4987 = vrot.slane %v4986, 1
  %v4988 = vmax.f32 %v4986, %v4987
  %v4989 = vsel %vm3714, %v3234, -inf
  %v4990 = vrot.slane %v4989, 4
  %v4991 = vmax.f32 %v4989, %v4990
  %v4992 = vrot.slane %v4991, 2
  %v4993 = vmax.f32 %v4991, %v4992
  %v4994 = vrot.slane %v4993, 1
  %v4995 = vmax.f32 %v4993, %v4994
  %v4996 = vsel %vm3714, %v3236, -inf
  %v4997 = vrot.slane %v4996, 4
  %v4998 = vmax.f32 %v4996, %v4997
  %v4999 = vrot.slane %v4998, 2
  %v5000 = vmax.f32 %v4998, %v4999
  %v5001 = vrot.slane %v5000, 1
  %v5002 = vmax.f32 %v5000, %v5001
  %v5003 = vsel %vm3714, %v3244, -inf
  %v5004 = vrot.slane %v5003, 4
  %v5005 = vmax.f32 %v5003, %v5004
  %v5006 = vrot.slane %v5005, 2
  %v5007 = vmax.f32 %v5005, %v5006
  %v5008 = vrot.slane %v5007, 1
  %v5009 = vmax.f32 %v5007, %v5008
  %v5010 = vsel %vm3714, %v3252, -inf
  %v5011 = vrot.slane %v5010, 4
  %v5012 = vmax.f32 %v5010, %v5011
  %v5013 = vrot.slane %v5012, 2
  %v5014 = vmax.f32 %v5012, %v5013
  %v5015 = vrot.slane %v5014, 1
  %v5016 = vmax.f32 %v5014, %v5015
  %v5017 = vsel %vm3714, %v3251, -inf
  %v5018 = vrot.slane %v5017, 4
  %v5019 = vmax.f32 %v5017, %v5018
  %v5020 = vrot.slane %v5019, 2
  %v5021 = vmax.f32 %v5019, %v5020
  %v5022 = vrot.slane %v5021, 1
  %v5023 = vmax.f32 %v5021, %v5022
  %v5024 = vsel %vm3714, %v3253, -inf
  %v5025 = vrot.slane %v5024, 4
  %v5026 = vmax.f32 %v5024, %v5025
  %v5027 = vrot.slane %v5026, 2
  %v5028 = vmax.f32 %v5026, %v5027
  %v5029 = vrot.slane %v5028, 1
  %v5030 = vmax.f32 %v5028, %v5029
  %v5031 = vsel %vm3714, %v3261, -inf
  %v5032 = vrot.slane %v5031, 4
  %v5033 = vmax.f32 %v5031, %v5032
  %v5034 = vrot.slane %v5033, 2
  %v5035 = vmax.f32 %v5033, %v5034
  %v5036 = vrot.slane %v5035, 1
  %v5037 = vmax.f32 %v5035, %v5036
  %v5038 = vsel %vm3714, %v3269, -inf
  %v5039 = vrot.slane %v5038, 4
  %v5040 = vmax.f32 %v5038, %v5039
  %v5041 = vrot.slane %v5040, 2
  %v5042 = vmax.f32 %v5040, %v5041
  %v5043 = vrot.slane %v5042, 1
  %v5044 = vmax.f32 %v5042, %v5043
  %v5045 = vsel %vm3714, %v3268, -inf
  %v5046 = vrot.slane %v5045, 4
  %v5047 = vmax.f32 %v5045, %v5046
  %v5048 = vrot.slane %v5047, 2
  %v5049 = vmax.f32 %v5047, %v5048
  %v5050 = vrot.slane %v5049, 1
  %v5051 = vmax.f32 %v5049, %v5050
  %v5052 = vsel %vm3714, %v3270, -inf
  %v5053 = vrot.slane %v5052, 4
  %v5054 = vmax.f32 %v5052, %v5053
  %v5055 = vrot.slane %v5054, 2
  %v5056 = vmax.f32 %v5054, %v5055
  %v5057 = vrot.slane %v5056, 1
  %v5058 = vmax.f32 %v5056, %v5057
  %v5059 = vsel %vm3714, %v3278, -inf
  %v5060 = vrot.slane %v5059, 4
  %v5061 = vmax.f32 %v5059, %v5060
  %v5062 = vrot.slane %v5061, 2
  %v5063 = vmax.f32 %v5061, %v5062
  %v5064 = vrot.slane %v5063, 1
  %v5065 = vmax.f32 %v5063, %v5064
  %v5066 = vsel %vm3714, %v3286, -inf
  %v5067 = vrot.slane %v5066, 4
  %v5068 = vmax.f32 %v5066, %v5067
  %v5069 = vrot.slane %v5068, 2
  %v5070 = vmax.f32 %v5068, %v5069
  %v5071 = vrot.slane %v5070, 1
  %v5072 = vmax.f32 %v5070, %v5071
  %v5073 = vsel %vm3714, %v3285, -inf
  %v5074 = vrot.slane %v5073, 4
  %v5075 = vmax.f32 %v5073, %v5074
  %v5076 = vrot.slane %v5075, 2
  %v5077 = vmax.f32 %v5075, %v5076
  %v5078 = vrot.slane %v5077, 1
  %v5079 = vmax.f32 %v5077, %v5078
  %v5080 = vsel %vm3714, %v3287, -inf
  %v5081 = vrot.slane %v5080, 4
  %v5082 = vmax.f32 %v5080, %v5081
  %v5083 = vrot.slane %v5082, 2
  %v5084 = vmax.f32 %v5082, %v5083
  %v5085 = vrot.slane %v5084, 1
  %v5086 = vmax.f32 %v5084, %v5085
  %v5087 = vsel %vm3714, %v3295, -inf
  %v5088 = vrot.slane %v5087, 4
  %v5089 = vmax.f32 %v5087, %v5088
  %v5090 = vrot.slane %v5089, 2
  %v5091 = vmax.f32 %v5089, %v5090
  %v5092 = vrot.slane %v5091, 1
  %v5093 = vmax.f32 %v5091, %v5092
  %v5094 = vsel %vm3714, %v3303, -inf
  %v5095 = vrot.slane %v5094, 4
  %v5096 = vmax.f32 %v5094, %v5095
  %v5097 = vrot.slane %v5096, 2
  %v5098 = vmax.f32 %v5096, %v5097
  %v5099 = vrot.slane %v5098, 1
  %v5100 = vmax.f32 %v5098, %v5099
  %v5101 = vsel %vm3714, %v3302, -inf
  %v5102 = vrot.slane %v5101, 4
  %v5103 = vmax.f32 %v5101, %v5102
  %v5104 = vrot.slane %v5103, 2
  %v5105 = vmax.f32 %v5103, %v5104
  %v5106 = vrot.slane %v5105, 1
  %v5107 = vmax.f32 %v5105, %v5106
  %v5108 = vsel %vm3714, %v3304, -inf
  %v5109 = vrot.slane %v5108, 4
  %v5110 = vmax.f32 %v5108, %v5109
  %v5111 = vrot.slane %v5110, 2
  %v5112 = vmax.f32 %v5110, %v5111
  %v5113 = vrot.slane %v5112, 1
  %v5114 = vmax.f32 %v5112, %v5113
  %v5115 = vsel %vm3714, %v3312, -inf
  %v5116 = vrot.slane %v5115, 4
  %v5117 = vmax.f32 %v5115, %v5116
  %v5118 = vrot.slane %v5117, 2
  %v5119 = vmax.f32 %v5117, %v5118
  %v5120 = vrot.slane %v5119, 1
  %v5121 = vmax.f32 %v5119, %v5120
  %v5122 = vsel %vm3714, %v3320, -inf
  %v5123 = vrot.slane %v5122, 4
  %v5124 = vmax.f32 %v5122, %v5123
  %v5125 = vrot.slane %v5124, 2
  %v5126 = vmax.f32 %v5124, %v5125
  %v5127 = vrot.slane %v5126, 1
  %v5128 = vmax.f32 %v5126, %v5127
  %v5129 = vsel %vm3714, %v3319, -inf
  %v5130 = vrot.slane %v5129, 4
  %v5131 = vmax.f32 %v5129, %v5130
  %v5132 = vrot.slane %v5131, 2
  %v5133 = vmax.f32 %v5131, %v5132
  %v5134 = vrot.slane %v5133, 1
  %v5135 = vmax.f32 %v5133, %v5134
  %v5136 = vsel %vm3714, %v3321, -inf
  %v5137 = vrot.slane %v5136, 4
  %v5138 = vmax.f32 %v5136, %v5137
  %v5139 = vrot.slane %v5138, 2
  %v5140 = vmax.f32 %v5138, %v5139
  %v5141 = vrot.slane %v5140, 1
  %v5142 = vmax.f32 %v5140, %v5141
  %v5143 = vsel %vm3714, %v3329, -inf
  %v5144 = vrot.slane %v5143, 4
  %v5145 = vmax.f32 %v5143, %v5144
  %v5146 = vrot.slane %v5145, 2
  %v5147 = vmax.f32 %v5145, %v5146
  %v5148 = vrot.slane %v5147, 1
  %v5149 = vmax.f32 %v5147, %v5148
  %v5150 = vsel %vm3714, %v3337, -inf
  %v5151 = vrot.slane %v5150, 4
  %v5152 = vmax.f32 %v5150, %v5151
  %v5153 = vrot.slane %v5152, 2
  %v5154 = vmax.f32 %v5152, %v5153
  %v5155 = vrot.slane %v5154, 1
  %v5156 = vmax.f32 %v5154, %v5155
  %v5157 = vsel %vm3714, %v3336, -inf
  %v5158 = vrot.slane %v5157, 4
  %v5159 = vmax.f32 %v5157, %v5158
  %v5160 = vrot.slane %v5159, 2
  %v5161 = vmax.f32 %v5159, %v5160
  %v5162 = vrot.slane %v5161, 1
  %v5163 = vmax.f32 %v5161, %v5162
  %v5164 = vsel %vm3714, %v3338, -inf
  %v5165 = vrot.slane %v5164, 4
  %v5166 = vmax.f32 %v5164, %v5165
  %v5167 = vrot.slane %v5166, 2
  %v5168 = vmax.f32 %v5166, %v5167
  %v5169 = vrot.slane %v5168, 1
  %v5170 = vmax.f32 %v5168, %v5169
  %v5171 = vsel %vm3714, %v3345, -inf
  %v5172 = vrot.slane %v5171, 4
  %v5173 = vmax.f32 %v5171, %v5172
  %v5174 = vrot.slane %v5173, 2
  %v5175 = vmax.f32 %v5173, %v5174
  %v5176 = vrot.slane %v5175, 1
  %v5177 = vmax.f32 %v5175, %v5176
  %v5178 = vsel %vm3714, %v3346, -inf
  %v5179 = vrot.slane %v5178, 4
  %v5180 = vmax.f32 %v5178, %v5179
  %v5181 = vrot.slane %v5180, 2
  %v5182 = vmax.f32 %v5180, %v5181
  %v5183 = vrot.slane %v5182, 1
  %v5184 = vmax.f32 %v5182, %v5183
  %v5185 = vsel %vm3714, %v3354, -inf
  %v5186 = vrot.slane %v5185, 4
  %v5187 = vmax.f32 %v5185, %v5186
  %v5188 = vrot.slane %v5187, 2
  %v5189 = vmax.f32 %v5187, %v5188
  %v5190 = vrot.slane %v5189, 1
  %v5191 = vmax.f32 %v5189, %v5190
  %v5192 = vsel %vm3714, %v3362, -inf
  %v5193 = vrot.slane %v5192, 4
  %v5194 = vmax.f32 %v5192, %v5193
  %v5195 = vrot.slane %v5194, 2
  %v5196 = vmax.f32 %v5194, %v5195
  %v5197 = vrot.slane %v5196, 1
  %v5198 = vmax.f32 %v5196, %v5197
  %v5199 = vsel %vm3714, %v3361, -inf
  %v5200 = vrot.slane %v5199, 4
  %v5201 = vmax.f32 %v5199, %v5200
  %v5202 = vrot.slane %v5201, 2
  %v5203 = vmax.f32 %v5201, %v5202
  %v5204 = vrot.slane %v5203, 1
  %v5205 = vmax.f32 %v5203, %v5204
  %v5206 = vsel %vm3714, %v3363, -inf
  %v5207 = vrot.slane %v5206, 4
  %v5208 = vmax.f32 %v5206, %v5207
  %v5209 = vrot.slane %v5208, 2
  %v5210 = vmax.f32 %v5208, %v5209
  %v5211 = vrot.slane %v5210, 1
  %v5212 = vmax.f32 %v5210, %v5211
  %v5213 = vsel %vm3714, %v3371, -inf
  %v5214 = vrot.slane %v5213, 4
  %v5215 = vmax.f32 %v5213, %v5214
  %v5216 = vrot.slane %v5215, 2
  %v5217 = vmax.f32 %v5215, %v5216
  %v5218 = vrot.slane %v5217, 1
  %v5219 = vmax.f32 %v5217, %v5218
  %v5220 = vsel %vm3714, %v3379, -inf
  %v5221 = vrot.slane %v5220, 4
  %v5222 = vmax.f32 %v5220, %v5221
  %v5223 = vrot.slane %v5222, 2
  %v5224 = vmax.f32 %v5222, %v5223
  %v5225 = vrot.slane %v5224, 1
  %v5226 = vmax.f32 %v5224, %v5225
  %v5227 = vsel %vm3714, %v3378, -inf
  %v5228 = vrot.slane %v5227, 4
  %v5229 = vmax.f32 %v5227, %v5228
  %v5230 = vrot.slane %v5229, 2
  %v5231 = vmax.f32 %v5229, %v5230
  %v5232 = vrot.slane %v5231, 1
  %v5233 = vmax.f32 %v5231, %v5232
  %v5234 = vsel %vm3714, %v3380, -inf
  %v5235 = vrot.slane %v5234, 4
  %v5236 = vmax.f32 %v5234, %v5235
  %v5237 = vrot.slane %v5236, 2
  %v5238 = vmax.f32 %v5236, %v5237
  %v5239 = vrot.slane %v5238, 1
  %v5240 = vmax.f32 %v5238, %v5239
  %v5241 = vsel %vm3714, %v3388, -inf
  %v5242 = vrot.slane %v5241, 4
  %v5243 = vmax.f32 %v5241, %v5242
  %v5244 = vrot.slane %v5243, 2
  %v5245 = vmax.f32 %v5243, %v5244
  %v5246 = vrot.slane %v5245, 1
  %v5247 = vmax.f32 %v5245, %v5246
  %v5248 = vsel %vm3714, %v3396, -inf
  %v5249 = vrot.slane %v5248, 4
  %v5250 = vmax.f32 %v5248, %v5249
  %v5251 = vrot.slane %v5250, 2
  %v5252 = vmax.f32 %v5250, %v5251
  %v5253 = vrot.slane %v5252, 1
  %v5254 = vmax.f32 %v5252, %v5253
  %v5255 = vsel %vm3714, %v3395, -inf
  %v5256 = vrot.slane %v5255, 4
  %v5257 = vmax.f32 %v5255, %v5256
  %v5258 = vrot.slane %v5257, 2
  %v5259 = vmax.f32 %v5257, %v5258
  %v5260 = vrot.slane %v5259, 1
  %v5261 = vmax.f32 %v5259, %v5260
  %v5262 = vsel %vm3714, %v3397, -inf
  %v5263 = vrot.slane %v5262, 4
  %v5264 = vmax.f32 %v5262, %v5263
  %v5265 = vrot.slane %v5264, 2
  %v5266 = vmax.f32 %v5264, %v5265
  %v5267 = vrot.slane %v5266, 1
  %v5268 = vmax.f32 %v5266, %v5267
  %v5269 = vsel %vm3714, %v3405, -inf
  %v5270 = vrot.slane %v5269, 4
  %v5271 = vmax.f32 %v5269, %v5270
  %v5272 = vrot.slane %v5271, 2
  %v5273 = vmax.f32 %v5271, %v5272
  %v5274 = vrot.slane %v5273, 1
  %v5275 = vmax.f32 %v5273, %v5274
  %v5276 = vsel %vm3714, %v3413, -inf
  %v5277 = vrot.slane %v5276, 4
  %v5278 = vmax.f32 %v5276, %v5277
  %v5279 = vrot.slane %v5278, 2
  %v5280 = vmax.f32 %v5278, %v5279
  %v5281 = vrot.slane %v5280, 1
  %v5282 = vmax.f32 %v5280, %v5281
  %v5283 = vsel %vm3714, %v3412, -inf
  %v5284 = vrot.slane %v5283, 4
  %v5285 = vmax.f32 %v5283, %v5284
  %v5286 = vrot.slane %v5285, 2
  %v5287 = vmax.f32 %v5285, %v5286
  %v5288 = vrot.slane %v5287, 1
  %v5289 = vmax.f32 %v5287, %v5288
  %v5290 = vsel %vm3714, %v3414, -inf
  %v5291 = vrot.slane %v5290, 4
  %v5292 = vmax.f32 %v5290, %v5291
  %v5293 = vrot.slane %v5292, 2
  %v5294 = vmax.f32 %v5292, %v5293
  %v5295 = vrot.slane %v5294, 1
  %v5296 = vmax.f32 %v5294, %v5295
  %v5297 = vsel %vm3714, %v3422, -inf
  %v5298 = vrot.slane %v5297, 4
  %v5299 = vmax.f32 %v5297, %v5298
  %v5300 = vrot.slane %v5299, 2
  %v5301 = vmax.f32 %v5299, %v5300
  %v5302 = vrot.slane %v5301, 1
  %v5303 = vmax.f32 %v5301, %v5302
  %v5304 = vsel %vm3714, %v3430, -inf
  %v5305 = vrot.slane %v5304, 4
  %v5306 = vmax.f32 %v5304, %v5305
  %v5307 = vrot.slane %v5306, 2
  %v5308 = vmax.f32 %v5306, %v5307
  %v5309 = vrot.slane %v5308, 1
  %v5310 = vmax.f32 %v5308, %v5309
  %v5311 = vsel %vm3714, %v3429, -inf
  %v5312 = vrot.slane %v5311, 4
  %v5313 = vmax.f32 %v5311, %v5312
  %v5314 = vrot.slane %v5313, 2
  %v5315 = vmax.f32 %v5313, %v5314
  %v5316 = vrot.slane %v5315, 1
  %v5317 = vmax.f32 %v5315, %v5316
  %v5318 = vsel %vm3714, %v3431, -inf
  %v5319 = vrot.slane %v5318, 4
  %v5320 = vmax.f32 %v5318, %v5319
  %v5321 = vrot.slane %v5320, 2
  %v5322 = vmax.f32 %v5320, %v5321
  %v5323 = vrot.slane %v5322, 1
  %v5324 = vmax.f32 %v5322, %v5323
  %v5325 = vsel %vm3714, %v3439, -inf
  %v5326 = vrot.slane %v5325, 4
  %v5327 = vmax.f32 %v5325, %v5326
  %v5328 = vrot.slane %v5327, 2
  %v5329 = vmax.f32 %v5327, %v5328
  %v5330 = vrot.slane %v5329, 1
  %v5331 = vmax.f32 %v5329, %v5330
  %v5332 = vsel %vm3714, %v3447, -inf
  %v5333 = vrot.slane %v5332, 4
  %v5334 = vmax.f32 %v5332, %v5333
  %v5335 = vrot.slane %v5334, 2
  %v5336 = vmax.f32 %v5334, %v5335
  %v5337 = vrot.slane %v5336, 1
  %v5338 = vmax.f32 %v5336, %v5337
  %v5339 = vsel %vm3714, %v3446, -inf
  %v5340 = vrot.slane %v5339, 4
  %v5341 = vmax.f32 %v5339, %v5340
  %v5342 = vrot.slane %v5341, 2
  %v5343 = vmax.f32 %v5341, %v5342
  %v5344 = vrot.slane %v5343, 1
  %v5345 = vmax.f32 %v5343, %v5344
  %v5346 = vsel %vm3714, %v3448, -inf
  %v5347 = vrot.slane %v5346, 4
  %v5348 = vmax.f32 %v5346, %v5347
  %v5349 = vrot.slane %v5348, 2
  %v5350 = vmax.f32 %v5348, %v5349
  %v5351 = vrot.slane %v5350, 1
  %v5352 = vmax.f32 %v5350, %v5351
  %v5353 = vsel %vm3714, %v3456, -inf
  %v5354 = vrot.slane %v5353, 4
  %v5355 = vmax.f32 %v5353, %v5354
  %v5356 = vrot.slane %v5355, 2
  %v5357 = vmax.f32 %v5355, %v5356
  %v5358 = vrot.slane %v5357, 1
  %v5359 = vmax.f32 %v5357, %v5358
  %v5360 = vsel %vm3714, %v3464, -inf
  %v5361 = vrot.slane %v5360, 4
  %v5362 = vmax.f32 %v5360, %v5361
  %v5363 = vrot.slane %v5362, 2
  %v5364 = vmax.f32 %v5362, %v5363
  %v5365 = vrot.slane %v5364, 1
  %v5366 = vmax.f32 %v5364, %v5365
  %v5367 = vsel %vm3714, %v3463, -inf
  %v5368 = vrot.slane %v5367, 4
  %v5369 = vmax.f32 %v5367, %v5368
  %v5370 = vrot.slane %v5369, 2
  %v5371 = vmax.f32 %v5369, %v5370
  %v5372 = vrot.slane %v5371, 1
  %v5373 = vmax.f32 %v5371, %v5372
  %v5374 = vsel %vm3714, %v3465, -inf
  %v5375 = vrot.slane %v5374, 4
  %v5376 = vmax.f32 %v5374, %v5375
  %v5377 = vrot.slane %v5376, 2
  %v5378 = vmax.f32 %v5376, %v5377
  %v5379 = vrot.slane %v5378, 1
  %v5380 = vmax.f32 %v5378, %v5379
  %v5381 = vsel %vm3714, %v3472, -inf
  %v5382 = vrot.slane %v5381, 4
  %v5383 = vmax.f32 %v5381, %v5382
  %v5384 = vrot.slane %v5383, 2
  %v5385 = vmax.f32 %v5383, %v5384
  %v5386 = vrot.slane %v5385, 1
  %v5387 = vmax.f32 %v5385, %v5386
  %v5388 = vsel %vm3714, %v3473, -inf
  %v5389 = vrot.slane %v5388, 4
  %v5390 = vmax.f32 %v5388, %v5389
  %v5391 = vrot.slane %v5390, 2
  %v5392 = vmax.f32 %v5390, %v5391
  %v5393 = vrot.slane %v5392, 1
  %v5394 = vmax.f32 %v5392, %v5393
  %v5395 = vld [vmem:[%s3] sm:$0xff]
  %v5396 = vld [vmem:[%s3 + $0x8] sm:$0xff]
  %v5397 = vld [vmem:[%s3 + $0x10] sm:$0xff]
  %v5398 = vld [vmem:[%s3 + $0x18] sm:$0xff]
  %vm5639 = vcmask 1041409
  %v5640 = vsel %vm5639, %v3728, %v3721
  %vm5641 = vcmask 1042434
  %v5642 = vsel %vm5641, %v3735, %v5640
  %vm5643 = vcmask 1043459
  %v5644 = vsel %vm5643, %v3742, %v5642
  %vm5645 = vcmask 1044484
  %v5646 = vsel %vm5645, %v3749, %v5644
  %vm5647 = vcmask 1045509
  %v5648 = vsel %vm5647, %v3756, %v5646
  %vm5649 = vcmask 1046534
  %v5650 = vsel %vm5649, %v3763, %v5648
  %vm5651 = vcmask 1047559
  %v5652 = vsel %vm5651, %v3770, %v5650
  %v5653 = vsel %vm5639, %v3784, %v3777
  %v5654 = vsel %vm5641, %v3791, %v5653
  %v5655 = vsel %vm5643, %v3798, %v5654
  %v5656 = vsel %vm5645, %v3805, %v5655
  %v5657 = vsel %vm5647, %v3812, %v5656
  %v5658 = vsel %vm5649, %v3819, %v5657
  %v5659 = vsel %vm5651, %v3826, %v5658
  %v5660 = vsel %vm5639, %v3840, %v3833
  %v5661 = vsel %vm5641, %v3847, %v5660
  %v5662 = vsel %vm5643, %v3854, %v5661
  %v5663 = vsel %vm5645, %v3861, %v5662
  %v5664 = vsel %vm5647, %v3868, %v5663
  %v5665 = vsel %vm5649, %v3875, %v5664
  %v5666 = vsel %vm5651, %v3882, %v5665
  %v5667 = vsel %vm5639, %v3896, %v3889
  %v5668 = vsel %vm5641, %v3903, %v5667
  %v5669 = vsel %vm5643, %v3910, %v5668
  %v5670 = vsel %vm5645, %v3917, %v5669
  %v5671 = vsel %vm5647, %v3924, %v5670
  %v5672 = vsel %vm5649, %v3931, %v5671
  %v5673 = vsel %vm5651, %v3938, %v5672
  %v5674 = vsel %vm5639, %v3952, %v3945
  %v5675 = vsel %vm5641, %v3959, %v5674
  %v5676 = vsel %vm5643, %v3966, %v5675
  %v5677 = vsel %vm5645, %v3973, %v5676
  %v5678 = vsel %vm5647, %v3980, %v5677
  %v5679 = vsel %vm5649, %v3987, %v5678
  %v5680 = vsel %vm5651, %v3994, %v5679
  %v5681 = vsel %vm5639, %v4008, %v4001
  %v5682 = vsel %vm5641, %v4015, %v5681
  %v5683 = vsel %vm5643, %v4022, %v5682
  %v5684 = vsel %vm5645, %v4029, %v5683
  %v5685 = vsel %vm5647, %v4036, %v5684
  %v5686 = vsel %vm5649, %v4043, %v5685
  %v5687 = vsel %vm5651, %v4050, %v5686
  %v5688 = vsel %vm5639, %v4064, %v4057
  %v5689 = vsel %vm5641, %v4071, %v5688
  %v5690 = vsel %vm5643, %v4078, %v5689
  %v5691 = vsel %vm5645, %v4085, %v5690
  %v5692 = vsel %vm5647, %v4092, %v5691
  %v5693 = vsel %vm5649, %v4099, %v5692
  %v5694 = vsel %vm5651, %v4106, %v5693
  %v5695 = vsel %vm5639, %v4120, %v4113
  %v5696 = vsel %vm5641, %v4127, %v5695
  %v5697 = vsel %vm5643, %v4134, %v5696
  %v5698 = vsel %vm5645, %v4141, %v5697
  %v5699 = vsel %vm5647, %v4148, %v5698
  %v5700 = vsel %vm5649, %v4155, %v5699
  %v5701 = vsel %vm5651, %v4162, %v5700
  %v5702 = vsel %vm5639, %v4176, %v4169
  %v5703 = vsel %vm5641, %v4183, %v5702
  %v5704 = vsel %vm5643, %v4190, %v5703
  %v5705 = vsel %vm5645, %v4197, %v5704
  %v5706 = vsel %vm5647, %v4204, %v5705
  %v5707 = vsel %vm5649, %v4211, %v5706
  %v5708 = vsel %vm5651, %v4218, %v5707
  %v5709 = vsel %vm5639, %v4232, %v4225
  %v5710 = vsel %vm5641, %v4239, %v5709
  %v5711 = vsel %vm5643, %v4246, %v5710
  %v5712 = vsel %vm5645, %v4253, %v5711
  %v5713 = vsel %vm5647, %v4260, %v5712
  %v5714 = vsel %vm5649, %v4267, %v5713
  %v5715 = vsel %vm5651, %v4274, %v5714
  %v5716 = vsel %vm5639, %v4288, %v4281
  %v5717 = vsel %vm5641, %v4295, %v5716
  %v5718 = vsel %vm5643, %v4302, %v5717
  %v5719 = vsel %vm5645, %v4309, %v5718
  %v5720 = vsel %vm5647, %v4316, %v5719
  %v5721 = vsel %vm5649, %v4323, %v5720
  %v5722 = vsel %vm5651, %v4330, %v5721
  %v5723 = vsel %vm5639, %v4344, %v4337
  %v5724 = vsel %vm5641, %v4351, %v5723
  %v5725 = vsel %vm5643, %v4358, %v5724
  %v5726 = vsel %vm5645, %v4365, %v5725
  %v5727 = vsel %vm5647, %v4372, %v5726
  %v5728 = vsel %vm5649, %v4379, %v5727
  %v5729 = vsel %vm5651, %v4386, %v5728
  %v5730 = vsel %vm5639, %v4400, %v4393
  %v5731 = vsel %vm5641, %v4407, %v5730
  %v5732 = vsel %vm5643, %v4414, %v5731
  %v5733 = vsel %vm5645, %v4421, %v5732
  %v5734 = vsel %vm5647, %v4428, %v5733
  %v5735 = vsel %vm5649, %v4435, %v5734
  %v5736 = vsel %vm5651, %v4442, %v5735
  %v5737 = vsel %vm5639, %v4456, %v4449
  %v5738 = vsel %vm5641, %v4463, %v5737
  %v5739 = vsel %vm5643, %v4470, %v5738
  %v5740 = vsel %vm5645, %v4477, %v5739
  %v5741 = vsel %vm5647, %v4484, %v5740
  %v5742 = vsel %vm5649, %v4491, %v5741
  %v5743 = vsel %vm5651, %v4498, %v5742
  %v5744 = vsel %vm5639, %v4512, %v4505
  %v5745 = vsel %vm5641, %v4519, %v5744
  %v5746 = vsel %vm5643, %v4526, %v5745
  %v5747 = vsel %vm5645, %v4533, %v5746
  %v5748 = vsel %vm5647, %v4540, %v5747
  %v5749 = vsel %vm5649, %v4547, %v5748
  %v5750 = vsel %vm5651, %v4554, %v5749
  %v5751 = vsel %vm5639, %v4568, %v4561
  %v5752 = vsel %vm5641, %v4575, %v5751
  %v5753 = vsel %vm5643, %v4582, %v5752
  %v5754 = vsel %vm5645, %v4589, %v5753
  %v5755 = vsel %vm5647, %v4596, %v5754
  %v5756 = vsel %vm5649, %v4603, %v5755
  %v5757 = vsel %vm5651, %v4610, %v5756
  %v5758 = vsel %vm5639, %v4624, %v4617
  %v5759 = vsel %vm5641, %v4631, %v5758
  %v5760 = vsel %vm5643, %v4638, %v5759
  %v5761 = vsel %vm5645, %v4645, %v5760
  %v5762 = vsel %vm5647, %v4652, %v5761
  %v5763 = vsel %vm5649, %v4659, %v5762
  %v5764 = vsel %vm5651, %v4666, %v5763
  %v5765 = vsel %vm5639, %v4680, %v4673
  %v5766 = vsel %vm5641, %v4687, %v5765
  %v5767 = vsel %vm5643, %v4694, %v5766
  %v5768 = vsel %vm5645, %v4701, %v5767
  %v5769 = vsel %vm5647, %v4708, %v5768
  %v5770 = vsel %vm5649, %v4715, %v5769
  %v5771 = vsel %vm5651, %v4722, %v5770
  %v5772 = vsel %vm5639, %v4736, %v4729
  %v5773 = vsel %vm5641, %v4743, %v5772
  %v5774 = vsel %vm5643, %v4750, %v5773
  %v5775 = vsel %vm5645, %v4757, %v5774
  %v5776 = vsel %vm5647, %v4764, %v5775
  %v5777 = vsel %vm5649, %v4771, %v5776
  %v5778 = vsel %vm5651, %v4778, %v5777
  %v5779 = vsel %vm5639, %v4792, %v4785
  %v5780 = vsel %vm5641, %v4799, %v5779
  %v5781 = vsel %vm5643, %v4806, %v5780
  %v5782 = vsel %vm5645, %v4813, %v5781
  %v5783 = vsel %vm5647, %v4820, %v5782
  %v5784 = vsel %vm5649, %v4827, %v5783
  %v5785 = vsel %vm5651, %v4834, %v5784
  %v5786 = vsel %vm5639, %v4848, %v4841
  %v5787 = vsel %vm5641, %v4855, %v5786
  %v5788 = vsel %vm5643, %v4862, %v5787
  %v5789 = vsel %vm5645, %v4869, %v5788
  %v5790 = vsel %vm5647, %v4876, %v5789
  %v5791 = vsel %vm5649, %v4883, %v5790
  %v5792 = vsel %vm5651, %v4890, %v5791
  %v5793 = vsel %vm5639, %v4904, %v4897
  %v5794 = vsel %vm5641, %v4911, %v5793
  %v5795 = vsel %vm5643, %v4918, %v5794
  %v5796 = vsel %vm5645, %v4925, %v5795
  %v5797 = vsel %vm5647, %v4932, %v5796
  %v5798 = vsel %vm5649, %v4939, %v5797
  %v5799 = vsel %vm5651, %v4946, %v5798
  %v5800 = vsel %vm5639, %v4960, %v4953
  %v5801 = vsel %vm5641, %v4967, %v5800
  %v5802 = vsel %vm5643, %v4974, %v5801
  %v5803 = vsel %vm5645, %v4981, %v5802
  %v5804 = vsel %vm5647, %v4988, %v5803
  %v5805 = vsel %vm5649, %v4995, %v5804
  %v5806 = vsel %vm5651, %v5002, %v5805
  %v5807 = vsel %vm5639, %v5016, %v5009
  %v5808 = vsel %vm5641, %v5023, %v5807
  %v5809 = vsel %vm5643, %v5030, %v5808
  %v5810 = vsel %vm5645, %v5037, %v5809
  %v5811 = vsel %vm5647, %v5044, %v5810
  %v5812 = vsel %vm5649, %v5051, %v5811
  %v5813 = vsel %vm5651, %v5058, %v5812
  %v5814 = vsel %vm5639, %v5072, %v5065
  %v5815 = vsel %vm5641, %v5079, %v5814
  %v5816 = vsel %vm5643, %v5086, %v5815
  %v5817 = vsel %vm5645, %v5093, %v5816
  %v5818 = vsel %vm5647, %v5100, %v5817
  %v5819 = vsel %vm5649, %v5107, %v5818
  %v5820 = vsel %vm5651, %v5114, %v5819
  %v5821 = vsel %vm5639, %v5128, %v5121
  %v5822 = vsel %vm5641, %v5135, %v5821
  %v5823 = vsel %vm5643, %v5142, %v5822
  %v5824 = vsel %vm5645, %v5149, %v5823
  %v5825 = vsel %vm5647, %v5156, %v5824
  %v5826 = vsel %vm5649, %v5163, %v5825
  %v5827 = vsel %vm5651, %v5170, %v5826
  %v5828 = vsel %vm5639, %v5184, %v5177
  %v5829 = vsel %vm5641, %v5191, %v5828
  %v5830 = vsel %vm5643, %v5198, %v5829
  %v5831 = vsel %vm5645, %v5205, %v5830
  %v5832 = vsel %vm5647, %v5212, %v5831
  %v5833 = vsel %vm5649, %v5219, %v5832
  %v5834 = vsel %vm5651, %v5226, %v5833
  %v5835 = vsel %vm5639, %v5240, %v5233
  %v5836 = vsel %vm5641, %v5247, %v5835
  %v5837 = vsel %vm5643, %v5254, %v5836
  %v5838 = vsel %vm5645, %v5261, %v5837
  %v5839 = vsel %vm5647, %v5268, %v5838
  %v5840 = vsel %vm5649, %v5275, %v5839
  %v5841 = vsel %vm5651, %v5282, %v5840
  %v5842 = vsel %vm5639, %v5296, %v5289
  %v5843 = vsel %vm5641, %v5303, %v5842
  %v5844 = vsel %vm5643, %v5310, %v5843
  %v5845 = vsel %vm5645, %v5317, %v5844
  %v5846 = vsel %vm5647, %v5324, %v5845
  %v5847 = vsel %vm5649, %v5331, %v5846
  %v5848 = vsel %vm5651, %v5338, %v5847
  %v5849 = vsel %vm5639, %v5352, %v5345
  %v5850 = vsel %vm5641, %v5359, %v5849
  %v5851 = vsel %vm5643, %v5366, %v5850
  %v5852 = vsel %vm5645, %v5373, %v5851
  %v5853 = vsel %vm5647, %v5380, %v5852
  %v5854 = vsel %vm5649, %v5387, %v5853
  %v5855 = vsel %vm5651, %v5394, %v5854
  %vm5856 = vcmask 130048
  %v5857 = vsel %vm5856, %v5652, 0
  %v5859 = vsel %vm5856, %v5659, 0
  %v5861 = vsel %vm5856, %v5666, 0
  %v5863 = vsel %vm5856, %v5673, 0
  %v5865 = vsel %vm5856, %v5680, 0
  %v5867 = vsel %vm5856, %v5687, 0
  %v5869 = vsel %vm5856, %v5694, 0
  %v5871 = vsel %vm5856, %v5701, 0
  %v5873 = vsel %vm5856, %v5708, 0
  %v5875 = vsel %vm5856, %v5715, 0
  %v5877 = vsel %vm5856, %v5722, 0
  %v5879 = vsel %vm5856, %v5729, 0
  %v5881 = vsel %vm5856, %v5736, 0
  %v5883 = vsel %vm5856, %v5743, 0
  %v5885 = vsel %vm5856, %v5750, 0
  %v5887 = vsel %vm5856, %v5757, 0
  %v5889 = vsel %vm5856, %v5764, 0
  %v5891 = vsel %vm5856, %v5771, 0
  %v5893 = vsel %vm5856, %v5778, 0
  %v5895 = vsel %vm5856, %v5785, 0
  %v5897 = vsel %vm5856, %v5792, 0
  %v5899 = vsel %vm5856, %v5799, 0
  %v5901 = vsel %vm5856, %v5806, 0
  %v5903 = vsel %vm5856, %v5813, 0
  %v5905 = vsel %vm5856, %v5820, 0
  %v5907 = vsel %vm5856, %v5827, 0
  %v5909 = vsel %vm5856, %v5834, 0
  %v5911 = vsel %vm5856, %v5841, 0
  %v5913 = vsel %vm5856, %v5848, 0
  %v5915 = vsel %vm5856, %v5855, 0
  %5917 = vmatprep.subr.mxu0 0.0
  %5918 = vmatpush1.msra.mxu0 0.0
  %5919 = vmatprep.subr.mxu0 0.0
  %5920 = vmatpush1.msra.mxu0 0.0
  %5921 = vmatprep.subr.mxu0 0.0
  %5922 = vmatpush1.msra.mxu0 0.0
  %5923 = vmatprep.subr.mxu0 0.0
  %5924 = vmatpush1.msra.mxu0 0.0
  %5925 = vmatprep.subr.mxu0 0.0
  %5926 = vmatpush1.msra.mxu0 0.0
  %5927 = vmatprep.subr.mxu0 0.0
  %5928 = vmatpush1.msra.mxu0 0.0
  %5929 = vmatprep.subr.mxu0 0.0
  %5930 = vmatpush1.msra.mxu0 0.0
  %5931 = vmatprep.subr.mxu0 0.0
  %5932 = vmatpush1.msra.mxu0 0.0
  %5933 = vmatprep.subr.mxu0 0.0
  %5934 = vmatpush1.msra.mxu0 0.0
  %5935 = vmatprep.subr.mxu0 0.0
  %5936 = vmatpush1.msra.mxu0 0.0
  %5937 = vmatprep.subr.mxu0 0.0
  %5938 = vmatpush1.msra.mxu0 0.0
  %5939 = vmatprep.subr.mxu0 0.0
  %5940 = vmatpush1.msra.mxu0 0.0
  %5941 = vmatprep.subr.mxu0 0.0
  %5942 = vmatpush1.msra.mxu0 0.0
  %5943 = vmatprep.subr.mxu0 0.0
  %5944 = vmatpush1.msra.mxu0 0.0
  %5945 = vmatprep.subr.mxu0 %v5398
  %5946 = vmatpush1.msra.mxu0 %v5397
  %5947 = vmatprep.subr.mxu0 %v5396
  %5948 = vmatpush1.msra.mxu0 %v5395
  %5949 = vmatprep.subr.mxu0 0.0
  %5950 = vmatpush2.msra.mxu0 0.0
  %5951 = vmatprep.subr.mxu0 0.0
  %5952 = vmatpush2.msra.mxu0 0.0
  %5953 = vmatprep.subr.mxu0 0.0
  %5954 = vmatpush2.msra.mxu0 0.0
  %5955 = vmatprep.subr.mxu0 0.0
  %5956 = vmatpush2.msra.mxu0 0.0
  %5957 = vmatprep.subr.mxu0 0.0
  %5958 = vmatpush2.msra.mxu0 0.0
  %5959 = vmatprep.subr.mxu0 0.0
  %5960 = vmatpush2.msra.mxu0 0.0
  %5961 = vmatprep.subr.mxu0 0.0
  %5962 = vmatpush2.msra.mxu0 0.0
  %5963 = vmatprep.subr.mxu0 0.0
  %5964 = vmatpush2.msra.mxu0 0.0
  %5965 = vmatprep.subr.mxu0 0.0
  %5966 = vmatpush2.msra.mxu0 0.0
  %5967 = vmatprep.subr.mxu0 0.0
  %5968 = vmatpush2.msra.mxu0 0.0
  %5969 = vmatprep.subr.mxu0 0.0
  %5970 = vmatpush2.msra.mxu0 0.0
  %5971 = vmatprep.subr.mxu0 0.0
  %5972 = vmatpush2.msra.mxu0 0.0
  %5973 = vmatprep.subr.mxu0 0.0
  %5974 = vmatpush2.msra.mxu0 0.0
  %5975 = vmatprep.subr.mxu0 0.0
  %5976 = vmatpush2.msra.mxu0 0.0
  %5977 = vmatprep.subr.mxu0 0.0
  %5978 = vmatpush2.msra.mxu0 0.0
  %5979 = vmatprep.subr.mxu0 0.0
  %5980 = vmatpush2.msra.mxu0 0.0
  %5981 = vmatprep.mubr.f32.mxu0 0.0
  %5982 = vmatmul.mubr.f32.gmra.mxu0 %v5857
  %v5983 = vpop.f32.mrf.mxu0
  %v5984 = vadd.f32 0.0, %v5983
  %v5985 = vpop.f32.mrf.mxu0
  %v5986 = vadd.f32 0.0, %v5985
  %5987 = vmatprep.mubr.f32.mxu0 0.0
  %5988 = vmatmul.mubr.f32.gmra.mxu0 %v5859
  %v5989 = vpop.f32.mrf.mxu0
  %v5990 = vadd.f32 0.0, %v5989
  %v5991 = vpop.f32.mrf.mxu0
  %v5992 = vadd.f32 0.0, %v5991
  %5993 = vmatprep.mubr.f32.mxu0 0.0
  %5994 = vmatmul.mubr.f32.gmra.mxu0 %v5861
  %v5995 = vpop.f32.mrf.mxu0
  %v5996 = vadd.f32 0.0, %v5995
  %v5997 = vpop.f32.mrf.mxu0
  %v5998 = vadd.f32 0.0, %v5997
  %5999 = vmatprep.mubr.f32.mxu0 0.0
  %6000 = vmatmul.mubr.f32.gmra.mxu0 %v5863
  %v6001 = vpop.f32.mrf.mxu0
  %v6002 = vadd.f32 0.0, %v6001
  %v6003 = vpop.f32.mrf.mxu0
  %v6004 = vadd.f32 0.0, %v6003
  %6005 = vmatprep.mubr.f32.mxu0 0.0
  %6006 = vmatmul.mubr.f32.gmra.mxu0 %v5865
  %v6007 = vpop.f32.mrf.mxu0
  %v6008 = vadd.f32 0.0, %v6007
  %v6009 = vpop.f32.mrf.mxu0
  %v6010 = vadd.f32 0.0, %v6009
  %6011 = vmatprep.mubr.f32.mxu0 0.0
  %6012 = vmatmul.mubr.f32.gmra.mxu0 %v5867
  %v6013 = vpop.f32.mrf.mxu0
  %v6014 = vadd.f32 0.0, %v6013
  %v6015 = vpop.f32.mrf.mxu0
  %v6016 = vadd.f32 0.0, %v6015
  %6017 = vmatprep.mubr.f32.mxu0 0.0
  %6018 = vmatmul.mubr.f32.gmra.mxu0 %v5869
  %v6019 = vpop.f32.mrf.mxu0
  %v6020 = vadd.f32 0.0, %v6019
  %v6021 = vpop.f32.mrf.mxu0
  %v6022 = vadd.f32 0.0, %v6021
  %6023 = vmatprep.mubr.f32.mxu0 0.0
  %6024 = vmatmul.mubr.f32.gmra.mxu0 %v5871
  %v6025 = vpop.f32.mrf.mxu0
  %v6026 = vadd.f32 0.0, %v6025
  %v6027 = vpop.f32.mrf.mxu0
  %v6028 = vadd.f32 0.0, %v6027
  %6029 = vmatprep.mubr.f32.mxu0 0.0
  %6030 = vmatmul.mubr.f32.gmra.mxu0 %v5873
  %v6031 = vpop.f32.mrf.mxu0
  %v6032 = vadd.f32 0.0, %v6031
  %v6033 = vpop.f32.mrf.mxu0
  %v6034 = vadd.f32 0.0, %v6033
  %6035 = vmatprep.mubr.f32.mxu0 0.0
  %6036 = vmatmul.mubr.f32.gmra.mxu0 %v5875
  %v6037 = vpop.f32.mrf.mxu0
  %v6038 = vadd.f32 0.0, %v6037
  %v6039 = vpop.f32.mrf.mxu0
  %v6040 = vadd.f32 0.0, %v6039
  %6041 = vmatprep.mubr.f32.mxu0 0.0
  %6042 = vmatmul.mubr.f32.gmra.mxu0 %v5877
  %v6043 = vpop.f32.mrf.mxu0
  %v6044 = vadd.f32 0.0, %v6043
  %v6045 = vpop.f32.mrf.mxu0
  %v6046 = vadd.f32 0.0, %v6045
  %6047 = vmatprep.mubr.f32.mxu0 0.0
  %6048 = vmatmul.mubr.f32.gmra.mxu0 %v5879
  %v6049 = vpop.f32.mrf.mxu0
  %v6050 = vadd.f32 0.0, %v6049
  %v6051 = vpop.f32.mrf.mxu0
  %v6052 = vadd.f32 0.0, %v6051
  %6053 = vmatprep.mubr.f32.mxu0 0.0
  %6054 = vmatmul.mubr.f32.gmra.mxu0 %v5881
  %v6055 = vpop.f32.mrf.mxu0
  %v6056 = vadd.f32 0.0, %v6055
  %v6057 = vpop.f32.mrf.mxu0
  %v6058 = vadd.f32 0.0, %v6057
  %6059 = vmatprep.mubr.f32.mxu0 0.0
  %6060 = vmatmul.mubr.f32.gmra.mxu0 %v5883
  %v6061 = vpop.f32.mrf.mxu0
  %v6062 = vadd.f32 0.0, %v6061
  %v6063 = vpop.f32.mrf.mxu0
  %v6064 = vadd.f32 0.0, %v6063
  %6065 = vmatprep.mubr.f32.mxu0 0.0
  %6066 = vmatmul.mubr.f32.gmra.mxu0 %v5885
  %v6067 = vpop.f32.mrf.mxu0
  %v6068 = vadd.f32 0.0, %v6067
  %v6069 = vpop.f32.mrf.mxu0
  %v6070 = vadd.f32 0.0, %v6069
  %6071 = vmatprep.mubr.f32.mxu0 0.0
  %6072 = vmatmul.mubr.f32.gmra.mxu0 %v5887
  %v6073 = vpop.f32.mrf.mxu0
  %v6074 = vadd.f32 0.0, %v6073
  %v6075 = vpop.f32.mrf.mxu0
  %v6076 = vadd.f32 0.0, %v6075
  %6077 = vmatprep.mubr.f32.mxu0 0.0
  %6078 = vmatmul.mubr.f32.gmra.mxu0 %v5889
  %v6079 = vpop.f32.mrf.mxu0
  %v6080 = vadd.f32 0.0, %v6079
  %v6081 = vpop.f32.mrf.mxu0
  %v6082 = vadd.f32 0.0, %v6081
  %6083 = vmatprep.mubr.f32.mxu0 0.0
  %6084 = vmatmul.mubr.f32.gmra.mxu0 %v5891
  %v6085 = vpop.f32.mrf.mxu0
  %v6086 = vadd.f32 0.0, %v6085
  %v6087 = vpop.f32.mrf.mxu0
  %v6088 = vadd.f32 0.0, %v6087
  %6089 = vmatprep.mubr.f32.mxu0 0.0
  %6090 = vmatmul.mubr.f32.gmra.mxu0 %v5893
  %v6091 = vpop.f32.mrf.mxu0
  %v6092 = vadd.f32 0.0, %v6091
  %v6093 = vpop.f32.mrf.mxu0
  %v6094 = vadd.f32 0.0, %v6093
  %6095 = vmatprep.mubr.f32.mxu0 0.0
  %6096 = vmatmul.mubr.f32.gmra.mxu0 %v5895
  %v6097 = vpop.f32.mrf.mxu0
  %v6098 = vadd.f32 0.0, %v6097
  %v6099 = vpop.f32.mrf.mxu0
  %v6100 = vadd.f32 0.0, %v6099
  %6101 = vmatprep.mubr.f32.mxu0 0.0
  %6102 = vmatmul.mubr.f32.gmra.mxu0 %v5897
  %v6103 = vpop.f32.mrf.mxu0
  %v6104 = vadd.f32 0.0, %v6103
  %v6105 = vpop.f32.mrf.mxu0
  %v6106 = vadd.f32 0.0, %v6105
  %6107 = vmatprep.mubr.f32.mxu0 0.0
  %6108 = vmatmul.mubr.f32.gmra.mxu0 %v5899
  %v6109 = vpop.f32.mrf.mxu0
  %v6110 = vadd.f32 0.0, %v6109
  %v6111 = vpop.f32.mrf.mxu0
  %v6112 = vadd.f32 0.0, %v6111
  %6113 = vmatprep.mubr.f32.mxu0 0.0
  %6114 = vmatmul.mubr.f32.gmra.mxu0 %v5901
  %v6115 = vpop.f32.mrf.mxu0
  %v6116 = vadd.f32 0.0, %v6115
  %v6117 = vpop.f32.mrf.mxu0
  %v6118 = vadd.f32 0.0, %v6117
  %6119 = vmatprep.mubr.f32.mxu0 0.0
  %6120 = vmatmul.mubr.f32.gmra.mxu0 %v5903
  %v6121 = vpop.f32.mrf.mxu0
  %v6122 = vadd.f32 0.0, %v6121
  %v6123 = vpop.f32.mrf.mxu0
  %v6124 = vadd.f32 0.0, %v6123
  %6125 = vmatprep.mubr.f32.mxu0 0.0
  %6126 = vmatmul.mubr.f32.gmra.mxu0 %v5905
  %v6127 = vpop.f32.mrf.mxu0
  %v6128 = vadd.f32 0.0, %v6127
  %v6129 = vpop.f32.mrf.mxu0
  %v6130 = vadd.f32 0.0, %v6129
  %6131 = vmatprep.mubr.f32.mxu0 0.0
  %6132 = vmatmul.mubr.f32.gmra.mxu0 %v5907
  %v6133 = vpop.f32.mrf.mxu0
  %v6134 = vadd.f32 0.0, %v6133
  %v6135 = vpop.f32.mrf.mxu0
  %v6136 = vadd.f32 0.0, %v6135
  %6137 = vmatprep.mubr.f32.mxu0 0.0
  %6138 = vmatmul.mubr.f32.gmra.mxu0 %v5909
  %v6139 = vpop.f32.mrf.mxu0
  %v6140 = vadd.f32 0.0, %v6139
  %v6141 = vpop.f32.mrf.mxu0
  %v6142 = vadd.f32 0.0, %v6141
  %6143 = vmatprep.mubr.f32.mxu0 0.0
  %6144 = vmatmul.mubr.f32.gmra.mxu0 %v5911
  %v6145 = vpop.f32.mrf.mxu0
  %v6146 = vadd.f32 0.0, %v6145
  %v6147 = vpop.f32.mrf.mxu0
  %v6148 = vadd.f32 0.0, %v6147
  %6149 = vmatprep.mubr.f32.mxu0 0.0
  %6150 = vmatmul.mubr.f32.gmra.mxu0 %v5913
  %v6151 = vpop.f32.mrf.mxu0
  %v6152 = vadd.f32 0.0, %v6151
  %v6153 = vpop.f32.mrf.mxu0
  %v6154 = vadd.f32 0.0, %v6153
  %6155 = vmatprep.mubr.f32.mxu0 0.0
  %6156 = vmatmul.mubr.f32.gmra.mxu0 %v5915
  %v6157 = vpop.f32.mrf.mxu0
  %v6158 = vadd.f32 0.0, %v6157
  %v6159 = vpop.f32.mrf.mxu0
  %v6160 = vadd.f32 0.0, %v6159
  %6161 = vdwg.mxu0
  %v6222 = vcombine.low %v5984, %v5986
  %v6223 = vcombine.high %v5984, %v5986
  %v6225 = vunpack.c.l.s4 1983009808
  %v6226 = vunpack.c.0.s8 %v6225
  %v6227 = vlaneseq
  %v6228 = vshrl.u32 %v6227, 7
  %v6229 = vsub.s32 %v6226, %v6228
  %v6230 = vrot.slane %v6222, %v6229
  %v6232 = vunpack.c.l.s4 1983009808
  %v6233 = vunpack.c.0.s8 %v6232
  %v6234 = vlaneseq
  %v6235 = vshrl.u32 %v6234, 7
  %v6236 = vsub.s32 %v6233, %v6235
  %v6237 = vrot.slane %v6223, %v6236
  %v6238 = vcombine.high %v6230, %v6230
  %v6239 = vcombine.high %v6237, %v6237
  %v6240 = vcombine.low %v5990, %v5992
  %v6241 = vcombine.high %v5990, %v5992
  %v6243 = vunpack.c.l.s4 1983009808
  %v6244 = vunpack.c.0.s8 %v6243
  %v6245 = vlaneseq
  %v6246 = vshrl.u32 %v6245, 7
  %v6247 = vsub.s32 %v6244, %v6246
  %v6248 = vrot.slane %v6240, %v6247
  %v6250 = vunpack.c.l.s4 1983009808
  %v6251 = vunpack.c.0.s8 %v6250
  %v6252 = vlaneseq
  %v6253 = vshrl.u32 %v6252, 7
  %v6254 = vsub.s32 %v6251, %v6253
  %v6255 = vrot.slane %v6241, %v6254
  %v6256 = vcombine.high %v6248, %v6248
  %v6257 = vcombine.high %v6255, %v6255
  %v6258 = vcombine.low %v5996, %v5998
  %v6259 = vcombine.high %v5996, %v5998
  %v6261 = vunpack.c.l.s4 1983009808
  %v6262 = vunpack.c.0.s8 %v6261
  %v6263 = vlaneseq
  %v6264 = vshrl.u32 %v6263, 7
  %v6265 = vsub.s32 %v6262, %v6264
  %v6266 = vrot.slane %v6258, %v6265
  %v6268 = vunpack.c.l.s4 1983009808
  %v6269 = vunpack.c.0.s8 %v6268
  %v6270 = vlaneseq
  %v6271 = vshrl.u32 %v6270, 7
  %v6272 = vsub.s32 %v6269, %v6271
  %v6273 = vrot.slane %v6259, %v6272
  %v6274 = vcombine.high %v6266, %v6266
  %v6275 = vcombine.high %v6273, %v6273
  %v6276 = vcombine.low %v6002, %v6004
  %v6277 = vcombine.high %v6002, %v6004
  %v6279 = vunpack.c.l.s4 1983009808
  %v6280 = vunpack.c.0.s8 %v6279
  %v6281 = vlaneseq
  %v6282 = vshrl.u32 %v6281, 7
  %v6283 = vsub.s32 %v6280, %v6282
  %v6284 = vrot.slane %v6276, %v6283
  %v6286 = vunpack.c.l.s4 1983009808
  %v6287 = vunpack.c.0.s8 %v6286
  %v6288 = vlaneseq
  %v6289 = vshrl.u32 %v6288, 7
  %v6290 = vsub.s32 %v6287, %v6289
  %v6291 = vrot.slane %v6277, %v6290
  %v6292 = vcombine.high %v6284, %v6284
  %v6293 = vcombine.high %v6291, %v6291
  %v6294 = vcombine.low %v6008, %v6010
  %v6295 = vcombine.high %v6008, %v6010
  %v6297 = vunpack.c.l.s4 1983009808
  %v6298 = vunpack.c.0.s8 %v6297
  %v6299 = vlaneseq
  %v6300 = vshrl.u32 %v6299, 7
  %v6301 = vsub.s32 %v6298, %v6300
  %v6302 = vrot.slane %v6294, %v6301
  %v6304 = vunpack.c.l.s4 1983009808
  %v6305 = vunpack.c.0.s8 %v6304
  %v6306 = vlaneseq
  %v6307 = vshrl.u32 %v6306, 7
  %v6308 = vsub.s32 %v6305, %v6307
  %v6309 = vrot.slane %v6295, %v6308
  %v6310 = vcombine.high %v6302, %v6302
  %v6311 = vcombine.high %v6309, %v6309
  %v6312 = vcombine.low %v6014, %v6016
  %v6313 = vcombine.high %v6014, %v6016
  %v6315 = vunpack.c.l.s4 1983009808
  %v6316 = vunpack.c.0.s8 %v6315
  %v6317 = vlaneseq
  %v6318 = vshrl.u32 %v6317, 7
  %v6319 = vsub.s32 %v6316, %v6318
  %v6320 = vrot.slane %v6312, %v6319
  %v6322 = vunpack.c.l.s4 1983009808
  %v6323 = vunpack.c.0.s8 %v6322
  %v6324 = vlaneseq
  %v6325 = vshrl.u32 %v6324, 7
  %v6326 = vsub.s32 %v6323, %v6325
  %v6327 = vrot.slane %v6313, %v6326
  %v6328 = vcombine.high %v6320, %v6320
  %v6329 = vcombine.high %v6327, %v6327
  %v6330 = vcombine.low %v6020, %v6022
  %v6331 = vcombine.high %v6020, %v6022
  %v6333 = vunpack.c.l.s4 1983009808
  %v6334 = vunpack.c.0.s8 %v6333
  %v6335 = vlaneseq
  %v6336 = vshrl.u32 %v6335, 7
  %v6337 = vsub.s32 %v6334, %v6336
  %v6338 = vrot.slane %v6330, %v6337
  %v6340 = vunpack.c.l.s4 1983009808
  %v6341 = vunpack.c.0.s8 %v6340
  %v6342 = vlaneseq
  %v6343 = vshrl.u32 %v6342, 7
  %v6344 = vsub.s32 %v6341, %v6343
  %v6345 = vrot.slane %v6331, %v6344
  %v6346 = vcombine.high %v6338, %v6338
  %v6347 = vcombine.high %v6345, %v6345
  %v6348 = vcombine.low %v6026, %v6028
  %v6349 = vcombine.high %v6026, %v6028
  %v6351 = vunpack.c.l.s4 1983009808
  %v6352 = vunpack.c.0.s8 %v6351
  %v6353 = vlaneseq
  %v6354 = vshrl.u32 %v6353, 7
  %v6355 = vsub.s32 %v6352, %v6354
  %v6356 = vrot.slane %v6348, %v6355
  %v6358 = vunpack.c.l.s4 1983009808
  %v6359 = vunpack.c.0.s8 %v6358
  %v6360 = vlaneseq
  %v6361 = vshrl.u32 %v6360, 7
  %v6362 = vsub.s32 %v6359, %v6361
  %v6363 = vrot.slane %v6349, %v6362
  %v6364 = vcombine.high %v6356, %v6356
  %v6365 = vcombine.high %v6363, %v6363
  %v6366 = vcombine.low %v6032, %v6034
  %v6367 = vcombine.high %v6032, %v6034
  %v6369 = vunpack.c.l.s4 1983009808
  %v6370 = vunpack.c.0.s8 %v6369
  %v6371 = vlaneseq
  %v6372 = vshrl.u32 %v6371, 7
  %v6373 = vsub.s32 %v6370, %v6372
  %v6374 = vrot.slane %v6366, %v6373
  %v6376 = vunpack.c.l.s4 1983009808
  %v6377 = vunpack.c.0.s8 %v6376
  %v6378 = vlaneseq
  %v6379 = vshrl.u32 %v6378, 7
  %v6380 = vsub.s32 %v6377, %v6379
  %v6381 = vrot.slane %v6367, %v6380
  %v6382 = vcombine.high %v6374, %v6374
  %v6383 = vcombine.high %v6381, %v6381
  %v6384 = vcombine.low %v6038, %v6040
  %v6385 = vcombine.high %v6038, %v6040
  %v6387 = vunpack.c.l.s4 1983009808
  %v6388 = vunpack.c.0.s8 %v6387
  %v6389 = vlaneseq
  %v6390 = vshrl.u32 %v6389, 7
  %v6391 = vsub.s32 %v6388, %v6390
  %v6392 = vrot.slane %v6384, %v6391
  %v6394 = vunpack.c.l.s4 1983009808
  %v6395 = vunpack.c.0.s8 %v6394
  %v6396 = vlaneseq
  %v6397 = vshrl.u32 %v6396, 7
  %v6398 = vsub.s32 %v6395, %v6397
  %v6399 = vrot.slane %v6385, %v6398
  %v6400 = vcombine.high %v6392, %v6392
  %v6401 = vcombine.high %v6399, %v6399
  %v6402 = vcombine.low %v6044, %v6046
  %v6403 = vcombine.high %v6044, %v6046
  %v6405 = vunpack.c.l.s4 1983009808
  %v6406 = vunpack.c.0.s8 %v6405
  %v6407 = vlaneseq
  %v6408 = vshrl.u32 %v6407, 7
  %v6409 = vsub.s32 %v6406, %v6408
  %v6410 = vrot.slane %v6402, %v6409
  %v6412 = vunpack.c.l.s4 1983009808
  %v6413 = vunpack.c.0.s8 %v6412
  %v6414 = vlaneseq
  %v6415 = vshrl.u32 %v6414, 7
  %v6416 = vsub.s32 %v6413, %v6415
  %v6417 = vrot.slane %v6403, %v6416
  %v6418 = vcombine.high %v6410, %v6410
  %v6419 = vcombine.high %v6417, %v6417
  %v6420 = vcombine.low %v6050, %v6052
  %v6421 = vcombine.high %v6050, %v6052
  %v6423 = vunpack.c.l.s4 1983009808
  %v6424 = vunpack.c.0.s8 %v6423
  %v6425 = vlaneseq
  %v6426 = vshrl.u32 %v6425, 7
  %v6427 = vsub.s32 %v6424, %v6426
  %v6428 = vrot.slane %v6420, %v6427
  %v6430 = vunpack.c.l.s4 1983009808
  %v6431 = vunpack.c.0.s8 %v6430
  %v6432 = vlaneseq
  %v6433 = vshrl.u32 %v6432, 7
  %v6434 = vsub.s32 %v6431, %v6433
  %v6435 = vrot.slane %v6421, %v6434
  %v6436 = vcombine.high %v6428, %v6428
  %v6437 = vcombine.high %v6435, %v6435
  %v6438 = vcombine.low %v6056, %v6058
  %v6439 = vcombine.high %v6056, %v6058
  %v6441 = vunpack.c.l.s4 1983009808
  %v6442 = vunpack.c.0.s8 %v6441
  %v6443 = vlaneseq
  %v6444 = vshrl.u32 %v6443, 7
  %v6445 = vsub.s32 %v6442, %v6444
  %v6446 = vrot.slane %v6438, %v6445
  %v6448 = vunpack.c.l.s4 1983009808
  %v6449 = vunpack.c.0.s8 %v6448
  %v6450 = vlaneseq
  %v6451 = vshrl.u32 %v6450, 7
  %v6452 = vsub.s32 %v6449, %v6451
  %v6453 = vrot.slane %v6439, %v6452
  %v6454 = vcombine.high %v6446, %v6446
  %v6455 = vcombine.high %v6453, %v6453
  %v6456 = vcombine.low %v6062, %v6064
  %v6457 = vcombine.high %v6062, %v6064
  %v6459 = vunpack.c.l.s4 1983009808
  %v6460 = vunpack.c.0.s8 %v6459
  %v6461 = vlaneseq
  %v6462 = vshrl.u32 %v6461, 7
  %v6463 = vsub.s32 %v6460, %v6462
  %v6464 = vrot.slane %v6456, %v6463
  %v6466 = vunpack.c.l.s4 1983009808
  %v6467 = vunpack.c.0.s8 %v6466
  %v6468 = vlaneseq
  %v6469 = vshrl.u32 %v6468, 7
  %v6470 = vsub.s32 %v6467, %v6469
  %v6471 = vrot.slane %v6457, %v6470
  %v6472 = vcombine.high %v6464, %v6464
  %v6473 = vcombine.high %v6471, %v6471
  %v6474 = vcombine.low %v6068, %v6070
  %v6475 = vcombine.high %v6068, %v6070
  %v6477 = vunpack.c.l.s4 1983009808
  %v6478 = vunpack.c.0.s8 %v6477
  %v6479 = vlaneseq
  %v6480 = vshrl.u32 %v6479, 7
  %v6481 = vsub.s32 %v6478, %v6480
  %v6482 = vrot.slane %v6474, %v6481
  %v6484 = vunpack.c.l.s4 1983009808
  %v6485 = vunpack.c.0.s8 %v6484
  %v6486 = vlaneseq
  %v6487 = vshrl.u32 %v6486, 7
  %v6488 = vsub.s32 %v6485, %v6487
  %v6489 = vrot.slane %v6475, %v6488
  %v6490 = vcombine.high %v6482, %v6482
  %v6491 = vcombine.high %v6489, %v6489
  %v6492 = vcombine.low %v6074, %v6076
  %v6493 = vcombine.high %v6074, %v6076
  %v6495 = vunpack.c.l.s4 1983009808
  %v6496 = vunpack.c.0.s8 %v6495
  %v6497 = vlaneseq
  %v6498 = vshrl.u32 %v6497, 7
  %v6499 = vsub.s32 %v6496, %v6498
  %v6500 = vrot.slane %v6492, %v6499
  %v6502 = vunpack.c.l.s4 1983009808
  %v6503 = vunpack.c.0.s8 %v6502
  %v6504 = vlaneseq
  %v6505 = vshrl.u32 %v6504, 7
  %v6506 = vsub.s32 %v6503, %v6505
  %v6507 = vrot.slane %v6493, %v6506
  %v6508 = vcombine.high %v6500, %v6500
  %v6509 = vcombine.high %v6507, %v6507
  %v6510 = vcombine.low %v6080, %v6082
  %v6511 = vcombine.high %v6080, %v6082
  %v6513 = vunpack.c.l.s4 1983009808
  %v6514 = vunpack.c.0.s8 %v6513
  %v6515 = vlaneseq
  %v6516 = vshrl.u32 %v6515, 7
  %v6517 = vsub.s32 %v6514, %v6516
  %v6518 = vrot.slane %v6510, %v6517
  %v6520 = vunpack.c.l.s4 1983009808
  %v6521 = vunpack.c.0.s8 %v6520
  %v6522 = vlaneseq
  %v6523 = vshrl.u32 %v6522, 7
  %v6524 = vsub.s32 %v6521, %v6523
  %v6525 = vrot.slane %v6511, %v6524
  %v6526 = vcombine.high %v6518, %v6518
  %v6527 = vcombine.high %v6525, %v6525
  %v6528 = vcombine.low %v6086, %v6088
  %v6529 = vcombine.high %v6086, %v6088
  %v6531 = vunpack.c.l.s4 1983009808
  %v6532 = vunpack.c.0.s8 %v6531
  %v6533 = vlaneseq
  %v6534 = vshrl.u32 %v6533, 7
  %v6535 = vsub.s32 %v6532, %v6534
  %v6536 = vrot.slane %v6528, %v6535
  %v6538 = vunpack.c.l.s4 1983009808
  %v6539 = vunpack.c.0.s8 %v6538
  %v6540 = vlaneseq
  %v6541 = vshrl.u32 %v6540, 7
  %v6542 = vsub.s32 %v6539, %v6541
  %v6543 = vrot.slane %v6529, %v6542
  %v6544 = vcombine.high %v6536, %v6536
  %v6545 = vcombine.high %v6543, %v6543
  %v6546 = vcombine.low %v6092, %v6094
  %v6547 = vcombine.high %v6092, %v6094
  %v6549 = vunpack.c.l.s4 1983009808
  %v6550 = vunpack.c.0.s8 %v6549
  %v6551 = vlaneseq
  %v6552 = vshrl.u32 %v6551, 7
  %v6553 = vsub.s32 %v6550, %v6552
  %v6554 = vrot.slane %v6546, %v6553
  %v6556 = vunpack.c.l.s4 1983009808
  %v6557 = vunpack.c.0.s8 %v6556
  %v6558 = vlaneseq
  %v6559 = vshrl.u32 %v6558, 7
  %v6560 = vsub.s32 %v6557, %v6559
  %v6561 = vrot.slane %v6547, %v6560
  %v6562 = vcombine.high %v6554, %v6554
  %v6563 = vcombine.high %v6561, %v6561
  %v6564 = vcombine.low %v6098, %v6100
  %v6565 = vcombine.high %v6098, %v6100
  %v6567 = vunpack.c.l.s4 1983009808
  %v6568 = vunpack.c.0.s8 %v6567
  %v6569 = vlaneseq
  %v6570 = vshrl.u32 %v6569, 7
  %v6571 = vsub.s32 %v6568, %v6570
  %v6572 = vrot.slane %v6564, %v6571
  %v6574 = vunpack.c.l.s4 1983009808
  %v6575 = vunpack.c.0.s8 %v6574
  %v6576 = vlaneseq
  %v6577 = vshrl.u32 %v6576, 7
  %v6578 = vsub.s32 %v6575, %v6577
  %v6579 = vrot.slane %v6565, %v6578
  %v6580 = vcombine.high %v6572, %v6572
  %v6581 = vcombine.high %v6579, %v6579
  %v6582 = vcombine.low %v6104, %v6106
  %v6583 = vcombine.high %v6104, %v6106
  %v6585 = vunpack.c.l.s4 1983009808
  %v6586 = vunpack.c.0.s8 %v6585
  %v6587 = vlaneseq
  %v6588 = vshrl.u32 %v6587, 7
  %v6589 = vsub.s32 %v6586, %v6588
  %v6590 = vrot.slane %v6582, %v6589
  %v6592 = vunpack.c.l.s4 1983009808
  %v6593 = vunpack.c.0.s8 %v6592
  %v6594 = vlaneseq
  %v6595 = vshrl.u32 %v6594, 7
  %v6596 = vsub.s32 %v6593, %v6595
  %v6597 = vrot.slane %v6583, %v6596
  %v6598 = vcombine.high %v6590, %v6590
  %v6599 = vcombine.high %v6597, %v6597
  %v6600 = vcombine.low %v6110, %v6112
  %v6601 = vcombine.high %v6110, %v6112
  %v6603 = vunpack.c.l.s4 1983009808
  %v6604 = vunpack.c.0.s8 %v6603
  %v6605 = vlaneseq
  %v6606 = vshrl.u32 %v6605, 7
  %v6607 = vsub.s32 %v6604, %v6606
  %v6608 = vrot.slane %v6600, %v6607
  %v6610 = vunpack.c.l.s4 1983009808
  %v6611 = vunpack.c.0.s8 %v6610
  %v6612 = vlaneseq
  %v6613 = vshrl.u32 %v6612, 7
  %v6614 = vsub.s32 %v6611, %v6613
  %v6615 = vrot.slane %v6601, %v6614
  %v6616 = vcombine.high %v6608, %v6608
  %v6617 = vcombine.high %v6615, %v6615
  %v6618 = vcombine.low %v6116, %v6118
  %v6619 = vcombine.high %v6116, %v6118
  %v6621 = vunpack.c.l.s4 1983009808
  %v6622 = vunpack.c.0.s8 %v6621
  %v6623 = vlaneseq
  %v6624 = vshrl.u32 %v6623, 7
  %v6625 = vsub.s32 %v6622, %v6624
  %v6626 = vrot.slane %v6618, %v6625
  %v6628 = vunpack.c.l.s4 1983009808
  %v6629 = vunpack.c.0.s8 %v6628
  %v6630 = vlaneseq
  %v6631 = vshrl.u32 %v6630, 7
  %v6632 = vsub.s32 %v6629, %v6631
  %v6633 = vrot.slane %v6619, %v6632
  %v6634 = vcombine.high %v6626, %v6626
  %v6635 = vcombine.high %v6633, %v6633
  %v6636 = vcombine.low %v6122, %v6124
  %v6637 = vcombine.high %v6122, %v6124
  %v6639 = vunpack.c.l.s4 1983009808
  %v6640 = vunpack.c.0.s8 %v6639
  %v6641 = vlaneseq
  %v6642 = vshrl.u32 %v6641, 7
  %v6643 = vsub.s32 %v6640, %v6642
  %v6644 = vrot.slane %v6636, %v6643
  %v6646 = vunpack.c.l.s4 1983009808
  %v6647 = vunpack.c.0.s8 %v6646
  %v6648 = vlaneseq
  %v6649 = vshrl.u32 %v6648, 7
  %v6650 = vsub.s32 %v6647, %v6649
  %v6651 = vrot.slane %v6637, %v6650
  %v6652 = vcombine.high %v6644, %v6644
  %v6653 = vcombine.high %v6651, %v6651
  %v6654 = vcombine.low %v6128, %v6130
  %v6655 = vcombine.high %v6128, %v6130
  %v6657 = vunpack.c.l.s4 1983009808
  %v6658 = vunpack.c.0.s8 %v6657
  %v6659 = vlaneseq
  %v6660 = vshrl.u32 %v6659, 7
  %v6661 = vsub.s32 %v6658, %v6660
  %v6662 = vrot.slane %v6654, %v6661
  %v6664 = vunpack.c.l.s4 1983009808
  %v6665 = vunpack.c.0.s8 %v6664
  %v6666 = vlaneseq
  %v6667 = vshrl.u32 %v6666, 7
  %v6668 = vsub.s32 %v6665, %v6667
  %v6669 = vrot.slane %v6655, %v6668
  %v6670 = vcombine.high %v6662, %v6662
  %v6671 = vcombine.high %v6669, %v6669
  %v6672 = vcombine.low %v6134, %v6136
  %v6673 = vcombine.high %v6134, %v6136
  %v6675 = vunpack.c.l.s4 1983009808
  %v6676 = vunpack.c.0.s8 %v6675
  %v6677 = vlaneseq
  %v6678 = vshrl.u32 %v6677, 7
  %v6679 = vsub.s32 %v6676, %v6678
  %v6680 = vrot.slane %v6672, %v6679
  %v6682 = vunpack.c.l.s4 1983009808
  %v6683 = vunpack.c.0.s8 %v6682
  %v6684 = vlaneseq
  %v6685 = vshrl.u32 %v6684, 7
  %v6686 = vsub.s32 %v6683, %v6685
  %v6687 = vrot.slane %v6673, %v6686
  %v6688 = vcombine.high %v6680, %v6680
  %v6689 = vcombine.high %v6687, %v6687
  %v6690 = vcombine.low %v6140, %v6142
  %v6691 = vcombine.high %v6140, %v6142
  %v6693 = vunpack.c.l.s4 1983009808
  %v6694 = vunpack.c.0.s8 %v6693
  %v6695 = vlaneseq
  %v6696 = vshrl.u32 %v6695, 7
  %v6697 = vsub.s32 %v6694, %v6696
  %v6698 = vrot.slane %v6690, %v6697
  %v6700 = vunpack.c.l.s4 1983009808
  %v6701 = vunpack.c.0.s8 %v6700
  %v6702 = vlaneseq
  %v6703 = vshrl.u32 %v6702, 7
  %v6704 = vsub.s32 %v6701, %v6703
  %v6705 = vrot.slane %v6691, %v6704
  %v6706 = vcombine.high %v6698, %v6698
  %v6707 = vcombine.high %v6705, %v6705
  %v6708 = vcombine.low %v6146, %v6148
  %v6709 = vcombine.high %v6146, %v6148
  %v6711 = vunpack.c.l.s4 1983009808
  %v6712 = vunpack.c.0.s8 %v6711
  %v6713 = vlaneseq
  %v6714 = vshrl.u32 %v6713, 7
  %v6715 = vsub.s32 %v6712, %v6714
  %v6716 = vrot.slane %v6708, %v6715
  %v6718 = vunpack.c.l.s4 1983009808
  %v6719 = vunpack.c.0.s8 %v6718
  %v6720 = vlaneseq
  %v6721 = vshrl.u32 %v6720, 7
  %v6722 = vsub.s32 %v6719, %v6721
  %v6723 = vrot.slane %v6709, %v6722
  %v6724 = vcombine.high %v6716, %v6716
  %v6725 = vcombine.high %v6723, %v6723
  %v6726 = vcombine.low %v6152, %v6154
  %v6727 = vcombine.high %v6152, %v6154
  %v6729 = vunpack.c.l.s4 1983009808
  %v6730 = vunpack.c.0.s8 %v6729
  %v6731 = vlaneseq
  %v6732 = vshrl.u32 %v6731, 7
  %v6733 = vsub.s32 %v6730, %v6732
  %v6734 = vrot.slane %v6726, %v6733
  %v6736 = vunpack.c.l.s4 1983009808
  %v6737 = vunpack.c.0.s8 %v6736
  %v6738 = vlaneseq
  %v6739 = vshrl.u32 %v6738, 7
  %v6740 = vsub.s32 %v6737, %v6739
  %v6741 = vrot.slane %v6727, %v6740
  %v6742 = vcombine.high %v6734, %v6734
  %v6743 = vcombine.high %v6741, %v6741
  %v6744 = vcombine.low %v6158, %v6160
  %v6745 = vcombine.high %v6158, %v6160
  %v6747 = vunpack.c.l.s4 1983009808
  %v6748 = vunpack.c.0.s8 %v6747
  %v6749 = vlaneseq
  %v6750 = vshrl.u32 %v6749, 7
  %v6751 = vsub.s32 %v6748, %v6750
  %v6752 = vrot.slane %v6744, %v6751
  %v6754 = vunpack.c.l.s4 1983009808
  %v6755 = vunpack.c.0.s8 %v6754
  %v6756 = vlaneseq
  %v6757 = vshrl.u32 %v6756, 7
  %v6758 = vsub.s32 %v6755, %v6757
  %v6759 = vrot.slane %v6745, %v6758
  %v6760 = vcombine.high %v6752, %v6752
  %v6761 = vcombine.high %v6759, %v6759
  %vm6866 = vmor %vm298, %vm5641
  %vm6867 = vmor %vm6866, %vm5645
  %vm6868 = vmor %vm6867, %vm5649
  %v6869 = vrot.slane %v6230, 7
  %v6870 = vrot.slane %v6869, 2
  %v6871 = vrot.slane %v6238, 7
  %v6872 = vsel %vm6868, %v6870, %v6871
  %v6873 = vrot.slane %v6871, 2
  %v6874 = vrot.slane %v6237, 7
  %v6875 = vsel %vm6868, %v6873, %v6874
  %v6876 = vrot.slane %v6874, 2
  %v6877 = vrot.slane %v6239, 7
  %v6878 = vsel %vm6868, %v6876, %v6877
  %v6879 = vrot.slane %v6877, 2
  %v6880 = vrot.slane %v6248, 7
  %v6881 = vsel %vm6868, %v6879, %v6880
  %v6882 = vrot.slane %v6880, 2
  %v6883 = vrot.slane %v6256, 7
  %v6884 = vsel %vm6868, %v6882, %v6883
  %v6885 = vrot.slane %v6883, 2
  %v6886 = vrot.slane %v6255, 7
  %v6887 = vsel %vm6868, %v6885, %v6886
  %v6888 = vrot.slane %v6886, 2
  %v6889 = vrot.slane %v6257, 7
  %v6890 = vsel %vm6868, %v6888, %v6889
  %v6891 = vrot.slane %v6889, 2
  %v6892 = vrot.slane %v6266, 7
  %v6893 = vsel %vm6868, %v6891, %v6892
  %v6894 = vrot.slane %v6892, 2
  %v6895 = vrot.slane %v6274, 7
  %v6896 = vsel %vm6868, %v6894, %v6895
  %v6897 = vrot.slane %v6895, 2
  %v6898 = vrot.slane %v6273, 7
  %v6899 = vsel %vm6868, %v6897, %v6898
  %v6900 = vrot.slane %v6898, 2
  %v6901 = vrot.slane %v6275, 7
  %v6902 = vsel %vm6868, %v6900, %v6901
  %v6903 = vrot.slane %v6901, 2
  %v6904 = vrot.slane %v6284, 7
  %v6905 = vsel %vm6868, %v6903, %v6904
  %v6906 = vrot.slane %v6904, 2
  %v6907 = vrot.slane %v6292, 7
  %v6908 = vsel %vm6868, %v6906, %v6907
  %v6909 = vrot.slane %v6293, 7
  %v6910 = vrot.slane %v6909, 2
  %v6911 = vrot.slane %v6302, 7
  %v6912 = vsel %vm6868, %v6910, %v6911
  %v6913 = vrot.slane %v6911, 2
  %v6914 = vrot.slane %v6310, 7
  %v6915 = vsel %vm6868, %v6913, %v6914
  %v6916 = vrot.slane %v6914, 2
  %v6917 = vrot.slane %v6309, 7
  %v6918 = vsel %vm6868, %v6916, %v6917
  %v6919 = vrot.slane %v6917, 2
  %v6920 = vrot.slane %v6311, 7
  %v6921 = vsel %vm6868, %v6919, %v6920
  %v6922 = vrot.slane %v6920, 2
  %v6923 = vrot.slane %v6320, 7
  %v6924 = vsel %vm6868, %v6922, %v6923
  %v6925 = vrot.slane %v6923, 2
  %v6926 = vrot.slane %v6328, 7
  %v6927 = vsel %vm6868, %v6925, %v6926
  %v6928 = vrot.slane %v6926, 2
  %v6929 = vrot.slane %v6327, 7
  %v6930 = vsel %vm6868, %v6928, %v6929
  %v6931 = vrot.slane %v6929, 2
  %v6932 = vrot.slane %v6329, 7
  %v6933 = vsel %vm6868, %v6931, %v6932
  %v6934 = vrot.slane %v6932, 2
  %v6935 = vrot.slane %v6338, 7
  %v6936 = vsel %vm6868, %v6934, %v6935
  %v6937 = vrot.slane %v6935, 2
  %v6938 = vrot.slane %v6346, 7
  %v6939 = vsel %vm6868, %v6937, %v6938
  %v6940 = vrot.slane %v6938, 2
  %v6941 = vrot.slane %v6345, 7
  %v6942 = vsel %vm6868, %v6940, %v6941
  %v6943 = vrot.slane %v6941, 2
  %v6944 = vrot.slane %v6347, 7
  %v6945 = vsel %vm6868, %v6943, %v6944
  %v6946 = vrot.slane %v6944, 2
  %v6947 = vrot.slane %v6356, 7
  %v6948 = vsel %vm6868, %v6946, %v6947
  %v6949 = vrot.slane %v6363, 7
  %v6950 = vrot.slane %v6949, 2
  %v6951 = vrot.slane %v6365, 7
  %v6952 = vsel %vm6868, %v6950, %v6951
  %v6953 = vrot.slane %v6951, 2
  %v6954 = vrot.slane %v6374, 7
  %v6955 = vsel %vm6868, %v6953, %v6954
  %v6956 = vrot.slane %v6954, 2
  %v6957 = vrot.slane %v6382, 7
  %v6958 = vsel %vm6868, %v6956, %v6957
  %v6959 = vrot.slane %v6957, 2
  %v6960 = vrot.slane %v6381, 7
  %v6961 = vsel %vm6868, %v6959, %v6960
  %v6962 = vrot.slane %v6960, 2
  %v6963 = vrot.slane %v6383, 7
  %v6964 = vsel %vm6868, %v6962, %v6963
  %v6965 = vrot.slane %v6963, 2
  %v6966 = vrot.slane %v6392, 7
  %v6967 = vsel %vm6868, %v6965, %v6966
  %v6968 = vrot.slane %v6966, 2
  %v6969 = vrot.slane %v6400, 7
  %v6970 = vsel %vm6868, %v6968, %v6969
  %v6971 = vrot.slane %v6969, 2
  %v6972 = vrot.slane %v6399, 7
  %v6973 = vsel %vm6868, %v6971, %v6972
  %v6974 = vrot.slane %v6972, 2
  %v6975 = vrot.slane %v6401, 7
  %v6976 = vsel %vm6868, %v6974, %v6975
  %v6977 = vrot.slane %v6975, 2
  %v6978 = vrot.slane %v6410, 7
  %v6979 = vsel %vm6868, %v6977, %v6978
  %v6980 = vrot.slane %v6978, 2
  %v6981 = vrot.slane %v6418, 7
  %v6982 = vsel %vm6868, %v6980, %v6981
  %v6983 = vrot.slane %v6981, 2
  %v6984 = vrot.slane %v6417, 7
  %v6985 = vsel %vm6868, %v6983, %v6984
  %v6986 = vrot.slane %v6984, 2
  %v6987 = vrot.slane %v6419, 7
  %v6988 = vsel %vm6868, %v6986, %v6987
  %v6989 = vrot.slane %v6436, 7
  %v6990 = vrot.slane %v6989, 2
  %v6991 = vrot.slane %v6435, 7
  %v6992 = vsel %vm6868, %v6990, %v6991
  %v6993 = vrot.slane %v6991, 2
  %v6994 = vrot.slane %v6437, 7
  %v6995 = vsel %vm6868, %v6993, %v6994
  %v6996 = vrot.slane %v6994, 2
  %v6997 = vrot.slane %v6446, 7
  %v6998 = vsel %vm6868, %v6996, %v6997
  %v6999 = vrot.slane %v6997, 2
  %v7000 = vrot.slane %v6454, 7
  %v7001 = vsel %vm6868, %v6999, %v7000
  %v7002 = vrot.slane %v7000, 2
  %v7003 = vrot.slane %v6453, 7
  %v7004 = vsel %vm6868, %v7002, %v7003
  %v7005 = vrot.slane %v7003, 2
  %v7006 = vrot.slane %v6455, 7
  %v7007 = vsel %vm6868, %v7005, %v7006
  %v7008 = vrot.slane %v7006, 2
  %v7009 = vrot.slane %v6464, 7
  %v7010 = vsel %vm6868, %v7008, %v7009
  %v7011 = vrot.slane %v7009, 2
  %v7012 = vrot.slane %v6472, 7
  %v7013 = vsel %vm6868, %v7011, %v7012
  %v7014 = vrot.slane %v7012, 2
  %v7015 = vrot.slane %v6471, 7
  %v7016 = vsel %vm6868, %v7014, %v7015
  %v7017 = vrot.slane %v7015, 2
  %v7018 = vrot.slane %v6473, 7
  %v7019 = vsel %vm6868, %v7017, %v7018
  %v7020 = vrot.slane %v7018, 2
  %v7021 = vrot.slane %v6482, 7
  %v7022 = vsel %vm6868, %v7020, %v7021
  %v7023 = vrot.slane %v7021, 2
  %v7024 = vrot.slane %v6490, 7
  %v7025 = vsel %vm6868, %v7023, %v7024
  %v7026 = vrot.slane %v7024, 2
  %v7027 = vrot.slane %v6489, 7
  %v7028 = vsel %vm6868, %v7026, %v7027
  %v7029 = vrot.slane %v6500, 7
  %v7030 = vrot.slane %v7029, 2
  %v7031 = vrot.slane %v6508, 7
  %v7032 = vsel %vm6868, %v7030, %v7031
  %v7033 = vrot.slane %v7031, 2
  %v7034 = vrot.slane %v6507, 7
  %v7035 = vsel %vm6868, %v7033, %v7034
  %v7036 = vrot.slane %v7034, 2
  %v7037 = vrot.slane %v6509, 7
  %v7038 = vsel %vm6868, %v7036, %v7037
  %v7039 = vrot.slane %v7037, 2
  %v7040 = vrot.slane %v6518, 7
  %v7041 = vsel %vm6868, %v7039, %v7040
  %v7042 = vrot.slane %v7040, 2
  %v7043 = vrot.slane %v6526, 7
  %v7044 = vsel %vm6868, %v7042, %v7043
  %v7045 = vrot.slane %v7043, 2
  %v7046 = vrot.slane %v6525, 7
  %v7047 = vsel %vm6868, %v7045, %v7046
  %v7048 = vrot.slane %v7046, 2
  %v7049 = vrot.slane %v6527, 7
  %v7050 = vsel %vm6868, %v7048, %v7049
  %v7051 = vrot.slane %v7049, 2
  %v7052 = vrot.slane %v6536, 7
  %v7053 = vsel %vm6868, %v7051, %v7052
  %v7054 = vrot.slane %v7052, 2
  %v7055 = vrot.slane %v6544, 7
  %v7056 = vsel %vm6868, %v7054, %v7055
  %v7057 = vrot.slane %v7055, 2
  %v7058 = vrot.slane %v6543, 7
  %v7059 = vsel %vm6868, %v7057, %v7058
  %v7060 = vrot.slane %v7058, 2
  %v7061 = vrot.slane %v6545, 7
  %v7062 = vsel %vm6868, %v7060, %v7061
  %v7063 = vrot.slane %v7061, 2
  %v7064 = vrot.slane %v6554, 7
  %v7065 = vsel %vm6868, %v7063, %v7064
  %v7066 = vrot.slane %v7064, 2
  %v7067 = vrot.slane %v6562, 7
  %v7068 = vsel %vm6868, %v7066, %v7067
  %v7069 = vrot.slane %v6563, 7
  %v7070 = vrot.slane %v7069, 2
  %v7071 = vrot.slane %v6572, 7
  %v7072 = vsel %vm6868, %v7070, %v7071
  %v7073 = vrot.slane %v7071, 2
  %v7074 = vrot.slane %v6580, 7
  %v7075 = vsel %vm6868, %v7073, %v7074
  %v7076 = vrot.slane %v7074, 2
  %v7077 = vrot.slane %v6579, 7
  %v7078 = vsel %vm6868, %v7076, %v7077
  %v7079 = vrot.slane %v7077, 2
  %v7080 = vrot.slane %v6581, 7
  %v7081 = vsel %vm6868, %v7079, %v7080
  %v7082 = vrot.slane %v7080, 2
  %v7083 = vrot.slane %v6590, 7
  %v7084 = vsel %vm6868, %v7082, %v7083
  %v7085 = vrot.slane %v7083, 2
  %v7086 = vrot.slane %v6598, 7
  %v7087 = vsel %vm6868, %v7085, %v7086
  %v7088 = vrot.slane %v7086, 2
  %v7089 = vrot.slane %v6597, 7
  %v7090 = vsel %vm6868, %v7088, %v7089
  %v7091 = vrot.slane %v7089, 2
  %v7092 = vrot.slane %v6599, 7
  %v7093 = vsel %vm6868, %v7091, %v7092
  %v7094 = vrot.slane %v7092, 2
  %v7095 = vrot.slane %v6608, 7
  %v7096 = vsel %vm6868, %v7094, %v7095
  %v7097 = vrot.slane %v7095, 2
  %v7098 = vrot.slane %v6616, 7
  %v7099 = vsel %vm6868, %v7097, %v7098
  %v7100 = vrot.slane %v7098, 2
  %v7101 = vrot.slane %v6615, 7
  %v7102 = vsel %vm6868, %v7100, %v7101
  %v7103 = vrot.slane %v7101, 2
  %v7104 = vrot.slane %v6617, 7
  %v7105 = vsel %vm6868, %v7103, %v7104
  %v7106 = vrot.slane %v7104, 2
  %v7107 = vrot.slane %v6626, 7
  %v7108 = vsel %vm6868, %v7106, %v7107
  %v7109 = vrot.slane %v6633, 7
  %v7110 = vrot.slane %v7109, 2
  %v7111 = vrot.slane %v6635, 7
  %v7112 = vsel %vm6868, %v7110, %v7111
  %v7113 = vrot.slane %v7111, 2
  %v7114 = vrot.slane %v6644, 7
  %v7115 = vsel %vm6868, %v7113, %v7114
  %v7116 = vrot.slane %v7114, 2
  %v7117 = vrot.slane %v6652, 7
  %v7118 = vsel %vm6868, %v7116, %v7117
  %v7119 = vrot.slane %v7117, 2
  %v7120 = vrot.slane %v6651, 7
  %v7121 = vsel %vm6868, %v7119, %v7120
  %v7122 = vrot.slane %v7120, 2
  %v7123 = vrot.slane %v6653, 7
  %v7124 = vsel %vm6868, %v7122, %v7123
  %v7125 = vrot.slane %v7123, 2
  %v7126 = vrot.slane %v6662, 7
  %v7127 = vsel %vm6868, %v7125, %v7126
  %v7128 = vrot.slane %v7126, 2
  %v7129 = vrot.slane %v6670, 7
  %v7130 = vsel %vm6868, %v7128, %v7129
  %v7131 = vrot.slane %v7129, 2
  %v7132 = vrot.slane %v6669, 7
  %v7133 = vsel %vm6868, %v7131, %v7132
  %v7134 = vrot.slane %v7132, 2
  %v7135 = vrot.slane %v6671, 7
  %v7136 = vsel %vm6868, %v7134, %v7135
  %v7137 = vrot.slane %v7135, 2
  %v7138 = vrot.slane %v6680, 7
  %v7139 = vsel %vm6868, %v7137, %v7138
  %v7140 = vrot.slane %v7138, 2
  %v7141 = vrot.slane %v6688, 7
  %v7142 = vsel %vm6868, %v7140, %v7141
  %v7143 = vrot.slane %v7141, 2
  %v7144 = vrot.slane %v6687, 7
  %v7145 = vsel %vm6868, %v7143, %v7144
  %v7146 = vrot.slane %v7144, 2
  %v7147 = vrot.slane %v6689, 7
  %v7148 = vsel %vm6868, %v7146, %v7147
  %v7149 = vrot.slane %v6706, 7
  %v7150 = vrot.slane %v7149, 2
  %v7151 = vrot.slane %v6705, 7
  %v7152 = vsel %vm6868, %v7150, %v7151
  %v7153 = vrot.slane %v7151, 2
  %v7154 = vrot.slane %v6707, 7
  %v7155 = vsel %vm6868, %v7153, %v7154
  %v7156 = vrot.slane %v7154, 2
  %v7157 = vrot.slane %v6716, 7
  %v7158 = vsel %vm6868, %v7156, %v7157
  %v7159 = vrot.slane %v7157, 2
  %v7160 = vrot.slane %v6724, 7
  %v7161 = vsel %vm6868, %v7159, %v7160
  %v7162 = vrot.slane %v7160, 2
  %v7163 = vrot.slane %v6723, 7
  %v7164 = vsel %vm6868, %v7162, %v7163
  %v7165 = vrot.slane %v7163, 2
  %v7166 = vrot.slane %v6725, 7
  %v7167 = vsel %vm6868, %v7165, %v7166
  %v7168 = vrot.slane %v7166, 2
  %v7169 = vrot.slane %v6734, 7
  %v7170 = vsel %vm6868, %v7168, %v7169
  %v7171 = vrot.slane %v7169, 2
  %v7172 = vrot.slane %v6742, 7
  %v7173 = vsel %vm6868, %v7171, %v7172
  %v7174 = vrot.slane %v7172, 2
  %v7175 = vrot.slane %v6741, 7
  %v7176 = vsel %vm6868, %v7174, %v7175
  %v7177 = vrot.slane %v7175, 2
  %v7178 = vrot.slane %v6743, 7
  %v7179 = vsel %vm6868, %v7177, %v7178
  %v7180 = vrot.slane %v7178, 2
  %v7181 = vrot.slane %v6752, 7
  %v7182 = vsel %vm6868, %v7180, %v7181
  %v7183 = vrot.slane %v7181, 2
  %v7184 = vrot.slane %v6760, 7
  %v7185 = vsel %vm6868, %v7183, %v7184
  %v7186 = vrot.slane %v7184, 2
  %v7187 = vrot.slane %v6759, 7
  %v7188 = vsel %vm6868, %v7186, %v7187
  %7189 = vrot.lane.b32.xlu0 %v6872, 96
  %v7190 = vpop.permute.xlu0 %7189
  %7191 = vrot.lane.b32.xlu0 %v6875, 96
  %v7192 = vpop.permute.xlu0 %7191
  %7193 = vrot.lane.b32.xlu0 %v6878, 96
  %v7194 = vpop.permute.xlu0 %7193
  %7195 = vrot.lane.b32.xlu0 %v6881, 96
  %v7196 = vpop.permute.xlu0 %7195
  %7197 = vrot.lane.b32.xlu0 %v6884, 96
  %v7198 = vpop.permute.xlu0 %7197
  %7199 = vrot.lane.b32.xlu0 %v6887, 96
  %v7200 = vpop.permute.xlu0 %7199
  %7201 = vrot.lane.b32.xlu0 %v6890, 96
  %v7202 = vpop.permute.xlu0 %7201
  %7203 = vrot.lane.b32.xlu0 %v6893, 96
  %v7204 = vpop.permute.xlu0 %7203
  %7205 = vrot.lane.b32.xlu0 %v6896, 96
  %v7206 = vpop.permute.xlu0 %7205
  %7207 = vrot.lane.b32.xlu0 %v6899, 96
  %v7208 = vpop.permute.xlu0 %7207
  %7209 = vrot.lane.b32.xlu0 %v6902, 96
  %v7210 = vpop.permute.xlu0 %7209
  %7211 = vrot.lane.b32.xlu0 %v6905, 96
  %v7212 = vpop.permute.xlu0 %7211
  %7213 = vrot.lane.b32.xlu0 %v6908, 96
  %v7214 = vpop.permute.xlu0 %7213
  %7215 = vrot.lane.b32.xlu0 %v6912, 96
  %v7216 = vpop.permute.xlu0 %7215
  %7217 = vrot.lane.b32.xlu0 %v6915, 96
  %v7218 = vpop.permute.xlu0 %7217
  %7219 = vrot.lane.b32.xlu0 %v6918, 96
  %v7220 = vpop.permute.xlu0 %7219
  %7221 = vrot.lane.b32.xlu0 %v6921, 96
  %v7222 = vpop.permute.xlu0 %7221
  %7223 = vrot.lane.b32.xlu0 %v6924, 96
  %v7224 = vpop.permute.xlu0 %7223
  %7225 = vrot.lane.b32.xlu0 %v6927, 96
  %v7226 = vpop.permute.xlu0 %7225
  %7227 = vrot.lane.b32.xlu0 %v6930, 96
  %v7228 = vpop.permute.xlu0 %7227
  %7229 = vrot.lane.b32.xlu0 %v6933, 96
  %v7230 = vpop.permute.xlu0 %7229
  %7231 = vrot.lane.b32.xlu0 %v6936, 96
  %v7232 = vpop.permute.xlu0 %7231
  %7233 = vrot.lane.b32.xlu0 %v6939, 96
  %v7234 = vpop.permute.xlu0 %7233
  %7235 = vrot.lane.b32.xlu0 %v6942, 96
  %v7236 = vpop.permute.xlu0 %7235
  %7237 = vrot.lane.b32.xlu0 %v6945, 96
  %v7238 = vpop.permute.xlu0 %7237
  %7239 = vrot.lane.b32.xlu0 %v6948, 96
  %v7240 = vpop.permute.xlu0 %7239
  %7241 = vrot.lane.b32.xlu0 %v6952, 96
  %v7242 = vpop.permute.xlu0 %7241
  %7243 = vrot.lane.b32.xlu0 %v6955, 96
  %v7244 = vpop.permute.xlu0 %7243
  %7245 = vrot.lane.b32.xlu0 %v6958, 96
  %v7246 = vpop.permute.xlu0 %7245
  %7247 = vrot.lane.b32.xlu0 %v6961, 96
  %v7248 = vpop.permute.xlu0 %7247
  %7249 = vrot.lane.b32.xlu0 %v6964, 96
  %v7250 = vpop.permute.xlu0 %7249
  %7251 = vrot.lane.b32.xlu0 %v6967, 96
  %v7252 = vpop.permute.xlu0 %7251
  %7253 = vrot.lane.b32.xlu0 %v6970, 96
  %v7254 = vpop.permute.xlu0 %7253
  %7255 = vrot.lane.b32.xlu0 %v6973, 96
  %v7256 = vpop.permute.xlu0 %7255
  %7257 = vrot.lane.b32.xlu0 %v6976, 96
  %v7258 = vpop.permute.xlu0 %7257
  %7259 = vrot.lane.b32.xlu0 %v6979, 96
  %v7260 = vpop.permute.xlu0 %7259
  %7261 = vrot.lane.b32.xlu0 %v6982, 96
  %v7262 = vpop.permute.xlu0 %7261
  %7263 = vrot.lane.b32.xlu0 %v6985, 96
  %v7264 = vpop.permute.xlu0 %7263
  %7265 = vrot.lane.b32.xlu0 %v6988, 96
  %v7266 = vpop.permute.xlu0 %7265
  %7267 = vrot.lane.b32.xlu0 %v6992, 96
  %v7268 = vpop.permute.xlu0 %7267
  %7269 = vrot.lane.b32.xlu0 %v6995, 96
  %v7270 = vpop.permute.xlu0 %7269
  %7271 = vrot.lane.b32.xlu0 %v6998, 96
  %v7272 = vpop.permute.xlu0 %7271
  %7273 = vrot.lane.b32.xlu0 %v7001, 96
  %v7274 = vpop.permute.xlu0 %7273
  %7275 = vrot.lane.b32.xlu0 %v7004, 96
  %v7276 = vpop.permute.xlu0 %7275
  %7277 = vrot.lane.b32.xlu0 %v7007, 96
  %v7278 = vpop.permute.xlu0 %7277
  %7279 = vrot.lane.b32.xlu0 %v7010, 96
  %v7280 = vpop.permute.xlu0 %7279
  %7281 = vrot.lane.b32.xlu0 %v7013, 96
  %v7282 = vpop.permute.xlu0 %7281
  %7283 = vrot.lane.b32.xlu0 %v7016, 96
  %v7284 = vpop.permute.xlu0 %7283
  %7285 = vrot.lane.b32.xlu0 %v7019, 96
  %v7286 = vpop.permute.xlu0 %7285
  %7287 = vrot.lane.b32.xlu0 %v7022, 96
  %v7288 = vpop.permute.xlu0 %7287
  %7289 = vrot.lane.b32.xlu0 %v7025, 96
  %v7290 = vpop.permute.xlu0 %7289
  %7291 = vrot.lane.b32.xlu0 %v7028, 96
  %v7292 = vpop.permute.xlu0 %7291
  %7293 = vrot.lane.b32.xlu0 %v7032, 96
  %v7294 = vpop.permute.xlu0 %7293
  %7295 = vrot.lane.b32.xlu0 %v7035, 96
  %v7296 = vpop.permute.xlu0 %7295
  %7297 = vrot.lane.b32.xlu0 %v7038, 96
  %v7298 = vpop.permute.xlu0 %7297
  %7299 = vrot.lane.b32.xlu0 %v7041, 96
  %v7300 = vpop.permute.xlu0 %7299
  %7301 = vrot.lane.b32.xlu0 %v7044, 96
  %v7302 = vpop.permute.xlu0 %7301
  %7303 = vrot.lane.b32.xlu0 %v7047, 96
  %v7304 = vpop.permute.xlu0 %7303
  %7305 = vrot.lane.b32.xlu0 %v7050, 96
  %v7306 = vpop.permute.xlu0 %7305
  %7307 = vrot.lane.b32.xlu0 %v7053, 96
  %v7308 = vpop.permute.xlu0 %7307
  %7309 = vrot.lane.b32.xlu0 %v7056, 96
  %v7310 = vpop.permute.xlu0 %7309
  %7311 = vrot.lane.b32.xlu0 %v7059, 96
  %v7312 = vpop.permute.xlu0 %7311
  %7313 = vrot.lane.b32.xlu0 %v7062, 96
  %v7314 = vpop.permute.xlu0 %7313
  %7315 = vrot.lane.b32.xlu0 %v7065, 96
  %v7316 = vpop.permute.xlu0 %7315
  %7317 = vrot.lane.b32.xlu0 %v7068, 96
  %v7318 = vpop.permute.xlu0 %7317
  %7319 = vrot.lane.b32.xlu0 %v7072, 96
  %v7320 = vpop.permute.xlu0 %7319
  %7321 = vrot.lane.b32.xlu0 %v7075, 96
  %v7322 = vpop.permute.xlu0 %7321
  %7323 = vrot.lane.b32.xlu0 %v7078, 96
  %v7324 = vpop.permute.xlu0 %7323
  %7325 = vrot.lane.b32.xlu0 %v7081, 96
  %v7326 = vpop.permute.xlu0 %7325
  %7327 = vrot.lane.b32.xlu0 %v7084, 96
  %v7328 = vpop.permute.xlu0 %7327
  %7329 = vrot.lane.b32.xlu0 %v7087, 96
  %v7330 = vpop.permute.xlu0 %7329
  %7331 = vrot.lane.b32.xlu0 %v7090, 96
  %v7332 = vpop.permute.xlu0 %7331
  %7333 = vrot.lane.b32.xlu0 %v7093, 96
  %v7334 = vpop.permute.xlu0 %7333
  %7335 = vrot.lane.b32.xlu0 %v7096, 96
  %v7336 = vpop.permute.xlu0 %7335
  %7337 = vrot.lane.b32.xlu0 %v7099, 96
  %v7338 = vpop.permute.xlu0 %7337
  %7339 = vrot.lane.b32.xlu0 %v7102, 96
  %v7340 = vpop.permute.xlu0 %7339
  %7341 = vrot.lane.b32.xlu0 %v7105, 96
  %v7342 = vpop.permute.xlu0 %7341
  %7343 = vrot.lane.b32.xlu0 %v7108, 96
  %v7344 = vpop.permute.xlu0 %7343
  %7345 = vrot.lane.b32.xlu0 %v7112, 96
  %v7346 = vpop.permute.xlu0 %7345
  %7347 = vrot.lane.b32.xlu0 %v7115, 96
  %v7348 = vpop.permute.xlu0 %7347
  %7349 = vrot.lane.b32.xlu0 %v7118, 96
  %v7350 = vpop.permute.xlu0 %7349
  %7351 = vrot.lane.b32.xlu0 %v7121, 96
  %v7352 = vpop.permute.xlu0 %7351
  %7353 = vrot.lane.b32.xlu0 %v7124, 96
  %v7354 = vpop.permute.xlu0 %7353
  %7355 = vrot.lane.b32.xlu0 %v7127, 96
  %v7356 = vpop.permute.xlu0 %7355
  %7357 = vrot.lane.b32.xlu0 %v7130, 96
  %v7358 = vpop.permute.xlu0 %7357
  %7359 = vrot.lane.b32.xlu0 %v7133, 96
  %v7360 = vpop.permute.xlu0 %7359
  %7361 = vrot.lane.b32.xlu0 %v7136, 96
  %v7362 = vpop.permute.xlu0 %7361
  %7363 = vrot.lane.b32.xlu0 %v7139, 96
  %v7364 = vpop.permute.xlu0 %7363
  %7365 = vrot.lane.b32.xlu0 %v7142, 96
  %v7366 = vpop.permute.xlu0 %7365
  %7367 = vrot.lane.b32.xlu0 %v7145, 96
  %v7368 = vpop.permute.xlu0 %7367
  %7369 = vrot.lane.b32.xlu0 %v7148, 96
  %v7370 = vpop.permute.xlu0 %7369
  %7371 = vrot.lane.b32.xlu0 %v7152, 96
  %v7372 = vpop.permute.xlu0 %7371
  %7373 = vrot.lane.b32.xlu0 %v7155, 96
  %v7374 = vpop.permute.xlu0 %7373
  %7375 = vrot.lane.b32.xlu0 %v7158, 96
  %v7376 = vpop.permute.xlu0 %7375
  %7377 = vrot.lane.b32.xlu0 %v7161, 96
  %v7378 = vpop.permute.xlu0 %7377
  %7379 = vrot.lane.b32.xlu0 %v7164, 96
  %v7380 = vpop.permute.xlu0 %7379
  %7381 = vrot.lane.b32.xlu0 %v7167, 96
  %v7382 = vpop.permute.xlu0 %7381
  %7383 = vrot.lane.b32.xlu0 %v7170, 96
  %v7384 = vpop.permute.xlu0 %7383
  %7385 = vrot.lane.b32.xlu0 %v7173, 96
  %v7386 = vpop.permute.xlu0 %7385
  %7387 = vrot.lane.b32.xlu0 %v7176, 96
  %v7388 = vpop.permute.xlu0 %7387
  %7389 = vrot.lane.b32.xlu0 %v7179, 96
  %v7390 = vpop.permute.xlu0 %7389
  %7391 = vrot.lane.b32.xlu0 %v7182, 96
  %v7392 = vpop.permute.xlu0 %7391
  %7393 = vrot.lane.b32.xlu0 %v7185, 96
  %v7394 = vpop.permute.xlu0 %7393
  %7395 = vrot.lane.b32.xlu0 %v7188, 96
  %v7396 = vpop.permute.xlu0 %7395
  %v7501 = vadd.f32 %v6230, %v7190
  %v7502 = vadd.f32 %v6238, %v7192
  %v7503 = vadd.f32 %v6237, %v7194
  %v7504 = vadd.f32 %v6239, %v7196
  %v7505 = vadd.f32 %v6248, %v7198
  %v7506 = vadd.f32 %v6256, %v7200
  %v7507 = vadd.f32 %v6255, %v7202
  %v7508 = vadd.f32 %v6257, %v7204
  %v7509 = vadd.f32 %v6266, %v7206
  %v7510 = vadd.f32 %v6274, %v7208
  %v7511 = vadd.f32 %v6273, %v7210
  %v7512 = vadd.f32 %v6275, %v7212
  %v7513 = vadd.f32 %v6284, %v7214
  %v7514 = vadd.f32 %v6293, %v7216
  %v7515 = vadd.f32 %v6302, %v7218
  %v7516 = vadd.f32 %v6310, %v7220
  %v7517 = vadd.f32 %v6309, %v7222
  %v7518 = vadd.f32 %v6311, %v7224
  %v7519 = vadd.f32 %v6320, %v7226
  %v7520 = vadd.f32 %v6328, %v7228
  %v7521 = vadd.f32 %v6327, %v7230
  %v7522 = vadd.f32 %v6329, %v7232
  %v7523 = vadd.f32 %v6338, %v7234
  %v7524 = vadd.f32 %v6346, %v7236
  %v7525 = vadd.f32 %v6345, %v7238
  %v7526 = vadd.f32 %v6347, %v7240
  %v7527 = vadd.f32 %v6363, %v7242
  %v7528 = vadd.f32 %v6365, %v7244
  %v7529 = vadd.f32 %v6374, %v7246
  %v7530 = vadd.f32 %v6382, %v7248
  %v7531 = vadd.f32 %v6381, %v7250
  %v7532 = vadd.f32 %v6383, %v7252
  %v7533 = vadd.f32 %v6392, %v7254
  %v7534 = vadd.f32 %v6400, %v7256
  %v7535 = vadd.f32 %v6399, %v7258
  %v7536 = vadd.f32 %v6401, %v7260
  %v7537 = vadd.f32 %v6410, %v7262
  %v7538 = vadd.f32 %v6418, %v7264
  %v7539 = vadd.f32 %v6417, %v7266
  %v7540 = vadd.f32 %v6436, %v7268
  %v7541 = vadd.f32 %v6435, %v7270
  %v7542 = vadd.f32 %v6437, %v7272
  %v7543 = vadd.f32 %v6446, %v7274
  %v7544 = vadd.f32 %v6454, %v7276
  %v7545 = vadd.f32 %v6453, %v7278
  %v7546 = vadd.f32 %v6455, %v7280
  %v7547 = vadd.f32 %v6464, %v7282
  %v7548 = vadd.f32 %v6472, %v7284
  %v7549 = vadd.f32 %v6471, %v7286
  %v7550 = vadd.f32 %v6473, %v7288
  %v7551 = vadd.f32 %v6482, %v7290
  %v7552 = vadd.f32 %v6490, %v7292
  %v7553 = vadd.f32 %v6500, %v7294
  %v7554 = vadd.f32 %v6508, %v7296
  %v7555 = vadd.f32 %v6507, %v7298
  %v7556 = vadd.f32 %v6509, %v7300
  %v7557 = vadd.f32 %v6518, %v7302
  %v7558 = vadd.f32 %v6526, %v7304
  %v7559 = vadd.f32 %v6525, %v7306
  %v7560 = vadd.f32 %v6527, %v7308
  %v7561 = vadd.f32 %v6536, %v7310
  %v7562 = vadd.f32 %v6544, %v7312
  %v7563 = vadd.f32 %v6543, %v7314
  %v7564 = vadd.f32 %v6545, %v7316
  %v7565 = vadd.f32 %v6554, %v7318
  %v7566 = vadd.f32 %v6563, %v7320
  %v7567 = vadd.f32 %v6572, %v7322
  %v7568 = vadd.f32 %v6580, %v7324
  %v7569 = vadd.f32 %v6579, %v7326
  %v7570 = vadd.f32 %v6581, %v7328
  %v7571 = vadd.f32 %v6590, %v7330
  %v7572 = vadd.f32 %v6598, %v7332
  %v7573 = vadd.f32 %v6597, %v7334
  %v7574 = vadd.f32 %v6599, %v7336
  %v7575 = vadd.f32 %v6608, %v7338
  %v7576 = vadd.f32 %v6616, %v7340
  %v7577 = vadd.f32 %v6615, %v7342
  %v7578 = vadd.f32 %v6617, %v7344
  %v7579 = vadd.f32 %v6633, %v7346
  %v7580 = vadd.f32 %v6635, %v7348
  %v7581 = vadd.f32 %v6644, %v7350
  %v7582 = vadd.f32 %v6652, %v7352
  %v7583 = vadd.f32 %v6651, %v7354
  %v7584 = vadd.f32 %v6653, %v7356
  %v7585 = vadd.f32 %v6662, %v7358
  %v7586 = vadd.f32 %v6670, %v7360
  %v7587 = vadd.f32 %v6669, %v7362
  %v7588 = vadd.f32 %v6671, %v7364
  %v7589 = vadd.f32 %v6680, %v7366
  %v7590 = vadd.f32 %v6688, %v7368
  %v7591 = vadd.f32 %v6687, %v7370
  %v7592 = vadd.f32 %v6706, %v7372
  %v7593 = vadd.f32 %v6705, %v7374
  %v7594 = vadd.f32 %v6707, %v7376
  %v7595 = vadd.f32 %v6716, %v7378
  %v7596 = vadd.f32 %v6724, %v7380
  %v7597 = vadd.f32 %v6723, %v7382
  %v7598 = vadd.f32 %v6725, %v7384
  %v7599 = vadd.f32 %v6734, %v7386
  %v7600 = vadd.f32 %v6742, %v7388
  %v7601 = vadd.f32 %v6741, %v7390
  %v7602 = vadd.f32 %v6743, %v7392
  %v7603 = vadd.f32 %v6752, %v7394
  %v7604 = vadd.f32 %v6760, %v7396
  %7605 = vrot.lane.b32.xlu0 %v6238, 64
  %v7606 = vpop.permute.xlu0 %7605
  %7607 = vrot.lane.b32.xlu0 %v6237, 64
  %v7608 = vpop.permute.xlu0 %7607
  %7609 = vrot.lane.b32.xlu0 %v6239, 64
  %v7610 = vpop.permute.xlu0 %7609
  %7611 = vrot.lane.b32.xlu0 %v6248, 64
  %v7612 = vpop.permute.xlu0 %7611
  %7613 = vrot.lane.b32.xlu0 %v6256, 64
  %v7614 = vpop.permute.xlu0 %7613
  %7615 = vrot.lane.b32.xlu0 %v6255, 64
  %v7616 = vpop.permute.xlu0 %7615
  %7617 = vrot.lane.b32.xlu0 %v6257, 64
  %v7618 = vpop.permute.xlu0 %7617
  %7619 = vrot.lane.b32.xlu0 %v6266, 64
  %v7620 = vpop.permute.xlu0 %7619
  %7621 = vrot.lane.b32.xlu0 %v6274, 64
  %v7622 = vpop.permute.xlu0 %7621
  %7623 = vrot.lane.b32.xlu0 %v6273, 64
  %v7624 = vpop.permute.xlu0 %7623
  %7625 = vrot.lane.b32.xlu0 %v6275, 64
  %v7626 = vpop.permute.xlu0 %7625
  %7627 = vrot.lane.b32.xlu0 %v6284, 64
  %v7628 = vpop.permute.xlu0 %7627
  %7629 = vrot.lane.b32.xlu0 %v6292, 64
  %v7630 = vpop.permute.xlu0 %7629
  %7631 = vrot.lane.b32.xlu0 %v6302, 64
  %v7632 = vpop.permute.xlu0 %7631
  %7633 = vrot.lane.b32.xlu0 %v6310, 64
  %v7634 = vpop.permute.xlu0 %7633
  %7635 = vrot.lane.b32.xlu0 %v6309, 64
  %v7636 = vpop.permute.xlu0 %7635
  %7637 = vrot.lane.b32.xlu0 %v6311, 64
  %v7638 = vpop.permute.xlu0 %7637
  %7639 = vrot.lane.b32.xlu0 %v6320, 64
  %v7640 = vpop.permute.xlu0 %7639
  %7641 = vrot.lane.b32.xlu0 %v6328, 64
  %v7642 = vpop.permute.xlu0 %7641
  %7643 = vrot.lane.b32.xlu0 %v6327, 64
  %v7644 = vpop.permute.xlu0 %7643
  %7645 = vrot.lane.b32.xlu0 %v6329, 64
  %v7646 = vpop.permute.xlu0 %7645
  %7647 = vrot.lane.b32.xlu0 %v6338, 64
  %v7648 = vpop.permute.xlu0 %7647
  %7649 = vrot.lane.b32.xlu0 %v6346, 64
  %v7650 = vpop.permute.xlu0 %7649
  %7651 = vrot.lane.b32.xlu0 %v6345, 64
  %v7652 = vpop.permute.xlu0 %7651
  %7653 = vrot.lane.b32.xlu0 %v6347, 64
  %v7654 = vpop.permute.xlu0 %7653
  %7655 = vrot.lane.b32.xlu0 %v6356, 64
  %v7656 = vpop.permute.xlu0 %7655
  %7657 = vrot.lane.b32.xlu0 %v6365, 64
  %v7658 = vpop.permute.xlu0 %7657
  %7659 = vrot.lane.b32.xlu0 %v6374, 64
  %v7660 = vpop.permute.xlu0 %7659
  %7661 = vrot.lane.b32.xlu0 %v6382, 64
  %v7662 = vpop.permute.xlu0 %7661
  %7663 = vrot.lane.b32.xlu0 %v6381, 64
  %v7664 = vpop.permute.xlu0 %7663
  %7665 = vrot.lane.b32.xlu0 %v6383, 64
  %v7666 = vpop.permute.xlu0 %7665
  %7667 = vrot.lane.b32.xlu0 %v6392, 64
  %v7668 = vpop.permute.xlu0 %7667
  %7669 = vrot.lane.b32.xlu0 %v6400, 64
  %v7670 = vpop.permute.xlu0 %7669
  %7671 = vrot.lane.b32.xlu0 %v6399, 64
  %v7672 = vpop.permute.xlu0 %7671
  %7673 = vrot.lane.b32.xlu0 %v6401, 64
  %v7674 = vpop.permute.xlu0 %7673
  %7675 = vrot.lane.b32.xlu0 %v6410, 64
  %v7676 = vpop.permute.xlu0 %7675
  %7677 = vrot.lane.b32.xlu0 %v6418, 64
  %v7678 = vpop.permute.xlu0 %7677
  %7679 = vrot.lane.b32.xlu0 %v6417, 64
  %v7680 = vpop.permute.xlu0 %7679
  %7681 = vrot.lane.b32.xlu0 %v6419, 64
  %v7682 = vpop.permute.xlu0 %7681
  %7683 = vrot.lane.b32.xlu0 %v6435, 64
  %v7684 = vpop.permute.xlu0 %7683
  %7685 = vrot.lane.b32.xlu0 %v6437, 64
  %v7686 = vpop.permute.xlu0 %7685
  %7687 = vrot.lane.b32.xlu0 %v6446, 64
  %v7688 = vpop.permute.xlu0 %7687
  %7689 = vrot.lane.b32.xlu0 %v6454, 64
  %v7690 = vpop.permute.xlu0 %7689
  %7691 = vrot.lane.b32.xlu0 %v6453, 64
  %v7692 = vpop.permute.xlu0 %7691
  %7693 = vrot.lane.b32.xlu0 %v6455, 64
  %v7694 = vpop.permute.xlu0 %7693
  %7695 = vrot.lane.b32.xlu0 %v6464, 64
  %v7696 = vpop.permute.xlu0 %7695
  %7697 = vrot.lane.b32.xlu0 %v6472, 64
  %v7698 = vpop.permute.xlu0 %7697
  %7699 = vrot.lane.b32.xlu0 %v6471, 64
  %v7700 = vpop.permute.xlu0 %7699
  %7701 = vrot.lane.b32.xlu0 %v6473, 64
  %v7702 = vpop.permute.xlu0 %7701
  %7703 = vrot.lane.b32.xlu0 %v6482, 64
  %v7704 = vpop.permute.xlu0 %7703
  %7705 = vrot.lane.b32.xlu0 %v6490, 64
  %v7706 = vpop.permute.xlu0 %7705
  %7707 = vrot.lane.b32.xlu0 %v6489, 64
  %v7708 = vpop.permute.xlu0 %7707
  %7709 = vrot.lane.b32.xlu0 %v6508, 64
  %v7710 = vpop.permute.xlu0 %7709
  %7711 = vrot.lane.b32.xlu0 %v6507, 64
  %v7712 = vpop.permute.xlu0 %7711
  %7713 = vrot.lane.b32.xlu0 %v6509, 64
  %v7714 = vpop.permute.xlu0 %7713
  %7715 = vrot.lane.b32.xlu0 %v6518, 64
  %v7716 = vpop.permute.xlu0 %7715
  %7717 = vrot.lane.b32.xlu0 %v6526, 64
  %v7718 = vpop.permute.xlu0 %7717
  %7719 = vrot.lane.b32.xlu0 %v6525, 64
  %v7720 = vpop.permute.xlu0 %7719
  %7721 = vrot.lane.b32.xlu0 %v6527, 64
  %v7722 = vpop.permute.xlu0 %7721
  %7723 = vrot.lane.b32.xlu0 %v6536, 64
  %v7724 = vpop.permute.xlu0 %7723
  %7725 = vrot.lane.b32.xlu0 %v6544, 64
  %v7726 = vpop.permute.xlu0 %7725
  %7727 = vrot.lane.b32.xlu0 %v6543, 64
  %v7728 = vpop.permute.xlu0 %7727
  %7729 = vrot.lane.b32.xlu0 %v6545, 64
  %v7730 = vpop.permute.xlu0 %7729
  %7731 = vrot.lane.b32.xlu0 %v6554, 64
  %v7732 = vpop.permute.xlu0 %7731
  %7733 = vrot.lane.b32.xlu0 %v6562, 64
  %v7734 = vpop.permute.xlu0 %7733
  %7735 = vrot.lane.b32.xlu0 %v6572, 64
  %v7736 = vpop.permute.xlu0 %7735
  %7737 = vrot.lane.b32.xlu0 %v6580, 64
  %v7738 = vpop.permute.xlu0 %7737
  %7739 = vrot.lane.b32.xlu0 %v6579, 64
  %v7740 = vpop.permute.xlu0 %7739
  %7741 = vrot.lane.b32.xlu0 %v6581, 64
  %v7742 = vpop.permute.xlu0 %7741
  %7743 = vrot.lane.b32.xlu0 %v6590, 64
  %v7744 = vpop.permute.xlu0 %7743
  %7745 = vrot.lane.b32.xlu0 %v6598, 64
  %v7746 = vpop.permute.xlu0 %7745
  %7747 = vrot.lane.b32.xlu0 %v6597, 64
  %v7748 = vpop.permute.xlu0 %7747
  %7749 = vrot.lane.b32.xlu0 %v6599, 64
  %v7750 = vpop.permute.xlu0 %7749
  %7751 = vrot.lane.b32.xlu0 %v6608, 64
  %v7752 = vpop.permute.xlu0 %7751
  %7753 = vrot.lane.b32.xlu0 %v6616, 64
  %v7754 = vpop.permute.xlu0 %7753
  %7755 = vrot.lane.b32.xlu0 %v6615, 64
  %v7756 = vpop.permute.xlu0 %7755
  %7757 = vrot.lane.b32.xlu0 %v6617, 64
  %v7758 = vpop.permute.xlu0 %7757
  %7759 = vrot.lane.b32.xlu0 %v6626, 64
  %v7760 = vpop.permute.xlu0 %7759
  %7761 = vrot.lane.b32.xlu0 %v6635, 64
  %v7762 = vpop.permute.xlu0 %7761
  %7763 = vrot.lane.b32.xlu0 %v6644, 64
  %v7764 = vpop.permute.xlu0 %7763
  %7765 = vrot.lane.b32.xlu0 %v6652, 64
  %v7766 = vpop.permute.xlu0 %7765
  %7767 = vrot.lane.b32.xlu0 %v6651, 64
  %v7768 = vpop.permute.xlu0 %7767
  %7769 = vrot.lane.b32.xlu0 %v6653, 64
  %v7770 = vpop.permute.xlu0 %7769
  %7771 = vrot.lane.b32.xlu0 %v6662, 64
  %v7772 = vpop.permute.xlu0 %7771
  %7773 = vrot.lane.b32.xlu0 %v6670, 64
  %v7774 = vpop.permute.xlu0 %7773
  %7775 = vrot.lane.b32.xlu0 %v6669, 64
  %v7776 = vpop.permute.xlu0 %7775
  %7777 = vrot.lane.b32.xlu0 %v6671, 64
  %v7778 = vpop.permute.xlu0 %7777
  %7779 = vrot.lane.b32.xlu0 %v6680, 64
  %v7780 = vpop.permute.xlu0 %7779
  %7781 = vrot.lane.b32.xlu0 %v6688, 64
  %v7782 = vpop.permute.xlu0 %7781
  %7783 = vrot.lane.b32.xlu0 %v6687, 64
  %v7784 = vpop.permute.xlu0 %7783
  %7785 = vrot.lane.b32.xlu0 %v6689, 64
  %v7786 = vpop.permute.xlu0 %7785
  %7787 = vrot.lane.b32.xlu0 %v6705, 64
  %v7788 = vpop.permute.xlu0 %7787
  %7789 = vrot.lane.b32.xlu0 %v6707, 64
  %v7790 = vpop.permute.xlu0 %7789
  %7791 = vrot.lane.b32.xlu0 %v6716, 64
  %v7792 = vpop.permute.xlu0 %7791
  %7793 = vrot.lane.b32.xlu0 %v6724, 64
  %v7794 = vpop.permute.xlu0 %7793
  %7795 = vrot.lane.b32.xlu0 %v6723, 64
  %v7796 = vpop.permute.xlu0 %7795
  %7797 = vrot.lane.b32.xlu0 %v6725, 64
  %v7798 = vpop.permute.xlu0 %7797
  %7799 = vrot.lane.b32.xlu0 %v6734, 64
  %v7800 = vpop.permute.xlu0 %7799
  %7801 = vrot.lane.b32.xlu0 %v6742, 64
  %v7802 = vpop.permute.xlu0 %7801
  %7803 = vrot.lane.b32.xlu0 %v6741, 64
  %v7804 = vpop.permute.xlu0 %7803
  %7805 = vrot.lane.b32.xlu0 %v6743, 64
  %v7806 = vpop.permute.xlu0 %7805
  %7807 = vrot.lane.b32.xlu0 %v6752, 64
  %v7808 = vpop.permute.xlu0 %7807
  %7809 = vrot.lane.b32.xlu0 %v6760, 64
  %v7810 = vpop.permute.xlu0 %7809
  %7811 = vrot.lane.b32.xlu0 %v6759, 64
  %v7812 = vpop.permute.xlu0 %7811
  %v7917 = vadd.f32 %v7501, %v7606
  %v7918 = vadd.f32 %v7502, %v7608
  %v7919 = vadd.f32 %v7503, %v7610
  %v7920 = vadd.f32 %v7504, %v7612
  %v7921 = vadd.f32 %v7505, %v7614
  %v7922 = vadd.f32 %v7506, %v7616
  %v7923 = vadd.f32 %v7507, %v7618
  %v7924 = vadd.f32 %v7508, %v7620
  %v7925 = vadd.f32 %v7509, %v7622
  %v7926 = vadd.f32 %v7510, %v7624
  %v7927 = vadd.f32 %v7511, %v7626
  %v7928 = vadd.f32 %v7512, %v7628
  %v7929 = vadd.f32 %v7513, %v7630
  %v7930 = vadd.f32 %v7514, %v7632
  %v7931 = vadd.f32 %v7515, %v7634
  %v7932 = vadd.f32 %v7516, %v7636
  %v7933 = vadd.f32 %v7517, %v7638
  %v7934 = vadd.f32 %v7518, %v7640
  %v7935 = vadd.f32 %v7519, %v7642
  %v7936 = vadd.f32 %v7520, %v7644
  %v7937 = vadd.f32 %v7521, %v7646
  %v7938 = vadd.f32 %v7522, %v7648
  %v7939 = vadd.f32 %v7523, %v7650
  %v7940 = vadd.f32 %v7524, %v7652
  %v7941 = vadd.f32 %v7525, %v7654
  %v7942 = vadd.f32 %v7526, %v7656
  %v7943 = vadd.f32 %v7527, %v7658
  %v7944 = vadd.f32 %v7528, %v7660
  %v7945 = vadd.f32 %v7529, %v7662
  %v7946 = vadd.f32 %v7530, %v7664
  %v7947 = vadd.f32 %v7531, %v7666
  %v7948 = vadd.f32 %v7532, %v7668
  %v7949 = vadd.f32 %v7533, %v7670
  %v7950 = vadd.f32 %v7534, %v7672
  %v7951 = vadd.f32 %v7535, %v7674
  %v7952 = vadd.f32 %v7536, %v7676
  %v7953 = vadd.f32 %v7537, %v7678
  %v7954 = vadd.f32 %v7538, %v7680
  %v7955 = vadd.f32 %v7539, %v7682
  %v7956 = vadd.f32 %v7540, %v7684
  %v7957 = vadd.f32 %v7541, %v7686
  %v7958 = vadd.f32 %v7542, %v7688
  %v7959 = vadd.f32 %v7543, %v7690
  %v7960 = vadd.f32 %v7544, %v7692
  %v7961 = vadd.f32 %v7545, %v7694
  %v7962 = vadd.f32 %v7546, %v7696
  %v7963 = vadd.f32 %v7547, %v7698
  %v7964 = vadd.f32 %v7548, %v7700
  %v7965 = vadd.f32 %v7549, %v7702
  %v7966 = vadd.f32 %v7550, %v7704
  %v7967 = vadd.f32 %v7551, %v7706
  %v7968 = vadd.f32 %v7552, %v7708
  %v7969 = vadd.f32 %v7553, %v7710
  %v7970 = vadd.f32 %v7554, %v7712
  %v7971 = vadd.f32 %v7555, %v7714
  %v7972 = vadd.f32 %v7556, %v7716
  %v7973 = vadd.f32 %v7557, %v7718
  %v7974 = vadd.f32 %v7558, %v7720
  %v7975 = vadd.f32 %v7559, %v7722
  %v7976 = vadd.f32 %v7560, %v7724
  %v7977 = vadd.f32 %v7561, %v7726
  %v7978 = vadd.f32 %v7562, %v7728
  %v7979 = vadd.f32 %v7563, %v7730
  %v7980 = vadd.f32 %v7564, %v7732
  %v7981 = vadd.f32 %v7565, %v7734
  %v7982 = vadd.f32 %v7566, %v7736
  %v7983 = vadd.f32 %v7567, %v7738
  %v7984 = vadd.f32 %v7568, %v7740
  %v7985 = vadd.f32 %v7569, %v7742
  %v7986 = vadd.f32 %v7570, %v7744
  %v7987 = vadd.f32 %v7571, %v7746
  %v7988 = vadd.f32 %v7572, %v7748
  %v7989 = vadd.f32 %v7573, %v7750
  %v7990 = vadd.f32 %v7574, %v7752
  %v7991 = vadd.f32 %v7575, %v7754
  %v7992 = vadd.f32 %v7576, %v7756
  %v7993 = vadd.f32 %v7577, %v7758
  %v7994 = vadd.f32 %v7578, %v7760
  %v7995 = vadd.f32 %v7579, %v7762
  %v7996 = vadd.f32 %v7580, %v7764
  %v7997 = vadd.f32 %v7581, %v7766
  %v7998 = vadd.f32 %v7582, %v7768
  %v7999 = vadd.f32 %v7583, %v7770
  %v8000 = vadd.f32 %v7584, %v7772
  %v8001 = vadd.f32 %v7585, %v7774
  %v8002 = vadd.f32 %v7586, %v7776
  %v8003 = vadd.f32 %v7587, %v7778
  %v8004 = vadd.f32 %v7588, %v7780
  %v8005 = vadd.f32 %v7589, %v7782
  %v8006 = vadd.f32 %v7590, %v7784
  %v8007 = vadd.f32 %v7591, %v7786
  %v8008 = vadd.f32 %v7592, %v7788
  %v8009 = vadd.f32 %v7593, %v7790
  %v8010 = vadd.f32 %v7594, %v7792
  %v8011 = vadd.f32 %v7595, %v7794
  %v8012 = vadd.f32 %v7596, %v7796
  %v8013 = vadd.f32 %v7597, %v7798
  %v8014 = vadd.f32 %v7598, %v7800
  %v8015 = vadd.f32 %v7599, %v7802
  %v8016 = vadd.f32 %v7600, %v7804
  %v8017 = vadd.f32 %v7601, %v7806
  %v8018 = vadd.f32 %v7602, %v7808
  %v8019 = vadd.f32 %v7603, %v7810
  %v8020 = vadd.f32 %v7604, %v7812
  %v8021 = vrot.slane %v6907, 2
  %v8022 = vrot.slane %v6291, 7
  %v8023 = vsel %vm6868, %v8021, %v8022
  %v8024 = vrot.slane %v6947, 2
  %v8025 = vrot.slane %v6364, 7
  %v8026 = vsel %vm6868, %v8024, %v8025
  %v8027 = vrot.slane %v6987, 2
  %v8028 = vrot.slane %v6428, 7
  %v8029 = vsel %vm6868, %v8027, %v8028
  %v8030 = vrot.slane %v7027, 2
  %v8031 = vrot.slane %v6491, 7
  %v8032 = vsel %vm6868, %v8030, %v8031
  %v8033 = vrot.slane %v7067, 2
  %v8034 = vrot.slane %v6561, 7
  %v8035 = vsel %vm6868, %v8033, %v8034
  %v8036 = vrot.slane %v7107, 2
  %v8037 = vrot.slane %v6634, 7
  %v8038 = vsel %vm6868, %v8036, %v8037
  %v8039 = vrot.slane %v7147, 2
  %v8040 = vrot.slane %v6698, 7
  %v8041 = vsel %vm6868, %v8039, %v8040
  %v8042 = vrot.slane %v7187, 2
  %v8043 = vrot.slane %v6761, 7
  %v8044 = vsel %vm6868, %v8042, %v8043
  %8045 = vrot.lane.b32.xlu0 %v6875, 32
  %v8046 = vpop.permute.xlu0 %8045
  %8047 = vrot.lane.b32.xlu0 %v6878, 32
  %v8048 = vpop.permute.xlu0 %8047
  %8049 = vrot.lane.b32.xlu0 %v6881, 32
  %v8050 = vpop.permute.xlu0 %8049
  %8051 = vrot.lane.b32.xlu0 %v6884, 32
  %v8052 = vpop.permute.xlu0 %8051
  %8053 = vrot.lane.b32.xlu0 %v6887, 32
  %v8054 = vpop.permute.xlu0 %8053
  %8055 = vrot.lane.b32.xlu0 %v6890, 32
  %v8056 = vpop.permute.xlu0 %8055
  %8057 = vrot.lane.b32.xlu0 %v6893, 32
  %v8058 = vpop.permute.xlu0 %8057
  %8059 = vrot.lane.b32.xlu0 %v6896, 32
  %v8060 = vpop.permute.xlu0 %8059
  %8061 = vrot.lane.b32.xlu0 %v6899, 32
  %v8062 = vpop.permute.xlu0 %8061
  %8063 = vrot.lane.b32.xlu0 %v6902, 32
  %v8064 = vpop.permute.xlu0 %8063
  %8065 = vrot.lane.b32.xlu0 %v6905, 32
  %v8066 = vpop.permute.xlu0 %8065
  %8067 = vrot.lane.b32.xlu0 %v6908, 32
  %v8068 = vpop.permute.xlu0 %8067
  %8069 = vrot.lane.b32.xlu0 %v8023, 32
  %v8070 = vpop.permute.xlu0 %8069
  %8071 = vrot.lane.b32.xlu0 %v6915, 32
  %v8072 = vpop.permute.xlu0 %8071
  %8073 = vrot.lane.b32.xlu0 %v6918, 32
  %v8074 = vpop.permute.xlu0 %8073
  %8075 = vrot.lane.b32.xlu0 %v6921, 32
  %v8076 = vpop.permute.xlu0 %8075
  %8077 = vrot.lane.b32.xlu0 %v6924, 32
  %v8078 = vpop.permute.xlu0 %8077
  %8079 = vrot.lane.b32.xlu0 %v6927, 32
  %v8080 = vpop.permute.xlu0 %8079
  %8081 = vrot.lane.b32.xlu0 %v6930, 32
  %v8082 = vpop.permute.xlu0 %8081
  %8083 = vrot.lane.b32.xlu0 %v6933, 32
  %v8084 = vpop.permute.xlu0 %8083
  %8085 = vrot.lane.b32.xlu0 %v6936, 32
  %v8086 = vpop.permute.xlu0 %8085
  %8087 = vrot.lane.b32.xlu0 %v6939, 32
  %v8088 = vpop.permute.xlu0 %8087
  %8089 = vrot.lane.b32.xlu0 %v6942, 32
  %v8090 = vpop.permute.xlu0 %8089
  %8091 = vrot.lane.b32.xlu0 %v6945, 32
  %v8092 = vpop.permute.xlu0 %8091
  %8093 = vrot.lane.b32.xlu0 %v6948, 32
  %v8094 = vpop.permute.xlu0 %8093
  %8095 = vrot.lane.b32.xlu0 %v8026, 32
  %v8096 = vpop.permute.xlu0 %8095
  %8097 = vrot.lane.b32.xlu0 %v6955, 32
  %v8098 = vpop.permute.xlu0 %8097
  %8099 = vrot.lane.b32.xlu0 %v6958, 32
  %v8100 = vpop.permute.xlu0 %8099
  %8101 = vrot.lane.b32.xlu0 %v6961, 32
  %v8102 = vpop.permute.xlu0 %8101
  %8103 = vrot.lane.b32.xlu0 %v6964, 32
  %v8104 = vpop.permute.xlu0 %8103
  %8105 = vrot.lane.b32.xlu0 %v6967, 32
  %v8106 = vpop.permute.xlu0 %8105
  %8107 = vrot.lane.b32.xlu0 %v6970, 32
  %v8108 = vpop.permute.xlu0 %8107
  %8109 = vrot.lane.b32.xlu0 %v6973, 32
  %v8110 = vpop.permute.xlu0 %8109
  %8111 = vrot.lane.b32.xlu0 %v6976, 32
  %v8112 = vpop.permute.xlu0 %8111
  %8113 = vrot.lane.b32.xlu0 %v6979, 32
  %v8114 = vpop.permute.xlu0 %8113
  %8115 = vrot.lane.b32.xlu0 %v6982, 32
  %v8116 = vpop.permute.xlu0 %8115
  %8117 = vrot.lane.b32.xlu0 %v6985, 32
  %v8118 = vpop.permute.xlu0 %8117
  %8119 = vrot.lane.b32.xlu0 %v6988, 32
  %v8120 = vpop.permute.xlu0 %8119
  %8121 = vrot.lane.b32.xlu0 %v8029, 32
  %v8122 = vpop.permute.xlu0 %8121
  %8123 = vrot.lane.b32.xlu0 %v6995, 32
  %v8124 = vpop.permute.xlu0 %8123
  %8125 = vrot.lane.b32.xlu0 %v6998, 32
  %v8126 = vpop.permute.xlu0 %8125
  %8127 = vrot.lane.b32.xlu0 %v7001, 32
  %v8128 = vpop.permute.xlu0 %8127
  %8129 = vrot.lane.b32.xlu0 %v7004, 32
  %v8130 = vpop.permute.xlu0 %8129
  %8131 = vrot.lane.b32.xlu0 %v7007, 32
  %v8132 = vpop.permute.xlu0 %8131
  %8133 = vrot.lane.b32.xlu0 %v7010, 32
  %v8134 = vpop.permute.xlu0 %8133
  %8135 = vrot.lane.b32.xlu0 %v7013, 32
  %v8136 = vpop.permute.xlu0 %8135
  %8137 = vrot.lane.b32.xlu0 %v7016, 32
  %v8138 = vpop.permute.xlu0 %8137
  %8139 = vrot.lane.b32.xlu0 %v7019, 32
  %v8140 = vpop.permute.xlu0 %8139
  %8141 = vrot.lane.b32.xlu0 %v7022, 32
  %v8142 = vpop.permute.xlu0 %8141
  %8143 = vrot.lane.b32.xlu0 %v7025, 32
  %v8144 = vpop.permute.xlu0 %8143
  %8145 = vrot.lane.b32.xlu0 %v7028, 32
  %v8146 = vpop.permute.xlu0 %8145
  %8147 = vrot.lane.b32.xlu0 %v8032, 32
  %v8148 = vpop.permute.xlu0 %8147
  %8149 = vrot.lane.b32.xlu0 %v7035, 32
  %v8150 = vpop.permute.xlu0 %8149
  %8151 = vrot.lane.b32.xlu0 %v7038, 32
  %v8152 = vpop.permute.xlu0 %8151
  %8153 = vrot.lane.b32.xlu0 %v7041, 32
  %v8154 = vpop.permute.xlu0 %8153
  %8155 = vrot.lane.b32.xlu0 %v7044, 32
  %v8156 = vpop.permute.xlu0 %8155
  %8157 = vrot.lane.b32.xlu0 %v7047, 32
  %v8158 = vpop.permute.xlu0 %8157
  %8159 = vrot.lane.b32.xlu0 %v7050, 32
  %v8160 = vpop.permute.xlu0 %8159
  %8161 = vrot.lane.b32.xlu0 %v7053, 32
  %v8162 = vpop.permute.xlu0 %8161
  %8163 = vrot.lane.b32.xlu0 %v7056, 32
  %v8164 = vpop.permute.xlu0 %8163
  %8165 = vrot.lane.b32.xlu0 %v7059, 32
  %v8166 = vpop.permute.xlu0 %8165
  %8167 = vrot.lane.b32.xlu0 %v7062, 32
  %v8168 = vpop.permute.xlu0 %8167
  %8169 = vrot.lane.b32.xlu0 %v7065, 32
  %v8170 = vpop.permute.xlu0 %8169
  %8171 = vrot.lane.b32.xlu0 %v7068, 32
  %v8172 = vpop.permute.xlu0 %8171
  %8173 = vrot.lane.b32.xlu0 %v8035, 32
  %v8174 = vpop.permute.xlu0 %8173
  %8175 = vrot.lane.b32.xlu0 %v7075, 32
  %v8176 = vpop.permute.xlu0 %8175
  %8177 = vrot.lane.b32.xlu0 %v7078, 32
  %v8178 = vpop.permute.xlu0 %8177
  %8179 = vrot.lane.b32.xlu0 %v7081, 32
  %v8180 = vpop.permute.xlu0 %8179
  %8181 = vrot.lane.b32.xlu0 %v7084, 32
  %v8182 = vpop.permute.xlu0 %8181
  %8183 = vrot.lane.b32.xlu0 %v7087, 32
  %v8184 = vpop.permute.xlu0 %8183
  %8185 = vrot.lane.b32.xlu0 %v7090, 32
  %v8186 = vpop.permute.xlu0 %8185
  %8187 = vrot.lane.b32.xlu0 %v7093, 32
  %v8188 = vpop.permute.xlu0 %8187
  %8189 = vrot.lane.b32.xlu0 %v7096, 32
  %v8190 = vpop.permute.xlu0 %8189
  %8191 = vrot.lane.b32.xlu0 %v7099, 32
  %v8192 = vpop.permute.xlu0 %8191
  %8193 = vrot.lane.b32.xlu0 %v7102, 32
  %v8194 = vpop.permute.xlu0 %8193
  %8195 = vrot.lane.b32.xlu0 %v7105, 32
  %v8196 = vpop.permute.xlu0 %8195
  %8197 = vrot.lane.b32.xlu0 %v7108, 32
  %v8198 = vpop.permute.xlu0 %8197
  %8199 = vrot.lane.b32.xlu0 %v8038, 32
  %v8200 = vpop.permute.xlu0 %8199
  %8201 = vrot.lane.b32.xlu0 %v7115, 32
  %v8202 = vpop.permute.xlu0 %8201
  %8203 = vrot.lane.b32.xlu0 %v7118, 32
  %v8204 = vpop.permute.xlu0 %8203
  %8205 = vrot.lane.b32.xlu0 %v7121, 32
  %v8206 = vpop.permute.xlu0 %8205
  %8207 = vrot.lane.b32.xlu0 %v7124, 32
  %v8208 = vpop.permute.xlu0 %8207
  %8209 = vrot.lane.b32.xlu0 %v7127, 32
  %v8210 = vpop.permute.xlu0 %8209
  %8211 = vrot.lane.b32.xlu0 %v7130, 32
  %v8212 = vpop.permute.xlu0 %8211
  %8213 = vrot.lane.b32.xlu0 %v7133, 32
  %v8214 = vpop.permute.xlu0 %8213
  %8215 = vrot.lane.b32.xlu0 %v7136, 32
  %v8216 = vpop.permute.xlu0 %8215
  %8217 = vrot.lane.b32.xlu0 %v7139, 32
  %v8218 = vpop.permute.xlu0 %8217
  %8219 = vrot.lane.b32.xlu0 %v7142, 32
  %v8220 = vpop.permute.xlu0 %8219
  %8221 = vrot.lane.b32.xlu0 %v7145, 32
  %v8222 = vpop.permute.xlu0 %8221
  %8223 = vrot.lane.b32.xlu0 %v7148, 32
  %v8224 = vpop.permute.xlu0 %8223
  %8225 = vrot.lane.b32.xlu0 %v8041, 32
  %v8226 = vpop.permute.xlu0 %8225
  %8227 = vrot.lane.b32.xlu0 %v7155, 32
  %v8228 = vpop.permute.xlu0 %8227
  %8229 = vrot.lane.b32.xlu0 %v7158, 32
  %v8230 = vpop.permute.xlu0 %8229
  %8231 = vrot.lane.b32.xlu0 %v7161, 32
  %v8232 = vpop.permute.xlu0 %8231
  %8233 = vrot.lane.b32.xlu0 %v7164, 32
  %v8234 = vpop.permute.xlu0 %8233
  %8235 = vrot.lane.b32.xlu0 %v7167, 32
  %v8236 = vpop.permute.xlu0 %8235
  %8237 = vrot.lane.b32.xlu0 %v7170, 32
  %v8238 = vpop.permute.xlu0 %8237
  %8239 = vrot.lane.b32.xlu0 %v7173, 32
  %v8240 = vpop.permute.xlu0 %8239
  %8241 = vrot.lane.b32.xlu0 %v7176, 32
  %v8242 = vpop.permute.xlu0 %8241
  %8243 = vrot.lane.b32.xlu0 %v7179, 32
  %v8244 = vpop.permute.xlu0 %8243
  %8245 = vrot.lane.b32.xlu0 %v7182, 32
  %v8246 = vpop.permute.xlu0 %8245
  %8247 = vrot.lane.b32.xlu0 %v7185, 32
  %v8248 = vpop.permute.xlu0 %8247
  %8249 = vrot.lane.b32.xlu0 %v7188, 32
  %v8250 = vpop.permute.xlu0 %8249
  %8251 = vrot.lane.b32.xlu0 %v8044, 32
  %v8252 = vpop.permute.xlu0 %8251
  %v8357 = vadd.f32 %v7917, %v8046
  %v8358 = vadd.f32 %v7918, %v8048
  %v8359 = vadd.f32 %v7919, %v8050
  %v8360 = vadd.f32 %v7920, %v8052
  %v8361 = vadd.f32 %v7921, %v8054
  %v8362 = vadd.f32 %v7922, %v8056
  %v8363 = vadd.f32 %v7923, %v8058
  %v8364 = vadd.f32 %v7924, %v8060
  %v8365 = vadd.f32 %v7925, %v8062
  %v8366 = vadd.f32 %v7926, %v8064
  %v8367 = vadd.f32 %v7927, %v8066
  %v8368 = vadd.f32 %v7928, %v8068
  %v8369 = vadd.f32 %v7929, %v8070
  %v8370 = vadd.f32 %v7930, %v8072
  %v8371 = vadd.f32 %v7931, %v8074
  %v8372 = vadd.f32 %v7932, %v8076
  %v8373 = vadd.f32 %v7933, %v8078
  %v8374 = vadd.f32 %v7934, %v8080
  %v8375 = vadd.f32 %v7935, %v8082
  %v8376 = vadd.f32 %v7936, %v8084
  %v8377 = vadd.f32 %v7937, %v8086
  %v8378 = vadd.f32 %v7938, %v8088
  %v8379 = vadd.f32 %v7939, %v8090
  %v8380 = vadd.f32 %v7940, %v8092
  %v8381 = vadd.f32 %v7941, %v8094
  %v8382 = vadd.f32 %v7942, %v8096
  %v8383 = vadd.f32 %v7943, %v8098
  %v8384 = vadd.f32 %v7944, %v8100
  %v8385 = vadd.f32 %v7945, %v8102
  %v8386 = vadd.f32 %v7946, %v8104
  %v8387 = vadd.f32 %v7947, %v8106
  %v8388 = vadd.f32 %v7948, %v8108
  %v8389 = vadd.f32 %v7949, %v8110
  %v8390 = vadd.f32 %v7950, %v8112
  %v8391 = vadd.f32 %v7951, %v8114
  %v8392 = vadd.f32 %v7952, %v8116
  %v8393 = vadd.f32 %v7953, %v8118
  %v8394 = vadd.f32 %v7954, %v8120
  %v8395 = vadd.f32 %v7955, %v8122
  %v8396 = vadd.f32 %v7956, %v8124
  %v8397 = vadd.f32 %v7957, %v8126
  %v8398 = vadd.f32 %v7958, %v8128
  %v8399 = vadd.f32 %v7959, %v8130
  %v8400 = vadd.f32 %v7960, %v8132
  %v8401 = vadd.f32 %v7961, %v8134
  %v8402 = vadd.f32 %v7962, %v8136
  %v8403 = vadd.f32 %v7963, %v8138
  %v8404 = vadd.f32 %v7964, %v8140
  %v8405 = vadd.f32 %v7965, %v8142
  %v8406 = vadd.f32 %v7966, %v8144
  %v8407 = vadd.f32 %v7967, %v8146
  %v8408 = vadd.f32 %v7968, %v8148
  %v8409 = vadd.f32 %v7969, %v8150
  %v8410 = vadd.f32 %v7970, %v8152
  %v8411 = vadd.f32 %v7971, %v8154
  %v8412 = vadd.f32 %v7972, %v8156
  %v8413 = vadd.f32 %v7973, %v8158
  %v8414 = vadd.f32 %v7974, %v8160
  %v8415 = vadd.f32 %v7975, %v8162
  %v8416 = vadd.f32 %v7976, %v8164
  %v8417 = vadd.f32 %v7977, %v8166
  %v8418 = vadd.f32 %v7978, %v8168
  %v8419 = vadd.f32 %v7979, %v8170
  %v8420 = vadd.f32 %v7980, %v8172
  %v8421 = vadd.f32 %v7981, %v8174
  %v8422 = vadd.f32 %v7982, %v8176
  %v8423 = vadd.f32 %v7983, %v8178
  %v8424 = vadd.f32 %v7984, %v8180
  %v8425 = vadd.f32 %v7985, %v8182
  %v8426 = vadd.f32 %v7986, %v8184
  %v8427 = vadd.f32 %v7987, %v8186
  %v8428 = vadd.f32 %v7988, %v8188
  %v8429 = vadd.f32 %v7989, %v8190
  %v8430 = vadd.f32 %v7990, %v8192
  %v8431 = vadd.f32 %v7991, %v8194
  %v8432 = vadd.f32 %v7992, %v8196
  %v8433 = vadd.f32 %v7993, %v8198
  %v8434 = vadd.f32 %v7994, %v8200
  %v8435 = vadd.f32 %v7995, %v8202
  %v8436 = vadd.f32 %v7996, %v8204
  %v8437 = vadd.f32 %v7997, %v8206
  %v8438 = vadd.f32 %v7998, %v8208
  %v8439 = vadd.f32 %v7999, %v8210
  %v8440 = vadd.f32 %v8000, %v8212
  %v8441 = vadd.f32 %v8001, %v8214
  %v8442 = vadd.f32 %v8002, %v8216
  %v8443 = vadd.f32 %v8003, %v8218
  %v8444 = vadd.f32 %v8004, %v8220
  %v8445 = vadd.f32 %v8005, %v8222
  %v8446 = vadd.f32 %v8006, %v8224
  %v8447 = vadd.f32 %v8007, %v8226
  %v8448 = vadd.f32 %v8008, %v8228
  %v8449 = vadd.f32 %v8009, %v8230
  %v8450 = vadd.f32 %v8010, %v8232
  %v8451 = vadd.f32 %v8011, %v8234
  %v8452 = vadd.f32 %v8012, %v8236
  %v8453 = vadd.f32 %v8013, %v8238
  %v8454 = vadd.f32 %v8014, %v8240
  %v8455 = vadd.f32 %v8015, %v8242
  %v8456 = vadd.f32 %v8016, %v8244
  %v8457 = vadd.f32 %v8017, %v8246
  %v8458 = vadd.f32 %v8018, %v8248
  %v8459 = vadd.f32 %v8019, %v8250
  %v8460 = vadd.f32 %v8020, %v8252
  %v8461 = vrot.slane %v6237, 2
  %v8462 = vrot.slane %v6239, 2
  %v8463 = vrot.slane %v6248, 2
  %v8464 = vrot.slane %v6256, 2
  %v8465 = vrot.slane %v6255, 2
  %v8466 = vrot.slane %v6257, 2
  %v8467 = vrot.slane %v6266, 2
  %v8468 = vrot.slane %v6274, 2
  %v8469 = vrot.slane %v6273, 2
  %v8470 = vrot.slane %v6275, 2
  %v8471 = vrot.slane %v6284, 2
  %v8472 = vrot.slane %v6292, 2
  %v8473 = vrot.slane %v6291, 2
  %v8474 = vrot.slane %v6310, 2
  %v8475 = vrot.slane %v6309, 2
  %v8476 = vrot.slane %v6311, 2
  %v8477 = vrot.slane %v6320, 2
  %v8478 = vrot.slane %v6328, 2
  %v8479 = vrot.slane %v6327, 2
  %v8480 = vrot.slane %v6329, 2
  %v8481 = vrot.slane %v6338, 2
  %v8482 = vrot.slane %v6346, 2
  %v8483 = vrot.slane %v6345, 2
  %v8484 = vrot.slane %v6347, 2
  %v8485 = vrot.slane %v6356, 2
  %v8486 = vrot.slane %v6364, 2
  %v8487 = vrot.slane %v6374, 2
  %v8488 = vrot.slane %v6382, 2
  %v8489 = vrot.slane %v6381, 2
  %v8490 = vrot.slane %v6383, 2
  %v8491 = vrot.slane %v6392, 2
  %v8492 = vrot.slane %v6400, 2
  %v8493 = vrot.slane %v6399, 2
  %v8494 = vrot.slane %v6401, 2
  %v8495 = vrot.slane %v6410, 2
  %v8496 = vrot.slane %v6418, 2
  %v8497 = vrot.slane %v6417, 2
  %v8498 = vrot.slane %v6419, 2
  %v8499 = vrot.slane %v6428, 2
  %v8500 = vrot.slane %v6437, 2
  %v8501 = vrot.slane %v6446, 2
  %v8502 = vrot.slane %v6454, 2
  %v8503 = vrot.slane %v6453, 2
  %v8504 = vrot.slane %v6455, 2
  %v8505 = vrot.slane %v6464, 2
  %v8506 = vrot.slane %v6472, 2
  %v8507 = vrot.slane %v6471, 2
  %v8508 = vrot.slane %v6473, 2
  %v8509 = vrot.slane %v6482, 2
  %v8510 = vrot.slane %v6490, 2
  %v8511 = vrot.slane %v6489, 2
  %v8512 = vrot.slane %v6491, 2
  %v8513 = vrot.slane %v6507, 2
  %v8514 = vrot.slane %v6509, 2
  %v8515 = vrot.slane %v6518, 2
  %v8516 = vrot.slane %v6526, 2
  %v8517 = vrot.slane %v6525, 2
  %v8518 = vrot.slane %v6527, 2
  %v8519 = vrot.slane %v6536, 2
  %v8520 = vrot.slane %v6544, 2
  %v8521 = vrot.slane %v6543, 2
  %v8522 = vrot.slane %v6545, 2
  %v8523 = vrot.slane %v6554, 2
  %v8524 = vrot.slane %v6562, 2
  %v8525 = vrot.slane %v6561, 2
  %v8526 = vrot.slane %v6580, 2
  %v8527 = vrot.slane %v6579, 2
  %v8528 = vrot.slane %v6581, 2
  %v8529 = vrot.slane %v6590, 2
  %v8530 = vrot.slane %v6598, 2
  %v8531 = vrot.slane %v6597, 2
  %v8532 = vrot.slane %v6599, 2
  %v8533 = vrot.slane %v6608, 2
  %v8534 = vrot.slane %v6616, 2
  %v8535 = vrot.slane %v6615, 2
  %v8536 = vrot.slane %v6617, 2
  %v8537 = vrot.slane %v6626, 2
  %v8538 = vrot.slane %v6634, 2
  %v8539 = vrot.slane %v6644, 2
  %v8540 = vrot.slane %v6652, 2
  %v8541 = vrot.slane %v6651, 2
  %v8542 = vrot.slane %v6653, 2
  %v8543 = vrot.slane %v6662, 2
  %v8544 = vrot.slane %v6670, 2
  %v8545 = vrot.slane %v6669, 2
  %v8546 = vrot.slane %v6671, 2
  %v8547 = vrot.slane %v6680, 2
  %v8548 = vrot.slane %v6688, 2
  %v8549 = vrot.slane %v6687, 2
  %v8550 = vrot.slane %v6689, 2
  %v8551 = vrot.slane %v6698, 2
  %v8552 = vrot.slane %v6707, 2
  %v8553 = vrot.slane %v6716, 2
  %v8554 = vrot.slane %v6724, 2
  %v8555 = vrot.slane %v6723, 2
  %v8556 = vrot.slane %v6725, 2
  %v8557 = vrot.slane %v6734, 2
  %v8558 = vrot.slane %v6742, 2
  %v8559 = vrot.slane %v6741, 2
  %v8560 = vrot.slane %v6743, 2
  %v8561 = vrot.slane %v6752, 2
  %v8562 = vrot.slane %v6760, 2
  %v8563 = vrot.slane %v6759, 2
  %v8564 = vrot.slane %v6761, 2
  %v8669 = vadd.f32 %v8357, %v8461
  %v8670 = vadd.f32 %v8358, %v8462
  %v8671 = vadd.f32 %v8359, %v8463
  %v8672 = vadd.f32 %v8360, %v8464
  %v8673 = vadd.f32 %v8361, %v8465
  %v8674 = vadd.f32 %v8362, %v8466
  %v8675 = vadd.f32 %v8363, %v8467
  %v8676 = vadd.f32 %v8364, %v8468
  %v8677 = vadd.f32 %v8365, %v8469
  %v8678 = vadd.f32 %v8366, %v8470
  %v8679 = vadd.f32 %v8367, %v8471
  %v8680 = vadd.f32 %v8368, %v8472
  %v8681 = vadd.f32 %v8369, %v8473
  %v8682 = vadd.f32 %v8370, %v8474
  %v8683 = vadd.f32 %v8371, %v8475
  %v8684 = vadd.f32 %v8372, %v8476
  %v8685 = vadd.f32 %v8373, %v8477
  %v8686 = vadd.f32 %v8374, %v8478
  %v8687 = vadd.f32 %v8375, %v8479
  %v8688 = vadd.f32 %v8376, %v8480
  %v8689 = vadd.f32 %v8377, %v8481
  %v8690 = vadd.f32 %v8378, %v8482
  %v8691 = vadd.f32 %v8379, %v8483
  %v8692 = vadd.f32 %v8380, %v8484
  %v8693 = vadd.f32 %v8381, %v8485
  %v8694 = vadd.f32 %v8382, %v8486
  %v8695 = vadd.f32 %v8383, %v8487
  %v8696 = vadd.f32 %v8384, %v8488
  %v8697 = vadd.f32 %v8385, %v8489
  %v8698 = vadd.f32 %v8386, %v8490
  %v8699 = vadd.f32 %v8387, %v8491
  %v8700 = vadd.f32 %v8388, %v8492
  %v8701 = vadd.f32 %v8389, %v8493
  %v8702 = vadd.f32 %v8390, %v8494
  %v8703 = vadd.f32 %v8391, %v8495
  %v8704 = vadd.f32 %v8392, %v8496
  %v8705 = vadd.f32 %v8393, %v8497
  %v8706 = vadd.f32 %v8394, %v8498
  %v8707 = vadd.f32 %v8395, %v8499
  %v8708 = vadd.f32 %v8396, %v8500
  %v8709 = vadd.f32 %v8397, %v8501
  %v8710 = vadd.f32 %v8398, %v8502
  %v8711 = vadd.f32 %v8399, %v8503
  %v8712 = vadd.f32 %v8400, %v8504
  %v8713 = vadd.f32 %v8401, %v8505
  %v8714 = vadd.f32 %v8402, %v8506
  %v8715 = vadd.f32 %v8403, %v8507
  %v8716 = vadd.f32 %v8404, %v8508
  %v8717 = vadd.f32 %v8405, %v8509
  %v8718 = vadd.f32 %v8406, %v8510
  %v8719 = vadd.f32 %v8407, %v8511
  %v8720 = vadd.f32 %v8408, %v8512
  %v8721 = vadd.f32 %v8409, %v8513
  %v8722 = vadd.f32 %v8410, %v8514
  %v8723 = vadd.f32 %v8411, %v8515
  %v8724 = vadd.f32 %v8412, %v8516
  %v8725 = vadd.f32 %v8413, %v8517
  %v8726 = vadd.f32 %v8414, %v8518
  %v8727 = vadd.f32 %v8415, %v8519
  %v8728 = vadd.f32 %v8416, %v8520
  %v8729 = vadd.f32 %v8417, %v8521
  %v8730 = vadd.f32 %v8418, %v8522
  %v8731 = vadd.f32 %v8419, %v8523
  %v8732 = vadd.f32 %v8420, %v8524
  %v8733 = vadd.f32 %v8421, %v8525
  %v8734 = vadd.f32 %v8422, %v8526
  %v8735 = vadd.f32 %v8423, %v8527
  %v8736 = vadd.f32 %v8424, %v8528
  %v8737 = vadd.f32 %v8425, %v8529
  %v8738 = vadd.f32 %v8426, %v8530
  %v8739 = vadd.f32 %v8427, %v8531
  %v8740 = vadd.f32 %v8428, %v8532
  %v8741 = vadd.f32 %v8429, %v8533
  %v8742 = vadd.f32 %v8430, %v8534
  %v8743 = vadd.f32 %v8431, %v8535
  %v8744 = vadd.f32 %v8432, %v8536
  %v8745 = vadd.f32 %v8433, %v8537
  %v8746 = vadd.f32 %v8434, %v8538
  %v8747 = vadd.f32 %v8435, %v8539
  %v8748 = vadd.f32 %v8436, %v8540
  %v8749 = vadd.f32 %v8437, %v8541
  %v8750 = vadd.f32 %v8438, %v8542
  %v8751 = vadd.f32 %v8439, %v8543
  %v8752 = vadd.f32 %v8440, %v8544
  %v8753 = vadd.f32 %v8441, %v8545
  %v8754 = vadd.f32 %v8442, %v8546
  %v8755 = vadd.f32 %v8443, %v8547
  %v8756 = vadd.f32 %v8444, %v8548
  %v8757 = vadd.f32 %v8445, %v8549
  %v8758 = vadd.f32 %v8446, %v8550
  %v8759 = vadd.f32 %v8447, %v8551
  %v8760 = vadd.f32 %v8448, %v8552
  %v8761 = vadd.f32 %v8449, %v8553
  %v8762 = vadd.f32 %v8450, %v8554
  %v8763 = vadd.f32 %v8451, %v8555
  %v8764 = vadd.f32 %v8452, %v8556
  %v8765 = vadd.f32 %v8453, %v8557
  %v8766 = vadd.f32 %v8454, %v8558
  %v8767 = vadd.f32 %v8455, %v8559
  %v8768 = vadd.f32 %v8456, %v8560
  %v8769 = vadd.f32 %v8457, %v8561
  %v8770 = vadd.f32 %v8458, %v8562
  %v8771 = vadd.f32 %v8459, %v8563
  %v8772 = vadd.f32 %v8460, %v8564
  %v8773 = vld [vmem:[%s4] sm:$0x1]
  %v8775 = vlaneseq
  %v8776 = vshrl.u32 %v8775, 7
  %v8777 = vsub.s32 0, %v8776
  %v8778 = vrot.slane %v8773, %v8777
  %v8779 = vcombine.high %v8778, %v8778
  %v8781 = vunpack.c.l.s4 1983009808
  %v8782 = vunpack.c.0.s8 %v8781
  %v8783 = vlaneseq
  %v8784 = vshrl.u32 %v8783, 7
  %v8785 = vsub.s32 %v8782, %v8784
  %v8786 = vrot.slane %v8778, %v8785
  %v8788 = vunpack.c.l.s4 1983009808
  %v8789 = vunpack.c.0.s8 %v8788
  %v8790 = vlaneseq
  %v8791 = vshrl.u32 %v8790, 7
  %v8792 = vsub.s32 %v8789, %v8791
  %v8793 = vrot.slane %v8779, %v8792
  %v8794 = vcombine.high %v8786, %v8786
  %v8795 = vcombine.high %v8793, %v8793
  %v8800 = vadd.f32 %v8669, %v8786
  %v8801 = vadd.f32 %v8670, %v8794
  %v8802 = vadd.f32 %v8671, %v8793
  %v8803 = vadd.f32 %v8672, %v8795
  %v8804 = vadd.f32 %v8673, %v8786
  %v8805 = vadd.f32 %v8674, %v8794
  %v8806 = vadd.f32 %v8675, %v8793
  %v8807 = vadd.f32 %v8676, %v8795
  %v8808 = vadd.f32 %v8677, %v8786
  %v8809 = vadd.f32 %v8678, %v8794
  %v8810 = vadd.f32 %v8679, %v8793
  %v8811 = vadd.f32 %v8680, %v8795
  %v8812 = vadd.f32 %v8681, %v8786
  %v8813 = vadd.f32 %v8682, %v8786
  %v8814 = vadd.f32 %v8683, %v8794
  %v8815 = vadd.f32 %v8684, %v8793
  %v8816 = vadd.f32 %v8685, %v8795
  %v8817 = vadd.f32 %v8686, %v8786
  %v8818 = vadd.f32 %v8687, %v8794
  %v8819 = vadd.f32 %v8688, %v8793
  %v8820 = vadd.f32 %v8689, %v8795
  %v8821 = vadd.f32 %v8690, %v8786
  %v8822 = vadd.f32 %v8691, %v8794
  %v8823 = vadd.f32 %v8692, %v8793
  %v8824 = vadd.f32 %v8693, %v8795
  %v8825 = vadd.f32 %v8694, %v8786
  %v8826 = vadd.f32 %v8695, %v8786
  %v8827 = vadd.f32 %v8696, %v8794
  %v8828 = vadd.f32 %v8697, %v8793
  %v8829 = vadd.f32 %v8698, %v8795
  %v8830 = vadd.f32 %v8699, %v8786
  %v8831 = vadd.f32 %v8700, %v8794
  %v8832 = vadd.f32 %v8701, %v8793
  %v8833 = vadd.f32 %v8702, %v8795
  %v8834 = vadd.f32 %v8703, %v8786
  %v8835 = vadd.f32 %v8704, %v8794
  %v8836 = vadd.f32 %v8705, %v8793
  %v8837 = vadd.f32 %v8706, %v8795
  %v8838 = vadd.f32 %v8707, %v8786
  %v8839 = vadd.f32 %v8708, %v8786
  %v8840 = vadd.f32 %v8709, %v8794
  %v8841 = vadd.f32 %v8710, %v8793
  %v8842 = vadd.f32 %v8711, %v8795
  %v8843 = vadd.f32 %v8712, %v8786
  %v8844 = vadd.f32 %v8713, %v8794
  %v8845 = vadd.f32 %v8714, %v8793
  %v8846 = vadd.f32 %v8715, %v8795
  %v8847 = vadd.f32 %v8716, %v8786
  %v8848 = vadd.f32 %v8717, %v8794
  %v8849 = vadd.f32 %v8718, %v8793
  %v8850 = vadd.f32 %v8719, %v8795
  %v8851 = vadd.f32 %v8720, %v8786
  %v8852 = vadd.f32 %v8721, %v8786
  %v8853 = vadd.f32 %v8722, %v8794
  %v8854 = vadd.f32 %v8723, %v8793
  %v8855 = vadd.f32 %v8724, %v8795
  %v8856 = vadd.f32 %v8725, %v8786
  %v8857 = vadd.f32 %v8726, %v8794
  %v8858 = vadd.f32 %v8727, %v8793
  %v8859 = vadd.f32 %v8728, %v8795
  %v8860 = vadd.f32 %v8729, %v8786
  %v8861 = vadd.f32 %v8730, %v8794
  %v8862 = vadd.f32 %v8731, %v8793
  %v8863 = vadd.f32 %v8732, %v8795
  %v8864 = vadd.f32 %v8733, %v8786
  %v8865 = vadd.f32 %v8734, %v8786
  %v8866 = vadd.f32 %v8735, %v8794
  %v8867 = vadd.f32 %v8736, %v8793
  %v8868 = vadd.f32 %v8737, %v8795
  %v8869 = vadd.f32 %v8738, %v8786
  %v8870 = vadd.f32 %v8739, %v8794
  %v8871 = vadd.f32 %v8740, %v8793
  %v8872 = vadd.f32 %v8741, %v8795
  %v8873 = vadd.f32 %v8742, %v8786
  %v8874 = vadd.f32 %v8743, %v8794
  %v8875 = vadd.f32 %v8744, %v8793
  %v8876 = vadd.f32 %v8745, %v8795
  %v8877 = vadd.f32 %v8746, %v8786
  %v8878 = vadd.f32 %v8747, %v8786
  %v8879 = vadd.f32 %v8748, %v8794
  %v8880 = vadd.f32 %v8749, %v8793
  %v8881 = vadd.f32 %v8750, %v8795
  %v8882 = vadd.f32 %v8751, %v8786
  %v8883 = vadd.f32 %v8752, %v8794
  %v8884 = vadd.f32 %v8753, %v8793
  %v8885 = vadd.f32 %v8754, %v8795
  %v8886 = vadd.f32 %v8755, %v8786
  %v8887 = vadd.f32 %v8756, %v8794
  %v8888 = vadd.f32 %v8757, %v8793
  %v8889 = vadd.f32 %v8758, %v8795
  %v8890 = vadd.f32 %v8759, %v8786
  %v8891 = vadd.f32 %v8760, %v8786
  %v8892 = vadd.f32 %v8761, %v8794
  %v8893 = vadd.f32 %v8762, %v8793
  %v8894 = vadd.f32 %v8763, %v8795
  %v8895 = vadd.f32 %v8764, %v8786
  %v8896 = vadd.f32 %v8765, %v8794
  %v8897 = vadd.f32 %v8766, %v8793
  %v8898 = vadd.f32 %v8767, %v8795
  %v8899 = vadd.f32 %v8768, %v8786
  %v8900 = vadd.f32 %v8769, %v8794
  %v8901 = vadd.f32 %v8770, %v8793
  %v8902 = vadd.f32 %v8771, %v8795
  %v8903 = vadd.f32 %v8772, %v8786
  %v8904 = vmax.f32 %v8800, 0.0
  %v8905 = vmax.f32 %v8801, 0.0
  %v8906 = vmax.f32 %v8802, 0.0
  %v8907 = vmax.f32 %v8803, 0.0
  %v8908 = vmax.f32 %v8804, 0.0
  %v8909 = vmax.f32 %v8805, 0.0
  %v8910 = vmax.f32 %v8806, 0.0
  %v8911 = vmax.f32 %v8807, 0.0
  %v8912 = vmax.f32 %v8808, 0.0
  %v8913 = vmax.f32 %v8809, 0.0
  %v8914 = vmax.f32 %v8810, 0.0
  %v8915 = vmax.f32 %v8811, 0.0
  %v8916 = vmax.f32 %v8812, 0.0
  %v8917 = vmax.f32 %v8813, 0.0
  %v8918 = vmax.f32 %v8814, 0.0
  %v8919 = vmax.f32 %v8815, 0.0
  %v8920 = vmax.f32 %v8816, 0.0
  %v8921 = vmax.f32 %v8817, 0.0
  %v8922 = vmax.f32 %v8818, 0.0
  %v8923 = vmax.f32 %v8819, 0.0
  %v8924 = vmax.f32 %v8820, 0.0
  %v8925 = vmax.f32 %v8821, 0.0
  %v8926 = vmax.f32 %v8822, 0.0
  %v8927 = vmax.f32 %v8823, 0.0
  %v8928 = vmax.f32 %v8824, 0.0
  %v8929 = vmax.f32 %v8825, 0.0
  %v8930 = vmax.f32 %v8826, 0.0
  %v8931 = vmax.f32 %v8827, 0.0
  %v8932 = vmax.f32 %v8828, 0.0
  %v8933 = vmax.f32 %v8829, 0.0
  %v8934 = vmax.f32 %v8830, 0.0
  %v8935 = vmax.f32 %v8831, 0.0
  %v8936 = vmax.f32 %v8832, 0.0
  %v8937 = vmax.f32 %v8833, 0.0
  %v8938 = vmax.f32 %v8834, 0.0
  %v8939 = vmax.f32 %v8835, 0.0
  %v8940 = vmax.f32 %v8836, 0.0
  %v8941 = vmax.f32 %v8837, 0.0
  %v8942 = vmax.f32 %v8838, 0.0
  %v8943 = vmax.f32 %v8839, 0.0
  %v8944 = vmax.f32 %v8840, 0.0
  %v8945 = vmax.f32 %v8841, 0.0
  %v8946 = vmax.f32 %v8842, 0.0
  %v8947 = vmax.f32 %v8843, 0.0
  %v8948 = vmax.f32 %v8844, 0.0
  %v8949 = vmax.f32 %v8845, 0.0
  %v8950 = vmax.f32 %v8846, 0.0
  %v8951 = vmax.f32 %v8847, 0.0
  %v8952 = vmax.f32 %v8848, 0.0
  %v8953 = vmax.f32 %v8849, 0.0
  %v8954 = vmax.f32 %v8850, 0.0
  %v8955 = vmax.f32 %v8851, 0.0
  %v8956 = vmax.f32 %v8852, 0.0
  %v8957 = vmax.f32 %v8853, 0.0
  %v8958 = vmax.f32 %v8854, 0.0
  %v8959 = vmax.f32 %v8855, 0.0
  %v8960 = vmax.f32 %v8856, 0.0
  %v8961 = vmax.f32 %v8857, 0.0
  %v8962 = vmax.f32 %v8858, 0.0
  %v8963 = vmax.f32 %v8859, 0.0
  %v8964 = vmax.f32 %v8860, 0.0
  %v8965 = vmax.f32 %v8861, 0.0
  %v8966 = vmax.f32 %v8862, 0.0
  %v8967 = vmax.f32 %v8863, 0.0
  %v8968 = vmax.f32 %v8864, 0.0
  %v8969 = vmax.f32 %v8865, 0.0
  %v8970 = vmax.f32 %v8866, 0.0
  %v8971 = vmax.f32 %v8867, 0.0
  %v8972 = vmax.f32 %v8868, 0.0
  %v8973 = vmax.f32 %v8869, 0.0
  %v8974 = vmax.f32 %v8870, 0.0
  %v8975 = vmax.f32 %v8871, 0.0
  %v8976 = vmax.f32 %v8872, 0.0
  %v8977 = vmax.f32 %v8873, 0.0
  %v8978 = vmax.f32 %v8874, 0.0
  %v8979 = vmax.f32 %v8875, 0.0
  %v8980 = vmax.f32 %v8876, 0.0
  %v8981 = vmax.f32 %v8877, 0.0
  %v8982 = vmax.f32 %v8878, 0.0
  %v8983 = vmax.f32 %v8879, 0.0
  %v8984 = vmax.f32 %v8880, 0.0
  %v8985 = vmax.f32 %v8881, 0.0
  %v8986 = vmax.f32 %v8882, 0.0
  %v8987 = vmax.f32 %v8883, 0.0
  %v8988 = vmax.f32 %v8884, 0.0
  %v8989 = vmax.f32 %v8885, 0.0
  %v8990 = vmax.f32 %v8886, 0.0
  %v8991 = vmax.f32 %v8887, 0.0
  %v8992 = vmax.f32 %v8888, 0.0
  %v8993 = vmax.f32 %v8889, 0.0
  %v8994 = vmax.f32 %v8890, 0.0
  %v8995 = vmax.f32 %v8891, 0.0
  %v8996 = vmax.f32 %v8892, 0.0
  %v8997 = vmax.f32 %v8893, 0.0
  %v8998 = vmax.f32 %v8894, 0.0
  %v8999 = vmax.f32 %v8895, 0.0
  %v9000 = vmax.f32 %v8896, 0.0
  %v9001 = vmax.f32 %v8897, 0.0
  %v9002 = vmax.f32 %v8898, 0.0
  %v9003 = vmax.f32 %v8899, 0.0
  %v9004 = vmax.f32 %v8900, 0.0
  %v9005 = vmax.f32 %v8901, 0.0
  %v9006 = vmax.f32 %v8902, 0.0
  %v9007 = vmax.f32 %v8903, 0.0
  %vm9008 = vcmask 254976
  %v9009 = vsel %vm9008, %v8904, -inf
  %v9010 = vrot.slane %v9009, 4
  %v9011 = vmax.f32 %v9009, %v9010
  %v9012 = vrot.slane %v9011, 2
  %v9013 = vmax.f32 %v9011, %v9012
  %v9014 = vrot.slane %v9013, 1
  %v9015 = vmax.f32 %v9013, %v9014
  %v9016 = vsel %vm9008, %v8905, -inf
  %v9017 = vrot.slane %v9016, 4
  %v9018 = vmax.f32 %v9016, %v9017
  %v9019 = vrot.slane %v9018, 2
  %v9020 = vmax.f32 %v9018, %v9019
  %v9021 = vrot.slane %v9020, 1
  %v9022 = vmax.f32 %v9020, %v9021
  %v9023 = vsel %vm9008, %v8906, -inf
  %v9024 = vrot.slane %v9023, 4
  %v9025 = vmax.f32 %v9023, %v9024
  %v9026 = vrot.slane %v9025, 2
  %v9027 = vmax.f32 %v9025, %v9026
  %v9028 = vrot.slane %v9027, 1
  %v9029 = vmax.f32 %v9027, %v9028
  %v9030 = vsel %vm9008, %v8907, -inf
  %v9031 = vrot.slane %v9030, 4
  %v9032 = vmax.f32 %v9030, %v9031
  %v9033 = vrot.slane %v9032, 2
  %v9034 = vmax.f32 %v9032, %v9033
  %v9035 = vrot.slane %v9034, 1
  %v9036 = vmax.f32 %v9034, %v9035
  %v9037 = vsel %vm9008, %v8908, -inf
  %v9038 = vrot.slane %v9037, 4
  %v9039 = vmax.f32 %v9037, %v9038
  %v9040 = vrot.slane %v9039, 2
  %v9041 = vmax.f32 %v9039, %v9040
  %v9042 = vrot.slane %v9041, 1
  %v9043 = vmax.f32 %v9041, %v9042
  %v9044 = vsel %vm9008, %v8909, -inf
  %v9045 = vrot.slane %v9044, 4
  %v9046 = vmax.f32 %v9044, %v9045
  %v9047 = vrot.slane %v9046, 2
  %v9048 = vmax.f32 %v9046, %v9047
  %v9049 = vrot.slane %v9048, 1
  %v9050 = vmax.f32 %v9048, %v9049
  %v9051 = vsel %vm9008, %v8910, -inf
  %v9052 = vrot.slane %v9051, 4
  %v9053 = vmax.f32 %v9051, %v9052
  %v9054 = vrot.slane %v9053, 2
  %v9055 = vmax.f32 %v9053, %v9054
  %v9056 = vrot.slane %v9055, 1
  %v9057 = vmax.f32 %v9055, %v9056
  %v9058 = vsel %vm9008, %v8911, -inf
  %v9059 = vrot.slane %v9058, 4
  %v9060 = vmax.f32 %v9058, %v9059
  %v9061 = vrot.slane %v9060, 2
  %v9062 = vmax.f32 %v9060, %v9061
  %v9063 = vrot.slane %v9062, 1
  %v9064 = vmax.f32 %v9062, %v9063
  %v9065 = vsel %vm9008, %v8912, -inf
  %v9066 = vrot.slane %v9065, 4
  %v9067 = vmax.f32 %v9065, %v9066
  %v9068 = vrot.slane %v9067, 2
  %v9069 = vmax.f32 %v9067, %v9068
  %v9070 = vrot.slane %v9069, 1
  %v9071 = vmax.f32 %v9069, %v9070
  %v9072 = vsel %vm9008, %v8913, -inf
  %v9073 = vrot.slane %v9072, 4
  %v9074 = vmax.f32 %v9072, %v9073
  %v9075 = vrot.slane %v9074, 2
  %v9076 = vmax.f32 %v9074, %v9075
  %v9077 = vrot.slane %v9076, 1
  %v9078 = vmax.f32 %v9076, %v9077
  %v9079 = vsel %vm9008, %v8914, -inf
  %v9080 = vrot.slane %v9079, 4
  %v9081 = vmax.f32 %v9079, %v9080
  %v9082 = vrot.slane %v9081, 2
  %v9083 = vmax.f32 %v9081, %v9082
  %v9084 = vrot.slane %v9083, 1
  %v9085 = vmax.f32 %v9083, %v9084
  %v9086 = vsel %vm9008, %v8915, -inf
  %v9087 = vrot.slane %v9086, 4
  %v9088 = vmax.f32 %v9086, %v9087
  %v9089 = vrot.slane %v9088, 2
  %v9090 = vmax.f32 %v9088, %v9089
  %v9091 = vrot.slane %v9090, 1
  %v9092 = vmax.f32 %v9090, %v9091
  %v9093 = vsel %vm9008, %v8916, -inf
  %v9094 = vrot.slane %v9093, 4
  %v9095 = vmax.f32 %v9093, %v9094
  %v9096 = vrot.slane %v9095, 2
  %v9097 = vmax.f32 %v9095, %v9096
  %v9098 = vrot.slane %v9097, 1
  %v9099 = vmax.f32 %v9097, %v9098
  %v9100 = vsel %vm9008, %v8917, -inf
  %v9101 = vrot.slane %v9100, 4
  %v9102 = vmax.f32 %v9100, %v9101
  %v9103 = vrot.slane %v9102, 2
  %v9104 = vmax.f32 %v9102, %v9103
  %v9105 = vrot.slane %v9104, 1
  %v9106 = vmax.f32 %v9104, %v9105
  %v9107 = vsel %vm9008, %v8918, -inf
  %v9108 = vrot.slane %v9107, 4
  %v9109 = vmax.f32 %v9107, %v9108
  %v9110 = vrot.slane %v9109, 2
  %v9111 = vmax.f32 %v9109, %v9110
  %v9112 = vrot.slane %v9111, 1
  %v9113 = vmax.f32 %v9111, %v9112
  %v9114 = vsel %vm9008, %v8919, -inf
  %v9115 = vrot.slane %v9114, 4
  %v9116 = vmax.f32 %v9114, %v9115
  %v9117 = vrot.slane %v9116, 2
  %v9118 = vmax.f32 %v9116, %v9117
  %v9119 = vrot.slane %v9118, 1
  %v9120 = vmax.f32 %v9118, %v9119
  %v9121 = vsel %vm9008, %v8920, -inf
  %v9122 = vrot.slane %v9121, 4
  %v9123 = vmax.f32 %v9121, %v9122
  %v9124 = vrot.slane %v9123, 2
  %v9125 = vmax.f32 %v9123, %v9124
  %v9126 = vrot.slane %v9125, 1
  %v9127 = vmax.f32 %v9125, %v9126
  %v9128 = vsel %vm9008, %v8921, -inf
  %v9129 = vrot.slane %v9128, 4
  %v9130 = vmax.f32 %v9128, %v9129
  %v9131 = vrot.slane %v9130, 2
  %v9132 = vmax.f32 %v9130, %v9131
  %v9133 = vrot.slane %v9132, 1
  %v9134 = vmax.f32 %v9132, %v9133
  %v9135 = vsel %vm9008, %v8922, -inf
  %v9136 = vrot.slane %v9135, 4
  %v9137 = vmax.f32 %v9135, %v9136
  %v9138 = vrot.slane %v9137, 2
  %v9139 = vmax.f32 %v9137, %v9138
  %v9140 = vrot.slane %v9139, 1
  %v9141 = vmax.f32 %v9139, %v9140
  %v9142 = vsel %vm9008, %v8923, -inf
  %v9143 = vrot.slane %v9142, 4
  %v9144 = vmax.f32 %v9142, %v9143
  %v9145 = vrot.slane %v9144, 2
  %v9146 = vmax.f32 %v9144, %v9145
  %v9147 = vrot.slane %v9146, 1
  %v9148 = vmax.f32 %v9146, %v9147
  %v9149 = vsel %vm9008, %v8924, -inf
  %v9150 = vrot.slane %v9149, 4
  %v9151 = vmax.f32 %v9149, %v9150
  %v9152 = vrot.slane %v9151, 2
  %v9153 = vmax.f32 %v9151, %v9152
  %v9154 = vrot.slane %v9153, 1
  %v9155 = vmax.f32 %v9153, %v9154
  %v9156 = vsel %vm9008, %v8925, -inf
  %v9157 = vrot.slane %v9156, 4
  %v9158 = vmax.f32 %v9156, %v9157
  %v9159 = vrot.slane %v9158, 2
  %v9160 = vmax.f32 %v9158, %v9159
  %v9161 = vrot.slane %v9160, 1
  %v9162 = vmax.f32 %v9160, %v9161
  %v9163 = vsel %vm9008, %v8926, -inf
  %v9164 = vrot.slane %v9163, 4
  %v9165 = vmax.f32 %v9163, %v9164
  %v9166 = vrot.slane %v9165, 2
  %v9167 = vmax.f32 %v9165, %v9166
  %v9168 = vrot.slane %v9167, 1
  %v9169 = vmax.f32 %v9167, %v9168
  %v9170 = vsel %vm9008, %v8927, -inf
  %v9171 = vrot.slane %v9170, 4
  %v9172 = vmax.f32 %v9170, %v9171
  %v9173 = vrot.slane %v9172, 2
  %v9174 = vmax.f32 %v9172, %v9173
  %v9175 = vrot.slane %v9174, 1
  %v9176 = vmax.f32 %v9174, %v9175
  %v9177 = vsel %vm9008, %v8928, -inf
  %v9178 = vrot.slane %v9177, 4
  %v9179 = vmax.f32 %v9177, %v9178
  %v9180 = vrot.slane %v9179, 2
  %v9181 = vmax.f32 %v9179, %v9180
  %v9182 = vrot.slane %v9181, 1
  %v9183 = vmax.f32 %v9181, %v9182
  %v9184 = vsel %vm9008, %v8929, -inf
  %v9185 = vrot.slane %v9184, 4
  %v9186 = vmax.f32 %v9184, %v9185
  %v9187 = vrot.slane %v9186, 2
  %v9188 = vmax.f32 %v9186, %v9187
  %v9189 = vrot.slane %v9188, 1
  %v9190 = vmax.f32 %v9188, %v9189
  %v9191 = vsel %vm9008, %v8930, -inf
  %v9192 = vrot.slane %v9191, 4
  %v9193 = vmax.f32 %v9191, %v9192
  %v9194 = vrot.slane %v9193, 2
  %v9195 = vmax.f32 %v9193, %v9194
  %v9196 = vrot.slane %v9195, 1
  %v9197 = vmax.f32 %v9195, %v9196
  %v9198 = vsel %vm9008, %v8931, -inf
  %v9199 = vrot.slane %v9198, 4
  %v9200 = vmax.f32 %v9198, %v9199
  %v9201 = vrot.slane %v9200, 2
  %v9202 = vmax.f32 %v9200, %v9201
  %v9203 = vrot.slane %v9202, 1
  %v9204 = vmax.f32 %v9202, %v9203
  %v9205 = vsel %vm9008, %v8932, -inf
  %v9206 = vrot.slane %v9205, 4
  %v9207 = vmax.f32 %v9205, %v9206
  %v9208 = vrot.slane %v9207, 2
  %v9209 = vmax.f32 %v9207, %v9208
  %v9210 = vrot.slane %v9209, 1
  %v9211 = vmax.f32 %v9209, %v9210
  %v9212 = vsel %vm9008, %v8933, -inf
  %v9213 = vrot.slane %v9212, 4
  %v9214 = vmax.f32 %v9212, %v9213
  %v9215 = vrot.slane %v9214, 2
  %v9216 = vmax.f32 %v9214, %v9215
  %v9217 = vrot.slane %v9216, 1
  %v9218 = vmax.f32 %v9216, %v9217
  %v9219 = vsel %vm9008, %v8934, -inf
  %v9220 = vrot.slane %v9219, 4
  %v9221 = vmax.f32 %v9219, %v9220
  %v9222 = vrot.slane %v9221, 2
  %v9223 = vmax.f32 %v9221, %v9222
  %v9224 = vrot.slane %v9223, 1
  %v9225 = vmax.f32 %v9223, %v9224
  %v9226 = vsel %vm9008, %v8935, -inf
  %v9227 = vrot.slane %v9226, 4
  %v9228 = vmax.f32 %v9226, %v9227
  %v9229 = vrot.slane %v9228, 2
  %v9230 = vmax.f32 %v9228, %v9229
  %v9231 = vrot.slane %v9230, 1
  %v9232 = vmax.f32 %v9230, %v9231
  %v9233 = vsel %vm9008, %v8936, -inf
  %v9234 = vrot.slane %v9233, 4
  %v9235 = vmax.f32 %v9233, %v9234
  %v9236 = vrot.slane %v9235, 2
  %v9237 = vmax.f32 %v9235, %v9236
  %v9238 = vrot.slane %v9237, 1
  %v9239 = vmax.f32 %v9237, %v9238
  %v9240 = vsel %vm9008, %v8937, -inf
  %v9241 = vrot.slane %v9240, 4
  %v9242 = vmax.f32 %v9240, %v9241
  %v9243 = vrot.slane %v9242, 2
  %v9244 = vmax.f32 %v9242, %v9243
  %v9245 = vrot.slane %v9244, 1
  %v9246 = vmax.f32 %v9244, %v9245
  %v9247 = vsel %vm9008, %v8938, -inf
  %v9248 = vrot.slane %v9247, 4
  %v9249 = vmax.f32 %v9247, %v9248
  %v9250 = vrot.slane %v9249, 2
  %v9251 = vmax.f32 %v9249, %v9250
  %v9252 = vrot.slane %v9251, 1
  %v9253 = vmax.f32 %v9251, %v9252
  %v9254 = vsel %vm9008, %v8939, -inf
  %v9255 = vrot.slane %v9254, 4
  %v9256 = vmax.f32 %v9254, %v9255
  %v9257 = vrot.slane %v9256, 2
  %v9258 = vmax.f32 %v9256, %v9257
  %v9259 = vrot.slane %v9258, 1
  %v9260 = vmax.f32 %v9258, %v9259
  %v9261 = vsel %vm9008, %v8940, -inf
  %v9262 = vrot.slane %v9261, 4
  %v9263 = vmax.f32 %v9261, %v9262
  %v9264 = vrot.slane %v9263, 2
  %v9265 = vmax.f32 %v9263, %v9264
  %v9266 = vrot.slane %v9265, 1
  %v9267 = vmax.f32 %v9265, %v9266
  %v9268 = vsel %vm9008, %v8941, -inf
  %v9269 = vrot.slane %v9268, 4
  %v9270 = vmax.f32 %v9268, %v9269
  %v9271 = vrot.slane %v9270, 2
  %v9272 = vmax.f32 %v9270, %v9271
  %v9273 = vrot.slane %v9272, 1
  %v9274 = vmax.f32 %v9272, %v9273
  %v9275 = vsel %vm9008, %v8942, -inf
  %v9276 = vrot.slane %v9275, 4
  %v9277 = vmax.f32 %v9275, %v9276
  %v9278 = vrot.slane %v9277, 2
  %v9279 = vmax.f32 %v9277, %v9278
  %v9280 = vrot.slane %v9279, 1
  %v9281 = vmax.f32 %v9279, %v9280
  %v9282 = vsel %vm9008, %v8943, -inf
  %v9283 = vrot.slane %v9282, 4
  %v9284 = vmax.f32 %v9282, %v9283
  %v9285 = vrot.slane %v9284, 2
  %v9286 = vmax.f32 %v9284, %v9285
  %v9287 = vrot.slane %v9286, 1
  %v9288 = vmax.f32 %v9286, %v9287
  %v9289 = vsel %vm9008, %v8944, -inf
  %v9290 = vrot.slane %v9289, 4
  %v9291 = vmax.f32 %v9289, %v9290
  %v9292 = vrot.slane %v9291, 2
  %v9293 = vmax.f32 %v9291, %v9292
  %v9294 = vrot.slane %v9293, 1
  %v9295 = vmax.f32 %v9293, %v9294
  %v9296 = vsel %vm9008, %v8945, -inf
  %v9297 = vrot.slane %v9296, 4
  %v9298 = vmax.f32 %v9296, %v9297
  %v9299 = vrot.slane %v9298, 2
  %v9300 = vmax.f32 %v9298, %v9299
  %v9301 = vrot.slane %v9300, 1
  %v9302 = vmax.f32 %v9300, %v9301
  %v9303 = vsel %vm9008, %v8946, -inf
  %v9304 = vrot.slane %v9303, 4
  %v9305 = vmax.f32 %v9303, %v9304
  %v9306 = vrot.slane %v9305, 2
  %v9307 = vmax.f32 %v9305, %v9306
  %v9308 = vrot.slane %v9307, 1
  %v9309 = vmax.f32 %v9307, %v9308
  %v9310 = vsel %vm9008, %v8947, -inf
  %v9311 = vrot.slane %v9310, 4
  %v9312 = vmax.f32 %v9310, %v9311
  %v9313 = vrot.slane %v9312, 2
  %v9314 = vmax.f32 %v9312, %v9313
  %v9315 = vrot.slane %v9314, 1
  %v9316 = vmax.f32 %v9314, %v9315
  %v9317 = vsel %vm9008, %v8948, -inf
  %v9318 = vrot.slane %v9317, 4
  %v9319 = vmax.f32 %v9317, %v9318
  %v9320 = vrot.slane %v9319, 2
  %v9321 = vmax.f32 %v9319, %v9320
  %v9322 = vrot.slane %v9321, 1
  %v9323 = vmax.f32 %v9321, %v9322
  %v9324 = vsel %vm9008, %v8949, -inf
  %v9325 = vrot.slane %v9324, 4
  %v9326 = vmax.f32 %v9324, %v9325
  %v9327 = vrot.slane %v9326, 2
  %v9328 = vmax.f32 %v9326, %v9327
  %v9329 = vrot.slane %v9328, 1
  %v9330 = vmax.f32 %v9328, %v9329
  %v9331 = vsel %vm9008, %v8950, -inf
  %v9332 = vrot.slane %v9331, 4
  %v9333 = vmax.f32 %v9331, %v9332
  %v9334 = vrot.slane %v9333, 2
  %v9335 = vmax.f32 %v9333, %v9334
  %v9336 = vrot.slane %v9335, 1
  %v9337 = vmax.f32 %v9335, %v9336
  %v9338 = vsel %vm9008, %v8951, -inf
  %v9339 = vrot.slane %v9338, 4
  %v9340 = vmax.f32 %v9338, %v9339
  %v9341 = vrot.slane %v9340, 2
  %v9342 = vmax.f32 %v9340, %v9341
  %v9343 = vrot.slane %v9342, 1
  %v9344 = vmax.f32 %v9342, %v9343
  %v9345 = vsel %vm9008, %v8952, -inf
  %v9346 = vrot.slane %v9345, 4
  %v9347 = vmax.f32 %v9345, %v9346
  %v9348 = vrot.slane %v9347, 2
  %v9349 = vmax.f32 %v9347, %v9348
  %v9350 = vrot.slane %v9349, 1
  %v9351 = vmax.f32 %v9349, %v9350
  %v9352 = vsel %vm9008, %v8953, -inf
  %v9353 = vrot.slane %v9352, 4
  %v9354 = vmax.f32 %v9352, %v9353
  %v9355 = vrot.slane %v9354, 2
  %v9356 = vmax.f32 %v9354, %v9355
  %v9357 = vrot.slane %v9356, 1
  %v9358 = vmax.f32 %v9356, %v9357
  %v9359 = vsel %vm9008, %v8954, -inf
  %v9360 = vrot.slane %v9359, 4
  %v9361 = vmax.f32 %v9359, %v9360
  %v9362 = vrot.slane %v9361, 2
  %v9363 = vmax.f32 %v9361, %v9362
  %v9364 = vrot.slane %v9363, 1
  %v9365 = vmax.f32 %v9363, %v9364
  %v9366 = vsel %vm9008, %v8955, -inf
  %v9367 = vrot.slane %v9366, 4
  %v9368 = vmax.f32 %v9366, %v9367
  %v9369 = vrot.slane %v9368, 2
  %v9370 = vmax.f32 %v9368, %v9369
  %v9371 = vrot.slane %v9370, 1
  %v9372 = vmax.f32 %v9370, %v9371
  %v9373 = vsel %vm9008, %v8956, -inf
  %v9374 = vrot.slane %v9373, 4
  %v9375 = vmax.f32 %v9373, %v9374
  %v9376 = vrot.slane %v9375, 2
  %v9377 = vmax.f32 %v9375, %v9376
  %v9378 = vrot.slane %v9377, 1
  %v9379 = vmax.f32 %v9377, %v9378
  %v9380 = vsel %vm9008, %v8957, -inf
  %v9381 = vrot.slane %v9380, 4
  %v9382 = vmax.f32 %v9380, %v9381
  %v9383 = vrot.slane %v9382, 2
  %v9384 = vmax.f32 %v9382, %v9383
  %v9385 = vrot.slane %v9384, 1
  %v9386 = vmax.f32 %v9384, %v9385
  %v9387 = vsel %vm9008, %v8958, -inf
  %v9388 = vrot.slane %v9387, 4
  %v9389 = vmax.f32 %v9387, %v9388
  %v9390 = vrot.slane %v9389, 2
  %v9391 = vmax.f32 %v9389, %v9390
  %v9392 = vrot.slane %v9391, 1
  %v9393 = vmax.f32 %v9391, %v9392
  %v9394 = vsel %vm9008, %v8959, -inf
  %v9395 = vrot.slane %v9394, 4
  %v9396 = vmax.f32 %v9394, %v9395
  %v9397 = vrot.slane %v9396, 2
  %v9398 = vmax.f32 %v9396, %v9397
  %v9399 = vrot.slane %v9398, 1
  %v9400 = vmax.f32 %v9398, %v9399
  %v9401 = vsel %vm9008, %v8960, -inf
  %v9402 = vrot.slane %v9401, 4
  %v9403 = vmax.f32 %v9401, %v9402
  %v9404 = vrot.slane %v9403, 2
  %v9405 = vmax.f32 %v9403, %v9404
  %v9406 = vrot.slane %v9405, 1
  %v9407 = vmax.f32 %v9405, %v9406
  %v9408 = vsel %vm9008, %v8961, -inf
  %v9409 = vrot.slane %v9408, 4
  %v9410 = vmax.f32 %v9408, %v9409
  %v9411 = vrot.slane %v9410, 2
  %v9412 = vmax.f32 %v9410, %v9411
  %v9413 = vrot.slane %v9412, 1
  %v9414 = vmax.f32 %v9412, %v9413
  %v9415 = vsel %vm9008, %v8962, -inf
  %v9416 = vrot.slane %v9415, 4
  %v9417 = vmax.f32 %v9415, %v9416
  %v9418 = vrot.slane %v9417, 2
  %v9419 = vmax.f32 %v9417, %v9418
  %v9420 = vrot.slane %v9419, 1
  %v9421 = vmax.f32 %v9419, %v9420
  %v9422 = vsel %vm9008, %v8963, -inf
  %v9423 = vrot.slane %v9422, 4
  %v9424 = vmax.f32 %v9422, %v9423
  %v9425 = vrot.slane %v9424, 2
  %v9426 = vmax.f32 %v9424, %v9425
  %v9427 = vrot.slane %v9426, 1
  %v9428 = vmax.f32 %v9426, %v9427
  %v9429 = vsel %vm9008, %v8964, -inf
  %v9430 = vrot.slane %v9429, 4
  %v9431 = vmax.f32 %v9429, %v9430
  %v9432 = vrot.slane %v9431, 2
  %v9433 = vmax.f32 %v9431, %v9432
  %v9434 = vrot.slane %v9433, 1
  %v9435 = vmax.f32 %v9433, %v9434
  %v9436 = vsel %vm9008, %v8965, -inf
  %v9437 = vrot.slane %v9436, 4
  %v9438 = vmax.f32 %v9436, %v9437
  %v9439 = vrot.slane %v9438, 2
  %v9440 = vmax.f32 %v9438, %v9439
  %v9441 = vrot.slane %v9440, 1
  %v9442 = vmax.f32 %v9440, %v9441
  %v9443 = vsel %vm9008, %v8966, -inf
  %v9444 = vrot.slane %v9443, 4
  %v9445 = vmax.f32 %v9443, %v9444
  %v9446 = vrot.slane %v9445, 2
  %v9447 = vmax.f32 %v9445, %v9446
  %v9448 = vrot.slane %v9447, 1
  %v9449 = vmax.f32 %v9447, %v9448
  %v9450 = vsel %vm9008, %v8967, -inf
  %v9451 = vrot.slane %v9450, 4
  %v9452 = vmax.f32 %v9450, %v9451
  %v9453 = vrot.slane %v9452, 2
  %v9454 = vmax.f32 %v9452, %v9453
  %v9455 = vrot.slane %v9454, 1
  %v9456 = vmax.f32 %v9454, %v9455
  %v9457 = vsel %vm9008, %v8968, -inf
  %v9458 = vrot.slane %v9457, 4
  %v9459 = vmax.f32 %v9457, %v9458
  %v9460 = vrot.slane %v9459, 2
  %v9461 = vmax.f32 %v9459, %v9460
  %v9462 = vrot.slane %v9461, 1
  %v9463 = vmax.f32 %v9461, %v9462
  %v9464 = vsel %vm9008, %v8969, -inf
  %v9465 = vrot.slane %v9464, 4
  %v9466 = vmax.f32 %v9464, %v9465
  %v9467 = vrot.slane %v9466, 2
  %v9468 = vmax.f32 %v9466, %v9467
  %v9469 = vrot.slane %v9468, 1
  %v9470 = vmax.f32 %v9468, %v9469
  %v9471 = vsel %vm9008, %v8970, -inf
  %v9472 = vrot.slane %v9471, 4
  %v9473 = vmax.f32 %v9471, %v9472
  %v9474 = vrot.slane %v9473, 2
  %v9475 = vmax.f32 %v9473, %v9474
  %v9476 = vrot.slane %v9475, 1
  %v9477 = vmax.f32 %v9475, %v9476
  %v9478 = vsel %vm9008, %v8971, -inf
  %v9479 = vrot.slane %v9478, 4
  %v9480 = vmax.f32 %v9478, %v9479
  %v9481 = vrot.slane %v9480, 2
  %v9482 = vmax.f32 %v9480, %v9481
  %v9483 = vrot.slane %v9482, 1
  %v9484 = vmax.f32 %v9482, %v9483
  %v9485 = vsel %vm9008, %v8972, -inf
  %v9486 = vrot.slane %v9485, 4
  %v9487 = vmax.f32 %v9485, %v9486
  %v9488 = vrot.slane %v9487, 2
  %v9489 = vmax.f32 %v9487, %v9488
  %v9490 = vrot.slane %v9489, 1
  %v9491 = vmax.f32 %v9489, %v9490
  %v9492 = vsel %vm9008, %v8973, -inf
  %v9493 = vrot.slane %v9492, 4
  %v9494 = vmax.f32 %v9492, %v9493
  %v9495 = vrot.slane %v9494, 2
  %v9496 = vmax.f32 %v9494, %v9495
  %v9497 = vrot.slane %v9496, 1
  %v9498 = vmax.f32 %v9496, %v9497
  %v9499 = vsel %vm9008, %v8974, -inf
  %v9500 = vrot.slane %v9499, 4
  %v9501 = vmax.f32 %v9499, %v9500
  %v9502 = vrot.slane %v9501, 2
  %v9503 = vmax.f32 %v9501, %v9502
  %v9504 = vrot.slane %v9503, 1
  %v9505 = vmax.f32 %v9503, %v9504
  %v9506 = vsel %vm9008, %v8975, -inf
  %v9507 = vrot.slane %v9506, 4
  %v9508 = vmax.f32 %v9506, %v9507
  %v9509 = vrot.slane %v9508, 2
  %v9510 = vmax.f32 %v9508, %v9509
  %v9511 = vrot.slane %v9510, 1
  %v9512 = vmax.f32 %v9510, %v9511
  %v9513 = vsel %vm9008, %v8976, -inf
  %v9514 = vrot.slane %v9513, 4
  %v9515 = vmax.f32 %v9513, %v9514
  %v9516 = vrot.slane %v9515, 2
  %v9517 = vmax.f32 %v9515, %v9516
  %v9518 = vrot.slane %v9517, 1
  %v9519 = vmax.f32 %v9517, %v9518
  %v9520 = vsel %vm9008, %v8977, -inf
  %v9521 = vrot.slane %v9520, 4
  %v9522 = vmax.f32 %v9520, %v9521
  %v9523 = vrot.slane %v9522, 2
  %v9524 = vmax.f32 %v9522, %v9523
  %v9525 = vrot.slane %v9524, 1
  %v9526 = vmax.f32 %v9524, %v9525
  %v9527 = vsel %vm9008, %v8978, -inf
  %v9528 = vrot.slane %v9527, 4
  %v9529 = vmax.f32 %v9527, %v9528
  %v9530 = vrot.slane %v9529, 2
  %v9531 = vmax.f32 %v9529, %v9530
  %v9532 = vrot.slane %v9531, 1
  %v9533 = vmax.f32 %v9531, %v9532
  %v9534 = vsel %vm9008, %v8979, -inf
  %v9535 = vrot.slane %v9534, 4
  %v9536 = vmax.f32 %v9534, %v9535
  %v9537 = vrot.slane %v9536, 2
  %v9538 = vmax.f32 %v9536, %v9537
  %v9539 = vrot.slane %v9538, 1
  %v9540 = vmax.f32 %v9538, %v9539
  %v9541 = vsel %vm9008, %v8980, -inf
  %v9542 = vrot.slane %v9541, 4
  %v9543 = vmax.f32 %v9541, %v9542
  %v9544 = vrot.slane %v9543, 2
  %v9545 = vmax.f32 %v9543, %v9544
  %v9546 = vrot.slane %v9545, 1
  %v9547 = vmax.f32 %v9545, %v9546
  %v9548 = vsel %vm9008, %v8981, -inf
  %v9549 = vrot.slane %v9548, 4
  %v9550 = vmax.f32 %v9548, %v9549
  %v9551 = vrot.slane %v9550, 2
  %v9552 = vmax.f32 %v9550, %v9551
  %v9553 = vrot.slane %v9552, 1
  %v9554 = vmax.f32 %v9552, %v9553
  %v9555 = vsel %vm9008, %v8982, -inf
  %v9556 = vrot.slane %v9555, 4
  %v9557 = vmax.f32 %v9555, %v9556
  %v9558 = vrot.slane %v9557, 2
  %v9559 = vmax.f32 %v9557, %v9558
  %v9560 = vrot.slane %v9559, 1
  %v9561 = vmax.f32 %v9559, %v9560
  %v9562 = vsel %vm9008, %v8983, -inf
  %v9563 = vrot.slane %v9562, 4
  %v9564 = vmax.f32 %v9562, %v9563
  %v9565 = vrot.slane %v9564, 2
  %v9566 = vmax.f32 %v9564, %v9565
  %v9567 = vrot.slane %v9566, 1
  %v9568 = vmax.f32 %v9566, %v9567
  %v9569 = vsel %vm9008, %v8984, -inf
  %v9570 = vrot.slane %v9569, 4
  %v9571 = vmax.f32 %v9569, %v9570
  %v9572 = vrot.slane %v9571, 2
  %v9573 = vmax.f32 %v9571, %v9572
  %v9574 = vrot.slane %v9573, 1
  %v9575 = vmax.f32 %v9573, %v9574
  %v9576 = vsel %vm9008, %v8985, -inf
  %v9577 = vrot.slane %v9576, 4
  %v9578 = vmax.f32 %v9576, %v9577
  %v9579 = vrot.slane %v9578, 2
  %v9580 = vmax.f32 %v9578, %v9579
  %v9581 = vrot.slane %v9580, 1
  %v9582 = vmax.f32 %v9580, %v9581
  %v9583 = vsel %vm9008, %v8986, -inf
  %v9584 = vrot.slane %v9583, 4
  %v9585 = vmax.f32 %v9583, %v9584
  %v9586 = vrot.slane %v9585, 2
  %v9587 = vmax.f32 %v9585, %v9586
  %v9588 = vrot.slane %v9587, 1
  %v9589 = vmax.f32 %v9587, %v9588
  %v9590 = vsel %vm9008, %v8987, -inf
  %v9591 = vrot.slane %v9590, 4
  %v9592 = vmax.f32 %v9590, %v9591
  %v9593 = vrot.slane %v9592, 2
  %v9594 = vmax.f32 %v9592, %v9593
  %v9595 = vrot.slane %v9594, 1
  %v9596 = vmax.f32 %v9594, %v9595
  %v9597 = vsel %vm9008, %v8988, -inf
  %v9598 = vrot.slane %v9597, 4
  %v9599 = vmax.f32 %v9597, %v9598
  %v9600 = vrot.slane %v9599, 2
  %v9601 = vmax.f32 %v9599, %v9600
  %v9602 = vrot.slane %v9601, 1
  %v9603 = vmax.f32 %v9601, %v9602
  %v9604 = vsel %vm9008, %v8989, -inf
  %v9605 = vrot.slane %v9604, 4
  %v9606 = vmax.f32 %v9604, %v9605
  %v9607 = vrot.slane %v9606, 2
  %v9608 = vmax.f32 %v9606, %v9607
  %v9609 = vrot.slane %v9608, 1
  %v9610 = vmax.f32 %v9608, %v9609
  %v9611 = vsel %vm9008, %v8990, -inf
  %v9612 = vrot.slane %v9611, 4
  %v9613 = vmax.f32 %v9611, %v9612
  %v9614 = vrot.slane %v9613, 2
  %v9615 = vmax.f32 %v9613, %v9614
  %v9616 = vrot.slane %v9615, 1
  %v9617 = vmax.f32 %v9615, %v9616
  %v9618 = vsel %vm9008, %v8991, -inf
  %v9619 = vrot.slane %v9618, 4
  %v9620 = vmax.f32 %v9618, %v9619
  %v9621 = vrot.slane %v9620, 2
  %v9622 = vmax.f32 %v9620, %v9621
  %v9623 = vrot.slane %v9622, 1
  %v9624 = vmax.f32 %v9622, %v9623
  %v9625 = vsel %vm9008, %v8992, -inf
  %v9626 = vrot.slane %v9625, 4
  %v9627 = vmax.f32 %v9625, %v9626
  %v9628 = vrot.slane %v9627, 2
  %v9629 = vmax.f32 %v9627, %v9628
  %v9630 = vrot.slane %v9629, 1
  %v9631 = vmax.f32 %v9629, %v9630
  %v9632 = vsel %vm9008, %v8993, -inf
  %v9633 = vrot.slane %v9632, 4
  %v9634 = vmax.f32 %v9632, %v9633
  %v9635 = vrot.slane %v9634, 2
  %v9636 = vmax.f32 %v9634, %v9635
  %v9637 = vrot.slane %v9636, 1
  %v9638 = vmax.f32 %v9636, %v9637
  %v9639 = vsel %vm9008, %v8994, -inf
  %v9640 = vrot.slane %v9639, 4
  %v9641 = vmax.f32 %v9639, %v9640
  %v9642 = vrot.slane %v9641, 2
  %v9643 = vmax.f32 %v9641, %v9642
  %v9644 = vrot.slane %v9643, 1
  %v9645 = vmax.f32 %v9643, %v9644
  %v9646 = vsel %vm9008, %v8995, -inf
  %v9647 = vrot.slane %v9646, 4
  %v9648 = vmax.f32 %v9646, %v9647
  %v9649 = vrot.slane %v9648, 2
  %v9650 = vmax.f32 %v9648, %v9649
  %v9651 = vrot.slane %v9650, 1
  %v9652 = vmax.f32 %v9650, %v9651
  %v9653 = vsel %vm9008, %v8996, -inf
  %v9654 = vrot.slane %v9653, 4
  %v9655 = vmax.f32 %v9653, %v9654
  %v9656 = vrot.slane %v9655, 2
  %v9657 = vmax.f32 %v9655, %v9656
  %v9658 = vrot.slane %v9657, 1
  %v9659 = vmax.f32 %v9657, %v9658
  %v9660 = vsel %vm9008, %v8997, -inf
  %v9661 = vrot.slane %v9660, 4
  %v9662 = vmax.f32 %v9660, %v9661
  %v9663 = vrot.slane %v9662, 2
  %v9664 = vmax.f32 %v9662, %v9663
  %v9665 = vrot.slane %v9664, 1
  %v9666 = vmax.f32 %v9664, %v9665
  %v9667 = vsel %vm9008, %v8998, -inf
  %v9668 = vrot.slane %v9667, 4
  %v9669 = vmax.f32 %v9667, %v9668
  %v9670 = vrot.slane %v9669, 2
  %v9671 = vmax.f32 %v9669, %v9670
  %v9672 = vrot.slane %v9671, 1
  %v9673 = vmax.f32 %v9671, %v9672
  %v9674 = vsel %vm9008, %v8999, -inf
  %v9675 = vrot.slane %v9674, 4
  %v9676 = vmax.f32 %v9674, %v9675
  %v9677 = vrot.slane %v9676, 2
  %v9678 = vmax.f32 %v9676, %v9677
  %v9679 = vrot.slane %v9678, 1
  %v9680 = vmax.f32 %v9678, %v9679
  %v9681 = vsel %vm9008, %v9000, -inf
  %v9682 = vrot.slane %v9681, 4
  %v9683 = vmax.f32 %v9681, %v9682
  %v9684 = vrot.slane %v9683, 2
  %v9685 = vmax.f32 %v9683, %v9684
  %v9686 = vrot.slane %v9685, 1
  %v9687 = vmax.f32 %v9685, %v9686
  %v9688 = vsel %vm9008, %v9001, -inf
  %v9689 = vrot.slane %v9688, 4
  %v9690 = vmax.f32 %v9688, %v9689
  %v9691 = vrot.slane %v9690, 2
  %v9692 = vmax.f32 %v9690, %v9691
  %v9693 = vrot.slane %v9692, 1
  %v9694 = vmax.f32 %v9692, %v9693
  %v9695 = vsel %vm9008, %v9002, -inf
  %v9696 = vrot.slane %v9695, 4
  %v9697 = vmax.f32 %v9695, %v9696
  %v9698 = vrot.slane %v9697, 2
  %v9699 = vmax.f32 %v9697, %v9698
  %v9700 = vrot.slane %v9699, 1
  %v9701 = vmax.f32 %v9699, %v9700
  %v9702 = vsel %vm9008, %v9003, -inf
  %v9703 = vrot.slane %v9702, 4
  %v9704 = vmax.f32 %v9702, %v9703
  %v9705 = vrot.slane %v9704, 2
  %v9706 = vmax.f32 %v9704, %v9705
  %v9707 = vrot.slane %v9706, 1
  %v9708 = vmax.f32 %v9706, %v9707
  %v9709 = vsel %vm9008, %v9004, -inf
  %v9710 = vrot.slane %v9709, 4
  %v9711 = vmax.f32 %v9709, %v9710
  %v9712 = vrot.slane %v9711, 2
  %v9713 = vmax.f32 %v9711, %v9712
  %v9714 = vrot.slane %v9713, 1
  %v9715 = vmax.f32 %v9713, %v9714
  %v9716 = vsel %vm9008, %v9005, -inf
  %v9717 = vrot.slane %v9716, 4
  %v9718 = vmax.f32 %v9716, %v9717
  %v9719 = vrot.slane %v9718, 2
  %v9720 = vmax.f32 %v9718, %v9719
  %v9721 = vrot.slane %v9720, 1
  %v9722 = vmax.f32 %v9720, %v9721
  %v9723 = vsel %vm9008, %v9006, -inf
  %v9724 = vrot.slane %v9723, 4
  %v9725 = vmax.f32 %v9723, %v9724
  %v9726 = vrot.slane %v9725, 2
  %v9727 = vmax.f32 %v9725, %v9726
  %v9728 = vrot.slane %v9727, 1
  %v9729 = vmax.f32 %v9727, %v9728
  %v9730 = vsel %vm9008, %v9007, -inf
  %v9731 = vrot.slane %v9730, 4
  %v9732 = vmax.f32 %v9730, %v9731
  %v9733 = vrot.slane %v9732, 2
  %v9734 = vmax.f32 %v9732, %v9733
  %v9735 = vrot.slane %v9734, 1
  %v9736 = vmax.f32 %v9734, %v9735
  %v9737 = vld [vmem:[%s5] sm:$0xff]
  %v9738 = vld [vmem:[%s5 + $0x8] sm:$0xff]
  %v9739 = vld [vmem:[%s5 + $0x10] sm:$0xff]
  %v9740 = vld [vmem:[%s5 + $0x18] sm:$0xff]
  %v9741 = vld [vmem:[%s5 + $0x20] sm:$0xff]
  %v9742 = vld [vmem:[%s5 + $0x28] sm:$0xff]
  %v9743 = vld [vmem:[%s5 + $0x30] sm:$0xff]
  %v9744 = vld [vmem:[%s5 + $0x38] sm:$0xff]
  %v9745 = vld [vmem:[%s5 + $0x40] sm:$0xff]
  %v9746 = vld [vmem:[%s5 + $0x48] sm:$0xff]
  %v9747 = vld [vmem:[%s5 + $0x50] sm:$0xff]
  %v9748 = vld [vmem:[%s5 + $0x58] sm:$0xff]
  %v9853 = vsel %vm5639, %v9022, %v9015
  %v9854 = vsel %vm5641, %v9029, %v9853
  %v9855 = vsel %vm5643, %v9036, %v9854
  %v9856 = vsel %vm5645, %v9043, %v9855
  %v9857 = vsel %vm5647, %v9050, %v9856
  %v9858 = vsel %vm5649, %v9057, %v9857
  %v9859 = vsel %vm5651, %v9064, %v9858
  %v9860 = vsel %vm5639, %v9078, %v9071
  %v9861 = vsel %vm5641, %v9085, %v9860
  %v9862 = vsel %vm5643, %v9092, %v9861
  %v9863 = vsel %vm5645, %v9099, %v9862
  %v9864 = vsel %vm5647, %v9106, %v9863
  %v9865 = vsel %vm5649, %v9113, %v9864
  %v9866 = vsel %vm5651, %v9120, %v9865
  %v9867 = vsel %vm5639, %v9134, %v9127
  %v9868 = vsel %vm5641, %v9141, %v9867
  %v9869 = vsel %vm5643, %v9148, %v9868
  %v9870 = vsel %vm5645, %v9155, %v9869
  %v9871 = vsel %vm5647, %v9162, %v9870
  %v9872 = vsel %vm5649, %v9169, %v9871
  %v9873 = vsel %vm5651, %v9176, %v9872
  %v9874 = vsel %vm5639, %v9190, %v9183
  %v9875 = vsel %vm5641, %v9197, %v9874
  %v9876 = vsel %vm5643, %v9204, %v9875
  %v9877 = vsel %vm5645, %v9211, %v9876
  %v9878 = vsel %vm5647, %v9218, %v9877
  %v9879 = vsel %vm5649, %v9225, %v9878
  %v9880 = vsel %vm5651, %v9232, %v9879
  %v9881 = vsel %vm5639, %v9246, %v9239
  %v9882 = vsel %vm5641, %v9253, %v9881
  %v9883 = vsel %vm5643, %v9260, %v9882
  %v9884 = vsel %vm5645, %v9267, %v9883
  %v9885 = vsel %vm5647, %v9274, %v9884
  %v9886 = vsel %vm5649, %v9281, %v9885
  %v9887 = vsel %vm5651, %v9288, %v9886
  %v9888 = vsel %vm5639, %v9302, %v9295
  %v9889 = vsel %vm5641, %v9309, %v9888
  %v9890 = vsel %vm5643, %v9316, %v9889
  %v9891 = vsel %vm5645, %v9323, %v9890
  %v9892 = vsel %vm5647, %v9330, %v9891
  %v9893 = vsel %vm5649, %v9337, %v9892
  %v9894 = vsel %vm5651, %v9344, %v9893
  %v9895 = vsel %vm5639, %v9358, %v9351
  %v9896 = vsel %vm5641, %v9365, %v9895
  %v9897 = vsel %vm5643, %v9372, %v9896
  %v9898 = vsel %vm5645, %v9379, %v9897
  %v9899 = vsel %vm5647, %v9386, %v9898
  %v9900 = vsel %vm5649, %v9393, %v9899
  %v9901 = vsel %vm5651, %v9400, %v9900
  %v9902 = vsel %vm5639, %v9414, %v9407
  %v9903 = vsel %vm5641, %v9421, %v9902
  %v9904 = vsel %vm5643, %v9428, %v9903
  %v9905 = vsel %vm5645, %v9435, %v9904
  %v9906 = vsel %vm5647, %v9442, %v9905
  %v9907 = vsel %vm5649, %v9449, %v9906
  %v9908 = vsel %vm5651, %v9456, %v9907
  %v9909 = vsel %vm5639, %v9470, %v9463
  %v9910 = vsel %vm5641, %v9477, %v9909
  %v9911 = vsel %vm5643, %v9484, %v9910
  %v9912 = vsel %vm5645, %v9491, %v9911
  %v9913 = vsel %vm5647, %v9498, %v9912
  %v9914 = vsel %vm5649, %v9505, %v9913
  %v9915 = vsel %vm5651, %v9512, %v9914
  %v9916 = vsel %vm5639, %v9526, %v9519
  %v9917 = vsel %vm5641, %v9533, %v9916
  %v9918 = vsel %vm5643, %v9540, %v9917
  %v9919 = vsel %vm5645, %v9547, %v9918
  %v9920 = vsel %vm5647, %v9554, %v9919
  %v9921 = vsel %vm5649, %v9561, %v9920
  %v9922 = vsel %vm5651, %v9568, %v9921
  %v9923 = vsel %vm5639, %v9582, %v9575
  %v9924 = vsel %vm5641, %v9589, %v9923
  %v9925 = vsel %vm5643, %v9596, %v9924
  %v9926 = vsel %vm5645, %v9603, %v9925
  %v9927 = vsel %vm5647, %v9610, %v9926
  %v9928 = vsel %vm5649, %v9617, %v9927
  %v9929 = vsel %vm5651, %v9624, %v9928
  %v9930 = vsel %vm5639, %v9638, %v9631
  %v9931 = vsel %vm5641, %v9645, %v9930
  %v9932 = vsel %vm5643, %v9652, %v9931
  %v9933 = vsel %vm5645, %v9659, %v9932
  %v9934 = vsel %vm5647, %v9666, %v9933
  %v9935 = vsel %vm5649, %v9673, %v9934
  %v9936 = vsel %vm5651, %v9680, %v9935
  %v9937 = vsel %vm5639, %v9694, %v9687
  %v9938 = vsel %vm5641, %v9701, %v9937
  %v9939 = vsel %vm5643, %v9708, %v9938
  %v9940 = vsel %vm5645, %v9715, %v9939
  %v9941 = vsel %vm5647, %v9722, %v9940
  %v9942 = vsel %vm5649, %v9729, %v9941
  %v9943 = vsel %vm5651, %v9736, %v9942
  %vm9944 = vcmask 261120
  %v9945 = vsel %vm9944, %v9859, 0
  %v9947 = vsel %vm9944, %v9866, 0
  %v9949 = vsel %vm9944, %v9873, 0
  %v9951 = vsel %vm9944, %v9880, 0
  %v9953 = vsel %vm9944, %v9887, 0
  %v9955 = vsel %vm9944, %v9894, 0
  %v9957 = vsel %vm9944, %v9901, 0
  %v9959 = vsel %vm9944, %v9908, 0
  %v9961 = vsel %vm9944, %v9915, 0
  %v9963 = vsel %vm9944, %v9922, 0
  %v9965 = vsel %vm9944, %v9929, 0
  %v9967 = vsel %vm9944, %v9936, 0
  %v9969 = vsel %vm9944, %v9943, 0
  %9971 = vmatprep.subr.mxu0 0.0
  %9972 = vmatpush1.msra.mxu0 0.0
  %9973 = vmatprep.subr.mxu0 0.0
  %9974 = vmatpush1.msra.mxu0 0.0
  %9975 = vmatprep.subr.mxu0 0.0
  %9976 = vmatpush1.msra.mxu0 0.0
  %9977 = vmatprep.subr.mxu0 0.0
  %9978 = vmatpush1.msra.mxu0 0.0
  %9979 = vmatprep.subr.mxu0 0.0
  %9980 = vmatpush1.msra.mxu0 0.0
  %9981 = vmatprep.subr.mxu0 0.0
  %9982 = vmatpush1.msra.mxu0 0.0
  %9983 = vmatprep.subr.mxu0 0.0
  %9984 = vmatpush1.msra.mxu0 0.0
  %9985 = vmatprep.subr.mxu0 0.0
  %9986 = vmatpush1.msra.mxu0 0.0
  %9987 = vmatprep.subr.mxu0 0.0
  %9988 = vmatpush1.msra.mxu0 0.0
  %9989 = vmatprep.subr.mxu0 0.0
  %9990 = vmatpush1.msra.mxu0 0.0
  %9991 = vmatprep.subr.mxu0 0.0
  %9992 = vmatpush1.msra.mxu0 0.0
  %9993 = vmatprep.subr.mxu0 0.0
  %9994 = vmatpush1.msra.mxu0 0.0
  %9995 = vmatprep.subr.mxu0 %v9747
  %9996 = vmatpush1.msra.mxu0 %v9746
  %9997 = vmatprep.subr.mxu0 %v9744
  %9998 = vmatpush1.msra.mxu0 %v9743
  %9999 = vmatprep.subr.mxu0 %v9741
  %10000 = vmatpush1.msra.mxu0 %v9740
  %10001 = vmatprep.subr.mxu0 %v9738
  %10002 = vmatpush1.msra.mxu0 %v9737
  %10003 = vmatprep.subr.mxu0 0.0
  %10004 = vmatpush2.msra.mxu0 0.0
  %10005 = vmatprep.subr.mxu0 0.0
  %10006 = vmatpush2.msra.mxu0 0.0
  %10007 = vmatprep.subr.mxu0 0.0
  %10008 = vmatpush2.msra.mxu0 0.0
  %10009 = vmatprep.subr.mxu0 0.0
  %10010 = vmatpush2.msra.mxu0 0.0
  %10011 = vmatprep.subr.mxu0 0.0
  %10012 = vmatpush2.msra.mxu0 0.0
  %10013 = vmatprep.subr.mxu0 0.0
  %10014 = vmatpush2.msra.mxu0 0.0
  %10015 = vmatprep.subr.mxu0 0.0
  %10016 = vmatpush2.msra.mxu0 0.0
  %10017 = vmatprep.subr.mxu0 0.0
  %10018 = vmatpush2.msra.mxu0 0.0
  %10019 = vmatprep.subr.mxu0 0.0
  %10020 = vmatpush2.msra.mxu0 0.0
  %10021 = vmatprep.subr.mxu0 0.0
  %10022 = vmatpush2.msra.mxu0 0.0
  %10023 = vmatprep.subr.mxu0 0.0
  %10024 = vmatpush2.msra.mxu0 0.0
  %10025 = vmatprep.subr.mxu0 0.0
  %10026 = vmatpush2.msra.mxu0 0.0
  %10027 = vmatprep.subr.mxu0 0.0
  %10028 = vmatpush2.msra.mxu0 0.0
  %10029 = vmatprep.subr.mxu0 0.0
  %10030 = vmatpush2.msra.mxu0 0.0
  %10031 = vmatprep.subr.mxu0 0.0
  %10032 = vmatpush2.msra.mxu0 0.0
  %10033 = vmatprep.subr.mxu0 0.0
  %10034 = vmatpush2.msra.mxu0 0.0
  %10035 = vmatprep.mubr.f32.mxu0 0.0
  %10036 = vmatmul.mubr.f32.gmra.mxu0 %v9945
  %v10037 = vpop.f32.mrf.mxu0
  %v10038 = vadd.f32 0.0, %v10037
  %v10039 = vpop.f32.mrf.mxu0
  %v10040 = vadd.f32 0.0, %v10039
  %10041 = vmatprep.mubr.f32.mxu0 0.0
  %10042 = vmatmul.mubr.f32.gmra.mxu0 %v9947
  %v10043 = vpop.f32.mrf.mxu0
  %v10044 = vadd.f32 0.0, %v10043
  %v10045 = vpop.f32.mrf.mxu0
  %v10046 = vadd.f32 0.0, %v10045
  %10047 = vmatprep.mubr.f32.mxu0 0.0
  %10048 = vmatmul.mubr.f32.gmra.mxu0 %v9949
  %v10049 = vpop.f32.mrf.mxu0
  %v10050 = vadd.f32 0.0, %v10049
  %v10051 = vpop.f32.mrf.mxu0
  %v10052 = vadd.f32 0.0, %v10051
  %10053 = vmatprep.mubr.f32.mxu0 0.0
  %10054 = vmatmul.mubr.f32.gmra.mxu0 %v9951
  %v10055 = vpop.f32.mrf.mxu0
  %v10056 = vadd.f32 0.0, %v10055
  %v10057 = vpop.f32.mrf.mxu0
  %v10058 = vadd.f32 0.0, %v10057
  %10059 = vmatprep.mubr.f32.mxu0 0.0
  %10060 = vmatmul.mubr.f32.gmra.mxu0 %v9953
  %v10061 = vpop.f32.mrf.mxu0
  %v10062 = vadd.f32 0.0, %v10061
  %v10063 = vpop.f32.mrf.mxu0
  %v10064 = vadd.f32 0.0, %v10063
  %10065 = vmatprep.mubr.f32.mxu0 0.0
  %10066 = vmatmul.mubr.f32.gmra.mxu0 %v9955
  %v10067 = vpop.f32.mrf.mxu0
  %v10068 = vadd.f32 0.0, %v10067
  %v10069 = vpop.f32.mrf.mxu0
  %v10070 = vadd.f32 0.0, %v10069
  %10071 = vmatprep.mubr.f32.mxu0 0.0
  %10072 = vmatmul.mubr.f32.gmra.mxu0 %v9957
  %v10073 = vpop.f32.mrf.mxu0
  %v10074 = vadd.f32 0.0, %v10073
  %v10075 = vpop.f32.mrf.mxu0
  %v10076 = vadd.f32 0.0, %v10075
  %10077 = vmatprep.mubr.f32.mxu0 0.0
  %10078 = vmatmul.mubr.f32.gmra.mxu0 %v9959
  %v10079 = vpop.f32.mrf.mxu0
  %v10080 = vadd.f32 0.0, %v10079
  %v10081 = vpop.f32.mrf.mxu0
  %v10082 = vadd.f32 0.0, %v10081
  %10083 = vmatprep.mubr.f32.mxu0 0.0
  %10084 = vmatmul.mubr.f32.gmra.mxu0 %v9961
  %v10085 = vpop.f32.mrf.mxu0
  %v10086 = vadd.f32 0.0, %v10085
  %v10087 = vpop.f32.mrf.mxu0
  %v10088 = vadd.f32 0.0, %v10087
  %10089 = vmatprep.mubr.f32.mxu0 0.0
  %10090 = vmatmul.mubr.f32.gmra.mxu0 %v9963
  %v10091 = vpop.f32.mrf.mxu0
  %v10092 = vadd.f32 0.0, %v10091
  %v10093 = vpop.f32.mrf.mxu0
  %v10094 = vadd.f32 0.0, %v10093
  %10095 = vmatprep.mubr.f32.mxu0 0.0
  %10096 = vmatmul.mubr.f32.gmra.mxu0 %v9965
  %v10097 = vpop.f32.mrf.mxu0
  %v10098 = vadd.f32 0.0, %v10097
  %v10099 = vpop.f32.mrf.mxu0
  %v10100 = vadd.f32 0.0, %v10099
  %10101 = vmatprep.mubr.f32.mxu0 0.0
  %10102 = vmatmul.mubr.f32.gmra.mxu0 %v9967
  %v10103 = vpop.f32.mrf.mxu0
  %v10104 = vadd.f32 0.0, %v10103
  %v10105 = vpop.f32.mrf.mxu0
  %v10106 = vadd.f32 0.0, %v10105
  %10107 = vmatprep.mubr.f32.mxu0 0.0
  %10108 = vmatmul.mubr.f32.gmra.mxu0 %v9969
  %v10109 = vpop.f32.mrf.mxu0
  %v10110 = vadd.f32 0.0, %v10109
  %v10111 = vpop.f32.mrf.mxu0
  %v10112 = vadd.f32 0.0, %v10111
  %10113 = vdwg.mxu0
  %10114 = vmatprep.subr.mxu0 0.0
  %10115 = vmatpush1.msra.mxu0 0.0
  %10116 = vmatprep.subr.mxu0 0.0
  %10117 = vmatpush1.msra.mxu0 0.0
  %10118 = vmatprep.subr.mxu0 0.0
  %10119 = vmatpush1.msra.mxu0 0.0
  %10120 = vmatprep.subr.mxu0 0.0
  %10121 = vmatpush1.msra.mxu0 0.0
  %10122 = vmatprep.subr.mxu0 0.0
  %10123 = vmatpush1.msra.mxu0 0.0
  %10124 = vmatprep.subr.mxu0 0.0
  %10125 = vmatpush1.msra.mxu0 0.0
  %10126 = vmatprep.subr.mxu0 0.0
  %10127 = vmatpush1.msra.mxu0 0.0
  %10128 = vmatprep.subr.mxu0 0.0
  %10129 = vmatpush1.msra.mxu0 0.0
  %10130 = vmatprep.subr.mxu0 0.0
  %10131 = vmatpush1.msra.mxu0 0.0
  %10132 = vmatprep.subr.mxu0 0.0
  %10133 = vmatpush1.msra.mxu0 0.0
  %10134 = vmatprep.subr.mxu0 0.0
  %10135 = vmatpush1.msra.mxu0 0.0
  %10136 = vmatprep.subr.mxu0 0.0
  %10137 = vmatpush1.msra.mxu0 0.0
  %10138 = vmatprep.subr.mxu0 0.0
  %10139 = vmatpush1.msra.mxu0 %v9748
  %10140 = vmatprep.subr.mxu0 0.0
  %10141 = vmatpush1.msra.mxu0 %v9745
  %10142 = vmatprep.subr.mxu0 0.0
  %10143 = vmatpush1.msra.mxu0 %v9742
  %10144 = vmatprep.subr.mxu0 0.0
  %10145 = vmatpush1.msra.mxu0 %v9739
  %10146 = vmatprep.subr.mxu0 0.0
  %10147 = vmatpush2.msra.mxu0 0.0
  %10148 = vmatprep.subr.mxu0 0.0
  %10149 = vmatpush2.msra.mxu0 0.0
  %10150 = vmatprep.subr.mxu0 0.0
  %10151 = vmatpush2.msra.mxu0 0.0
  %10152 = vmatprep.subr.mxu0 0.0
  %10153 = vmatpush2.msra.mxu0 0.0
  %10154 = vmatprep.subr.mxu0 0.0
  %10155 = vmatpush2.msra.mxu0 0.0
  %10156 = vmatprep.subr.mxu0 0.0
  %10157 = vmatpush2.msra.mxu0 0.0
  %10158 = vmatprep.subr.mxu0 0.0
  %10159 = vmatpush2.msra.mxu0 0.0
  %10160 = vmatprep.subr.mxu0 0.0
  %10161 = vmatpush2.msra.mxu0 0.0
  %10162 = vmatprep.subr.mxu0 0.0
  %10163 = vmatpush2.msra.mxu0 0.0
  %10164 = vmatprep.subr.mxu0 0.0
  %10165 = vmatpush2.msra.mxu0 0.0
  %10166 = vmatprep.subr.mxu0 0.0
  %10167 = vmatpush2.msra.mxu0 0.0
  %10168 = vmatprep.subr.mxu0 0.0
  %10169 = vmatpush2.msra.mxu0 0.0
  %10170 = vmatprep.subr.mxu0 0.0
  %10171 = vmatpush2.msra.mxu0 0.0
  %10172 = vmatprep.subr.mxu0 0.0
  %10173 = vmatpush2.msra.mxu0 0.0
  %10174 = vmatprep.subr.mxu0 0.0
  %10175 = vmatpush2.msra.mxu0 0.0
  %10176 = vmatprep.subr.mxu0 0.0
  %10177 = vmatpush2.msra.mxu0 0.0
  %10178 = vmatprep.mubr.f32.mxu0 0.0
  %10179 = vmatmul.mubr.f32.gmra.mxu0 %v9945
  %v10180 = vpop.f32.mrf.mxu0
  %v10181 = vadd.f32 0.0, %v10180
  %v10182 = vpop.f32.mrf.mxu0
  %10183 = vmatprep.mubr.f32.mxu0 0.0
  %10184 = vmatmul.mubr.f32.gmra.mxu0 %v9947
  %v10185 = vpop.f32.mrf.mxu0
  %v10186 = vadd.f32 0.0, %v10185
  %v10187 = vpop.f32.mrf.mxu0
  %10188 = vmatprep.mubr.f32.mxu0 0.0
  %10189 = vmatmul.mubr.f32.gmra.mxu0 %v9949
  %v10190 = vpop.f32.mrf.mxu0
  %v10191 = vadd.f32 0.0, %v10190
  %v10192 = vpop.f32.mrf.mxu0
  %10193 = vmatprep.mubr.f32.mxu0 0.0
  %10194 = vmatmul.mubr.f32.gmra.mxu0 %v9951
  %v10195 = vpop.f32.mrf.mxu0
  %v10196 = vadd.f32 0.0, %v10195
  %v10197 = vpop.f32.mrf.mxu0
  %10198 = vmatprep.mubr.f32.mxu0 0.0
  %10199 = vmatmul.mubr.f32.gmra.mxu0 %v9953
  %v10200 = vpop.f32.mrf.mxu0
  %v10201 = vadd.f32 0.0, %v10200
  %v10202 = vpop.f32.mrf.mxu0
  %10203 = vmatprep.mubr.f32.mxu0 0.0
  %10204 = vmatmul.mubr.f32.gmra.mxu0 %v9955
  %v10205 = vpop.f32.mrf.mxu0
  %v10206 = vadd.f32 0.0, %v10205
  %v10207 = vpop.f32.mrf.mxu0
  %10208 = vmatprep.mubr.f32.mxu0 0.0
  %10209 = vmatmul.mubr.f32.gmra.mxu0 %v9957
  %v10210 = vpop.f32.mrf.mxu0
  %v10211 = vadd.f32 0.0, %v10210
  %v10212 = vpop.f32.mrf.mxu0
  %10213 = vmatprep.mubr.f32.mxu0 0.0
  %10214 = vmatmul.mubr.f32.gmra.mxu0 %v9959
  %v10215 = vpop.f32.mrf.mxu0
  %v10216 = vadd.f32 0.0, %v10215
  %v10217 = vpop.f32.mrf.mxu0
  %10218 = vmatprep.mubr.f32.mxu0 0.0
  %10219 = vmatmul.mubr.f32.gmra.mxu0 %v9961
  %v10220 = vpop.f32.mrf.mxu0
  %v10221 = vadd.f32 0.0, %v10220
  %v10222 = vpop.f32.mrf.mxu0
  %10223 = vmatprep.mubr.f32.mxu0 0.0
  %10224 = vmatmul.mubr.f32.gmra.mxu0 %v9963
  %v10225 = vpop.f32.mrf.mxu0
  %v10226 = vadd.f32 0.0, %v10225
  %v10227 = vpop.f32.mrf.mxu0
  %10228 = vmatprep.mubr.f32.mxu0 0.0
  %10229 = vmatmul.mubr.f32.gmra.mxu0 %v9965
  %v10230 = vpop.f32.mrf.mxu0
  %v10231 = vadd.f32 0.0, %v10230
  %v10232 = vpop.f32.mrf.mxu0
  %10233 = vmatprep.mubr.f32.mxu0 0.0
  %10234 = vmatmul.mubr.f32.gmra.mxu0 %v9967
  %v10235 = vpop.f32.mrf.mxu0
  %v10236 = vadd.f32 0.0, %v10235
  %v10237 = vpop.f32.mrf.mxu0
  %10238 = vmatprep.mubr.f32.mxu0 0.0
  %10239 = vmatmul.mubr.f32.gmra.mxu0 %v9969
  %v10240 = vpop.f32.mrf.mxu0
  %v10241 = vadd.f32 0.0, %v10240
  %v10242 = vpop.f32.mrf.mxu0
  %10243 = vdwg.mxu0
  %v10283 = vcombine.low %v10038, %v10040
  %v10284 = vcombine.high %v10038, %v10040
  %v10285 = vcombine.high %v10181, %v10181
  %v10287 = vunpack.c.l.s4 1966171168
  %v10288 = vunpack.c.0.s8 %v10287
  %v10289 = vlaneseq
  %v10290 = vshrl.u32 %v10289, 7
  %v10291 = vsub.s32 %v10288, %v10290
  %v10292 = vrot.slane %v10283, %v10291
  %v10294 = vunpack.c.l.s4 1966171168
  %v10295 = vunpack.c.0.s8 %v10294
  %v10296 = vlaneseq
  %v10297 = vshrl.u32 %v10296, 7
  %v10298 = vsub.s32 %v10295, %v10297
  %v10299 = vrot.slane %v10284, %v10298
  %v10301 = vunpack.c.l.s4 1966171168
  %v10302 = vunpack.c.0.s8 %v10301
  %v10303 = vlaneseq
  %v10304 = vshrl.u32 %v10303, 7
  %v10305 = vsub.s32 %v10302, %v10304
  %v10306 = vrot.slane %v10181, %v10305
  %v10308 = vunpack.c.l.s4 1966171168
  %v10309 = vunpack.c.0.s8 %v10308
  %v10310 = vlaneseq
  %v10311 = vshrl.u32 %v10310, 7
  %v10312 = vsub.s32 %v10309, %v10311
  %v10313 = vrot.slane %v10285, %v10312
  %v10314 = vcombine.low %v10292, %v10306
  %v10315 = vcombine.high %v10292, %v10306
  %v10316 = vcombine.low %v10299, %v10313
  %v10317 = vcombine.high %v10299, %v10313
  %v10319 = vunpack.c.l.s4 1966171168
  %v10320 = vunpack.c.0.s8 %v10319
  %v10321 = vlaneseq
  %v10322 = vshrl.u32 %v10321, 7
  %v10323 = vsub.s32 %v10320, %v10322
  %v10324 = vrot.slane %v10314, %v10323
  %v10326 = vunpack.c.l.s4 1966171168
  %v10327 = vunpack.c.0.s8 %v10326
  %v10328 = vlaneseq
  %v10329 = vshrl.u32 %v10328, 7
  %v10330 = vsub.s32 %v10327, %v10329
  %v10331 = vrot.slane %v10316, %v10330
  %v10333 = vunpack.c.l.s4 1966171168
  %v10334 = vunpack.c.0.s8 %v10333
  %v10335 = vlaneseq
  %v10336 = vshrl.u32 %v10335, 7
  %v10337 = vsub.s32 %v10334, %v10336
  %v10338 = vrot.slane %v10315, %v10337
  %v10340 = vunpack.c.l.s4 1966171168
  %v10341 = vunpack.c.0.s8 %v10340
  %v10342 = vlaneseq
  %v10343 = vshrl.u32 %v10342, 7
  %v10344 = vsub.s32 %v10341, %v10343
  %v10345 = vrot.slane %v10317, %v10344
  %v10346 = vcombine.high %v10324, %v10324
  %v10347 = vcombine.high %v10331, %v10331
  %v10348 = vcombine.high %v10338, %v10338
  %v10349 = vcombine.high %v10345, %v10345
  %v10350 = vcombine.low %v10044, %v10046
  %v10351 = vcombine.high %v10044, %v10046
  %v10352 = vcombine.high %v10186, %v10186
  %v10354 = vunpack.c.l.s4 1966171168
  %v10355 = vunpack.c.0.s8 %v10354
  %v10356 = vlaneseq
  %v10357 = vshrl.u32 %v10356, 7
  %v10358 = vsub.s32 %v10355, %v10357
  %v10359 = vrot.slane %v10350, %v10358
  %v10361 = vunpack.c.l.s4 1966171168
  %v10362 = vunpack.c.0.s8 %v10361
  %v10363 = vlaneseq
  %v10364 = vshrl.u32 %v10363, 7
  %v10365 = vsub.s32 %v10362, %v10364
  %v10366 = vrot.slane %v10351, %v10365
  %v10368 = vunpack.c.l.s4 1966171168
  %v10369 = vunpack.c.0.s8 %v10368
  %v10370 = vlaneseq
  %v10371 = vshrl.u32 %v10370, 7
  %v10372 = vsub.s32 %v10369, %v10371
  %v10373 = vrot.slane %v10186, %v10372
  %v10375 = vunpack.c.l.s4 1966171168
  %v10376 = vunpack.c.0.s8 %v10375
  %v10377 = vlaneseq
  %v10378 = vshrl.u32 %v10377, 7
  %v10379 = vsub.s32 %v10376, %v10378
  %v10380 = vrot.slane %v10352, %v10379
  %v10381 = vcombine.low %v10359, %v10373
  %v10382 = vcombine.high %v10359, %v10373
  %v10383 = vcombine.low %v10366, %v10380
  %v10384 = vcombine.high %v10366, %v10380
  %v10386 = vunpack.c.l.s4 1966171168
  %v10387 = vunpack.c.0.s8 %v10386
  %v10388 = vlaneseq
  %v10389 = vshrl.u32 %v10388, 7
  %v10390 = vsub.s32 %v10387, %v10389
  %v10391 = vrot.slane %v10381, %v10390
  %v10393 = vunpack.c.l.s4 1966171168
  %v10394 = vunpack.c.0.s8 %v10393
  %v10395 = vlaneseq
  %v10396 = vshrl.u32 %v10395, 7
  %v10397 = vsub.s32 %v10394, %v10396
  %v10398 = vrot.slane %v10383, %v10397
  %v10400 = vunpack.c.l.s4 1966171168
  %v10401 = vunpack.c.0.s8 %v10400
  %v10402 = vlaneseq
  %v10403 = vshrl.u32 %v10402, 7
  %v10404 = vsub.s32 %v10401, %v10403
  %v10405 = vrot.slane %v10382, %v10404
  %v10407 = vunpack.c.l.s4 1966171168
  %v10408 = vunpack.c.0.s8 %v10407
  %v10409 = vlaneseq
  %v10410 = vshrl.u32 %v10409, 7
  %v10411 = vsub.s32 %v10408, %v10410
  %v10412 = vrot.slane %v10384, %v10411
  %v10413 = vcombine.high %v10391, %v10391
  %v10414 = vcombine.high %v10398, %v10398
  %v10415 = vcombine.high %v10405, %v10405
  %v10416 = vcombine.high %v10412, %v10412
  %v10417 = vcombine.low %v10050, %v10052
  %v10418 = vcombine.high %v10050, %v10052
  %v10419 = vcombine.high %v10191, %v10191
  %v10421 = vunpack.c.l.s4 1966171168
  %v10422 = vunpack.c.0.s8 %v10421
  %v10423 = vlaneseq
  %v10424 = vshrl.u32 %v10423, 7
  %v10425 = vsub.s32 %v10422, %v10424
  %v10426 = vrot.slane %v10417, %v10425
  %v10428 = vunpack.c.l.s4 1966171168
  %v10429 = vunpack.c.0.s8 %v10428
  %v10430 = vlaneseq
  %v10431 = vshrl.u32 %v10430, 7
  %v10432 = vsub.s32 %v10429, %v10431
  %v10433 = vrot.slane %v10418, %v10432
  %v10435 = vunpack.c.l.s4 1966171168
  %v10436 = vunpack.c.0.s8 %v10435
  %v10437 = vlaneseq
  %v10438 = vshrl.u32 %v10437, 7
  %v10439 = vsub.s32 %v10436, %v10438
  %v10440 = vrot.slane %v10191, %v10439
  %v10442 = vunpack.c.l.s4 1966171168
  %v10443 = vunpack.c.0.s8 %v10442
  %v10444 = vlaneseq
  %v10445 = vshrl.u32 %v10444, 7
  %v10446 = vsub.s32 %v10443, %v10445
  %v10447 = vrot.slane %v10419, %v10446
  %v10448 = vcombine.low %v10426, %v10440
  %v10449 = vcombine.high %v10426, %v10440
  %v10450 = vcombine.low %v10433, %v10447
  %v10451 = vcombine.high %v10433, %v10447
  %v10453 = vunpack.c.l.s4 1966171168
  %v10454 = vunpack.c.0.s8 %v10453
  %v10455 = vlaneseq
  %v10456 = vshrl.u32 %v10455, 7
  %v10457 = vsub.s32 %v10454, %v10456
  %v10458 = vrot.slane %v10448, %v10457
  %v10460 = vunpack.c.l.s4 1966171168
  %v10461 = vunpack.c.0.s8 %v10460
  %v10462 = vlaneseq
  %v10463 = vshrl.u32 %v10462, 7
  %v10464 = vsub.s32 %v10461, %v10463
  %v10465 = vrot.slane %v10450, %v10464
  %v10467 = vunpack.c.l.s4 1966171168
  %v10468 = vunpack.c.0.s8 %v10467
  %v10469 = vlaneseq
  %v10470 = vshrl.u32 %v10469, 7
  %v10471 = vsub.s32 %v10468, %v10470
  %v10472 = vrot.slane %v10449, %v10471
  %v10474 = vunpack.c.l.s4 1966171168
  %v10475 = vunpack.c.0.s8 %v10474
  %v10476 = vlaneseq
  %v10477 = vshrl.u32 %v10476, 7
  %v10478 = vsub.s32 %v10475, %v10477
  %v10479 = vrot.slane %v10451, %v10478
  %v10480 = vcombine.high %v10458, %v10458
  %v10481 = vcombine.high %v10465, %v10465
  %v10482 = vcombine.high %v10472, %v10472
  %v10483 = vcombine.high %v10479, %v10479
  %v10484 = vcombine.low %v10056, %v10058
  %v10485 = vcombine.high %v10056, %v10058
  %v10486 = vcombine.high %v10196, %v10196
  %v10488 = vunpack.c.l.s4 1966171168
  %v10489 = vunpack.c.0.s8 %v10488
  %v10490 = vlaneseq
  %v10491 = vshrl.u32 %v10490, 7
  %v10492 = vsub.s32 %v10489, %v10491
  %v10493 = vrot.slane %v10484, %v10492
  %v10495 = vunpack.c.l.s4 1966171168
  %v10496 = vunpack.c.0.s8 %v10495
  %v10497 = vlaneseq
  %v10498 = vshrl.u32 %v10497, 7
  %v10499 = vsub.s32 %v10496, %v10498
  %v10500 = vrot.slane %v10485, %v10499
  %v10502 = vunpack.c.l.s4 1966171168
  %v10503 = vunpack.c.0.s8 %v10502
  %v10504 = vlaneseq
  %v10505 = vshrl.u32 %v10504, 7
  %v10506 = vsub.s32 %v10503, %v10505
  %v10507 = vrot.slane %v10196, %v10506
  %v10509 = vunpack.c.l.s4 1966171168
  %v10510 = vunpack.c.0.s8 %v10509
  %v10511 = vlaneseq
  %v10512 = vshrl.u32 %v10511, 7
  %v10513 = vsub.s32 %v10510, %v10512
  %v10514 = vrot.slane %v10486, %v10513
  %v10515 = vcombine.low %v10493, %v10507
  %v10516 = vcombine.high %v10493, %v10507
  %v10517 = vcombine.low %v10500, %v10514
  %v10518 = vcombine.high %v10500, %v10514
  %v10520 = vunpack.c.l.s4 1966171168
  %v10521 = vunpack.c.0.s8 %v10520
  %v10522 = vlaneseq
  %v10523 = vshrl.u32 %v10522, 7
  %v10524 = vsub.s32 %v10521, %v10523
  %v10525 = vrot.slane %v10515, %v10524
  %v10527 = vunpack.c.l.s4 1966171168
  %v10528 = vunpack.c.0.s8 %v10527
  %v10529 = vlaneseq
  %v10530 = vshrl.u32 %v10529, 7
  %v10531 = vsub.s32 %v10528, %v10530
  %v10532 = vrot.slane %v10517, %v10531
  %v10534 = vunpack.c.l.s4 1966171168
  %v10535 = vunpack.c.0.s8 %v10534
  %v10536 = vlaneseq
  %v10537 = vshrl.u32 %v10536, 7
  %v10538 = vsub.s32 %v10535, %v10537
  %v10539 = vrot.slane %v10516, %v10538
  %v10541 = vunpack.c.l.s4 1966171168
  %v10542 = vunpack.c.0.s8 %v10541
  %v10543 = vlaneseq
  %v10544 = vshrl.u32 %v10543, 7
  %v10545 = vsub.s32 %v10542, %v10544
  %v10546 = vrot.slane %v10518, %v10545
  %v10547 = vcombine.high %v10525, %v10525
  %v10548 = vcombine.high %v10532, %v10532
  %v10549 = vcombine.high %v10539, %v10539
  %v10550 = vcombine.high %v10546, %v10546
  %v10551 = vcombine.low %v10062, %v10064
  %v10552 = vcombine.high %v10062, %v10064
  %v10553 = vcombine.high %v10201, %v10201
  %v10555 = vunpack.c.l.s4 1966171168
  %v10556 = vunpack.c.0.s8 %v10555
  %v10557 = vlaneseq
  %v10558 = vshrl.u32 %v10557, 7
  %v10559 = vsub.s32 %v10556, %v10558
  %v10560 = vrot.slane %v10551, %v10559
  %v10562 = vunpack.c.l.s4 1966171168
  %v10563 = vunpack.c.0.s8 %v10562
  %v10564 = vlaneseq
  %v10565 = vshrl.u32 %v10564, 7
  %v10566 = vsub.s32 %v10563, %v10565
  %v10567 = vrot.slane %v10552, %v10566
  %v10569 = vunpack.c.l.s4 1966171168
  %v10570 = vunpack.c.0.s8 %v10569
  %v10571 = vlaneseq
  %v10572 = vshrl.u32 %v10571, 7
  %v10573 = vsub.s32 %v10570, %v10572
  %v10574 = vrot.slane %v10201, %v10573
  %v10576 = vunpack.c.l.s4 1966171168
  %v10577 = vunpack.c.0.s8 %v10576
  %v10578 = vlaneseq
  %v10579 = vshrl.u32 %v10578, 7
  %v10580 = vsub.s32 %v10577, %v10579
  %v10581 = vrot.slane %v10553, %v10580
  %v10582 = vcombine.low %v10560, %v10574
  %v10583 = vcombine.high %v10560, %v10574
  %v10584 = vcombine.low %v10567, %v10581
  %v10585 = vcombine.high %v10567, %v10581
  %v10587 = vunpack.c.l.s4 1966171168
  %v10588 = vunpack.c.0.s8 %v10587
  %v10589 = vlaneseq
  %v10590 = vshrl.u32 %v10589, 7
  %v10591 = vsub.s32 %v10588, %v10590
  %v10592 = vrot.slane %v10582, %v10591
  %v10594 = vunpack.c.l.s4 1966171168
  %v10595 = vunpack.c.0.s8 %v10594
  %v10596 = vlaneseq
  %v10597 = vshrl.u32 %v10596, 7
  %v10598 = vsub.s32 %v10595, %v10597
  %v10599 = vrot.slane %v10584, %v10598
  %v10601 = vunpack.c.l.s4 1966171168
  %v10602 = vunpack.c.0.s8 %v10601
  %v10603 = vlaneseq
  %v10604 = vshrl.u32 %v10603, 7
  %v10605 = vsub.s32 %v10602, %v10604
  %v10606 = vrot.slane %v10583, %v10605
  %v10608 = vunpack.c.l.s4 1966171168
  %v10609 = vunpack.c.0.s8 %v10608
  %v10610 = vlaneseq
  %v10611 = vshrl.u32 %v10610, 7
  %v10612 = vsub.s32 %v10609, %v10611
  %v10613 = vrot.slane %v10585, %v10612
  %v10614 = vcombine.high %v10592, %v10592
  %v10615 = vcombine.high %v10606, %v10606
  %v10616 = vcombine.high %v10613, %v10613
  %v10617 = vcombine.low %v10068, %v10070
  %v10618 = vcombine.high %v10068, %v10070
  %v10619 = vcombine.high %v10206, %v10206
  %v10621 = vunpack.c.l.s4 1966171168
  %v10622 = vunpack.c.0.s8 %v10621
  %v10623 = vlaneseq
  %v10624 = vshrl.u32 %v10623, 7
  %v10625 = vsub.s32 %v10622, %v10624
  %v10626 = vrot.slane %v10617, %v10625
  %v10628 = vunpack.c.l.s4 1966171168
  %v10629 = vunpack.c.0.s8 %v10628
  %v10630 = vlaneseq
  %v10631 = vshrl.u32 %v10630, 7
  %v10632 = vsub.s32 %v10629, %v10631
  %v10633 = vrot.slane %v10618, %v10632
  %v10635 = vunpack.c.l.s4 1966171168
  %v10636 = vunpack.c.0.s8 %v10635
  %v10637 = vlaneseq
  %v10638 = vshrl.u32 %v10637, 7
  %v10639 = vsub.s32 %v10636, %v10638
  %v10640 = vrot.slane %v10206, %v10639
  %v10642 = vunpack.c.l.s4 1966171168
  %v10643 = vunpack.c.0.s8 %v10642
  %v10644 = vlaneseq
  %v10645 = vshrl.u32 %v10644, 7
  %v10646 = vsub.s32 %v10643, %v10645
  %v10647 = vrot.slane %v10619, %v10646
  %v10648 = vcombine.low %v10626, %v10640
  %v10649 = vcombine.high %v10626, %v10640
  %v10650 = vcombine.low %v10633, %v10647
  %v10651 = vcombine.high %v10633, %v10647
  %v10653 = vunpack.c.l.s4 1966171168
  %v10654 = vunpack.c.0.s8 %v10653
  %v10655 = vlaneseq
  %v10656 = vshrl.u32 %v10655, 7
  %v10657 = vsub.s32 %v10654, %v10656
  %v10658 = vrot.slane %v10648, %v10657
  %v10660 = vunpack.c.l.s4 1966171168
  %v10661 = vunpack.c.0.s8 %v10660
  %v10662 = vlaneseq
  %v10663 = vshrl.u32 %v10662, 7
  %v10664 = vsub.s32 %v10661, %v10663
  %v10665 = vrot.slane %v10650, %v10664
  %v10667 = vunpack.c.l.s4 1966171168
  %v10668 = vunpack.c.0.s8 %v10667
  %v10669 = vlaneseq
  %v10670 = vshrl.u32 %v10669, 7
  %v10671 = vsub.s32 %v10668, %v10670
  %v10672 = vrot.slane %v10649, %v10671
  %v10674 = vunpack.c.l.s4 1966171168
  %v10675 = vunpack.c.0.s8 %v10674
  %v10676 = vlaneseq
  %v10677 = vshrl.u32 %v10676, 7
  %v10678 = vsub.s32 %v10675, %v10677
  %v10679 = vrot.slane %v10651, %v10678
  %v10680 = vcombine.high %v10658, %v10658
  %v10681 = vcombine.high %v10665, %v10665
  %v10682 = vcombine.high %v10672, %v10672
  %v10683 = vcombine.high %v10679, %v10679
  %v10684 = vcombine.low %v10074, %v10076
  %v10685 = vcombine.high %v10074, %v10076
  %v10686 = vcombine.high %v10211, %v10211
  %v10688 = vunpack.c.l.s4 1966171168
  %v10689 = vunpack.c.0.s8 %v10688
  %v10690 = vlaneseq
  %v10691 = vshrl.u32 %v10690, 7
  %v10692 = vsub.s32 %v10689, %v10691
  %v10693 = vrot.slane %v10684, %v10692
  %v10695 = vunpack.c.l.s4 1966171168
  %v10696 = vunpack.c.0.s8 %v10695
  %v10697 = vlaneseq
  %v10698 = vshrl.u32 %v10697, 7
  %v10699 = vsub.s32 %v10696, %v10698
  %v10700 = vrot.slane %v10685, %v10699
  %v10702 = vunpack.c.l.s4 1966171168
  %v10703 = vunpack.c.0.s8 %v10702
  %v10704 = vlaneseq
  %v10705 = vshrl.u32 %v10704, 7
  %v10706 = vsub.s32 %v10703, %v10705
  %v10707 = vrot.slane %v10211, %v10706
  %v10709 = vunpack.c.l.s4 1966171168
  %v10710 = vunpack.c.0.s8 %v10709
  %v10711 = vlaneseq
  %v10712 = vshrl.u32 %v10711, 7
  %v10713 = vsub.s32 %v10710, %v10712
  %v10714 = vrot.slane %v10686, %v10713
  %v10715 = vcombine.low %v10693, %v10707
  %v10716 = vcombine.high %v10693, %v10707
  %v10717 = vcombine.low %v10700, %v10714
  %v10718 = vcombine.high %v10700, %v10714
  %v10720 = vunpack.c.l.s4 1966171168
  %v10721 = vunpack.c.0.s8 %v10720
  %v10722 = vlaneseq
  %v10723 = vshrl.u32 %v10722, 7
  %v10724 = vsub.s32 %v10721, %v10723
  %v10725 = vrot.slane %v10715, %v10724
  %v10727 = vunpack.c.l.s4 1966171168
  %v10728 = vunpack.c.0.s8 %v10727
  %v10729 = vlaneseq
  %v10730 = vshrl.u32 %v10729, 7
  %v10731 = vsub.s32 %v10728, %v10730
  %v10732 = vrot.slane %v10717, %v10731
  %v10734 = vunpack.c.l.s4 1966171168
  %v10735 = vunpack.c.0.s8 %v10734
  %v10736 = vlaneseq
  %v10737 = vshrl.u32 %v10736, 7
  %v10738 = vsub.s32 %v10735, %v10737
  %v10739 = vrot.slane %v10716, %v10738
  %v10741 = vunpack.c.l.s4 1966171168
  %v10742 = vunpack.c.0.s8 %v10741
  %v10743 = vlaneseq
  %v10744 = vshrl.u32 %v10743, 7
  %v10745 = vsub.s32 %v10742, %v10744
  %v10746 = vrot.slane %v10718, %v10745
  %v10747 = vcombine.high %v10725, %v10725
  %v10748 = vcombine.high %v10732, %v10732
  %v10749 = vcombine.high %v10746, %v10746
  %v10750 = vcombine.low %v10080, %v10082
  %v10751 = vcombine.high %v10080, %v10082
  %v10752 = vcombine.high %v10216, %v10216
  %v10754 = vunpack.c.l.s4 1966171168
  %v10755 = vunpack.c.0.s8 %v10754
  %v10756 = vlaneseq
  %v10757 = vshrl.u32 %v10756, 7
  %v10758 = vsub.s32 %v10755, %v10757
  %v10759 = vrot.slane %v10750, %v10758
  %v10761 = vunpack.c.l.s4 1966171168
  %v10762 = vunpack.c.0.s8 %v10761
  %v10763 = vlaneseq
  %v10764 = vshrl.u32 %v10763, 7
  %v10765 = vsub.s32 %v10762, %v10764
  %v10766 = vrot.slane %v10751, %v10765
  %v10768 = vunpack.c.l.s4 1966171168
  %v10769 = vunpack.c.0.s8 %v10768
  %v10770 = vlaneseq
  %v10771 = vshrl.u32 %v10770, 7
  %v10772 = vsub.s32 %v10769, %v10771
  %v10773 = vrot.slane %v10216, %v10772
  %v10775 = vunpack.c.l.s4 1966171168
  %v10776 = vunpack.c.0.s8 %v10775
  %v10777 = vlaneseq
  %v10778 = vshrl.u32 %v10777, 7
  %v10779 = vsub.s32 %v10776, %v10778
  %v10780 = vrot.slane %v10752, %v10779
  %v10781 = vcombine.low %v10759, %v10773
  %v10782 = vcombine.high %v10759, %v10773
  %v10783 = vcombine.low %v10766, %v10780
  %v10784 = vcombine.high %v10766, %v10780
  %v10786 = vunpack.c.l.s4 1966171168
  %v10787 = vunpack.c.0.s8 %v10786
  %v10788 = vlaneseq
  %v10789 = vshrl.u32 %v10788, 7
  %v10790 = vsub.s32 %v10787, %v10789
  %v10791 = vrot.slane %v10781, %v10790
  %v10793 = vunpack.c.l.s4 1966171168
  %v10794 = vunpack.c.0.s8 %v10793
  %v10795 = vlaneseq
  %v10796 = vshrl.u32 %v10795, 7
  %v10797 = vsub.s32 %v10794, %v10796
  %v10798 = vrot.slane %v10783, %v10797
  %v10800 = vunpack.c.l.s4 1966171168
  %v10801 = vunpack.c.0.s8 %v10800
  %v10802 = vlaneseq
  %v10803 = vshrl.u32 %v10802, 7
  %v10804 = vsub.s32 %v10801, %v10803
  %v10805 = vrot.slane %v10782, %v10804
  %v10807 = vunpack.c.l.s4 1966171168
  %v10808 = vunpack.c.0.s8 %v10807
  %v10809 = vlaneseq
  %v10810 = vshrl.u32 %v10809, 7
  %v10811 = vsub.s32 %v10808, %v10810
  %v10812 = vrot.slane %v10784, %v10811
  %v10813 = vcombine.high %v10791, %v10791
  %v10814 = vcombine.high %v10798, %v10798
  %v10815 = vcombine.high %v10805, %v10805
  %v10816 = vcombine.high %v10812, %v10812
  %v10817 = vcombine.low %v10086, %v10088
  %v10818 = vcombine.high %v10086, %v10088
  %v10819 = vcombine.high %v10221, %v10221
  %v10821 = vunpack.c.l.s4 1966171168
  %v10822 = vunpack.c.0.s8 %v10821
  %v10823 = vlaneseq
  %v10824 = vshrl.u32 %v10823, 7
  %v10825 = vsub.s32 %v10822, %v10824
  %v10826 = vrot.slane %v10817, %v10825
  %v10828 = vunpack.c.l.s4 1966171168
  %v10829 = vunpack.c.0.s8 %v10828
  %v10830 = vlaneseq
  %v10831 = vshrl.u32 %v10830, 7
  %v10832 = vsub.s32 %v10829, %v10831
  %v10833 = vrot.slane %v10818, %v10832
  %v10835 = vunpack.c.l.s4 1966171168
  %v10836 = vunpack.c.0.s8 %v10835
  %v10837 = vlaneseq
  %v10838 = vshrl.u32 %v10837, 7
  %v10839 = vsub.s32 %v10836, %v10838
  %v10840 = vrot.slane %v10221, %v10839
  %v10842 = vunpack.c.l.s4 1966171168
  %v10843 = vunpack.c.0.s8 %v10842
  %v10844 = vlaneseq
  %v10845 = vshrl.u32 %v10844, 7
  %v10846 = vsub.s32 %v10843, %v10845
  %v10847 = vrot.slane %v10819, %v10846
  %v10848 = vcombine.low %v10826, %v10840
  %v10849 = vcombine.high %v10826, %v10840
  %v10850 = vcombine.low %v10833, %v10847
  %v10851 = vcombine.high %v10833, %v10847
  %v10853 = vunpack.c.l.s4 1966171168
  %v10854 = vunpack.c.0.s8 %v10853
  %v10855 = vlaneseq
  %v10856 = vshrl.u32 %v10855, 7
  %v10857 = vsub.s32 %v10854, %v10856
  %v10858 = vrot.slane %v10848, %v10857
  %v10860 = vunpack.c.l.s4 1966171168
  %v10861 = vunpack.c.0.s8 %v10860
  %v10862 = vlaneseq
  %v10863 = vshrl.u32 %v10862, 7
  %v10864 = vsub.s32 %v10861, %v10863
  %v10865 = vrot.slane %v10850, %v10864
  %v10867 = vunpack.c.l.s4 1966171168
  %v10868 = vunpack.c.0.s8 %v10867
  %v10869 = vlaneseq
  %v10870 = vshrl.u32 %v10869, 7
  %v10871 = vsub.s32 %v10868, %v10870
  %v10872 = vrot.slane %v10849, %v10871
  %v10874 = vunpack.c.l.s4 1966171168
  %v10875 = vunpack.c.0.s8 %v10874
  %v10876 = vlaneseq
  %v10877 = vshrl.u32 %v10876, 7
  %v10878 = vsub.s32 %v10875, %v10877
  %v10879 = vrot.slane %v10851, %v10878
  %v10880 = vcombine.high %v10858, %v10858
  %v10881 = vcombine.high %v10865, %v10865
  %v10882 = vcombine.high %v10872, %v10872
  %v10883 = vcombine.high %v10879, %v10879
  %v10884 = vcombine.low %v10092, %v10094
  %v10885 = vcombine.high %v10092, %v10094
  %v10886 = vcombine.high %v10226, %v10226
  %v10888 = vunpack.c.l.s4 1966171168
  %v10889 = vunpack.c.0.s8 %v10888
  %v10890 = vlaneseq
  %v10891 = vshrl.u32 %v10890, 7
  %v10892 = vsub.s32 %v10889, %v10891
  %v10893 = vrot.slane %v10884, %v10892
  %v10895 = vunpack.c.l.s4 1966171168
  %v10896 = vunpack.c.0.s8 %v10895
  %v10897 = vlaneseq
  %v10898 = vshrl.u32 %v10897, 7
  %v10899 = vsub.s32 %v10896, %v10898
  %v10900 = vrot.slane %v10885, %v10899
  %v10902 = vunpack.c.l.s4 1966171168
  %v10903 = vunpack.c.0.s8 %v10902
  %v10904 = vlaneseq
  %v10905 = vshrl.u32 %v10904, 7
  %v10906 = vsub.s32 %v10903, %v10905
  %v10907 = vrot.slane %v10226, %v10906
  %v10909 = vunpack.c.l.s4 1966171168
  %v10910 = vunpack.c.0.s8 %v10909
  %v10911 = vlaneseq
  %v10912 = vshrl.u32 %v10911, 7
  %v10913 = vsub.s32 %v10910, %v10912
  %v10914 = vrot.slane %v10886, %v10913
  %v10915 = vcombine.low %v10893, %v10907
  %v10916 = vcombine.high %v10893, %v10907
  %v10917 = vcombine.low %v10900, %v10914
  %v10918 = vcombine.high %v10900, %v10914
  %v10920 = vunpack.c.l.s4 1966171168
  %v10921 = vunpack.c.0.s8 %v10920
  %v10922 = vlaneseq
  %v10923 = vshrl.u32 %v10922, 7
  %v10924 = vsub.s32 %v10921, %v10923
  %v10925 = vrot.slane %v10915, %v10924
  %v10927 = vunpack.c.l.s4 1966171168
  %v10928 = vunpack.c.0.s8 %v10927
  %v10929 = vlaneseq
  %v10930 = vshrl.u32 %v10929, 7
  %v10931 = vsub.s32 %v10928, %v10930
  %v10932 = vrot.slane %v10917, %v10931
  %v10934 = vunpack.c.l.s4 1966171168
  %v10935 = vunpack.c.0.s8 %v10934
  %v10936 = vlaneseq
  %v10937 = vshrl.u32 %v10936, 7
  %v10938 = vsub.s32 %v10935, %v10937
  %v10939 = vrot.slane %v10916, %v10938
  %v10941 = vunpack.c.l.s4 1966171168
  %v10942 = vunpack.c.0.s8 %v10941
  %v10943 = vlaneseq
  %v10944 = vshrl.u32 %v10943, 7
  %v10945 = vsub.s32 %v10942, %v10944
  %v10946 = vrot.slane %v10918, %v10945
  %v10947 = vcombine.high %v10925, %v10925
  %v10948 = vcombine.high %v10932, %v10932
  %v10949 = vcombine.high %v10939, %v10939
  %v10950 = vcombine.high %v10946, %v10946
  %v10951 = vcombine.low %v10098, %v10100
  %v10952 = vcombine.high %v10098, %v10100
  %v10953 = vcombine.high %v10231, %v10231
  %v10955 = vunpack.c.l.s4 1966171168
  %v10956 = vunpack.c.0.s8 %v10955
  %v10957 = vlaneseq
  %v10958 = vshrl.u32 %v10957, 7
  %v10959 = vsub.s32 %v10956, %v10958
  %v10960 = vrot.slane %v10951, %v10959
  %v10962 = vunpack.c.l.s4 1966171168
  %v10963 = vunpack.c.0.s8 %v10962
  %v10964 = vlaneseq
  %v10965 = vshrl.u32 %v10964, 7
  %v10966 = vsub.s32 %v10963, %v10965
  %v10967 = vrot.slane %v10952, %v10966
  %v10969 = vunpack.c.l.s4 1966171168
  %v10970 = vunpack.c.0.s8 %v10969
  %v10971 = vlaneseq
  %v10972 = vshrl.u32 %v10971, 7
  %v10973 = vsub.s32 %v10970, %v10972
  %v10974 = vrot.slane %v10231, %v10973
  %v10976 = vunpack.c.l.s4 1966171168
  %v10977 = vunpack.c.0.s8 %v10976
  %v10978 = vlaneseq
  %v10979 = vshrl.u32 %v10978, 7
  %v10980 = vsub.s32 %v10977, %v10979
  %v10981 = vrot.slane %v10953, %v10980
  %v10982 = vcombine.low %v10960, %v10974
  %v10983 = vcombine.high %v10960, %v10974
  %v10984 = vcombine.low %v10967, %v10981
  %v10985 = vcombine.high %v10967, %v10981
  %v10987 = vunpack.c.l.s4 1966171168
  %v10988 = vunpack.c.0.s8 %v10987
  %v10989 = vlaneseq
  %v10990 = vshrl.u32 %v10989, 7
  %v10991 = vsub.s32 %v10988, %v10990
  %v10992 = vrot.slane %v10982, %v10991
  %v10994 = vunpack.c.l.s4 1966171168
  %v10995 = vunpack.c.0.s8 %v10994
  %v10996 = vlaneseq
  %v10997 = vshrl.u32 %v10996, 7
  %v10998 = vsub.s32 %v10995, %v10997
  %v10999 = vrot.slane %v10984, %v10998
  %v11001 = vunpack.c.l.s4 1966171168
  %v11002 = vunpack.c.0.s8 %v11001
  %v11003 = vlaneseq
  %v11004 = vshrl.u32 %v11003, 7
  %v11005 = vsub.s32 %v11002, %v11004
  %v11006 = vrot.slane %v10983, %v11005
  %v11008 = vunpack.c.l.s4 1966171168
  %v11009 = vunpack.c.0.s8 %v11008
  %v11010 = vlaneseq
  %v11011 = vshrl.u32 %v11010, 7
  %v11012 = vsub.s32 %v11009, %v11011
  %v11013 = vrot.slane %v10985, %v11012
  %v11014 = vcombine.high %v10992, %v10992
  %v11015 = vcombine.high %v10999, %v10999
  %v11016 = vcombine.high %v11006, %v11006
  %v11017 = vcombine.high %v11013, %v11013
  %v11018 = vcombine.low %v10104, %v10106
  %v11019 = vcombine.high %v10104, %v10106
  %v11020 = vcombine.high %v10236, %v10236
  %v11022 = vunpack.c.l.s4 1966171168
  %v11023 = vunpack.c.0.s8 %v11022
  %v11024 = vlaneseq
  %v11025 = vshrl.u32 %v11024, 7
  %v11026 = vsub.s32 %v11023, %v11025
  %v11027 = vrot.slane %v11018, %v11026
  %v11029 = vunpack.c.l.s4 1966171168
  %v11030 = vunpack.c.0.s8 %v11029
  %v11031 = vlaneseq
  %v11032 = vshrl.u32 %v11031, 7
  %v11033 = vsub.s32 %v11030, %v11032
  %v11034 = vrot.slane %v11019, %v11033
  %v11036 = vunpack.c.l.s4 1966171168
  %v11037 = vunpack.c.0.s8 %v11036
  %v11038 = vlaneseq
  %v11039 = vshrl.u32 %v11038, 7
  %v11040 = vsub.s32 %v11037, %v11039
  %v11041 = vrot.slane %v10236, %v11040
  %v11043 = vunpack.c.l.s4 1966171168
  %v11044 = vunpack.c.0.s8 %v11043
  %v11045 = vlaneseq
  %v11046 = vshrl.u32 %v11045, 7
  %v11047 = vsub.s32 %v11044, %v11046
  %v11048 = vrot.slane %v11020, %v11047
  %v11049 = vcombine.low %v11027, %v11041
  %v11050 = vcombine.high %v11027, %v11041
  %v11051 = vcombine.low %v11034, %v11048
  %v11052 = vcombine.high %v11034, %v11048
  %v11054 = vunpack.c.l.s4 1966171168
  %v11055 = vunpack.c.0.s8 %v11054
  %v11056 = vlaneseq
  %v11057 = vshrl.u32 %v11056, 7
  %v11058 = vsub.s32 %v11055, %v11057
  %v11059 = vrot.slane %v11049, %v11058
  %v11061 = vunpack.c.l.s4 1966171168
  %v11062 = vunpack.c.0.s8 %v11061
  %v11063 = vlaneseq
  %v11064 = vshrl.u32 %v11063, 7
  %v11065 = vsub.s32 %v11062, %v11064
  %v11066 = vrot.slane %v11051, %v11065
  %v11068 = vunpack.c.l.s4 1966171168
  %v11069 = vunpack.c.0.s8 %v11068
  %v11070 = vlaneseq
  %v11071 = vshrl.u32 %v11070, 7
  %v11072 = vsub.s32 %v11069, %v11071
  %v11073 = vrot.slane %v11050, %v11072
  %v11075 = vunpack.c.l.s4 1966171168
  %v11076 = vunpack.c.0.s8 %v11075
  %v11077 = vlaneseq
  %v11078 = vshrl.u32 %v11077, 7
  %v11079 = vsub.s32 %v11076, %v11078
  %v11080 = vrot.slane %v11052, %v11079
  %v11081 = vcombine.high %v11066, %v11066
  %v11082 = vcombine.high %v11073, %v11073
  %v11083 = vcombine.high %v11080, %v11080
  %v11084 = vcombine.low %v10110, %v10112
  %v11085 = vcombine.high %v10110, %v10112
  %v11086 = vcombine.high %v10241, %v10241
  %v11088 = vunpack.c.l.s4 1966171168
  %v11089 = vunpack.c.0.s8 %v11088
  %v11090 = vlaneseq
  %v11091 = vshrl.u32 %v11090, 7
  %v11092 = vsub.s32 %v11089, %v11091
  %v11093 = vrot.slane %v11084, %v11092
  %v11095 = vunpack.c.l.s4 1966171168
  %v11096 = vunpack.c.0.s8 %v11095
  %v11097 = vlaneseq
  %v11098 = vshrl.u32 %v11097, 7
  %v11099 = vsub.s32 %v11096, %v11098
  %v11100 = vrot.slane %v11085, %v11099
  %v11102 = vunpack.c.l.s4 1966171168
  %v11103 = vunpack.c.0.s8 %v11102
  %v11104 = vlaneseq
  %v11105 = vshrl.u32 %v11104, 7
  %v11106 = vsub.s32 %v11103, %v11105
  %v11107 = vrot.slane %v10241, %v11106
  %v11109 = vunpack.c.l.s4 1966171168
  %v11110 = vunpack.c.0.s8 %v11109
  %v11111 = vlaneseq
  %v11112 = vshrl.u32 %v11111, 7
  %v11113 = vsub.s32 %v11110, %v11112
  %v11114 = vrot.slane %v11086, %v11113
  %v11115 = vcombine.low %v11093, %v11107
  %v11116 = vcombine.high %v11093, %v11107
  %v11117 = vcombine.low %v11100, %v11114
  %v11118 = vcombine.high %v11100, %v11114
  %v11120 = vunpack.c.l.s4 1966171168
  %v11121 = vunpack.c.0.s8 %v11120
  %v11122 = vlaneseq
  %v11123 = vshrl.u32 %v11122, 7
  %v11124 = vsub.s32 %v11121, %v11123
  %v11125 = vrot.slane %v11115, %v11124
  %v11127 = vunpack.c.l.s4 1966171168
  %v11128 = vunpack.c.0.s8 %v11127
  %v11129 = vlaneseq
  %v11130 = vshrl.u32 %v11129, 7
  %v11131 = vsub.s32 %v11128, %v11130
  %v11132 = vrot.slane %v11117, %v11131
  %v11134 = vunpack.c.l.s4 1966171168
  %v11135 = vunpack.c.0.s8 %v11134
  %v11136 = vlaneseq
  %v11137 = vshrl.u32 %v11136, 7
  %v11138 = vsub.s32 %v11135, %v11137
  %v11139 = vrot.slane %v11116, %v11138
  %v11141 = vunpack.c.l.s4 1966171168
  %v11142 = vunpack.c.0.s8 %v11141
  %v11143 = vlaneseq
  %v11144 = vshrl.u32 %v11143, 7
  %v11145 = vsub.s32 %v11142, %v11144
  %v11146 = vrot.slane %v11118, %v11145
  %v11147 = vcombine.high %v11125, %v11125
  %v11148 = vcombine.high %v11132, %v11132
  %v11149 = vcombine.high %v11139, %v11139
  %11214 = vrot.lane.b32.xlu0 %v10338, 64
  %v11215 = vpop.permute.xlu0 %11214
  %11216 = vrot.lane.b32.xlu0 %v10346, 64
  %v11217 = vpop.permute.xlu0 %11216
  %11218 = vrot.lane.b32.xlu0 %v10348, 64
  %v11219 = vpop.permute.xlu0 %11218
  %11220 = vrot.lane.b32.xlu0 %v10331, 64
  %v11221 = vpop.permute.xlu0 %11220
  %11222 = vrot.lane.b32.xlu0 %v10345, 64
  %v11223 = vpop.permute.xlu0 %11222
  %11224 = vrot.lane.b32.xlu0 %v10347, 64
  %v11225 = vpop.permute.xlu0 %11224
  %11226 = vrot.lane.b32.xlu0 %v10349, 64
  %v11227 = vpop.permute.xlu0 %11226
  %11228 = vrot.lane.b32.xlu0 %v10391, 64
  %v11229 = vpop.permute.xlu0 %11228
  %11230 = vrot.lane.b32.xlu0 %v10414, 64
  %v11231 = vpop.permute.xlu0 %11230
  %11232 = vrot.lane.b32.xlu0 %v10416, 64
  %v11233 = vpop.permute.xlu0 %11232
  %11234 = vrot.lane.b32.xlu0 %v10458, 64
  %v11235 = vpop.permute.xlu0 %11234
  %11236 = vrot.lane.b32.xlu0 %v10472, 64
  %v11237 = vpop.permute.xlu0 %11236
  %11238 = vrot.lane.b32.xlu0 %v10480, 64
  %v11239 = vpop.permute.xlu0 %11238
  %11240 = vrot.lane.b32.xlu0 %v10482, 64
  %v11241 = vpop.permute.xlu0 %11240
  %11242 = vrot.lane.b32.xlu0 %v10465, 64
  %v11243 = vpop.permute.xlu0 %11242
  %11244 = vrot.lane.b32.xlu0 %v10479, 64
  %v11245 = vpop.permute.xlu0 %11244
  %11246 = vrot.lane.b32.xlu0 %v10549, 64
  %v11247 = vpop.permute.xlu0 %11246
  %11248 = vrot.lane.b32.xlu0 %v10532, 64
  %v11249 = vpop.permute.xlu0 %11248
  %11250 = vrot.lane.b32.xlu0 %v10546, 64
  %v11251 = vpop.permute.xlu0 %11250
  %11252 = vrot.lane.b32.xlu0 %v10548, 64
  %v11253 = vpop.permute.xlu0 %11252
  %11254 = vrot.lane.b32.xlu0 %v10550, 64
  %v11255 = vpop.permute.xlu0 %11254
  %11256 = vrot.lane.b32.xlu0 %v10592, 64
  %v11257 = vpop.permute.xlu0 %11256
  %11258 = vrot.lane.b32.xlu0 %v10606, 64
  %v11259 = vpop.permute.xlu0 %11258
  %11260 = vrot.lane.b32.xlu0 %v10614, 64
  %v11261 = vpop.permute.xlu0 %11260
  %11262 = vrot.lane.b32.xlu0 %v10658, 64
  %v11263 = vpop.permute.xlu0 %11262
  %11264 = vrot.lane.b32.xlu0 %v10672, 64
  %v11265 = vpop.permute.xlu0 %11264
  %11266 = vrot.lane.b32.xlu0 %v10680, 64
  %v11267 = vpop.permute.xlu0 %11266
  %11268 = vrot.lane.b32.xlu0 %v10682, 64
  %v11269 = vpop.permute.xlu0 %11268
  %11270 = vrot.lane.b32.xlu0 %v10665, 64
  %v11271 = vpop.permute.xlu0 %11270
  %11272 = vrot.lane.b32.xlu0 %v10679, 64
  %v11273 = vpop.permute.xlu0 %11272
  %11274 = vrot.lane.b32.xlu0 %v10681, 64
  %v11275 = vpop.permute.xlu0 %11274
  %11276 = vrot.lane.b32.xlu0 %v10683, 64
  %v11277 = vpop.permute.xlu0 %11276
  %11278 = vrot.lane.b32.xlu0 %v10746, 64
  %v11279 = vpop.permute.xlu0 %11278
  %11280 = vrot.lane.b32.xlu0 %v10748, 64
  %v11281 = vpop.permute.xlu0 %11280
  %11282 = vrot.lane.b32.xlu0 %v10749, 64
  %v11283 = vpop.permute.xlu0 %11282
  %11284 = vrot.lane.b32.xlu0 %v10791, 64
  %v11285 = vpop.permute.xlu0 %11284
  %11286 = vrot.lane.b32.xlu0 %v10805, 64
  %v11287 = vpop.permute.xlu0 %11286
  %11288 = vrot.lane.b32.xlu0 %v10813, 64
  %v11289 = vpop.permute.xlu0 %11288
  %11290 = vrot.lane.b32.xlu0 %v10815, 64
  %v11291 = vpop.permute.xlu0 %11290
  %11292 = vrot.lane.b32.xlu0 %v10798, 64
  %v11293 = vpop.permute.xlu0 %11292
  %11294 = vrot.lane.b32.xlu0 %v10880, 64
  %v11295 = vpop.permute.xlu0 %11294
  %11296 = vrot.lane.b32.xlu0 %v10882, 64
  %v11297 = vpop.permute.xlu0 %11296
  %11298 = vrot.lane.b32.xlu0 %v10865, 64
  %v11299 = vpop.permute.xlu0 %11298
  %11300 = vrot.lane.b32.xlu0 %v10879, 64
  %v11301 = vpop.permute.xlu0 %11300
  %11302 = vrot.lane.b32.xlu0 %v10881, 64
  %v11303 = vpop.permute.xlu0 %11302
  %11304 = vrot.lane.b32.xlu0 %v10883, 64
  %v11305 = vpop.permute.xlu0 %11304
  %11306 = vrot.lane.b32.xlu0 %v10925, 64
  %v11307 = vpop.permute.xlu0 %11306
  %11308 = vrot.lane.b32.xlu0 %v10939, 64
  %v11309 = vpop.permute.xlu0 %11308
  %11310 = vrot.lane.b32.xlu0 %v10950, 64
  %v11311 = vpop.permute.xlu0 %11310
  %11312 = vrot.lane.b32.xlu0 %v10992, 64
  %v11313 = vpop.permute.xlu0 %11312
  %11314 = vrot.lane.b32.xlu0 %v11006, 64
  %v11315 = vpop.permute.xlu0 %11314
  %11316 = vrot.lane.b32.xlu0 %v11014, 64
  %v11317 = vpop.permute.xlu0 %11316
  %11318 = vrot.lane.b32.xlu0 %v11016, 64
  %v11319 = vpop.permute.xlu0 %11318
  %11320 = vrot.lane.b32.xlu0 %v10999, 64
  %v11321 = vpop.permute.xlu0 %11320
  %11322 = vrot.lane.b32.xlu0 %v11013, 64
  %v11323 = vpop.permute.xlu0 %11322
  %11324 = vrot.lane.b32.xlu0 %v11015, 64
  %v11325 = vpop.permute.xlu0 %11324
  %11326 = vrot.lane.b32.xlu0 %v11066, 64
  %v11327 = vpop.permute.xlu0 %11326
  %11328 = vrot.lane.b32.xlu0 %v11080, 64
  %v11329 = vpop.permute.xlu0 %11328
  %11330 = vrot.lane.b32.xlu0 %v11081, 64
  %v11331 = vpop.permute.xlu0 %11330
  %11332 = vrot.lane.b32.xlu0 %v11083, 64
  %v11333 = vpop.permute.xlu0 %11332
  %11334 = vrot.lane.b32.xlu0 %v11125, 64
  %v11335 = vpop.permute.xlu0 %11334
  %11336 = vrot.lane.b32.xlu0 %v11139, 64
  %v11337 = vpop.permute.xlu0 %11336
  %11338 = vrot.lane.b32.xlu0 %v11147, 64
  %v11339 = vpop.permute.xlu0 %11338
  %11340 = vrot.lane.b32.xlu0 %v11149, 64
  %v11341 = vpop.permute.xlu0 %11340
  %v11406 = vadd.f32 %v10324, %v11215
  %v11407 = vadd.f32 %v10338, %v11217
  %v11408 = vadd.f32 %v10346, %v11219
  %v11409 = vadd.f32 %v10348, %v11221
  %v11410 = vadd.f32 %v10331, %v11223
  %v11411 = vadd.f32 %v10345, %v11225
  %v11412 = vadd.f32 %v10347, %v11227
  %v11413 = vadd.f32 %v10349, %v11229
  %v11414 = vadd.f32 %v10412, %v11231
  %v11415 = vadd.f32 %v10414, %v11233
  %v11416 = vadd.f32 %v10416, %v11235
  %v11417 = vadd.f32 %v10458, %v11237
  %v11418 = vadd.f32 %v10472, %v11239
  %v11419 = vadd.f32 %v10480, %v11241
  %v11420 = vadd.f32 %v10482, %v11243
  %v11421 = vadd.f32 %v10465, %v11245
  %v11422 = vadd.f32 %v10547, %v11247
  %v11423 = vadd.f32 %v10549, %v11249
  %v11424 = vadd.f32 %v10532, %v11251
  %v11425 = vadd.f32 %v10546, %v11253
  %v11426 = vadd.f32 %v10548, %v11255
  %v11427 = vadd.f32 %v10550, %v11257
  %v11428 = vadd.f32 %v10592, %v11259
  %v11429 = vadd.f32 %v10606, %v11261
  %v11430 = vadd.f32 %v10616, %v11263
  %v11431 = vadd.f32 %v10658, %v11265
  %v11432 = vadd.f32 %v10672, %v11267
  %v11433 = vadd.f32 %v10680, %v11269
  %v11434 = vadd.f32 %v10682, %v11271
  %v11435 = vadd.f32 %v10665, %v11273
  %v11436 = vadd.f32 %v10679, %v11275
  %v11437 = vadd.f32 %v10681, %v11277
  %v11438 = vadd.f32 %v10732, %v11279
  %v11439 = vadd.f32 %v10746, %v11281
  %v11440 = vadd.f32 %v10748, %v11283
  %v11441 = vadd.f32 %v10749, %v11285
  %v11442 = vadd.f32 %v10791, %v11287
  %v11443 = vadd.f32 %v10805, %v11289
  %v11444 = vadd.f32 %v10813, %v11291
  %v11445 = vadd.f32 %v10815, %v11293
  %v11446 = vadd.f32 %v10872, %v11295
  %v11447 = vadd.f32 %v10880, %v11297
  %v11448 = vadd.f32 %v10882, %v11299
  %v11449 = vadd.f32 %v10865, %v11301
  %v11450 = vadd.f32 %v10879, %v11303
  %v11451 = vadd.f32 %v10881, %v11305
  %v11452 = vadd.f32 %v10883, %v11307
  %v11453 = vadd.f32 %v10925, %v11309
  %v11454 = vadd.f32 %v10948, %v11311
  %v11455 = vadd.f32 %v10950, %v11313
  %v11456 = vadd.f32 %v10992, %v11315
  %v11457 = vadd.f32 %v11006, %v11317
  %v11458 = vadd.f32 %v11014, %v11319
  %v11459 = vadd.f32 %v11016, %v11321
  %v11460 = vadd.f32 %v10999, %v11323
  %v11461 = vadd.f32 %v11013, %v11325
  %v11462 = vadd.f32 %v11082, %v11327
  %v11463 = vadd.f32 %v11066, %v11329
  %v11464 = vadd.f32 %v11080, %v11331
  %v11465 = vadd.f32 %v11081, %v11333
  %v11466 = vadd.f32 %v11083, %v11335
  %v11467 = vadd.f32 %v11125, %v11337
  %v11468 = vadd.f32 %v11139, %v11339
  %v11469 = vadd.f32 %v11147, %v11341
  %v11470 = vrot.slane %v10346, 1
  %v11471 = vrot.slane %v10348, 1
  %v11472 = vrot.slane %v10331, 1
  %v11473 = vrot.slane %v10345, 1
  %v11474 = vrot.slane %v10347, 1
  %v11475 = vrot.slane %v10349, 1
  %v11476 = vrot.slane %v10391, 1
  %v11477 = vrot.slane %v10405, 1
  %v11478 = vrot.slane %v10416, 1
  %v11479 = vrot.slane %v10458, 1
  %v11480 = vrot.slane %v10472, 1
  %v11481 = vrot.slane %v10480, 1
  %v11482 = vrot.slane %v10482, 1
  %v11483 = vrot.slane %v10465, 1
  %v11484 = vrot.slane %v10479, 1
  %v11485 = vrot.slane %v10481, 1
  %v11486 = vrot.slane %v10532, 1
  %v11487 = vrot.slane %v10546, 1
  %v11488 = vrot.slane %v10548, 1
  %v11489 = vrot.slane %v10550, 1
  %v11490 = vrot.slane %v10592, 1
  %v11491 = vrot.slane %v10606, 1
  %v11492 = vrot.slane %v10614, 1
  %v11493 = vrot.slane %v10615, 1
  %v11494 = vrot.slane %v10672, 1
  %v11495 = vrot.slane %v10680, 1
  %v11496 = vrot.slane %v10682, 1
  %v11497 = vrot.slane %v10665, 1
  %v11498 = vrot.slane %v10679, 1
  %v11499 = vrot.slane %v10681, 1
  %v11500 = vrot.slane %v10683, 1
  %v11501 = vrot.slane %v10725, 1
  %v11502 = vrot.slane %v10748, 1
  %v11503 = vrot.slane %v10749, 1
  %v11504 = vrot.slane %v10791, 1
  %v11505 = vrot.slane %v10805, 1
  %v11506 = vrot.slane %v10813, 1
  %v11507 = vrot.slane %v10815, 1
  %v11508 = vrot.slane %v10798, 1
  %v11509 = vrot.slane %v10812, 1
  %v11510 = vrot.slane %v10882, 1
  %v11511 = vrot.slane %v10865, 1
  %v11512 = vrot.slane %v10879, 1
  %v11513 = vrot.slane %v10881, 1
  %v11514 = vrot.slane %v10883, 1
  %v11515 = vrot.slane %v10925, 1
  %v11516 = vrot.slane %v10939, 1
  %v11517 = vrot.slane %v10947, 1
  %v11518 = vrot.slane %v10992, 1
  %v11519 = vrot.slane %v11006, 1
  %v11520 = vrot.slane %v11014, 1
  %v11521 = vrot.slane %v11016, 1
  %v11522 = vrot.slane %v10999, 1
  %v11523 = vrot.slane %v11013, 1
  %v11524 = vrot.slane %v11015, 1
  %v11525 = vrot.slane %v11017, 1
  %v11526 = vrot.slane %v11080, 1
  %v11527 = vrot.slane %v11081, 1
  %v11528 = vrot.slane %v11083, 1
  %v11529 = vrot.slane %v11125, 1
  %v11530 = vrot.slane %v11139, 1
  %v11531 = vrot.slane %v11147, 1
  %v11532 = vrot.slane %v11149, 1
  %v11533 = vrot.slane %v11132, 1
  %v11598 = vadd.f32 %v11406, %v11470
  %v11599 = vadd.f32 %v11407, %v11471
  %v11600 = vadd.f32 %v11408, %v11472
  %v11601 = vadd.f32 %v11409, %v11473
  %v11602 = vadd.f32 %v11410, %v11474
  %v11603 = vadd.f32 %v11411, %v11475
  %v11604 = vadd.f32 %v11412, %v11476
  %v11605 = vadd.f32 %v11413, %v11477
  %v11606 = vadd.f32 %v11414, %v11478
  %v11607 = vadd.f32 %v11415, %v11479
  %v11608 = vadd.f32 %v11416, %v11480
  %v11609 = vadd.f32 %v11417, %v11481
  %v11610 = vadd.f32 %v11418, %v11482
  %v11611 = vadd.f32 %v11419, %v11483
  %v11612 = vadd.f32 %v11420, %v11484
  %v11613 = vadd.f32 %v11421, %v11485
  %v11614 = vadd.f32 %v11422, %v11486
  %v11615 = vadd.f32 %v11423, %v11487
  %v11616 = vadd.f32 %v11424, %v11488
  %v11617 = vadd.f32 %v11425, %v11489
  %v11618 = vadd.f32 %v11426, %v11490
  %v11619 = vadd.f32 %v11427, %v11491
  %v11620 = vadd.f32 %v11428, %v11492
  %v11621 = vadd.f32 %v11429, %v11493
  %v11622 = vadd.f32 %v11430, %v11494
  %v11623 = vadd.f32 %v11431, %v11495
  %v11624 = vadd.f32 %v11432, %v11496
  %v11625 = vadd.f32 %v11433, %v11497
  %v11626 = vadd.f32 %v11434, %v11498
  %v11627 = vadd.f32 %v11435, %v11499
  %v11628 = vadd.f32 %v11436, %v11500
  %v11629 = vadd.f32 %v11437, %v11501
  %v11630 = vadd.f32 %v11438, %v11502
  %v11631 = vadd.f32 %v11439, %v11503
  %v11632 = vadd.f32 %v11440, %v11504
  %v11633 = vadd.f32 %v11441, %v11505
  %v11634 = vadd.f32 %v11442, %v11506
  %v11635 = vadd.f32 %v11443, %v11507
  %v11636 = vadd.f32 %v11444, %v11508
  %v11637 = vadd.f32 %v11445, %v11509
  %v11638 = vadd.f32 %v11446, %v11510
  %v11639 = vadd.f32 %v11447, %v11511
  %v11640 = vadd.f32 %v11448, %v11512
  %v11641 = vadd.f32 %v11449, %v11513
  %v11642 = vadd.f32 %v11450, %v11514
  %v11643 = vadd.f32 %v11451, %v11515
  %v11644 = vadd.f32 %v11452, %v11516
  %v11645 = vadd.f32 %v11453, %v11517
  %v11646 = vadd.f32 %v11454, %v11518
  %v11647 = vadd.f32 %v11455, %v11519
  %v11648 = vadd.f32 %v11456, %v11520
  %v11649 = vadd.f32 %v11457, %v11521
  %v11650 = vadd.f32 %v11458, %v11522
  %v11651 = vadd.f32 %v11459, %v11523
  %v11652 = vadd.f32 %v11460, %v11524
  %v11653 = vadd.f32 %v11461, %v11525
  %v11654 = vadd.f32 %v11462, %v11526
  %v11655 = vadd.f32 %v11463, %v11527
  %v11656 = vadd.f32 %v11464, %v11528
  %v11657 = vadd.f32 %v11465, %v11529
  %v11658 = vadd.f32 %v11466, %v11530
  %v11659 = vadd.f32 %v11467, %v11531
  %v11660 = vadd.f32 %v11468, %v11532
  %v11661 = vadd.f32 %v11469, %v11533
  %11662 = vrot.lane.b32.xlu0 %v10405, 64
  %v11663 = vpop.permute.xlu0 %11662
  %11664 = vrot.lane.b32.xlu0 %v10413, 64
  %v11665 = vpop.permute.xlu0 %11664
  %11666 = vrot.lane.b32.xlu0 %v10481, 64
  %v11667 = vpop.permute.xlu0 %11666
  %11668 = vrot.lane.b32.xlu0 %v10483, 64
  %v11669 = vpop.permute.xlu0 %11668
  %11670 = vrot.lane.b32.xlu0 %v10615, 64
  %v11671 = vpop.permute.xlu0 %11670
  %11672 = vrot.lane.b32.xlu0 %v10599, 64
  %v11673 = vpop.permute.xlu0 %11672
  %11674 = vrot.lane.b32.xlu0 %v10725, 64
  %v11675 = vpop.permute.xlu0 %11674
  %11676 = vrot.lane.b32.xlu0 %v10739, 64
  %v11677 = vpop.permute.xlu0 %11676
  %11678 = vrot.lane.b32.xlu0 %v10812, 64
  %v11679 = vpop.permute.xlu0 %11678
  %11680 = vrot.lane.b32.xlu0 %v10814, 64
  %v11681 = vpop.permute.xlu0 %11680
  %11682 = vrot.lane.b32.xlu0 %v10947, 64
  %v11683 = vpop.permute.xlu0 %11682
  %11684 = vrot.lane.b32.xlu0 %v10949, 64
  %v11685 = vpop.permute.xlu0 %11684
  %11686 = vrot.lane.b32.xlu0 %v11017, 64
  %v11687 = vpop.permute.xlu0 %11686
  %11688 = vrot.lane.b32.xlu0 %v11059, 64
  %v11689 = vpop.permute.xlu0 %11688
  %11690 = vrot.lane.b32.xlu0 %v11132, 64
  %v11691 = vpop.permute.xlu0 %11690
  %11692 = vrot.lane.b32.xlu0 %v11146, 64
  %v11693 = vpop.permute.xlu0 %11692
  %v11694 = vrot.slane %v11219, 1
  %v11695 = vrot.slane %v11221, 1
  %v11696 = vrot.slane %v11223, 1
  %v11697 = vrot.slane %v11225, 1
  %v11698 = vrot.slane %v11227, 1
  %v11699 = vrot.slane %v11229, 1
  %v11700 = vrot.slane %v11663, 1
  %v11701 = vrot.slane %v11665, 1
  %v11702 = vrot.slane %v11235, 1
  %v11703 = vrot.slane %v11237, 1
  %v11704 = vrot.slane %v11239, 1
  %v11705 = vrot.slane %v11241, 1
  %v11706 = vrot.slane %v11243, 1
  %v11707 = vrot.slane %v11245, 1
  %v11708 = vrot.slane %v11667, 1
  %v11709 = vrot.slane %v11669, 1
  %v11710 = vrot.slane %v11251, 1
  %v11711 = vrot.slane %v11253, 1
  %v11712 = vrot.slane %v11255, 1
  %v11713 = vrot.slane %v11257, 1
  %v11714 = vrot.slane %v11259, 1
  %v11715 = vrot.slane %v11261, 1
  %v11716 = vrot.slane %v11671, 1
  %v11717 = vrot.slane %v11673, 1
  %v11718 = vrot.slane %v11267, 1
  %v11719 = vrot.slane %v11269, 1
  %v11720 = vrot.slane %v11271, 1
  %v11721 = vrot.slane %v11273, 1
  %v11722 = vrot.slane %v11275, 1
  %v11723 = vrot.slane %v11277, 1
  %v11724 = vrot.slane %v11675, 1
  %v11725 = vrot.slane %v11677, 1
  %v11726 = vrot.slane %v11283, 1
  %v11727 = vrot.slane %v11285, 1
  %v11728 = vrot.slane %v11287, 1
  %v11729 = vrot.slane %v11289, 1
  %v11730 = vrot.slane %v11291, 1
  %v11731 = vrot.slane %v11293, 1
  %v11732 = vrot.slane %v11679, 1
  %v11733 = vrot.slane %v11681, 1
  %v11734 = vrot.slane %v11299, 1
  %v11735 = vrot.slane %v11301, 1
  %v11736 = vrot.slane %v11303, 1
  %v11737 = vrot.slane %v11305, 1
  %v11738 = vrot.slane %v11307, 1
  %v11739 = vrot.slane %v11309, 1
  %v11740 = vrot.slane %v11683, 1
  %v11741 = vrot.slane %v11685, 1
  %v11742 = vrot.slane %v11315, 1
  %v11743 = vrot.slane %v11317, 1
  %v11744 = vrot.slane %v11319, 1
  %v11745 = vrot.slane %v11321, 1
  %v11746 = vrot.slane %v11323, 1
  %v11747 = vrot.slane %v11325, 1
  %v11748 = vrot.slane %v11687, 1
  %v11749 = vrot.slane %v11689, 1
  %v11750 = vrot.slane %v11331, 1
  %v11751 = vrot.slane %v11333, 1
  %v11752 = vrot.slane %v11335, 1
  %v11753 = vrot.slane %v11337, 1
  %v11754 = vrot.slane %v11339, 1
  %v11755 = vrot.slane %v11341, 1
  %v11756 = vrot.slane %v11691, 1
  %v11757 = vrot.slane %v11693, 1
  %v11822 = vadd.f32 %v11598, %v11694
  %v11823 = vadd.f32 %v11599, %v11695
  %v11824 = vadd.f32 %v11600, %v11696
  %v11825 = vadd.f32 %v11601, %v11697
  %v11826 = vadd.f32 %v11602, %v11698
  %v11827 = vadd.f32 %v11603, %v11699
  %v11828 = vadd.f32 %v11604, %v11700
  %v11829 = vadd.f32 %v11605, %v11701
  %v11830 = vadd.f32 %v11606, %v11702
  %v11831 = vadd.f32 %v11607, %v11703
  %v11832 = vadd.f32 %v11608, %v11704
  %v11833 = vadd.f32 %v11609, %v11705
  %v11834 = vadd.f32 %v11610, %v11706
  %v11835 = vadd.f32 %v11611, %v11707
  %v11836 = vadd.f32 %v11612, %v11708
  %v11837 = vadd.f32 %v11613, %v11709
  %v11838 = vadd.f32 %v11614, %v11710
  %v11839 = vadd.f32 %v11615, %v11711
  %v11840 = vadd.f32 %v11616, %v11712
  %v11841 = vadd.f32 %v11617, %v11713
  %v11842 = vadd.f32 %v11618, %v11714
  %v11843 = vadd.f32 %v11619, %v11715
  %v11844 = vadd.f32 %v11620, %v11716
  %v11845 = vadd.f32 %v11621, %v11717
  %v11846 = vadd.f32 %v11622, %v11718
  %v11847 = vadd.f32 %v11623, %v11719
  %v11848 = vadd.f32 %v11624, %v11720
  %v11849 = vadd.f32 %v11625, %v11721
  %v11850 = vadd.f32 %v11626, %v11722
  %v11851 = vadd.f32 %v11627, %v11723
  %v11852 = vadd.f32 %v11628, %v11724
  %v11853 = vadd.f32 %v11629, %v11725
  %v11854 = vadd.f32 %v11630, %v11726
  %v11855 = vadd.f32 %v11631, %v11727
  %v11856 = vadd.f32 %v11632, %v11728
  %v11857 = vadd.f32 %v11633, %v11729
  %v11858 = vadd.f32 %v11634, %v11730
  %v11859 = vadd.f32 %v11635, %v11731
  %v11860 = vadd.f32 %v11636, %v11732
  %v11861 = vadd.f32 %v11637, %v11733
  %v11862 = vadd.f32 %v11638, %v11734
  %v11863 = vadd.f32 %v11639, %v11735
  %v11864 = vadd.f32 %v11640, %v11736
  %v11865 = vadd.f32 %v11641, %v11737
  %v11866 = vadd.f32 %v11642, %v11738
  %v11867 = vadd.f32 %v11643, %v11739
  %v11868 = vadd.f32 %v11644, %v11740
  %v11869 = vadd.f32 %v11645, %v11741
  %v11870 = vadd.f32 %v11646, %v11742
  %v11871 = vadd.f32 %v11647, %v11743
  %v11872 = vadd.f32 %v11648, %v11744
  %v11873 = vadd.f32 %v11649, %v11745
  %v11874 = vadd.f32 %v11650, %v11746
  %v11875 = vadd.f32 %v11651, %v11747
  %v11876 = vadd.f32 %v11652, %v11748
  %v11877 = vadd.f32 %v11653, %v11749
  %v11878 = vadd.f32 %v11654, %v11750
  %v11879 = vadd.f32 %v11655, %v11751
  %v11880 = vadd.f32 %v11656, %v11752
  %v11881 = vadd.f32 %v11657, %v11753
  %v11882 = vadd.f32 %v11658, %v11754
  %v11883 = vadd.f32 %v11659, %v11755
  %v11884 = vadd.f32 %v11660, %v11756
  %v11885 = vadd.f32 %v11661, %v11757
  %v11886 = vrot.slane %v10331, 2
  %v11887 = vrot.slane %v10345, 2
  %v11888 = vrot.slane %v10347, 2
  %v11889 = vrot.slane %v10349, 2
  %v11890 = vrot.slane %v10391, 2
  %v11891 = vrot.slane %v10405, 2
  %v11892 = vrot.slane %v10413, 2
  %v11893 = vrot.slane %v10415, 2
  %v11894 = vrot.slane %v10472, 2
  %v11895 = vrot.slane %v10480, 2
  %v11896 = vrot.slane %v10482, 2
  %v11897 = vrot.slane %v10465, 2
  %v11898 = vrot.slane %v10479, 2
  %v11899 = vrot.slane %v10481, 2
  %v11900 = vrot.slane %v10483, 2
  %v11901 = vrot.slane %v10525, 2
  %v11902 = vrot.slane %v10548, 2
  %v11903 = vrot.slane %v10550, 2
  %v11904 = vrot.slane %v10592, 2
  %v11905 = vrot.slane %v10606, 2
  %v11906 = vrot.slane %v10614, 2
  %v11907 = vrot.slane %v10615, 2
  %v11908 = vrot.slane %v10599, 2
  %v11909 = vrot.slane %v10613, 2
  %v11910 = vrot.slane %v10682, 2
  %v11911 = vrot.slane %v10665, 2
  %v11912 = vrot.slane %v10679, 2
  %v11913 = vrot.slane %v10681, 2
  %v11914 = vrot.slane %v10683, 2
  %v11915 = vrot.slane %v10725, 2
  %v11916 = vrot.slane %v10739, 2
  %v11917 = vrot.slane %v10747, 2
  %v11918 = vrot.slane %v10791, 2
  %v11919 = vrot.slane %v10805, 2
  %v11920 = vrot.slane %v10813, 2
  %v11921 = vrot.slane %v10815, 2
  %v11922 = vrot.slane %v10798, 2
  %v11923 = vrot.slane %v10812, 2
  %v11924 = vrot.slane %v10814, 2
  %v11925 = vrot.slane %v10816, 2
  %v11926 = vrot.slane %v10879, 2
  %v11927 = vrot.slane %v10881, 2
  %v11928 = vrot.slane %v10883, 2
  %v11929 = vrot.slane %v10925, 2
  %v11930 = vrot.slane %v10939, 2
  %v11931 = vrot.slane %v10947, 2
  %v11932 = vrot.slane %v10949, 2
  %v11933 = vrot.slane %v10932, 2
  %v11934 = vrot.slane %v11014, 2
  %v11935 = vrot.slane %v11016, 2
  %v11936 = vrot.slane %v10999, 2
  %v11937 = vrot.slane %v11013, 2
  %v11938 = vrot.slane %v11015, 2
  %v11939 = vrot.slane %v11017, 2
  %v11940 = vrot.slane %v11059, 2
  %v11941 = vrot.slane %v11073, 2
  %v11942 = vrot.slane %v11083, 2
  %v11943 = vrot.slane %v11125, 2
  %v11944 = vrot.slane %v11139, 2
  %v11945 = vrot.slane %v11147, 2
  %v11946 = vrot.slane %v11149, 2
  %v11947 = vrot.slane %v11132, 2
  %v11948 = vrot.slane %v11146, 2
  %v11949 = vrot.slane %v11148, 2
  %v12014 = vadd.f32 %v11822, %v11886
  %v12015 = vadd.f32 %v11823, %v11887
  %v12016 = vadd.f32 %v11824, %v11888
  %v12017 = vadd.f32 %v11825, %v11889
  %v12018 = vadd.f32 %v11826, %v11890
  %v12019 = vadd.f32 %v11827, %v11891
  %v12020 = vadd.f32 %v11828, %v11892
  %v12021 = vadd.f32 %v11829, %v11893
  %v12022 = vadd.f32 %v11830, %v11894
  %v12023 = vadd.f32 %v11831, %v11895
  %v12024 = vadd.f32 %v11832, %v11896
  %v12025 = vadd.f32 %v11833, %v11897
  %v12026 = vadd.f32 %v11834, %v11898
  %v12027 = vadd.f32 %v11835, %v11899
  %v12028 = vadd.f32 %v11836, %v11900
  %v12029 = vadd.f32 %v11837, %v11901
  %v12030 = vadd.f32 %v11838, %v11902
  %v12031 = vadd.f32 %v11839, %v11903
  %v12032 = vadd.f32 %v11840, %v11904
  %v12033 = vadd.f32 %v11841, %v11905
  %v12034 = vadd.f32 %v11842, %v11906
  %v12035 = vadd.f32 %v11843, %v11907
  %v12036 = vadd.f32 %v11844, %v11908
  %v12037 = vadd.f32 %v11845, %v11909
  %v12038 = vadd.f32 %v11846, %v11910
  %v12039 = vadd.f32 %v11847, %v11911
  %v12040 = vadd.f32 %v11848, %v11912
  %v12041 = vadd.f32 %v11849, %v11913
  %v12042 = vadd.f32 %v11850, %v11914
  %v12043 = vadd.f32 %v11851, %v11915
  %v12044 = vadd.f32 %v11852, %v11916
  %v12045 = vadd.f32 %v11853, %v11917
  %v12046 = vadd.f32 %v11854, %v11918
  %v12047 = vadd.f32 %v11855, %v11919
  %v12048 = vadd.f32 %v11856, %v11920
  %v12049 = vadd.f32 %v11857, %v11921
  %v12050 = vadd.f32 %v11858, %v11922
  %v12051 = vadd.f32 %v11859, %v11923
  %v12052 = vadd.f32 %v11860, %v11924
  %v12053 = vadd.f32 %v11861, %v11925
  %v12054 = vadd.f32 %v11862, %v11926
  %v12055 = vadd.f32 %v11863, %v11927
  %v12056 = vadd.f32 %v11864, %v11928
  %v12057 = vadd.f32 %v11865, %v11929
  %v12058 = vadd.f32 %v11866, %v11930
  %v12059 = vadd.f32 %v11867, %v11931
  %v12060 = vadd.f32 %v11868, %v11932
  %v12061 = vadd.f32 %v11869, %v11933
  %v12062 = vadd.f32 %v11870, %v11934
  %v12063 = vadd.f32 %v11871, %v11935
  %v12064 = vadd.f32 %v11872, %v11936
  %v12065 = vadd.f32 %v11873, %v11937
  %v12066 = vadd.f32 %v11874, %v11938
  %v12067 = vadd.f32 %v11875, %v11939
  %v12068 = vadd.f32 %v11876, %v11940
  %v12069 = vadd.f32 %v11877, %v11941
  %v12070 = vadd.f32 %v11878, %v11942
  %v12071 = vadd.f32 %v11879, %v11943
  %v12072 = vadd.f32 %v11880, %v11944
  %v12073 = vadd.f32 %v11881, %v11945
  %v12074 = vadd.f32 %v11882, %v11946
  %v12075 = vadd.f32 %v11883, %v11947
  %v12076 = vadd.f32 %v11884, %v11948
  %v12077 = vadd.f32 %v11885, %v11949
  %v12078 = vld [vmem:[%s6] sm:$0x1]
  %v12080 = vlaneseq
  %v12081 = vshrl.u32 %v12080, 7
  %v12082 = vsub.s32 0, %v12081
  %v12083 = vrot.slane %v12078, %v12082
  %v12084 = vcombine.high %v12083, %v12083
  %v12086 = vunpack.c.l.s4 1966171168
  %v12087 = vunpack.c.0.s8 %v12086
  %v12088 = vlaneseq
  %v12089 = vshrl.u32 %v12088, 7
  %v12090 = vsub.s32 %v12087, %v12089
  %v12091 = vrot.slane %v12083, %v12090
  %v12093 = vunpack.c.l.s4 1966171168
  %v12094 = vunpack.c.0.s8 %v12093
  %v12095 = vlaneseq
  %v12096 = vshrl.u32 %v12095, 7
  %v12097 = vsub.s32 %v12094, %v12096
  %v12098 = vrot.slane %v12084, %v12097
  %v12099 = vcombine.high %v12091, %v12091
  %v12100 = vcombine.high %v12098, %v12098
  %v12102 = vunpack.c.l.s4 1966171168
  %v12103 = vunpack.c.0.s8 %v12102
  %v12104 = vlaneseq
  %v12105 = vshrl.u32 %v12104, 7
  %v12106 = vsub.s32 %v12103, %v12105
  %v12107 = vrot.slane %v12091, %v12106
  %v12109 = vunpack.c.l.s4 1966171168
  %v12110 = vunpack.c.0.s8 %v12109
  %v12111 = vlaneseq
  %v12112 = vshrl.u32 %v12111, 7
  %v12113 = vsub.s32 %v12110, %v12112
  %v12114 = vrot.slane %v12098, %v12113
  %v12116 = vunpack.c.l.s4 1966171168
  %v12117 = vunpack.c.0.s8 %v12116
  %v12118 = vlaneseq
  %v12119 = vshrl.u32 %v12118, 7
  %v12120 = vsub.s32 %v12117, %v12119
  %v12121 = vrot.slane %v12099, %v12120
  %v12123 = vunpack.c.l.s4 1966171168
  %v12124 = vunpack.c.0.s8 %v12123
  %v12125 = vlaneseq
  %v12126 = vshrl.u32 %v12125, 7
  %v12127 = vsub.s32 %v12124, %v12126
  %v12128 = vrot.slane %v12100, %v12127
  %v12129 = vcombine.high %v12107, %v12107
  %v12130 = vcombine.high %v12114, %v12114
  %v12131 = vcombine.high %v12121, %v12121
  %v12132 = vcombine.high %v12128, %v12128
  %v12141 = vadd.f32 %v12014, %v12107
  %v12142 = vadd.f32 %v12015, %v12121
  %v12143 = vadd.f32 %v12016, %v12129
  %v12144 = vadd.f32 %v12017, %v12131
  %v12145 = vadd.f32 %v12018, %v12114
  %v12146 = vadd.f32 %v12019, %v12128
  %v12147 = vadd.f32 %v12020, %v12130
  %v12148 = vadd.f32 %v12021, %v12132
  %v12149 = vadd.f32 %v12022, %v12107
  %v12150 = vadd.f32 %v12023, %v12121
  %v12151 = vadd.f32 %v12024, %v12129
  %v12152 = vadd.f32 %v12025, %v12131
  %v12153 = vadd.f32 %v12026, %v12114
  %v12154 = vadd.f32 %v12027, %v12128
  %v12155 = vadd.f32 %v12028, %v12130
  %v12156 = vadd.f32 %v12029, %v12132
  %v12157 = vadd.f32 %v12030, %v12107
  %v12158 = vadd.f32 %v12031, %v12121
  %v12159 = vadd.f32 %v12032, %v12129
  %v12160 = vadd.f32 %v12033, %v12131
  %v12161 = vadd.f32 %v12034, %v12114
  %v12162 = vadd.f32 %v12035, %v12128
  %v12163 = vadd.f32 %v12036, %v12130
  %v12164 = vadd.f32 %v12037, %v12132
  %v12165 = vadd.f32 %v12038, %v12107
  %v12166 = vadd.f32 %v12039, %v12121
  %v12167 = vadd.f32 %v12040, %v12129
  %v12168 = vadd.f32 %v12041, %v12131
  %v12169 = vadd.f32 %v12042, %v12114
  %v12170 = vadd.f32 %v12043, %v12128
  %v12171 = vadd.f32 %v12044, %v12130
  %v12172 = vadd.f32 %v12045, %v12132
  %v12173 = vadd.f32 %v12046, %v12107
  %v12174 = vadd.f32 %v12047, %v12121
  %v12175 = vadd.f32 %v12048, %v12129
  %v12176 = vadd.f32 %v12049, %v12131
  %v12177 = vadd.f32 %v12050, %v12114
  %v12178 = vadd.f32 %v12051, %v12128
  %v12179 = vadd.f32 %v12052, %v12130
  %v12180 = vadd.f32 %v12053, %v12132
  %v12181 = vadd.f32 %v12054, %v12107
  %v12182 = vadd.f32 %v12055, %v12121
  %v12183 = vadd.f32 %v12056, %v12129
  %v12184 = vadd.f32 %v12057, %v12131
  %v12185 = vadd.f32 %v12058, %v12114
  %v12186 = vadd.f32 %v12059, %v12128
  %v12187 = vadd.f32 %v12060, %v12130
  %v12188 = vadd.f32 %v12061, %v12132
  %v12189 = vadd.f32 %v12062, %v12107
  %v12190 = vadd.f32 %v12063, %v12121
  %v12191 = vadd.f32 %v12064, %v12129
  %v12192 = vadd.f32 %v12065, %v12131
  %v12193 = vadd.f32 %v12066, %v12114
  %v12194 = vadd.f32 %v12067, %v12128
  %v12195 = vadd.f32 %v12068, %v12130
  %v12196 = vadd.f32 %v12069, %v12132
  %v12197 = vadd.f32 %v12070, %v12107
  %v12198 = vadd.f32 %v12071, %v12121
  %v12199 = vadd.f32 %v12072, %v12129
  %v12200 = vadd.f32 %v12073, %v12131
  %v12201 = vadd.f32 %v12074, %v12114
  %v12202 = vadd.f32 %v12075, %v12128
  %v12203 = vadd.f32 %v12076, %v12130
  %v12204 = vadd.f32 %v12077, %v12132
  %v12205 = vmax.f32 %v12141, 0.0
  %v12206 = vmax.f32 %v12142, 0.0
  %v12207 = vmax.f32 %v12143, 0.0
  %v12208 = vmax.f32 %v12144, 0.0
  %v12209 = vmax.f32 %v12145, 0.0
  %v12210 = vmax.f32 %v12146, 0.0
  %v12211 = vmax.f32 %v12147, 0.0
  %v12212 = vmax.f32 %v12148, 0.0
  %v12213 = vmax.f32 %v12149, 0.0
  %v12214 = vmax.f32 %v12150, 0.0
  %v12215 = vmax.f32 %v12151, 0.0
  %v12216 = vmax.f32 %v12152, 0.0
  %v12217 = vmax.f32 %v12153, 0.0
  %v12218 = vmax.f32 %v12154, 0.0
  %v12219 = vmax.f32 %v12155, 0.0
  %v12220 = vmax.f32 %v12156, 0.0
  %v12221 = vmax.f32 %v12157, 0.0
  %v12222 = vmax.f32 %v12158, 0.0
  %v12223 = vmax.f32 %v12159, 0.0
  %v12224 = vmax.f32 %v12160, 0.0
  %v12225 = vmax.f32 %v12161, 0.0
  %v12226 = vmax.f32 %v12162, 0.0
  %v12227 = vmax.f32 %v12163, 0.0
  %v12228 = vmax.f32 %v12164, 0.0
  %v12229 = vmax.f32 %v12165, 0.0
  %v12230 = vmax.f32 %v12166, 0.0
  %v12231 = vmax.f32 %v12167, 0.0
  %v12232 = vmax.f32 %v12168, 0.0
  %v12233 = vmax.f32 %v12169, 0.0
  %v12234 = vmax.f32 %v12170, 0.0
  %v12235 = vmax.f32 %v12171, 0.0
  %v12236 = vmax.f32 %v12172, 0.0
  %v12237 = vmax.f32 %v12173, 0.0
  %v12238 = vmax.f32 %v12174, 0.0
  %v12239 = vmax.f32 %v12175, 0.0
  %v12240 = vmax.f32 %v12176, 0.0
  %v12241 = vmax.f32 %v12177, 0.0
  %v12242 = vmax.f32 %v12178, 0.0
  %v12243 = vmax.f32 %v12179, 0.0
  %v12244 = vmax.f32 %v12180, 0.0
  %v12245 = vmax.f32 %v12181, 0.0
  %v12246 = vmax.f32 %v12182, 0.0
  %v12247 = vmax.f32 %v12183, 0.0
  %v12248 = vmax.f32 %v12184, 0.0
  %v12249 = vmax.f32 %v12185, 0.0
  %v12250 = vmax.f32 %v12186, 0.0
  %v12251 = vmax.f32 %v12187, 0.0
  %v12252 = vmax.f32 %v12188, 0.0
  %v12253 = vmax.f32 %v12189, 0.0
  %v12254 = vmax.f32 %v12190, 0.0
  %v12255 = vmax.f32 %v12191, 0.0
  %v12256 = vmax.f32 %v12192, 0.0
  %v12257 = vmax.f32 %v12193, 0.0
  %v12258 = vmax.f32 %v12194, 0.0
  %v12259 = vmax.f32 %v12195, 0.0
  %v12260 = vmax.f32 %v12196, 0.0
  %v12261 = vmax.f32 %v12197, 0.0
  %v12262 = vmax.f32 %v12198, 0.0
  %v12263 = vmax.f32 %v12199, 0.0
  %v12264 = vmax.f32 %v12200, 0.0
  %v12265 = vmax.f32 %v12201, 0.0
  %v12266 = vmax.f32 %v12202, 0.0
  %v12267 = vmax.f32 %v12203, 0.0
  %v12268 = vmax.f32 %v12204, 0.0
  %v12333 = vcombine.low %v12205, %v12206
  %v12335 = vunpack.c.l.s4 1966171168
  %v12336 = vunpack.c.0.s8 %v12335
  %v12337 = vlaneseq
  %v12338 = vshrl.u32 %v12337, 7
  %v12339 = vsub.s32 %v12336, %v12338
  %v12340 = vrot.slane %v12333, %v12339
  %v12342 = vunpack.c.l.s4 1966171168
  %v12343 = vunpack.c.0.s8 %v12342
  %v12344 = vlaneseq
  %v12345 = vshrl.u32 %v12344, 7
  %v12346 = vsub.s32 %v12343, %v12345
  %v12347 = vrot.slane %v12340, %v12346
  %v12348 = vcombine.low %v12207, %v12208
  %v12350 = vunpack.c.l.s4 1966171168
  %v12351 = vunpack.c.0.s8 %v12350
  %v12352 = vlaneseq
  %v12353 = vshrl.u32 %v12352, 7
  %v12354 = vsub.s32 %v12351, %v12353
  %v12355 = vrot.slane %v12348, %v12354
  %v12357 = vunpack.c.l.s4 1966171168
  %v12358 = vunpack.c.0.s8 %v12357
  %v12359 = vlaneseq
  %v12360 = vshrl.u32 %v12359, 7
  %v12361 = vsub.s32 %v12358, %v12360
  %v12362 = vrot.slane %v12355, %v12361
  %v12363 = vcombine.low %v12209, %v12210
  %v12365 = vunpack.c.l.s4 1966171168
  %v12366 = vunpack.c.0.s8 %v12365
  %v12367 = vlaneseq
  %v12368 = vshrl.u32 %v12367, 7
  %v12369 = vsub.s32 %v12366, %v12368
  %v12370 = vrot.slane %v12363, %v12369
  %v12372 = vunpack.c.l.s4 1966171168
  %v12373 = vunpack.c.0.s8 %v12372
  %v12374 = vlaneseq
  %v12375 = vshrl.u32 %v12374, 7
  %v12376 = vsub.s32 %v12373, %v12375
  %v12377 = vrot.slane %v12370, %v12376
  %v12378 = vcombine.low %v12211, %v12212
  %v12380 = vunpack.c.l.s4 1966171168
  %v12381 = vunpack.c.0.s8 %v12380
  %v12382 = vlaneseq
  %v12383 = vshrl.u32 %v12382, 7
  %v12384 = vsub.s32 %v12381, %v12383
  %v12385 = vrot.slane %v12378, %v12384
  %v12387 = vunpack.c.l.s4 1966171168
  %v12388 = vunpack.c.0.s8 %v12387
  %v12389 = vlaneseq
  %v12390 = vshrl.u32 %v12389, 7
  %v12391 = vsub.s32 %v12388, %v12390
  %v12392 = vrot.slane %v12385, %v12391
  %v12393 = vcombine.low %v12213, %v12214
  %v12395 = vunpack.c.l.s4 1966171168
  %v12396 = vunpack.c.0.s8 %v12395
  %v12397 = vlaneseq
  %v12398 = vshrl.u32 %v12397, 7
  %v12399 = vsub.s32 %v12396, %v12398
  %v12400 = vrot.slane %v12393, %v12399
  %v12402 = vunpack.c.l.s4 1966171168
  %v12403 = vunpack.c.0.s8 %v12402
  %v12404 = vlaneseq
  %v12405 = vshrl.u32 %v12404, 7
  %v12406 = vsub.s32 %v12403, %v12405
  %v12407 = vrot.slane %v12400, %v12406
  %v12408 = vcombine.low %v12215, %v12216
  %v12410 = vunpack.c.l.s4 1966171168
  %v12411 = vunpack.c.0.s8 %v12410
  %v12412 = vlaneseq
  %v12413 = vshrl.u32 %v12412, 7
  %v12414 = vsub.s32 %v12411, %v12413
  %v12415 = vrot.slane %v12408, %v12414
  %v12417 = vunpack.c.l.s4 1966171168
  %v12418 = vunpack.c.0.s8 %v12417
  %v12419 = vlaneseq
  %v12420 = vshrl.u32 %v12419, 7
  %v12421 = vsub.s32 %v12418, %v12420
  %v12422 = vrot.slane %v12415, %v12421
  %v12423 = vcombine.low %v12217, %v12218
  %v12425 = vunpack.c.l.s4 1966171168
  %v12426 = vunpack.c.0.s8 %v12425
  %v12427 = vlaneseq
  %v12428 = vshrl.u32 %v12427, 7
  %v12429 = vsub.s32 %v12426, %v12428
  %v12430 = vrot.slane %v12423, %v12429
  %v12432 = vunpack.c.l.s4 1966171168
  %v12433 = vunpack.c.0.s8 %v12432
  %v12434 = vlaneseq
  %v12435 = vshrl.u32 %v12434, 7
  %v12436 = vsub.s32 %v12433, %v12435
  %v12437 = vrot.slane %v12430, %v12436
  %v12438 = vcombine.low %v12219, %v12220
  %v12440 = vunpack.c.l.s4 1966171168
  %v12441 = vunpack.c.0.s8 %v12440
  %v12442 = vlaneseq
  %v12443 = vshrl.u32 %v12442, 7
  %v12444 = vsub.s32 %v12441, %v12443
  %v12445 = vrot.slane %v12438, %v12444
  %v12447 = vunpack.c.l.s4 1966171168
  %v12448 = vunpack.c.0.s8 %v12447
  %v12449 = vlaneseq
  %v12450 = vshrl.u32 %v12449, 7
  %v12451 = vsub.s32 %v12448, %v12450
  %v12452 = vrot.slane %v12445, %v12451
  %v12453 = vcombine.low %v12221, %v12222
  %v12455 = vunpack.c.l.s4 1966171168
  %v12456 = vunpack.c.0.s8 %v12455
  %v12457 = vlaneseq
  %v12458 = vshrl.u32 %v12457, 7
  %v12459 = vsub.s32 %v12456, %v12458
  %v12460 = vrot.slane %v12453, %v12459
  %v12462 = vunpack.c.l.s4 1966171168
  %v12463 = vunpack.c.0.s8 %v12462
  %v12464 = vlaneseq
  %v12465 = vshrl.u32 %v12464, 7
  %v12466 = vsub.s32 %v12463, %v12465
  %v12467 = vrot.slane %v12460, %v12466
  %v12468 = vcombine.low %v12223, %v12224
  %v12470 = vunpack.c.l.s4 1966171168
  %v12471 = vunpack.c.0.s8 %v12470
  %v12472 = vlaneseq
  %v12473 = vshrl.u32 %v12472, 7
  %v12474 = vsub.s32 %v12471, %v12473
  %v12475 = vrot.slane %v12468, %v12474
  %v12477 = vunpack.c.l.s4 1966171168
  %v12478 = vunpack.c.0.s8 %v12477
  %v12479 = vlaneseq
  %v12480 = vshrl.u32 %v12479, 7
  %v12481 = vsub.s32 %v12478, %v12480
  %v12482 = vrot.slane %v12475, %v12481
  %v12483 = vcombine.low %v12225, %v12226
  %v12485 = vunpack.c.l.s4 1966171168
  %v12486 = vunpack.c.0.s8 %v12485
  %v12487 = vlaneseq
  %v12488 = vshrl.u32 %v12487, 7
  %v12489 = vsub.s32 %v12486, %v12488
  %v12490 = vrot.slane %v12483, %v12489
  %v12492 = vunpack.c.l.s4 1966171168
  %v12493 = vunpack.c.0.s8 %v12492
  %v12494 = vlaneseq
  %v12495 = vshrl.u32 %v12494, 7
  %v12496 = vsub.s32 %v12493, %v12495
  %v12497 = vrot.slane %v12490, %v12496
  %v12498 = vcombine.low %v12227, %v12228
  %v12500 = vunpack.c.l.s4 1966171168
  %v12501 = vunpack.c.0.s8 %v12500
  %v12502 = vlaneseq
  %v12503 = vshrl.u32 %v12502, 7
  %v12504 = vsub.s32 %v12501, %v12503
  %v12505 = vrot.slane %v12498, %v12504
  %v12507 = vunpack.c.l.s4 1966171168
  %v12508 = vunpack.c.0.s8 %v12507
  %v12509 = vlaneseq
  %v12510 = vshrl.u32 %v12509, 7
  %v12511 = vsub.s32 %v12508, %v12510
  %v12512 = vrot.slane %v12505, %v12511
  %v12513 = vcombine.low %v12229, %v12230
  %v12515 = vunpack.c.l.s4 1966171168
  %v12516 = vunpack.c.0.s8 %v12515
  %v12517 = vlaneseq
  %v12518 = vshrl.u32 %v12517, 7
  %v12519 = vsub.s32 %v12516, %v12518
  %v12520 = vrot.slane %v12513, %v12519
  %v12522 = vunpack.c.l.s4 1966171168
  %v12523 = vunpack.c.0.s8 %v12522
  %v12524 = vlaneseq
  %v12525 = vshrl.u32 %v12524, 7
  %v12526 = vsub.s32 %v12523, %v12525
  %v12527 = vrot.slane %v12520, %v12526
  %v12528 = vcombine.low %v12231, %v12232
  %v12530 = vunpack.c.l.s4 1966171168
  %v12531 = vunpack.c.0.s8 %v12530
  %v12532 = vlaneseq
  %v12533 = vshrl.u32 %v12532, 7
  %v12534 = vsub.s32 %v12531, %v12533
  %v12535 = vrot.slane %v12528, %v12534
  %v12537 = vunpack.c.l.s4 1966171168
  %v12538 = vunpack.c.0.s8 %v12537
  %v12539 = vlaneseq
  %v12540 = vshrl.u32 %v12539, 7
  %v12541 = vsub.s32 %v12538, %v12540
  %v12542 = vrot.slane %v12535, %v12541
  %v12543 = vcombine.low %v12233, %v12234
  %v12545 = vunpack.c.l.s4 1966171168
  %v12546 = vunpack.c.0.s8 %v12545
  %v12547 = vlaneseq
  %v12548 = vshrl.u32 %v12547, 7
  %v12549 = vsub.s32 %v12546, %v12548
  %v12550 = vrot.slane %v12543, %v12549
  %v12552 = vunpack.c.l.s4 1966171168
  %v12553 = vunpack.c.0.s8 %v12552
  %v12554 = vlaneseq
  %v12555 = vshrl.u32 %v12554, 7
  %v12556 = vsub.s32 %v12553, %v12555
  %v12557 = vrot.slane %v12550, %v12556
  %v12558 = vcombine.low %v12235, %v12236
  %v12560 = vunpack.c.l.s4 1966171168
  %v12561 = vunpack.c.0.s8 %v12560
  %v12562 = vlaneseq
  %v12563 = vshrl.u32 %v12562, 7
  %v12564 = vsub.s32 %v12561, %v12563
  %v12565 = vrot.slane %v12558, %v12564
  %v12567 = vunpack.c.l.s4 1966171168
  %v12568 = vunpack.c.0.s8 %v12567
  %v12569 = vlaneseq
  %v12570 = vshrl.u32 %v12569, 7
  %v12571 = vsub.s32 %v12568, %v12570
  %v12572 = vrot.slane %v12565, %v12571
  %v12573 = vcombine.low %v12237, %v12238
  %v12575 = vunpack.c.l.s4 1966171168
  %v12576 = vunpack.c.0.s8 %v12575
  %v12577 = vlaneseq
  %v12578 = vshrl.u32 %v12577, 7
  %v12579 = vsub.s32 %v12576, %v12578
  %v12580 = vrot.slane %v12573, %v12579
  %v12582 = vunpack.c.l.s4 1966171168
  %v12583 = vunpack.c.0.s8 %v12582
  %v12584 = vlaneseq
  %v12585 = vshrl.u32 %v12584, 7
  %v12586 = vsub.s32 %v12583, %v12585
  %v12587 = vrot.slane %v12580, %v12586
  %v12588 = vcombine.low %v12239, %v12240
  %v12590 = vunpack.c.l.s4 1966171168
  %v12591 = vunpack.c.0.s8 %v12590
  %v12592 = vlaneseq
  %v12593 = vshrl.u32 %v12592, 7
  %v12594 = vsub.s32 %v12591, %v12593
  %v12595 = vrot.slane %v12588, %v12594
  %v12597 = vunpack.c.l.s4 1966171168
  %v12598 = vunpack.c.0.s8 %v12597
  %v12599 = vlaneseq
  %v12600 = vshrl.u32 %v12599, 7
  %v12601 = vsub.s32 %v12598, %v12600
  %v12602 = vrot.slane %v12595, %v12601
  %v12603 = vcombine.low %v12241, %v12242
  %v12605 = vunpack.c.l.s4 1966171168
  %v12606 = vunpack.c.0.s8 %v12605
  %v12607 = vlaneseq
  %v12608 = vshrl.u32 %v12607, 7
  %v12609 = vsub.s32 %v12606, %v12608
  %v12610 = vrot.slane %v12603, %v12609
  %v12612 = vunpack.c.l.s4 1966171168
  %v12613 = vunpack.c.0.s8 %v12612
  %v12614 = vlaneseq
  %v12615 = vshrl.u32 %v12614, 7
  %v12616 = vsub.s32 %v12613, %v12615
  %v12617 = vrot.slane %v12610, %v12616
  %v12618 = vcombine.low %v12243, %v12244
  %v12620 = vunpack.c.l.s4 1966171168
  %v12621 = vunpack.c.0.s8 %v12620
  %v12622 = vlaneseq
  %v12623 = vshrl.u32 %v12622, 7
  %v12624 = vsub.s32 %v12621, %v12623
  %v12625 = vrot.slane %v12618, %v12624
  %v12627 = vunpack.c.l.s4 1966171168
  %v12628 = vunpack.c.0.s8 %v12627
  %v12629 = vlaneseq
  %v12630 = vshrl.u32 %v12629, 7
  %v12631 = vsub.s32 %v12628, %v12630
  %v12632 = vrot.slane %v12625, %v12631
  %v12633 = vcombine.low %v12245, %v12246
  %v12635 = vunpack.c.l.s4 1966171168
  %v12636 = vunpack.c.0.s8 %v12635
  %v12637 = vlaneseq
  %v12638 = vshrl.u32 %v12637, 7
  %v12639 = vsub.s32 %v12636, %v12638
  %v12640 = vrot.slane %v12633, %v12639
  %v12642 = vunpack.c.l.s4 1966171168
  %v12643 = vunpack.c.0.s8 %v12642
  %v12644 = vlaneseq
  %v12645 = vshrl.u32 %v12644, 7
  %v12646 = vsub.s32 %v12643, %v12645
  %v12647 = vrot.slane %v12640, %v12646
  %v12648 = vcombine.low %v12247, %v12248
  %v12650 = vunpack.c.l.s4 1966171168
  %v12651 = vunpack.c.0.s8 %v12650
  %v12652 = vlaneseq
  %v12653 = vshrl.u32 %v12652, 7
  %v12654 = vsub.s32 %v12651, %v12653
  %v12655 = vrot.slane %v12648, %v12654
  %v12657 = vunpack.c.l.s4 1966171168
  %v12658 = vunpack.c.0.s8 %v12657
  %v12659 = vlaneseq
  %v12660 = vshrl.u32 %v12659, 7
  %v12661 = vsub.s32 %v12658, %v12660
  %v12662 = vrot.slane %v12655, %v12661
  %v12663 = vcombine.low %v12249, %v12250
  %v12665 = vunpack.c.l.s4 1966171168
  %v12666 = vunpack.c.0.s8 %v12665
  %v12667 = vlaneseq
  %v12668 = vshrl.u32 %v12667, 7
  %v12669 = vsub.s32 %v12666, %v12668
  %v12670 = vrot.slane %v12663, %v12669
  %v12672 = vunpack.c.l.s4 1966171168
  %v12673 = vunpack.c.0.s8 %v12672
  %v12674 = vlaneseq
  %v12675 = vshrl.u32 %v12674, 7
  %v12676 = vsub.s32 %v12673, %v12675
  %v12677 = vrot.slane %v12670, %v12676
  %v12678 = vcombine.low %v12251, %v12252
  %v12680 = vunpack.c.l.s4 1966171168
  %v12681 = vunpack.c.0.s8 %v12680
  %v12682 = vlaneseq
  %v12683 = vshrl.u32 %v12682, 7
  %v12684 = vsub.s32 %v12681, %v12683
  %v12685 = vrot.slane %v12678, %v12684
  %v12687 = vunpack.c.l.s4 1966171168
  %v12688 = vunpack.c.0.s8 %v12687
  %v12689 = vlaneseq
  %v12690 = vshrl.u32 %v12689, 7
  %v12691 = vsub.s32 %v12688, %v12690
  %v12692 = vrot.slane %v12685, %v12691
  %v12693 = vcombine.low %v12253, %v12254
  %v12695 = vunpack.c.l.s4 1966171168
  %v12696 = vunpack.c.0.s8 %v12695
  %v12697 = vlaneseq
  %v12698 = vshrl.u32 %v12697, 7
  %v12699 = vsub.s32 %v12696, %v12698
  %v12700 = vrot.slane %v12693, %v12699
  %v12702 = vunpack.c.l.s4 1966171168
  %v12703 = vunpack.c.0.s8 %v12702
  %v12704 = vlaneseq
  %v12705 = vshrl.u32 %v12704, 7
  %v12706 = vsub.s32 %v12703, %v12705
  %v12707 = vrot.slane %v12700, %v12706
  %v12708 = vcombine.low %v12255, %v12256
  %v12710 = vunpack.c.l.s4 1966171168
  %v12711 = vunpack.c.0.s8 %v12710
  %v12712 = vlaneseq
  %v12713 = vshrl.u32 %v12712, 7
  %v12714 = vsub.s32 %v12711, %v12713
  %v12715 = vrot.slane %v12708, %v12714
  %v12717 = vunpack.c.l.s4 1966171168
  %v12718 = vunpack.c.0.s8 %v12717
  %v12719 = vlaneseq
  %v12720 = vshrl.u32 %v12719, 7
  %v12721 = vsub.s32 %v12718, %v12720
  %v12722 = vrot.slane %v12715, %v12721
  %v12723 = vcombine.low %v12257, %v12258
  %v12725 = vunpack.c.l.s4 1966171168
  %v12726 = vunpack.c.0.s8 %v12725
  %v12727 = vlaneseq
  %v12728 = vshrl.u32 %v12727, 7
  %v12729 = vsub.s32 %v12726, %v12728
  %v12730 = vrot.slane %v12723, %v12729
  %v12732 = vunpack.c.l.s4 1966171168
  %v12733 = vunpack.c.0.s8 %v12732
  %v12734 = vlaneseq
  %v12735 = vshrl.u32 %v12734, 7
  %v12736 = vsub.s32 %v12733, %v12735
  %v12737 = vrot.slane %v12730, %v12736
  %v12738 = vcombine.low %v12259, %v12260
  %v12740 = vunpack.c.l.s4 1966171168
  %v12741 = vunpack.c.0.s8 %v12740
  %v12742 = vlaneseq
  %v12743 = vshrl.u32 %v12742, 7
  %v12744 = vsub.s32 %v12741, %v12743
  %v12745 = vrot.slane %v12738, %v12744
  %v12747 = vunpack.c.l.s4 1966171168
  %v12748 = vunpack.c.0.s8 %v12747
  %v12749 = vlaneseq
  %v12750 = vshrl.u32 %v12749, 7
  %v12751 = vsub.s32 %v12748, %v12750
  %v12752 = vrot.slane %v12745, %v12751
  %v12753 = vcombine.low %v12261, %v12262
  %v12755 = vunpack.c.l.s4 1966171168
  %v12756 = vunpack.c.0.s8 %v12755
  %v12757 = vlaneseq
  %v12758 = vshrl.u32 %v12757, 7
  %v12759 = vsub.s32 %v12756, %v12758
  %v12760 = vrot.slane %v12753, %v12759
  %v12762 = vunpack.c.l.s4 1966171168
  %v12763 = vunpack.c.0.s8 %v12762
  %v12764 = vlaneseq
  %v12765 = vshrl.u32 %v12764, 7
  %v12766 = vsub.s32 %v12763, %v12765
  %v12767 = vrot.slane %v12760, %v12766
  %v12768 = vcombine.low %v12263, %v12264
  %v12770 = vunpack.c.l.s4 1966171168
  %v12771 = vunpack.c.0.s8 %v12770
  %v12772 = vlaneseq
  %v12773 = vshrl.u32 %v12772, 7
  %v12774 = vsub.s32 %v12771, %v12773
  %v12775 = vrot.slane %v12768, %v12774
  %v12777 = vunpack.c.l.s4 1966171168
  %v12778 = vunpack.c.0.s8 %v12777
  %v12779 = vlaneseq
  %v12780 = vshrl.u32 %v12779, 7
  %v12781 = vsub.s32 %v12778, %v12780
  %v12782 = vrot.slane %v12775, %v12781
  %v12783 = vcombine.low %v12265, %v12266
  %v12785 = vunpack.c.l.s4 1966171168
  %v12786 = vunpack.c.0.s8 %v12785
  %v12787 = vlaneseq
  %v12788 = vshrl.u32 %v12787, 7
  %v12789 = vsub.s32 %v12786, %v12788
  %v12790 = vrot.slane %v12783, %v12789
  %v12792 = vunpack.c.l.s4 1966171168
  %v12793 = vunpack.c.0.s8 %v12792
  %v12794 = vlaneseq
  %v12795 = vshrl.u32 %v12794, 7
  %v12796 = vsub.s32 %v12793, %v12795
  %v12797 = vrot.slane %v12790, %v12796
  %v12798 = vcombine.low %v12267, %v12268
  %v12800 = vunpack.c.l.s4 1966171168
  %v12801 = vunpack.c.0.s8 %v12800
  %v12802 = vlaneseq
  %v12803 = vshrl.u32 %v12802, 7
  %v12804 = vsub.s32 %v12801, %v12803
  %v12805 = vrot.slane %v12798, %v12804
  %v12807 = vunpack.c.l.s4 1966171168
  %v12808 = vunpack.c.0.s8 %v12807
  %v12809 = vlaneseq
  %v12810 = vshrl.u32 %v12809, 7
  %v12811 = vsub.s32 %v12808, %v12810
  %v12812 = vrot.slane %v12805, %v12811
  %vm12845 = vcmask 517120
  %v12846 = vsel %vm12845, %v12347, -inf
  %v12847 = vrot.slane %v12846, 4
  %v12848 = vmax.f32 %v12846, %v12847
  %v12849 = vrot.slane %v12848, 2
  %v12850 = vmax.f32 %v12848, %v12849
  %v12851 = vrot.slane %v12850, 1
  %v12852 = vmax.f32 %v12850, %v12851
  %v12853 = vsel %vm12845, %v12362, -inf
  %v12854 = vrot.slane %v12853, 4
  %v12855 = vmax.f32 %v12853, %v12854
  %v12856 = vrot.slane %v12855, 2
  %v12857 = vmax.f32 %v12855, %v12856
  %v12858 = vrot.slane %v12857, 1
  %v12859 = vmax.f32 %v12857, %v12858
  %v12860 = vsel %vm12845, %v12377, -inf
  %v12861 = vrot.slane %v12860, 4
  %v12862 = vmax.f32 %v12860, %v12861
  %v12863 = vrot.slane %v12862, 2
  %v12864 = vmax.f32 %v12862, %v12863
  %v12865 = vrot.slane %v12864, 1
  %v12866 = vmax.f32 %v12864, %v12865
  %v12867 = vsel %vm12845, %v12392, -inf
  %v12868 = vrot.slane %v12867, 4
  %v12869 = vmax.f32 %v12867, %v12868
  %v12870 = vrot.slane %v12869, 2
  %v12871 = vmax.f32 %v12869, %v12870
  %v12872 = vrot.slane %v12871, 1
  %v12873 = vmax.f32 %v12871, %v12872
  %v12874 = vsel %vm12845, %v12407, -inf
  %v12875 = vrot.slane %v12874, 4
  %v12876 = vmax.f32 %v12874, %v12875
  %v12877 = vrot.slane %v12876, 2
  %v12878 = vmax.f32 %v12876, %v12877
  %v12879 = vrot.slane %v12878, 1
  %v12880 = vmax.f32 %v12878, %v12879
  %v12881 = vsel %vm12845, %v12422, -inf
  %v12882 = vrot.slane %v12881, 4
  %v12883 = vmax.f32 %v12881, %v12882
  %v12884 = vrot.slane %v12883, 2
  %v12885 = vmax.f32 %v12883, %v12884
  %v12886 = vrot.slane %v12885, 1
  %v12887 = vmax.f32 %v12885, %v12886
  %v12888 = vsel %vm12845, %v12437, -inf
  %v12889 = vrot.slane %v12888, 4
  %v12890 = vmax.f32 %v12888, %v12889
  %v12891 = vrot.slane %v12890, 2
  %v12892 = vmax.f32 %v12890, %v12891
  %v12893 = vrot.slane %v12892, 1
  %v12894 = vmax.f32 %v12892, %v12893
  %v12895 = vsel %vm12845, %v12452, -inf
  %v12896 = vrot.slane %v12895, 4
  %v12897 = vmax.f32 %v12895, %v12896
  %v12898 = vrot.slane %v12897, 2
  %v12899 = vmax.f32 %v12897, %v12898
  %v12900 = vrot.slane %v12899, 1
  %v12901 = vmax.f32 %v12899, %v12900
  %v12902 = vsel %vm12845, %v12467, -inf
  %v12903 = vrot.slane %v12902, 4
  %v12904 = vmax.f32 %v12902, %v12903
  %v12905 = vrot.slane %v12904, 2
  %v12906 = vmax.f32 %v12904, %v12905
  %v12907 = vrot.slane %v12906, 1
  %v12908 = vmax.f32 %v12906, %v12907
  %v12909 = vsel %vm12845, %v12482, -inf
  %v12910 = vrot.slane %v12909, 4
  %v12911 = vmax.f32 %v12909, %v12910
  %v12912 = vrot.slane %v12911, 2
  %v12913 = vmax.f32 %v12911, %v12912
  %v12914 = vrot.slane %v12913, 1
  %v12915 = vmax.f32 %v12913, %v12914
  %v12916 = vsel %vm12845, %v12497, -inf
  %v12917 = vrot.slane %v12916, 4
  %v12918 = vmax.f32 %v12916, %v12917
  %v12919 = vrot.slane %v12918, 2
  %v12920 = vmax.f32 %v12918, %v12919
  %v12921 = vrot.slane %v12920, 1
  %v12922 = vmax.f32 %v12920, %v12921
  %v12923 = vsel %vm12845, %v12512, -inf
  %v12924 = vrot.slane %v12923, 4
  %v12925 = vmax.f32 %v12923, %v12924
  %v12926 = vrot.slane %v12925, 2
  %v12927 = vmax.f32 %v12925, %v12926
  %v12928 = vrot.slane %v12927, 1
  %v12929 = vmax.f32 %v12927, %v12928
  %v12930 = vsel %vm12845, %v12527, -inf
  %v12931 = vrot.slane %v12930, 4
  %v12932 = vmax.f32 %v12930, %v12931
  %v12933 = vrot.slane %v12932, 2
  %v12934 = vmax.f32 %v12932, %v12933
  %v12935 = vrot.slane %v12934, 1
  %v12936 = vmax.f32 %v12934, %v12935
  %v12937 = vsel %vm12845, %v12542, -inf
  %v12938 = vrot.slane %v12937, 4
  %v12939 = vmax.f32 %v12937, %v12938
  %v12940 = vrot.slane %v12939, 2
  %v12941 = vmax.f32 %v12939, %v12940
  %v12942 = vrot.slane %v12941, 1
  %v12943 = vmax.f32 %v12941, %v12942
  %v12944 = vsel %vm12845, %v12557, -inf
  %v12945 = vrot.slane %v12944, 4
  %v12946 = vmax.f32 %v12944, %v12945
  %v12947 = vrot.slane %v12946, 2
  %v12948 = vmax.f32 %v12946, %v12947
  %v12949 = vrot.slane %v12948, 1
  %v12950 = vmax.f32 %v12948, %v12949
  %v12951 = vsel %vm12845, %v12572, -inf
  %v12952 = vrot.slane %v12951, 4
  %v12953 = vmax.f32 %v12951, %v12952
  %v12954 = vrot.slane %v12953, 2
  %v12955 = vmax.f32 %v12953, %v12954
  %v12956 = vrot.slane %v12955, 1
  %v12957 = vmax.f32 %v12955, %v12956
  %v12958 = vsel %vm12845, %v12587, -inf
  %v12959 = vrot.slane %v12958, 4
  %v12960 = vmax.f32 %v12958, %v12959
  %v12961 = vrot.slane %v12960, 2
  %v12962 = vmax.f32 %v12960, %v12961
  %v12963 = vrot.slane %v12962, 1
  %v12964 = vmax.f32 %v12962, %v12963
  %v12965 = vsel %vm12845, %v12602, -inf
  %v12966 = vrot.slane %v12965, 4
  %v12967 = vmax.f32 %v12965, %v12966
  %v12968 = vrot.slane %v12967, 2
  %v12969 = vmax.f32 %v12967, %v12968
  %v12970 = vrot.slane %v12969, 1
  %v12971 = vmax.f32 %v12969, %v12970
  %v12972 = vsel %vm12845, %v12617, -inf
  %v12973 = vrot.slane %v12972, 4
  %v12974 = vmax.f32 %v12972, %v12973
  %v12975 = vrot.slane %v12974, 2
  %v12976 = vmax.f32 %v12974, %v12975
  %v12977 = vrot.slane %v12976, 1
  %v12978 = vmax.f32 %v12976, %v12977
  %v12979 = vsel %vm12845, %v12632, -inf
  %v12980 = vrot.slane %v12979, 4
  %v12981 = vmax.f32 %v12979, %v12980
  %v12982 = vrot.slane %v12981, 2
  %v12983 = vmax.f32 %v12981, %v12982
  %v12984 = vrot.slane %v12983, 1
  %v12985 = vmax.f32 %v12983, %v12984
  %v12986 = vsel %vm12845, %v12647, -inf
  %v12987 = vrot.slane %v12986, 4
  %v12988 = vmax.f32 %v12986, %v12987
  %v12989 = vrot.slane %v12988, 2
  %v12990 = vmax.f32 %v12988, %v12989
  %v12991 = vrot.slane %v12990, 1
  %v12992 = vmax.f32 %v12990, %v12991
  %v12993 = vsel %vm12845, %v12662, -inf
  %v12994 = vrot.slane %v12993, 4
  %v12995 = vmax.f32 %v12993, %v12994
  %v12996 = vrot.slane %v12995, 2
  %v12997 = vmax.f32 %v12995, %v12996
  %v12998 = vrot.slane %v12997, 1
  %v12999 = vmax.f32 %v12997, %v12998
  %v13000 = vsel %vm12845, %v12677, -inf
  %v13001 = vrot.slane %v13000, 4
  %v13002 = vmax.f32 %v13000, %v13001
  %v13003 = vrot.slane %v13002, 2
  %v13004 = vmax.f32 %v13002, %v13003
  %v13005 = vrot.slane %v13004, 1
  %v13006 = vmax.f32 %v13004, %v13005
  %v13007 = vsel %vm12845, %v12692, -inf
  %v13008 = vrot.slane %v13007, 4
  %v13009 = vmax.f32 %v13007, %v13008
  %v13010 = vrot.slane %v13009, 2
  %v13011 = vmax.f32 %v13009, %v13010
  %v13012 = vrot.slane %v13011, 1
  %v13013 = vmax.f32 %v13011, %v13012
  %v13014 = vsel %vm12845, %v12707, -inf
  %v13015 = vrot.slane %v13014, 4
  %v13016 = vmax.f32 %v13014, %v13015
  %v13017 = vrot.slane %v13016, 2
  %v13018 = vmax.f32 %v13016, %v13017
  %v13019 = vrot.slane %v13018, 1
  %v13020 = vmax.f32 %v13018, %v13019
  %v13021 = vsel %vm12845, %v12722, -inf
  %v13022 = vrot.slane %v13021, 4
  %v13023 = vmax.f32 %v13021, %v13022
  %v13024 = vrot.slane %v13023, 2
  %v13025 = vmax.f32 %v13023, %v13024
  %v13026 = vrot.slane %v13025, 1
  %v13027 = vmax.f32 %v13025, %v13026
  %v13028 = vsel %vm12845, %v12737, -inf
  %v13029 = vrot.slane %v13028, 4
  %v13030 = vmax.f32 %v13028, %v13029
  %v13031 = vrot.slane %v13030, 2
  %v13032 = vmax.f32 %v13030, %v13031
  %v13033 = vrot.slane %v13032, 1
  %v13034 = vmax.f32 %v13032, %v13033
  %v13035 = vsel %vm12845, %v12752, -inf
  %v13036 = vrot.slane %v13035, 4
  %v13037 = vmax.f32 %v13035, %v13036
  %v13038 = vrot.slane %v13037, 2
  %v13039 = vmax.f32 %v13037, %v13038
  %v13040 = vrot.slane %v13039, 1
  %v13041 = vmax.f32 %v13039, %v13040
  %v13042 = vsel %vm12845, %v12767, -inf
  %v13043 = vrot.slane %v13042, 4
  %v13044 = vmax.f32 %v13042, %v13043
  %v13045 = vrot.slane %v13044, 2
  %v13046 = vmax.f32 %v13044, %v13045
  %v13047 = vrot.slane %v13046, 1
  %v13048 = vmax.f32 %v13046, %v13047
  %v13049 = vsel %vm12845, %v12782, -inf
  %v13050 = vrot.slane %v13049, 4
  %v13051 = vmax.f32 %v13049, %v13050
  %v13052 = vrot.slane %v13051, 2
  %v13053 = vmax.f32 %v13051, %v13052
  %v13054 = vrot.slane %v13053, 1
  %v13055 = vmax.f32 %v13053, %v13054
  %v13056 = vsel %vm12845, %v12797, -inf
  %v13057 = vrot.slane %v13056, 4
  %v13058 = vmax.f32 %v13056, %v13057
  %v13059 = vrot.slane %v13058, 2
  %v13060 = vmax.f32 %v13058, %v13059
  %v13061 = vrot.slane %v13060, 1
  %v13062 = vmax.f32 %v13060, %v13061
  %v13063 = vsel %vm12845, %v12812, -inf
  %v13064 = vrot.slane %v13063, 4
  %v13065 = vmax.f32 %v13063, %v13064
  %v13066 = vrot.slane %v13065, 2
  %v13067 = vmax.f32 %v13065, %v13066
  %v13068 = vrot.slane %v13067, 1
  %v13069 = vmax.f32 %v13067, %v13068
  %v13070 = vld [vmem:[%s7] sm:$0xff]
  %v13071 = vld [vmem:[%s7 + $0x8] sm:$0xff]
  %v13072 = vld [vmem:[%s7 + $0x10] sm:$0xff]
  %v13073 = vld [vmem:[%s7 + $0x18] sm:$0xff]
  %v13074 = vld [vmem:[%s7 + $0x20] sm:$0xff]
  %v13075 = vld [vmem:[%s7 + $0x28] sm:$0xff]
  %v13076 = vld [vmem:[%s7 + $0x30] sm:$0xff]
  %v13077 = vld [vmem:[%s7 + $0x38] sm:$0xff]
  %s13078 = scalar_lea.vmem %s7, 64
  %v13079 = vld [vmem:[%s13078] sm:$0xff]
  %v13080 = vld [vmem:[%s13078 + $0x8] sm:$0xff]
  %v13081 = vld [vmem:[%s13078 + $0x10] sm:$0xff]
  %v13082 = vld [vmem:[%s13078 + $0x18] sm:$0xff]
  %v13083 = vld [vmem:[%s13078 + $0x20] sm:$0xff]
  %v13084 = vld [vmem:[%s13078 + $0x28] sm:$0xff]
  %v13085 = vld [vmem:[%s13078 + $0x30] sm:$0xff]
  %v13086 = vld [vmem:[%s13078 + $0x38] sm:$0xff]
  %v13089 = vsel %vm5639, %v12971, %v12859
  %vm13090 = vcmask 523264
  %v13091 = vsel %vm13090, %v13089, 0
  %13093 = vmatprep.subr.mxu0 0.0
  %13094 = vmatpush1.msra.mxu0 0.0
  %13095 = vmatprep.subr.mxu0 0.0
  %13096 = vmatpush1.msra.mxu0 0.0
  %13097 = vmatprep.subr.mxu0 0.0
  %13098 = vmatpush1.msra.mxu0 0.0
  %13099 = vmatprep.subr.mxu0 0.0
  %13100 = vmatpush1.msra.mxu0 0.0
  %13101 = vmatprep.subr.mxu0 0.0
  %13102 = vmatpush1.msra.mxu0 0.0
  %13103 = vmatprep.subr.mxu0 0.0
  %13104 = vmatpush1.msra.mxu0 0.0
  %13105 = vmatprep.subr.mxu0 0.0
  %13106 = vmatpush1.msra.mxu0 0.0
  %13107 = vmatprep.subr.mxu0 0.0
  %13108 = vmatpush1.msra.mxu0 0.0
  %13109 = vmatprep.subr.mxu0 0.0
  %13110 = vmatpush1.msra.mxu0 %v13086
  %13111 = vmatprep.subr.mxu0 0.0
  %13112 = vmatpush1.msra.mxu0 %v13085
  %13113 = vmatprep.subr.mxu0 0.0
  %13114 = vmatpush1.msra.mxu0 %v13084
  %13115 = vmatprep.subr.mxu0 0.0
  %13116 = vmatpush1.msra.mxu0 %v13083
  %13117 = vmatprep.subr.mxu0 0.0
  %13118 = vmatpush1.msra.mxu0 %v13082
  %13119 = vmatprep.subr.mxu0 0.0
  %13120 = vmatpush1.msra.mxu0 %v13081
  %13121 = vmatprep.subr.mxu0 0.0
  %13122 = vmatpush1.msra.mxu0 %v13080
  %13123 = vmatprep.subr.mxu0 0.0
  %13124 = vmatpush1.msra.mxu0 %v13079
  %13125 = vmatprep.subr.mxu0 0.0
  %13126 = vmatpush2.msra.mxu0 0.0
  %13127 = vmatprep.subr.mxu0 0.0
  %13128 = vmatpush2.msra.mxu0 0.0
  %13129 = vmatprep.subr.mxu0 0.0
  %13130 = vmatpush2.msra.mxu0 0.0
  %13131 = vmatprep.subr.mxu0 0.0
  %13132 = vmatpush2.msra.mxu0 0.0
  %13133 = vmatprep.subr.mxu0 0.0
  %13134 = vmatpush2.msra.mxu0 0.0
  %13135 = vmatprep.subr.mxu0 0.0
  %13136 = vmatpush2.msra.mxu0 0.0
  %13137 = vmatprep.subr.mxu0 0.0
  %13138 = vmatpush2.msra.mxu0 0.0
  %13139 = vmatprep.subr.mxu0 0.0
  %13140 = vmatpush2.msra.mxu0 0.0
  %13141 = vmatprep.subr.mxu0 0.0
  %13142 = vmatpush2.msra.mxu0 0.0
  %13143 = vmatprep.subr.mxu0 0.0
  %13144 = vmatpush2.msra.mxu0 0.0
  %13145 = vmatprep.subr.mxu0 0.0
  %13146 = vmatpush2.msra.mxu0 0.0
  %13147 = vmatprep.subr.mxu0 0.0
  %13148 = vmatpush2.msra.mxu0 0.0
  %13149 = vmatprep.subr.mxu0 0.0
  %13150 = vmatpush2.msra.mxu0 0.0
  %13151 = vmatprep.subr.mxu0 0.0
  %13152 = vmatpush2.msra.mxu0 0.0
  %13153 = vmatprep.subr.mxu0 0.0
  %13154 = vmatpush2.msra.mxu0 0.0
  %13155 = vmatprep.subr.mxu0 0.0
  %13156 = vmatpush2.msra.mxu0 0.0
  %13157 = vmatprep.mubr.f32.mxu0 0.0
  %13158 = vmatmul.mubr.f32.gmra.mxu0 %v13091
  %v13159 = vpop.f32.mrf.mxu0
  %v13160 = vadd.f32 0.0, %v13159
  %v13161 = vpop.f32.mrf.mxu0
  %13162 = vdwg.mxu0
  %v13165 = vsel %vm5639, %v12964, %v12852
  %v13166 = vsel %vm13090, %v13165, 0
  %13168 = vmatprep.subr.mxu0 0.0
  %13169 = vmatpush1.msra.mxu0 0.0
  %13170 = vmatprep.subr.mxu0 0.0
  %13171 = vmatpush1.msra.mxu0 0.0
  %13172 = vmatprep.subr.mxu0 0.0
  %13173 = vmatpush1.msra.mxu0 0.0
  %13174 = vmatprep.subr.mxu0 0.0
  %13175 = vmatpush1.msra.mxu0 0.0
  %13176 = vmatprep.subr.mxu0 0.0
  %13177 = vmatpush1.msra.mxu0 0.0
  %13178 = vmatprep.subr.mxu0 0.0
  %13179 = vmatpush1.msra.mxu0 0.0
  %13180 = vmatprep.subr.mxu0 0.0
  %13181 = vmatpush1.msra.mxu0 0.0
  %13182 = vmatprep.subr.mxu0 0.0
  %13183 = vmatpush1.msra.mxu0 0.0
  %13184 = vmatprep.subr.mxu0 0.0
  %13185 = vmatpush1.msra.mxu0 %v13077
  %13186 = vmatprep.subr.mxu0 0.0
  %13187 = vmatpush1.msra.mxu0 %v13076
  %13188 = vmatprep.subr.mxu0 0.0
  %13189 = vmatpush1.msra.mxu0 %v13075
  %13190 = vmatprep.subr.mxu0 0.0
  %13191 = vmatpush1.msra.mxu0 %v13074
  %13192 = vmatprep.subr.mxu0 0.0
  %13193 = vmatpush1.msra.mxu0 %v13073
  %13194 = vmatprep.subr.mxu0 0.0
  %13195 = vmatpush1.msra.mxu0 %v13072
  %13196 = vmatprep.subr.mxu0 0.0
  %13197 = vmatpush1.msra.mxu0 %v13071
  %13198 = vmatprep.subr.mxu0 0.0
  %13199 = vmatpush1.msra.mxu0 %v13070
  %13200 = vmatprep.subr.mxu0 0.0
  %13201 = vmatpush2.msra.mxu0 0.0
  %13202 = vmatprep.subr.mxu0 0.0
  %13203 = vmatpush2.msra.mxu0 0.0
  %13204 = vmatprep.subr.mxu0 0.0
  %13205 = vmatpush2.msra.mxu0 0.0
  %13206 = vmatprep.subr.mxu0 0.0
  %13207 = vmatpush2.msra.mxu0 0.0
  %13208 = vmatprep.subr.mxu0 0.0
  %13209 = vmatpush2.msra.mxu0 0.0
  %13210 = vmatprep.subr.mxu0 0.0
  %13211 = vmatpush2.msra.mxu0 0.0
  %13212 = vmatprep.subr.mxu0 0.0
  %13213 = vmatpush2.msra.mxu0 0.0
  %13214 = vmatprep.subr.mxu0 0.0
  %13215 = vmatpush2.msra.mxu0 0.0
  %13216 = vmatprep.subr.mxu0 0.0
  %13217 = vmatpush2.msra.mxu0 0.0
  %13218 = vmatprep.subr.mxu0 0.0
  %13219 = vmatpush2.msra.mxu0 0.0
  %13220 = vmatprep.subr.mxu0 0.0
  %13221 = vmatpush2.msra.mxu0 0.0
  %13222 = vmatprep.subr.mxu0 0.0
  %13223 = vmatpush2.msra.mxu0 0.0
  %13224 = vmatprep.subr.mxu0 0.0
  %13225 = vmatpush2.msra.mxu0 0.0
  %13226 = vmatprep.subr.mxu0 0.0
  %13227 = vmatpush2.msra.mxu0 0.0
  %13228 = vmatprep.subr.mxu0 0.0
  %13229 = vmatpush2.msra.mxu0 0.0
  %13230 = vmatprep.subr.mxu0 0.0
  %13231 = vmatpush2.msra.mxu0 0.0
  %13232 = vmatprep.mubr.f32.mxu0 0.0
  %13233 = vmatmul.mubr.f32.gmra.mxu0 %v13166
  %v13234 = vpop.f32.mrf.mxu0
  %v13235 = vadd.f32 %v13160, %v13234
  %v13236 = vpop.f32.mrf.mxu0
  %13237 = vdwg.mxu0
  %s13238 = scalar_lea.vmem %s7, 128
  %v13239 = vld [vmem:[%s13238] sm:$0xff]
  %v13240 = vld [vmem:[%s13238 + $0x8] sm:$0xff]
  %v13241 = vld [vmem:[%s13238 + $0x10] sm:$0xff]
  %v13242 = vld [vmem:[%s13238 + $0x18] sm:$0xff]
  %v13243 = vld [vmem:[%s13238 + $0x20] sm:$0xff]
  %v13244 = vld [vmem:[%s13238 + $0x28] sm:$0xff]
  %v13245 = vld [vmem:[%s13238 + $0x30] sm:$0xff]
  %v13246 = vld [vmem:[%s13238 + $0x38] sm:$0xff]
  %v13249 = vsel %vm5639, %v12978, %v12866
  %v13250 = vsel %vm13090, %v13249, 0
  %13252 = vmatprep.subr.mxu0 0.0
  %13253 = vmatpush1.msra.mxu0 0.0
  %13254 = vmatprep.subr.mxu0 0.0
  %13255 = vmatpush1.msra.mxu0 0.0
  %13256 = vmatprep.subr.mxu0 0.0
  %13257 = vmatpush1.msra.mxu0 0.0
  %13258 = vmatprep.subr.mxu0 0.0
  %13259 = vmatpush1.msra.mxu0 0.0
  %13260 = vmatprep.subr.mxu0 0.0
  %13261 = vmatpush1.msra.mxu0 0.0
  %13262 = vmatprep.subr.mxu0 0.0
  %13263 = vmatpush1.msra.mxu0 0.0
  %13264 = vmatprep.subr.mxu0 0.0
  %13265 = vmatpush1.msra.mxu0 0.0
  %13266 = vmatprep.subr.mxu0 0.0
  %13267 = vmatpush1.msra.mxu0 0.0
  %13268 = vmatprep.subr.mxu0 0.0
  %13269 = vmatpush1.msra.mxu0 %v13246
  %13270 = vmatprep.subr.mxu0 0.0
  %13271 = vmatpush1.msra.mxu0 %v13245
  %13272 = vmatprep.subr.mxu0 0.0
  %13273 = vmatpush1.msra.mxu0 %v13244
  %13274 = vmatprep.subr.mxu0 0.0
  %13275 = vmatpush1.msra.mxu0 %v13243
  %13276 = vmatprep.subr.mxu0 0.0
  %13277 = vmatpush1.msra.mxu0 %v13242
  %13278 = vmatprep.subr.mxu0 0.0
  %13279 = vmatpush1.msra.mxu0 %v13241
  %13280 = vmatprep.subr.mxu0 0.0
  %13281 = vmatpush1.msra.mxu0 %v13240
  %13282 = vmatprep.subr.mxu0 0.0
  %13283 = vmatpush1.msra.mxu0 %v13239
  %13284 = vmatprep.subr.mxu0 0.0
  %13285 = vmatpush2.msra.mxu0 0.0
  %13286 = vmatprep.subr.mxu0 0.0
  %13287 = vmatpush2.msra.mxu0 0.0
  %13288 = vmatprep.subr.mxu0 0.0
  %13289 = vmatpush2.msra.mxu0 0.0
  %13290 = vmatprep.subr.mxu0 0.0
  %13291 = vmatpush2.msra.mxu0 0.0
  %13292 = vmatprep.subr.mxu0 0.0
  %13293 = vmatpush2.msra.mxu0 0.0
  %13294 = vmatprep.subr.mxu0 0.0
  %13295 = vmatpush2.msra.mxu0 0.0
  %13296 = vmatprep.subr.mxu0 0.0
  %13297 = vmatpush2.msra.mxu0 0.0
  %13298 = vmatprep.subr.mxu0 0.0
  %13299 = vmatpush2.msra.mxu0 0.0
  %13300 = vmatprep.subr.mxu0 0.0
  %13301 = vmatpush2.msra.mxu0 0.0
  %13302 = vmatprep.subr.mxu0 0.0
  %13303 = vmatpush2.msra.mxu0 0.0
  %13304 = vmatprep.subr.mxu0 0.0
  %13305 = vmatpush2.msra.mxu0 0.0
  %13306 = vmatprep.subr.mxu0 0.0
  %13307 = vmatpush2.msra.mxu0 0.0
  %13308 = vmatprep.subr.mxu0 0.0
  %13309 = vmatpush2.msra.mxu0 0.0
  %13310 = vmatprep.subr.mxu0 0.0
  %13311 = vmatpush2.msra.mxu0 0.0
  %13312 = vmatprep.subr.mxu0 0.0
  %13313 = vmatpush2.msra.mxu0 0.0
  %13314 = vmatprep.subr.mxu0 0.0
  %13315 = vmatpush2.msra.mxu0 0.0
  %13316 = vmatprep.mubr.f32.mxu0 0.0
  %13317 = vmatmul.mubr.f32.gmra.mxu0 %v13250
  %v13318 = vpop.f32.mrf.mxu0
  %v13319 = vadd.f32 0.0, %v13318
  %v13320 = vpop.f32.mrf.mxu0
  %13321 = vdwg.mxu0
  %v13322 = vadd.f32 %v13235, %v13319
  %s13323 = scalar_lea.vmem %s7, 192
  %v13324 = vld [vmem:[%s13323] sm:$0xff]
  %v13325 = vld [vmem:[%s13323 + $0x8] sm:$0xff]
  %v13326 = vld [vmem:[%s13323 + $0x10] sm:$0xff]
  %v13327 = vld [vmem:[%s13323 + $0x18] sm:$0xff]
  %v13328 = vld [vmem:[%s13323 + $0x20] sm:$0xff]
  %v13329 = vld [vmem:[%s13323 + $0x28] sm:$0xff]
  %v13330 = vld [vmem:[%s13323 + $0x30] sm:$0xff]
  %v13331 = vld [vmem:[%s13323 + $0x38] sm:$0xff]
  %v13334 = vsel %vm5639, %v12985, %v12873
  %v13335 = vsel %vm13090, %v13334, 0
  %13337 = vmatprep.subr.mxu0 0.0
  %13338 = vmatpush1.msra.mxu0 0.0
  %13339 = vmatprep.subr.mxu0 0.0
  %13340 = vmatpush1.msra.mxu0 0.0
  %13341 = vmatprep.subr.mxu0 0.0
  %13342 = vmatpush1.msra.mxu0 0.0
  %13343 = vmatprep.subr.mxu0 0.0
  %13344 = vmatpush1.msra.mxu0 0.0
  %13345 = vmatprep.subr.mxu0 0.0
  %13346 = vmatpush1.msra.mxu0 0.0
  %13347 = vmatprep.subr.mxu0 0.0
  %13348 = vmatpush1.msra.mxu0 0.0
  %13349 = vmatprep.subr.mxu0 0.0
  %13350 = vmatpush1.msra.mxu0 0.0
  %13351 = vmatprep.subr.mxu0 0.0
  %13352 = vmatpush1.msra.mxu0 0.0
  %13353 = vmatprep.subr.mxu0 0.0
  %13354 = vmatpush1.msra.mxu0 %v13331
  %13355 = vmatprep.subr.mxu0 0.0
  %13356 = vmatpush1.msra.mxu0 %v13330
  %13357 = vmatprep.subr.mxu0 0.0
  %13358 = vmatpush1.msra.mxu0 %v13329
  %13359 = vmatprep.subr.mxu0 0.0
  %13360 = vmatpush1.msra.mxu0 %v13328
  %13361 = vmatprep.subr.mxu0 0.0
  %13362 = vmatpush1.msra.mxu0 %v13327
  %13363 = vmatprep.subr.mxu0 0.0
  %13364 = vmatpush1.msra.mxu0 %v13326
  %13365 = vmatprep.subr.mxu0 0.0
  %13366 = vmatpush1.msra.mxu0 %v13325
  %13367 = vmatprep.subr.mxu0 0.0
  %13368 = vmatpush1.msra.mxu0 %v13324
  %13369 = vmatprep.subr.mxu0 0.0
  %13370 = vmatpush2.msra.mxu0 0.0
  %13371 = vmatprep.subr.mxu0 0.0
  %13372 = vmatpush2.msra.mxu0 0.0
  %13373 = vmatprep.subr.mxu0 0.0
  %13374 = vmatpush2.msra.mxu0 0.0
  %13375 = vmatprep.subr.mxu0 0.0
  %13376 = vmatpush2.msra.mxu0 0.0
  %13377 = vmatprep.subr.mxu0 0.0
  %13378 = vmatpush2.msra.mxu0 0.0
  %13379 = vmatprep.subr.mxu0 0.0
  %13380 = vmatpush2.msra.mxu0 0.0
  %13381 = vmatprep.subr.mxu0 0.0
  %13382 = vmatpush2.msra.mxu0 0.0
  %13383 = vmatprep.subr.mxu0 0.0
  %13384 = vmatpush2.msra.mxu0 0.0
  %13385 = vmatprep.subr.mxu0 0.0
  %13386 = vmatpush2.msra.mxu0 0.0
  %13387 = vmatprep.subr.mxu0 0.0
  %13388 = vmatpush2.msra.mxu0 0.0
  %13389 = vmatprep.subr.mxu0 0.0
  %13390 = vmatpush2.msra.mxu0 0.0
  %13391 = vmatprep.subr.mxu0 0.0
  %13392 = vmatpush2.msra.mxu0 0.0
  %13393 = vmatprep.subr.mxu0 0.0
  %13394 = vmatpush2.msra.mxu0 0.0
  %13395 = vmatprep.subr.mxu0 0.0
  %13396 = vmatpush2.msra.mxu0 0.0
  %13397 = vmatprep.subr.mxu0 0.0
  %13398 = vmatpush2.msra.mxu0 0.0
  %13399 = vmatprep.subr.mxu0 0.0
  %13400 = vmatpush2.msra.mxu0 0.0
  %13401 = vmatprep.mubr.f32.mxu0 0.0
  %13402 = vmatmul.mubr.f32.gmra.mxu0 %v13335
  %v13403 = vpop.f32.mrf.mxu0
  %v13404 = vadd.f32 0.0, %v13403
  %v13405 = vpop.f32.mrf.mxu0
  %13406 = vdwg.mxu0
  %v13407 = vadd.f32 %v13322, %v13404
  %s13408 = scalar_lea.vmem %s7, 256
  %v13409 = vld [vmem:[%s13408] sm:$0xff]
  %v13410 = vld [vmem:[%s13408 + $0x8] sm:$0xff]
  %v13411 = vld [vmem:[%s13408 + $0x10] sm:$0xff]
  %v13412 = vld [vmem:[%s13408 + $0x18] sm:$0xff]
  %v13413 = vld [vmem:[%s13408 + $0x20] sm:$0xff]
  %v13414 = vld [vmem:[%s13408 + $0x28] sm:$0xff]
  %v13415 = vld [vmem:[%s13408 + $0x30] sm:$0xff]
  %v13416 = vld [vmem:[%s13408 + $0x38] sm:$0xff]
  %v13419 = vsel %vm5639, %v12992, %v12880
  %v13420 = vsel %vm13090, %v13419, 0
  %13422 = vmatprep.subr.mxu0 0.0
  %13423 = vmatpush1.msra.mxu0 0.0
  %13424 = vmatprep.subr.mxu0 0.0
  %13425 = vmatpush1.msra.mxu0 0.0
  %13426 = vmatprep.subr.mxu0 0.0
  %13427 = vmatpush1.msra.mxu0 0.0
  %13428 = vmatprep.subr.mxu0 0.0
  %13429 = vmatpush1.msra.mxu0 0.0
  %13430 = vmatprep.subr.mxu0 0.0
  %13431 = vmatpush1.msra.mxu0 0.0
  %13432 = vmatprep.subr.mxu0 0.0
  %13433 = vmatpush1.msra.mxu0 0.0
  %13434 = vmatprep.subr.mxu0 0.0
  %13435 = vmatpush1.msra.mxu0 0.0
  %13436 = vmatprep.subr.mxu0 0.0
  %13437 = vmatpush1.msra.mxu0 0.0
  %13438 = vmatprep.subr.mxu0 0.0
  %13439 = vmatpush1.msra.mxu0 %v13416
  %13440 = vmatprep.subr.mxu0 0.0
  %13441 = vmatpush1.msra.mxu0 %v13415
  %13442 = vmatprep.subr.mxu0 0.0
  %13443 = vmatpush1.msra.mxu0 %v13414
  %13444 = vmatprep.subr.mxu0 0.0
  %13445 = vmatpush1.msra.mxu0 %v13413
  %13446 = vmatprep.subr.mxu0 0.0
  %13447 = vmatpush1.msra.mxu0 %v13412
  %13448 = vmatprep.subr.mxu0 0.0
  %13449 = vmatpush1.msra.mxu0 %v13411
  %13450 = vmatprep.subr.mxu0 0.0
  %13451 = vmatpush1.msra.mxu0 %v13410
  %13452 = vmatprep.subr.mxu0 0.0
  %13453 = vmatpush1.msra.mxu0 %v13409
  %13454 = vmatprep.subr.mxu0 0.0
  %13455 = vmatpush2.msra.mxu0 0.0
  %13456 = vmatprep.subr.mxu0 0.0
  %13457 = vmatpush2.msra.mxu0 0.0
  %13458 = vmatprep.subr.mxu0 0.0
  %13459 = vmatpush2.msra.mxu0 0.0
  %13460 = vmatprep.subr.mxu0 0.0
  %13461 = vmatpush2.msra.mxu0 0.0
  %13462 = vmatprep.subr.mxu0 0.0
  %13463 = vmatpush2.msra.mxu0 0.0
  %13464 = vmatprep.subr.mxu0 0.0
  %13465 = vmatpush2.msra.mxu0 0.0
  %13466 = vmatprep.subr.mxu0 0.0
  %13467 = vmatpush2.msra.mxu0 0.0
  %13468 = vmatprep.subr.mxu0 0.0
  %13469 = vmatpush2.msra.mxu0 0.0
  %13470 = vmatprep.subr.mxu0 0.0
  %13471 = vmatpush2.msra.mxu0 0.0
  %13472 = vmatprep.subr.mxu0 0.0
  %13473 = vmatpush2.msra.mxu0 0.0
  %13474 = vmatprep.subr.mxu0 0.0
  %13475 = vmatpush2.msra.mxu0 0.0
  %13476 = vmatprep.subr.mxu0 0.0
  %13477 = vmatpush2.msra.mxu0 0.0
  %13478 = vmatprep.subr.mxu0 0.0
  %13479 = vmatpush2.msra.mxu0 0.0
  %13480 = vmatprep.subr.mxu0 0.0
  %13481 = vmatpush2.msra.mxu0 0.0
  %13482 = vmatprep.subr.mxu0 0.0
  %13483 = vmatpush2.msra.mxu0 0.0
  %13484 = vmatprep.subr.mxu0 0.0
  %13485 = vmatpush2.msra.mxu0 0.0
  %13486 = vmatprep.mubr.f32.mxu0 0.0
  %13487 = vmatmul.mubr.f32.gmra.mxu0 %v13420
  %v13488 = vpop.f32.mrf.mxu0
  %v13489 = vadd.f32 0.0, %v13488
  %v13490 = vpop.f32.mrf.mxu0
  %13491 = vdwg.mxu0
  %v13492 = vadd.f32 %v13407, %v13489
  %s13493 = scalar_lea.vmem %s7, 320
  %v13494 = vld [vmem:[%s13493] sm:$0xff]
  %v13495 = vld [vmem:[%s13493 + $0x8] sm:$0xff]
  %v13496 = vld [vmem:[%s13493 + $0x10] sm:$0xff]
  %v13497 = vld [vmem:[%s13493 + $0x18] sm:$0xff]
  %v13498 = vld [vmem:[%s13493 + $0x20] sm:$0xff]
  %v13499 = vld [vmem:[%s13493 + $0x28] sm:$0xff]
  %v13500 = vld [vmem:[%s13493 + $0x30] sm:$0xff]
  %v13501 = vld [vmem:[%s13493 + $0x38] sm:$0xff]
  %v13504 = vsel %vm5639, %v12999, %v12887
  %v13505 = vsel %vm13090, %v13504, 0
  %13507 = vmatprep.subr.mxu0 0.0
  %13508 = vmatpush1.msra.mxu0 0.0
  %13509 = vmatprep.subr.mxu0 0.0
  %13510 = vmatpush1.msra.mxu0 0.0
  %13511 = vmatprep.subr.mxu0 0.0
  %13512 = vmatpush1.msra.mxu0 0.0
  %13513 = vmatprep.subr.mxu0 0.0
  %13514 = vmatpush1.msra.mxu0 0.0
  %13515 = vmatprep.subr.mxu0 0.0
  %13516 = vmatpush1.msra.mxu0 0.0
  %13517 = vmatprep.subr.mxu0 0.0
  %13518 = vmatpush1.msra.mxu0 0.0
  %13519 = vmatprep.subr.mxu0 0.0
  %13520 = vmatpush1.msra.mxu0 0.0
  %13521 = vmatprep.subr.mxu0 0.0
  %13522 = vmatpush1.msra.mxu0 0.0
  %13523 = vmatprep.subr.mxu0 0.0
  %13524 = vmatpush1.msra.mxu0 %v13501
  %13525 = vmatprep.subr.mxu0 0.0
  %13526 = vmatpush1.msra.mxu0 %v13500
  %13527 = vmatprep.subr.mxu0 0.0
  %13528 = vmatpush1.msra.mxu0 %v13499
  %13529 = vmatprep.subr.mxu0 0.0
  %13530 = vmatpush1.msra.mxu0 %v13498
  %13531 = vmatprep.subr.mxu0 0.0
  %13532 = vmatpush1.msra.mxu0 %v13497
  %13533 = vmatprep.subr.mxu0 0.0
  %13534 = vmatpush1.msra.mxu0 %v13496
  %13535 = vmatprep.subr.mxu0 0.0
  %13536 = vmatpush1.msra.mxu0 %v13495
  %13537 = vmatprep.subr.mxu0 0.0
  %13538 = vmatpush1.msra.mxu0 %v13494
  %13539 = vmatprep.subr.mxu0 0.0
  %13540 = vmatpush2.msra.mxu0 0.0
  %13541 = vmatprep.subr.mxu0 0.0
  %13542 = vmatpush2.msra.mxu0 0.0
  %13543 = vmatprep.subr.mxu0 0.0
  %13544 = vmatpush2.msra.mxu0 0.0
  %13545 = vmatprep.subr.mxu0 0.0
  %13546 = vmatpush2.msra.mxu0 0.0
  %13547 = vmatprep.subr.mxu0 0.0
  %13548 = vmatpush2.msra.mxu0 0.0
  %13549 = vmatprep.subr.mxu0 0.0
  %13550 = vmatpush2.msra.mxu0 0.0
  %13551 = vmatprep.subr.mxu0 0.0
  %13552 = vmatpush2.msra.mxu0 0.0
  %13553 = vmatprep.subr.mxu0 0.0
  %13554 = vmatpush2.msra.mxu0 0.0
  %13555 = vmatprep.subr.mxu0 0.0
  %13556 = vmatpush2.msra.mxu0 0.0
  %13557 = vmatprep.subr.mxu0 0.0
  %13558 = vmatpush2.msra.mxu0 0.0
  %13559 = vmatprep.subr.mxu0 0.0
  %13560 = vmatpush2.msra.mxu0 0.0
  %13561 = vmatprep.subr.mxu0 0.0
  %13562 = vmatpush2.msra.mxu0 0.0
  %13563 = vmatprep.subr.mxu0 0.0
  %13564 = vmatpush2.msra.mxu0 0.0
  %13565 = vmatprep.subr.mxu0 0.0
  %13566 = vmatpush2.msra.mxu0 0.0
  %13567 = vmatprep.subr.mxu0 0.0
  %13568 = vmatpush2.msra.mxu0 0.0
  %13569 = vmatprep.subr.mxu0 0.0
  %13570 = vmatpush2.msra.mxu0 0.0
  %13571 = vmatprep.mubr.f32.mxu0 0.0
  %13572 = vmatmul.mubr.f32.gmra.mxu0 %v13505
  %v13573 = vpop.f32.mrf.mxu0
  %v13574 = vadd.f32 0.0, %v13573
  %v13575 = vpop.f32.mrf.mxu0
  %13576 = vdwg.mxu0
  %v13577 = vadd.f32 %v13492, %v13574
  %s13578 = scalar_lea.vmem %s7, 384
  %v13579 = vld [vmem:[%s13578] sm:$0xff]
  %v13580 = vld [vmem:[%s13578 + $0x8] sm:$0xff]
  %v13581 = vld [vmem:[%s13578 + $0x10] sm:$0xff]
  %v13582 = vld [vmem:[%s13578 + $0x18] sm:$0xff]
  %v13583 = vld [vmem:[%s13578 + $0x20] sm:$0xff]
  %v13584 = vld [vmem:[%s13578 + $0x28] sm:$0xff]
  %v13585 = vld [vmem:[%s13578 + $0x30] sm:$0xff]
  %v13586 = vld [vmem:[%s13578 + $0x38] sm:$0xff]
  %v13589 = vsel %vm5639, %v13006, %v12894
  %v13590 = vsel %vm13090, %v13589, 0
  %13592 = vmatprep.subr.mxu0 0.0
  %13593 = vmatpush1.msra.mxu0 0.0
  %13594 = vmatprep.subr.mxu0 0.0
  %13595 = vmatpush1.msra.mxu0 0.0
  %13596 = vmatprep.subr.mxu0 0.0
  %13597 = vmatpush1.msra.mxu0 0.0
  %13598 = vmatprep.subr.mxu0 0.0
  %13599 = vmatpush1.msra.mxu0 0.0
  %13600 = vmatprep.subr.mxu0 0.0
  %13601 = vmatpush1.msra.mxu0 0.0
  %13602 = vmatprep.subr.mxu0 0.0
  %13603 = vmatpush1.msra.mxu0 0.0
  %13604 = vmatprep.subr.mxu0 0.0
  %13605 = vmatpush1.msra.mxu0 0.0
  %13606 = vmatprep.subr.mxu0 0.0
  %13607 = vmatpush1.msra.mxu0 0.0
  %13608 = vmatprep.subr.mxu0 0.0
  %13609 = vmatpush1.msra.mxu0 %v13586
  %13610 = vmatprep.subr.mxu0 0.0
  %13611 = vmatpush1.msra.mxu0 %v13585
  %13612 = vmatprep.subr.mxu0 0.0
  %13613 = vmatpush1.msra.mxu0 %v13584
  %13614 = vmatprep.subr.mxu0 0.0
  %13615 = vmatpush1.msra.mxu0 %v13583
  %13616 = vmatprep.subr.mxu0 0.0
  %13617 = vmatpush1.msra.mxu0 %v13582
  %13618 = vmatprep.subr.mxu0 0.0
  %13619 = vmatpush1.msra.mxu0 %v13581
  %13620 = vmatprep.subr.mxu0 0.0
  %13621 = vmatpush1.msra.mxu0 %v13580
  %13622 = vmatprep.subr.mxu0 0.0
  %13623 = vmatpush1.msra.mxu0 %v13579
  %13624 = vmatprep.subr.mxu0 0.0
  %13625 = vmatpush2.msra.mxu0 0.0
  %13626 = vmatprep.subr.mxu0 0.0
  %13627 = vmatpush2.msra.mxu0 0.0
  %13628 = vmatprep.subr.mxu0 0.0
  %13629 = vmatpush2.msra.mxu0 0.0
  %13630 = vmatprep.subr.mxu0 0.0
  %13631 = vmatpush2.msra.mxu0 0.0
  %13632 = vmatprep.subr.mxu0 0.0
  %13633 = vmatpush2.msra.mxu0 0.0
  %13634 = vmatprep.subr.mxu0 0.0
  %13635 = vmatpush2.msra.mxu0 0.0
  %13636 = vmatprep.subr.mxu0 0.0
  %13637 = vmatpush2.msra.mxu0 0.0
  %13638 = vmatprep.subr.mxu0 0.0
  %13639 = vmatpush2.msra.mxu0 0.0
  %13640 = vmatprep.subr.mxu0 0.0
  %13641 = vmatpush2.msra.mxu0 0.0
  %13642 = vmatprep.subr.mxu0 0.0
  %13643 = vmatpush2.msra.mxu0 0.0
  %13644 = vmatprep.subr.mxu0 0.0
  %13645 = vmatpush2.msra.mxu0 0.0
  %13646 = vmatprep.subr.mxu0 0.0
  %13647 = vmatpush2.msra.mxu0 0.0
  %13648 = vmatprep.subr.mxu0 0.0
  %13649 = vmatpush2.msra.mxu0 0.0
  %13650 = vmatprep.subr.mxu0 0.0
  %13651 = vmatpush2.msra.mxu0 0.0
  %13652 = vmatprep.subr.mxu0 0.0
  %13653 = vmatpush2.msra.mxu0 0.0
  %13654 = vmatprep.subr.mxu0 0.0
  %13655 = vmatpush2.msra.mxu0 0.0
  %13656 = vmatprep.mubr.f32.mxu0 0.0
  %13657 = vmatmul.mubr.f32.gmra.mxu0 %v13590
  %v13658 = vpop.f32.mrf.mxu0
  %v13659 = vadd.f32 0.0, %v13658
  %v13660 = vpop.f32.mrf.mxu0
  %13661 = vdwg.mxu0
  %v13662 = vadd.f32 %v13577, %v13659
  %s13663 = scalar_lea.vmem %s7, 448
  %v13664 = vld [vmem:[%s13663] sm:$0xff]
  %v13665 = vld [vmem:[%s13663 + $0x8] sm:$0xff]
  %v13666 = vld [vmem:[%s13663 + $0x10] sm:$0xff]
  %v13667 = vld [vmem:[%s13663 + $0x18] sm:$0xff]
  %v13668 = vld [vmem:[%s13663 + $0x20] sm:$0xff]
  %v13669 = vld [vmem:[%s13663 + $0x28] sm:$0xff]
  %v13670 = vld [vmem:[%s13663 + $0x30] sm:$0xff]
  %v13671 = vld [vmem:[%s13663 + $0x38] sm:$0xff]
  %v13674 = vsel %vm5639, %v13013, %v12901
  %v13675 = vsel %vm13090, %v13674, 0
  %13677 = vmatprep.subr.mxu0 0.0
  %13678 = vmatpush1.msra.mxu0 0.0
  %13679 = vmatprep.subr.mxu0 0.0
  %13680 = vmatpush1.msra.mxu0 0.0
  %13681 = vmatprep.subr.mxu0 0.0
  %13682 = vmatpush1.msra.mxu0 0.0
  %13683 = vmatprep.subr.mxu0 0.0
  %13684 = vmatpush1.msra.mxu0 0.0
  %13685 = vmatprep.subr.mxu0 0.0
  %13686 = vmatpush1.msra.mxu0 0.0
  %13687 = vmatprep.subr.mxu0 0.0
  %13688 = vmatpush1.msra.mxu0 0.0
  %13689 = vmatprep.subr.mxu0 0.0
  %13690 = vmatpush1.msra.mxu0 0.0
  %13691 = vmatprep.subr.mxu0 0.0
  %13692 = vmatpush1.msra.mxu0 0.0
  %13693 = vmatprep.subr.mxu0 0.0
  %13694 = vmatpush1.msra.mxu0 %v13671
  %13695 = vmatprep.subr.mxu0 0.0
  %13696 = vmatpush1.msra.mxu0 %v13670
  %13697 = vmatprep.subr.mxu0 0.0
  %13698 = vmatpush1.msra.mxu0 %v13669
  %13699 = vmatprep.subr.mxu0 0.0
  %13700 = vmatpush1.msra.mxu0 %v13668
  %13701 = vmatprep.subr.mxu0 0.0
  %13702 = vmatpush1.msra.mxu0 %v13667
  %13703 = vmatprep.subr.mxu0 0.0
  %13704 = vmatpush1.msra.mxu0 %v13666
  %13705 = vmatprep.subr.mxu0 0.0
  %13706 = vmatpush1.msra.mxu0 %v13665
  %13707 = vmatprep.subr.mxu0 0.0
  %13708 = vmatpush1.msra.mxu0 %v13664
  %13709 = vmatprep.subr.mxu0 0.0
  %13710 = vmatpush2.msra.mxu0 0.0
  %13711 = vmatprep.subr.mxu0 0.0
  %13712 = vmatpush2.msra.mxu0 0.0
  %13713 = vmatprep.subr.mxu0 0.0
  %13714 = vmatpush2.msra.mxu0 0.0
  %13715 = vmatprep.subr.mxu0 0.0
  %13716 = vmatpush2.msra.mxu0 0.0
  %13717 = vmatprep.subr.mxu0 0.0
  %13718 = vmatpush2.msra.mxu0 0.0
  %13719 = vmatprep.subr.mxu0 0.0
  %13720 = vmatpush2.msra.mxu0 0.0
  %13721 = vmatprep.subr.mxu0 0.0
  %13722 = vmatpush2.msra.mxu0 0.0
  %13723 = vmatprep.subr.mxu0 0.0
  %13724 = vmatpush2.msra.mxu0 0.0
  %13725 = vmatprep.subr.mxu0 0.0
  %13726 = vmatpush2.msra.mxu0 0.0
  %13727 = vmatprep.subr.mxu0 0.0
  %13728 = vmatpush2.msra.mxu0 0.0
  %13729 = vmatprep.subr.mxu0 0.0
  %13730 = vmatpush2.msra.mxu0 0.0
  %13731 = vmatprep.subr.mxu0 0.0
  %13732 = vmatpush2.msra.mxu0 0.0
  %13733 = vmatprep.subr.mxu0 0.0
  %13734 = vmatpush2.msra.mxu0 0.0
  %13735 = vmatprep.subr.mxu0 0.0
  %13736 = vmatpush2.msra.mxu0 0.0
  %13737 = vmatprep.subr.mxu0 0.0
  %13738 = vmatpush2.msra.mxu0 0.0
  %13739 = vmatprep.subr.mxu0 0.0
  %13740 = vmatpush2.msra.mxu0 0.0
  %13741 = vmatprep.mubr.f32.mxu0 0.0
  %13742 = vmatmul.mubr.f32.gmra.mxu0 %v13675
  %v13743 = vpop.f32.mrf.mxu0
  %v13744 = vadd.f32 0.0, %v13743
  %v13745 = vpop.f32.mrf.mxu0
  %13746 = vdwg.mxu0
  %v13747 = vadd.f32 %v13662, %v13744
  %s13748 = scalar_lea.vmem %s7, 512
  %v13749 = vld [vmem:[%s13748] sm:$0xff]
  %v13750 = vld [vmem:[%s13748 + $0x8] sm:$0xff]
  %v13751 = vld [vmem:[%s13748 + $0x10] sm:$0xff]
  %v13752 = vld [vmem:[%s13748 + $0x18] sm:$0xff]
  %v13753 = vld [vmem:[%s13748 + $0x20] sm:$0xff]
  %v13754 = vld [vmem:[%s13748 + $0x28] sm:$0xff]
  %v13755 = vld [vmem:[%s13748 + $0x30] sm:$0xff]
  %v13756 = vld [vmem:[%s13748 + $0x38] sm:$0xff]
  %v13759 = vsel %vm5639, %v13020, %v12908
  %v13760 = vsel %vm13090, %v13759, 0
  %13762 = vmatprep.subr.mxu0 0.0
  %13763 = vmatpush1.msra.mxu0 0.0
  %13764 = vmatprep.subr.mxu0 0.0
  %13765 = vmatpush1.msra.mxu0 0.0
  %13766 = vmatprep.subr.mxu0 0.0
  %13767 = vmatpush1.msra.mxu0 0.0
  %13768 = vmatprep.subr.mxu0 0.0
  %13769 = vmatpush1.msra.mxu0 0.0
  %13770 = vmatprep.subr.mxu0 0.0
  %13771 = vmatpush1.msra.mxu0 0.0
  %13772 = vmatprep.subr.mxu0 0.0
  %13773 = vmatpush1.msra.mxu0 0.0
  %13774 = vmatprep.subr.mxu0 0.0
  %13775 = vmatpush1.msra.mxu0 0.0
  %13776 = vmatprep.subr.mxu0 0.0
  %13777 = vmatpush1.msra.mxu0 0.0
  %13778 = vmatprep.subr.mxu0 0.0
  %13779 = vmatpush1.msra.mxu0 %v13756
  %13780 = vmatprep.subr.mxu0 0.0
  %13781 = vmatpush1.msra.mxu0 %v13755
  %13782 = vmatprep.subr.mxu0 0.0
  %13783 = vmatpush1.msra.mxu0 %v13754
  %13784 = vmatprep.subr.mxu0 0.0
  %13785 = vmatpush1.msra.mxu0 %v13753
  %13786 = vmatprep.subr.mxu0 0.0
  %13787 = vmatpush1.msra.mxu0 %v13752
  %13788 = vmatprep.subr.mxu0 0.0
  %13789 = vmatpush1.msra.mxu0 %v13751
  %13790 = vmatprep.subr.mxu0 0.0
  %13791 = vmatpush1.msra.mxu0 %v13750
  %13792 = vmatprep.subr.mxu0 0.0
  %13793 = vmatpush1.msra.mxu0 %v13749
  %13794 = vmatprep.subr.mxu0 0.0
  %13795 = vmatpush2.msra.mxu0 0.0
  %13796 = vmatprep.subr.mxu0 0.0
  %13797 = vmatpush2.msra.mxu0 0.0
  %13798 = vmatprep.subr.mxu0 0.0
  %13799 = vmatpush2.msra.mxu0 0.0
  %13800 = vmatprep.subr.mxu0 0.0
  %13801 = vmatpush2.msra.mxu0 0.0
  %13802 = vmatprep.subr.mxu0 0.0
  %13803 = vmatpush2.msra.mxu0 0.0
  %13804 = vmatprep.subr.mxu0 0.0
  %13805 = vmatpush2.msra.mxu0 0.0
  %13806 = vmatprep.subr.mxu0 0.0
  %13807 = vmatpush2.msra.mxu0 0.0
  %13808 = vmatprep.subr.mxu0 0.0
  %13809 = vmatpush2.msra.mxu0 0.0
  %13810 = vmatprep.subr.mxu0 0.0
  %13811 = vmatpush2.msra.mxu0 0.0
  %13812 = vmatprep.subr.mxu0 0.0
  %13813 = vmatpush2.msra.mxu0 0.0
  %13814 = vmatprep.subr.mxu0 0.0
  %13815 = vmatpush2.msra.mxu0 0.0
  %13816 = vmatprep.subr.mxu0 0.0
  %13817 = vmatpush2.msra.mxu0 0.0
  %13818 = vmatprep.subr.mxu0 0.0
  %13819 = vmatpush2.msra.mxu0 0.0
  %13820 = vmatprep.subr.mxu0 0.0
  %13821 = vmatpush2.msra.mxu0 0.0
  %13822 = vmatprep.subr.mxu0 0.0
  %13823 = vmatpush2.msra.mxu0 0.0
  %13824 = vmatprep.subr.mxu0 0.0
  %13825 = vmatpush2.msra.mxu0 0.0
  %13826 = vmatprep.mubr.f32.mxu0 0.0
  %13827 = vmatmul.mubr.f32.gmra.mxu0 %v13760
  %v13828 = vpop.f32.mrf.mxu0
  %v13829 = vadd.f32 0.0, %v13828
  %v13830 = vpop.f32.mrf.mxu0
  %13831 = vdwg.mxu0
  %v13832 = vadd.f32 %v13747, %v13829
  %s13833 = scalar_lea.vmem %s7, 576
  %v13834 = vld [vmem:[%s13833] sm:$0xff]
  %v13835 = vld [vmem:[%s13833 + $0x8] sm:$0xff]
  %v13836 = vld [vmem:[%s13833 + $0x10] sm:$0xff]
  %v13837 = vld [vmem:[%s13833 + $0x18] sm:$0xff]
  %v13838 = vld [vmem:[%s13833 + $0x20] sm:$0xff]
  %v13839 = vld [vmem:[%s13833 + $0x28] sm:$0xff]
  %v13840 = vld [vmem:[%s13833 + $0x30] sm:$0xff]
  %v13841 = vld [vmem:[%s13833 + $0x38] sm:$0xff]
  %v13844 = vsel %vm5639, %v13027, %v12915
  %v13845 = vsel %vm13090, %v13844, 0
  %13847 = vmatprep.subr.mxu0 0.0
  %13848 = vmatpush1.msra.mxu0 0.0
  %13849 = vmatprep.subr.mxu0 0.0
  %13850 = vmatpush1.msra.mxu0 0.0
  %13851 = vmatprep.subr.mxu0 0.0
  %13852 = vmatpush1.msra.mxu0 0.0
  %13853 = vmatprep.subr.mxu0 0.0
  %13854 = vmatpush1.msra.mxu0 0.0
  %13855 = vmatprep.subr.mxu0 0.0
  %13856 = vmatpush1.msra.mxu0 0.0
  %13857 = vmatprep.subr.mxu0 0.0
  %13858 = vmatpush1.msra.mxu0 0.0
  %13859 = vmatprep.subr.mxu0 0.0
  %13860 = vmatpush1.msra.mxu0 0.0
  %13861 = vmatprep.subr.mxu0 0.0
  %13862 = vmatpush1.msra.mxu0 0.0
  %13863 = vmatprep.subr.mxu0 0.0
  %13864 = vmatpush1.msra.mxu0 %v13841
  %13865 = vmatprep.subr.mxu0 0.0
  %13866 = vmatpush1.msra.mxu0 %v13840
  %13867 = vmatprep.subr.mxu0 0.0
  %13868 = vmatpush1.msra.mxu0 %v13839
  %13869 = vmatprep.subr.mxu0 0.0
  %13870 = vmatpush1.msra.mxu0 %v13838
  %13871 = vmatprep.subr.mxu0 0.0
  %13872 = vmatpush1.msra.mxu0 %v13837
  %13873 = vmatprep.subr.mxu0 0.0
  %13874 = vmatpush1.msra.mxu0 %v13836
  %13875 = vmatprep.subr.mxu0 0.0
  %13876 = vmatpush1.msra.mxu0 %v13835
  %13877 = vmatprep.subr.mxu0 0.0
  %13878 = vmatpush1.msra.mxu0 %v13834
  %13879 = vmatprep.subr.mxu0 0.0
  %13880 = vmatpush2.msra.mxu0 0.0
  %13881 = vmatprep.subr.mxu0 0.0
  %13882 = vmatpush2.msra.mxu0 0.0
  %13883 = vmatprep.subr.mxu0 0.0
  %13884 = vmatpush2.msra.mxu0 0.0
  %13885 = vmatprep.subr.mxu0 0.0
  %13886 = vmatpush2.msra.mxu0 0.0
  %13887 = vmatprep.subr.mxu0 0.0
  %13888 = vmatpush2.msra.mxu0 0.0
  %13889 = vmatprep.subr.mxu0 0.0
  %13890 = vmatpush2.msra.mxu0 0.0
  %13891 = vmatprep.subr.mxu0 0.0
  %13892 = vmatpush2.msra.mxu0 0.0
  %13893 = vmatprep.subr.mxu0 0.0
  %13894 = vmatpush2.msra.mxu0 0.0
  %13895 = vmatprep.subr.mxu0 0.0
  %13896 = vmatpush2.msra.mxu0 0.0
  %13897 = vmatprep.subr.mxu0 0.0
  %13898 = vmatpush2.msra.mxu0 0.0
  %13899 = vmatprep.subr.mxu0 0.0
  %13900 = vmatpush2.msra.mxu0 0.0
  %13901 = vmatprep.subr.mxu0 0.0
  %13902 = vmatpush2.msra.mxu0 0.0
  %13903 = vmatprep.subr.mxu0 0.0
  %13904 = vmatpush2.msra.mxu0 0.0
  %13905 = vmatprep.subr.mxu0 0.0
  %13906 = vmatpush2.msra.mxu0 0.0
  %13907 = vmatprep.subr.mxu0 0.0
  %13908 = vmatpush2.msra.mxu0 0.0
  %13909 = vmatprep.subr.mxu0 0.0
  %13910 = vmatpush2.msra.mxu0 0.0
  %13911 = vmatprep.mubr.f32.mxu0 0.0
  %13912 = vmatmul.mubr.f32.gmra.mxu0 %v13845
  %v13913 = vpop.f32.mrf.mxu0
  %v13914 = vadd.f32 0.0, %v13913
  %v13915 = vpop.f32.mrf.mxu0
  %13916 = vdwg.mxu0
  %v13917 = vadd.f32 %v13832, %v13914
  %s13918 = scalar_lea.vmem %s7, 640
  %v13919 = vld [vmem:[%s13918] sm:$0xff]
  %v13920 = vld [vmem:[%s13918 + $0x8] sm:$0xff]
  %v13921 = vld [vmem:[%s13918 + $0x10] sm:$0xff]
  %v13922 = vld [vmem:[%s13918 + $0x18] sm:$0xff]
  %v13923 = vld [vmem:[%s13918 + $0x20] sm:$0xff]
  %v13924 = vld [vmem:[%s13918 + $0x28] sm:$0xff]
  %v13925 = vld [vmem:[%s13918 + $0x30] sm:$0xff]
  %v13926 = vld [vmem:[%s13918 + $0x38] sm:$0xff]
  %v13929 = vsel %vm5639, %v13034, %v12922
  %v13930 = vsel %vm13090, %v13929, 0
  %13932 = vmatprep.subr.mxu0 0.0
  %13933 = vmatpush1.msra.mxu0 0.0
  %13934 = vmatprep.subr.mxu0 0.0
  %13935 = vmatpush1.msra.mxu0 0.0
  %13936 = vmatprep.subr.mxu0 0.0
  %13937 = vmatpush1.msra.mxu0 0.0
  %13938 = vmatprep.subr.mxu0 0.0
  %13939 = vmatpush1.msra.mxu0 0.0
  %13940 = vmatprep.subr.mxu0 0.0
  %13941 = vmatpush1.msra.mxu0 0.0
  %13942 = vmatprep.subr.mxu0 0.0
  %13943 = vmatpush1.msra.mxu0 0.0
  %13944 = vmatprep.subr.mxu0 0.0
  %13945 = vmatpush1.msra.mxu0 0.0
  %13946 = vmatprep.subr.mxu0 0.0
  %13947 = vmatpush1.msra.mxu0 0.0
  %13948 = vmatprep.subr.mxu0 0.0
  %13949 = vmatpush1.msra.mxu0 %v13926
  %13950 = vmatprep.subr.mxu0 0.0
  %13951 = vmatpush1.msra.mxu0 %v13925
  %13952 = vmatprep.subr.mxu0 0.0
  %13953 = vmatpush1.msra.mxu0 %v13924
  %13954 = vmatprep.subr.mxu0 0.0
  %13955 = vmatpush1.msra.mxu0 %v13923
  %13956 = vmatprep.subr.mxu0 0.0
  %13957 = vmatpush1.msra.mxu0 %v13922
  %13958 = vmatprep.subr.mxu0 0.0
  %13959 = vmatpush1.msra.mxu0 %v13921
  %13960 = vmatprep.subr.mxu0 0.0
  %13961 = vmatpush1.msra.mxu0 %v13920
  %13962 = vmatprep.subr.mxu0 0.0
  %13963 = vmatpush1.msra.mxu0 %v13919
  %13964 = vmatprep.subr.mxu0 0.0
  %13965 = vmatpush2.msra.mxu0 0.0
  %13966 = vmatprep.subr.mxu0 0.0
  %13967 = vmatpush2.msra.mxu0 0.0
  %13968 = vmatprep.subr.mxu0 0.0
  %13969 = vmatpush2.msra.mxu0 0.0
  %13970 = vmatprep.subr.mxu0 0.0
  %13971 = vmatpush2.msra.mxu0 0.0
  %13972 = vmatprep.subr.mxu0 0.0
  %13973 = vmatpush2.msra.mxu0 0.0
  %13974 = vmatprep.subr.mxu0 0.0
  %13975 = vmatpush2.msra.mxu0 0.0
  %13976 = vmatprep.subr.mxu0 0.0
  %13977 = vmatpush2.msra.mxu0 0.0
  %13978 = vmatprep.subr.mxu0 0.0
  %13979 = vmatpush2.msra.mxu0 0.0
  %13980 = vmatprep.subr.mxu0 0.0
  %13981 = vmatpush2.msra.mxu0 0.0
  %13982 = vmatprep.subr.mxu0 0.0
  %13983 = vmatpush2.msra.mxu0 0.0
  %13984 = vmatprep.subr.mxu0 0.0
  %13985 = vmatpush2.msra.mxu0 0.0
  %13986 = vmatprep.subr.mxu0 0.0
  %13987 = vmatpush2.msra.mxu0 0.0
  %13988 = vmatprep.subr.mxu0 0.0
  %13989 = vmatpush2.msra.mxu0 0.0
  %13990 = vmatprep.subr.mxu0 0.0
  %13991 = vmatpush2.msra.mxu0 0.0
  %13992 = vmatprep.subr.mxu0 0.0
  %13993 = vmatpush2.msra.mxu0 0.0
  %13994 = vmatprep.subr.mxu0 0.0
  %13995 = vmatpush2.msra.mxu0 0.0
  %13996 = vmatprep.mubr.f32.mxu0 0.0
  %13997 = vmatmul.mubr.f32.gmra.mxu0 %v13930
  %v13998 = vpop.f32.mrf.mxu0
  %v13999 = vadd.f32 0.0, %v13998
  %v14000 = vpop.f32.mrf.mxu0
  %14001 = vdwg.mxu0
  %v14002 = vadd.f32 %v13917, %v13999
  %s14003 = scalar_lea.vmem %s7, 704
  %v14004 = vld [vmem:[%s14003] sm:$0xff]
  %v14005 = vld [vmem:[%s14003 + $0x8] sm:$0xff]
  %v14006 = vld [vmem:[%s14003 + $0x10] sm:$0xff]
  %v14007 = vld [vmem:[%s14003 + $0x18] sm:$0xff]
  %v14008 = vld [vmem:[%s14003 + $0x20] sm:$0xff]
  %v14009 = vld [vmem:[%s14003 + $0x28] sm:$0xff]
  %v14010 = vld [vmem:[%s14003 + $0x30] sm:$0xff]
  %v14011 = vld [vmem:[%s14003 + $0x38] sm:$0xff]
  %v14014 = vsel %vm5639, %v13041, %v12929
  %v14015 = vsel %vm13090, %v14014, 0
  %14017 = vmatprep.subr.mxu0 0.0
  %14018 = vmatpush1.msra.mxu0 0.0
  %14019 = vmatprep.subr.mxu0 0.0
  %14020 = vmatpush1.msra.mxu0 0.0
  %14021 = vmatprep.subr.mxu0 0.0
  %14022 = vmatpush1.msra.mxu0 0.0
  %14023 = vmatprep.subr.mxu0 0.0
  %14024 = vmatpush1.msra.mxu0 0.0
  %14025 = vmatprep.subr.mxu0 0.0
  %14026 = vmatpush1.msra.mxu0 0.0
  %14027 = vmatprep.subr.mxu0 0.0
  %14028 = vmatpush1.msra.mxu0 0.0
  %14029 = vmatprep.subr.mxu0 0.0
  %14030 = vmatpush1.msra.mxu0 0.0
  %14031 = vmatprep.subr.mxu0 0.0
  %14032 = vmatpush1.msra.mxu0 0.0
  %14033 = vmatprep.subr.mxu0 0.0
  %14034 = vmatpush1.msra.mxu0 %v14011
  %14035 = vmatprep.subr.mxu0 0.0
  %14036 = vmatpush1.msra.mxu0 %v14010
  %14037 = vmatprep.subr.mxu0 0.0
  %14038 = vmatpush1.msra.mxu0 %v14009
  %14039 = vmatprep.subr.mxu0 0.0
  %14040 = vmatpush1.msra.mxu0 %v14008
  %14041 = vmatprep.subr.mxu0 0.0
  %14042 = vmatpush1.msra.mxu0 %v14007
  %14043 = vmatprep.subr.mxu0 0.0
  %14044 = vmatpush1.msra.mxu0 %v14006
  %14045 = vmatprep.subr.mxu0 0.0
  %14046 = vmatpush1.msra.mxu0 %v14005
  %14047 = vmatprep.subr.mxu0 0.0
  %14048 = vmatpush1.msra.mxu0 %v14004
  %14049 = vmatprep.subr.mxu0 0.0
  %14050 = vmatpush2.msra.mxu0 0.0
  %14051 = vmatprep.subr.mxu0 0.0
  %14052 = vmatpush2.msra.mxu0 0.0
  %14053 = vmatprep.subr.mxu0 0.0
  %14054 = vmatpush2.msra.mxu0 0.0
  %14055 = vmatprep.subr.mxu0 0.0
  %14056 = vmatpush2.msra.mxu0 0.0
  %14057 = vmatprep.subr.mxu0 0.0
  %14058 = vmatpush2.msra.mxu0 0.0
  %14059 = vmatprep.subr.mxu0 0.0
  %14060 = vmatpush2.msra.mxu0 0.0
  %14061 = vmatprep.subr.mxu0 0.0
  %14062 = vmatpush2.msra.mxu0 0.0
  %14063 = vmatprep.subr.mxu0 0.0
  %14064 = vmatpush2.msra.mxu0 0.0
  %14065 = vmatprep.subr.mxu0 0.0
  %14066 = vmatpush2.msra.mxu0 0.0
  %14067 = vmatprep.subr.mxu0 0.0
  %14068 = vmatpush2.msra.mxu0 0.0
  %14069 = vmatprep.subr.mxu0 0.0
  %14070 = vmatpush2.msra.mxu0 0.0
  %14071 = vmatprep.subr.mxu0 0.0
  %14072 = vmatpush2.msra.mxu0 0.0
  %14073 = vmatprep.subr.mxu0 0.0
  %14074 = vmatpush2.msra.mxu0 0.0
  %14075 = vmatprep.subr.mxu0 0.0
  %14076 = vmatpush2.msra.mxu0 0.0
  %14077 = vmatprep.subr.mxu0 0.0
  %14078 = vmatpush2.msra.mxu0 0.0
  %14079 = vmatprep.subr.mxu0 0.0
  %14080 = vmatpush2.msra.mxu0 0.0
  %14081 = vmatprep.mubr.f32.mxu0 0.0
  %14082 = vmatmul.mubr.f32.gmra.mxu0 %v14015
  %v14083 = vpop.f32.mrf.mxu0
  %v14084 = vadd.f32 0.0, %v14083
  %v14085 = vpop.f32.mrf.mxu0
  %14086 = vdwg.mxu0
  %v14087 = vadd.f32 %v14002, %v14084
  %s14088 = scalar_lea.vmem %s7, 768
  %v14089 = vld [vmem:[%s14088] sm:$0xff]
  %v14090 = vld [vmem:[%s14088 + $0x8] sm:$0xff]
  %v14091 = vld [vmem:[%s14088 + $0x10] sm:$0xff]
  %v14092 = vld [vmem:[%s14088 + $0x18] sm:$0xff]
  %v14093 = vld [vmem:[%s14088 + $0x20] sm:$0xff]
  %v14094 = vld [vmem:[%s14088 + $0x28] sm:$0xff]
  %v14095 = vld [vmem:[%s14088 + $0x30] sm:$0xff]
  %v14096 = vld [vmem:[%s14088 + $0x38] sm:$0xff]
  %v14099 = vsel %vm5639, %v13048, %v12936
  %v14100 = vsel %vm13090, %v14099, 0
  %14102 = vmatprep.subr.mxu0 0.0
  %14103 = vmatpush1.msra.mxu0 0.0
  %14104 = vmatprep.subr.mxu0 0.0
  %14105 = vmatpush1.msra.mxu0 0.0
  %14106 = vmatprep.subr.mxu0 0.0
  %14107 = vmatpush1.msra.mxu0 0.0
  %14108 = vmatprep.subr.mxu0 0.0
  %14109 = vmatpush1.msra.mxu0 0.0
  %14110 = vmatprep.subr.mxu0 0.0
  %14111 = vmatpush1.msra.mxu0 0.0
  %14112 = vmatprep.subr.mxu0 0.0
  %14113 = vmatpush1.msra.mxu0 0.0
  %14114 = vmatprep.subr.mxu0 0.0
  %14115 = vmatpush1.msra.mxu0 0.0
  %14116 = vmatprep.subr.mxu0 0.0
  %14117 = vmatpush1.msra.mxu0 0.0
  %14118 = vmatprep.subr.mxu0 0.0
  %14119 = vmatpush1.msra.mxu0 %v14096
  %14120 = vmatprep.subr.mxu0 0.0
  %14121 = vmatpush1.msra.mxu0 %v14095
  %14122 = vmatprep.subr.mxu0 0.0
  %14123 = vmatpush1.msra.mxu0 %v14094
  %14124 = vmatprep.subr.mxu0 0.0
  %14125 = vmatpush1.msra.mxu0 %v14093
  %14126 = vmatprep.subr.mxu0 0.0
  %14127 = vmatpush1.msra.mxu0 %v14092
  %14128 = vmatprep.subr.mxu0 0.0
  %14129 = vmatpush1.msra.mxu0 %v14091
  %14130 = vmatprep.subr.mxu0 0.0
  %14131 = vmatpush1.msra.mxu0 %v14090
  %14132 = vmatprep.subr.mxu0 0.0
  %14133 = vmatpush1.msra.mxu0 %v14089
  %14134 = vmatprep.subr.mxu0 0.0
  %14135 = vmatpush2.msra.mxu0 0.0
  %14136 = vmatprep.subr.mxu0 0.0
  %14137 = vmatpush2.msra.mxu0 0.0
  %14138 = vmatprep.subr.mxu0 0.0
  %14139 = vmatpush2.msra.mxu0 0.0
  %14140 = vmatprep.subr.mxu0 0.0
  %14141 = vmatpush2.msra.mxu0 0.0
  %14142 = vmatprep.subr.mxu0 0.0
  %14143 = vmatpush2.msra.mxu0 0.0
  %14144 = vmatprep.subr.mxu0 0.0
  %14145 = vmatpush2.msra.mxu0 0.0
  %14146 = vmatprep.subr.mxu0 0.0
  %14147 = vmatpush2.msra.mxu0 0.0
  %14148 = vmatprep.subr.mxu0 0.0
  %14149 = vmatpush2.msra.mxu0 0.0
  %14150 = vmatprep.subr.mxu0 0.0
  %14151 = vmatpush2.msra.mxu0 0.0
  %14152 = vmatprep.subr.mxu0 0.0
  %14153 = vmatpush2.msra.mxu0 0.0
  %14154 = vmatprep.subr.mxu0 0.0
  %14155 = vmatpush2.msra.mxu0 0.0
  %14156 = vmatprep.subr.mxu0 0.0
  %14157 = vmatpush2.msra.mxu0 0.0
  %14158 = vmatprep.subr.mxu0 0.0
  %14159 = vmatpush2.msra.mxu0 0.0
  %14160 = vmatprep.subr.mxu0 0.0
  %14161 = vmatpush2.msra.mxu0 0.0
  %14162 = vmatprep.subr.mxu0 0.0
  %14163 = vmatpush2.msra.mxu0 0.0
  %14164 = vmatprep.subr.mxu0 0.0
  %14165 = vmatpush2.msra.mxu0 0.0
  %14166 = vmatprep.mubr.f32.mxu0 0.0
  %14167 = vmatmul.mubr.f32.gmra.mxu0 %v14100
  %v14168 = vpop.f32.mrf.mxu0
  %v14169 = vadd.f32 0.0, %v14168
  %v14170 = vpop.f32.mrf.mxu0
  %14171 = vdwg.mxu0
  %v14172 = vadd.f32 %v14087, %v14169
  %s14173 = scalar_lea.vmem %s7, 832
  %v14174 = vld [vmem:[%s14173] sm:$0xff]
  %v14175 = vld [vmem:[%s14173 + $0x8] sm:$0xff]
  %v14176 = vld [vmem:[%s14173 + $0x10] sm:$0xff]
  %v14177 = vld [vmem:[%s14173 + $0x18] sm:$0xff]
  %v14178 = vld [vmem:[%s14173 + $0x20] sm:$0xff]
  %v14179 = vld [vmem:[%s14173 + $0x28] sm:$0xff]
  %v14180 = vld [vmem:[%s14173 + $0x30] sm:$0xff]
  %v14181 = vld [vmem:[%s14173 + $0x38] sm:$0xff]
  %v14184 = vsel %vm5639, %v13055, %v12943
  %v14185 = vsel %vm13090, %v14184, 0
  %14187 = vmatprep.subr.mxu0 0.0
  %14188 = vmatpush1.msra.mxu0 0.0
  %14189 = vmatprep.subr.mxu0 0.0
  %14190 = vmatpush1.msra.mxu0 0.0
  %14191 = vmatprep.subr.mxu0 0.0
  %14192 = vmatpush1.msra.mxu0 0.0
  %14193 = vmatprep.subr.mxu0 0.0
  %14194 = vmatpush1.msra.mxu0 0.0
  %14195 = vmatprep.subr.mxu0 0.0
  %14196 = vmatpush1.msra.mxu0 0.0
  %14197 = vmatprep.subr.mxu0 0.0
  %14198 = vmatpush1.msra.mxu0 0.0
  %14199 = vmatprep.subr.mxu0 0.0
  %14200 = vmatpush1.msra.mxu0 0.0
  %14201 = vmatprep.subr.mxu0 0.0
  %14202 = vmatpush1.msra.mxu0 0.0
  %14203 = vmatprep.subr.mxu0 0.0
  %14204 = vmatpush1.msra.mxu0 %v14181
  %14205 = vmatprep.subr.mxu0 0.0
  %14206 = vmatpush1.msra.mxu0 %v14180
  %14207 = vmatprep.subr.mxu0 0.0
  %14208 = vmatpush1.msra.mxu0 %v14179
  %14209 = vmatprep.subr.mxu0 0.0
  %14210 = vmatpush1.msra.mxu0 %v14178
  %14211 = vmatprep.subr.mxu0 0.0
  %14212 = vmatpush1.msra.mxu0 %v14177
  %14213 = vmatprep.subr.mxu0 0.0
  %14214 = vmatpush1.msra.mxu0 %v14176
  %14215 = vmatprep.subr.mxu0 0.0
  %14216 = vmatpush1.msra.mxu0 %v14175
  %14217 = vmatprep.subr.mxu0 0.0
  %14218 = vmatpush1.msra.mxu0 %v14174
  %14219 = vmatprep.subr.mxu0 0.0
  %14220 = vmatpush2.msra.mxu0 0.0
  %14221 = vmatprep.subr.mxu0 0.0
  %14222 = vmatpush2.msra.mxu0 0.0
  %14223 = vmatprep.subr.mxu0 0.0
  %14224 = vmatpush2.msra.mxu0 0.0
  %14225 = vmatprep.subr.mxu0 0.0
  %14226 = vmatpush2.msra.mxu0 0.0
  %14227 = vmatprep.subr.mxu0 0.0
  %14228 = vmatpush2.msra.mxu0 0.0
  %14229 = vmatprep.subr.mxu0 0.0
  %14230 = vmatpush2.msra.mxu0 0.0
  %14231 = vmatprep.subr.mxu0 0.0
  %14232 = vmatpush2.msra.mxu0 0.0
  %14233 = vmatprep.subr.mxu0 0.0
  %14234 = vmatpush2.msra.mxu0 0.0
  %14235 = vmatprep.subr.mxu0 0.0
  %14236 = vmatpush2.msra.mxu0 0.0
  %14237 = vmatprep.subr.mxu0 0.0
  %14238 = vmatpush2.msra.mxu0 0.0
  %14239 = vmatprep.subr.mxu0 0.0
  %14240 = vmatpush2.msra.mxu0 0.0
  %14241 = vmatprep.subr.mxu0 0.0
  %14242 = vmatpush2.msra.mxu0 0.0
  %14243 = vmatprep.subr.mxu0 0.0
  %14244 = vmatpush2.msra.mxu0 0.0
  %14245 = vmatprep.subr.mxu0 0.0
  %14246 = vmatpush2.msra.mxu0 0.0
  %14247 = vmatprep.subr.mxu0 0.0
  %14248 = vmatpush2.msra.mxu0 0.0
  %14249 = vmatprep.subr.mxu0 0.0
  %14250 = vmatpush2.msra.mxu0 0.0
  %14251 = vmatprep.mubr.f32.mxu0 0.0
  %14252 = vmatmul.mubr.f32.gmra.mxu0 %v14185
  %v14253 = vpop.f32.mrf.mxu0
  %v14254 = vadd.f32 0.0, %v14253
  %v14255 = vpop.f32.mrf.mxu0
  %14256 = vdwg.mxu0
  %v14257 = vadd.f32 %v14172, %v14254
  %s14258 = scalar_lea.vmem %s7, 896
  %v14259 = vld [vmem:[%s14258] sm:$0xff]
  %v14260 = vld [vmem:[%s14258 + $0x8] sm:$0xff]
  %v14261 = vld [vmem:[%s14258 + $0x10] sm:$0xff]
  %v14262 = vld [vmem:[%s14258 + $0x18] sm:$0xff]
  %v14263 = vld [vmem:[%s14258 + $0x20] sm:$0xff]
  %v14264 = vld [vmem:[%s14258 + $0x28] sm:$0xff]
  %v14265 = vld [vmem:[%s14258 + $0x30] sm:$0xff]
  %v14266 = vld [vmem:[%s14258 + $0x38] sm:$0xff]
  %v14269 = vsel %vm5639, %v13062, %v12950
  %v14270 = vsel %vm13090, %v14269, 0
  %14272 = vmatprep.subr.mxu0 0.0
  %14273 = vmatpush1.msra.mxu0 0.0
  %14274 = vmatprep.subr.mxu0 0.0
  %14275 = vmatpush1.msra.mxu0 0.0
  %14276 = vmatprep.subr.mxu0 0.0
  %14277 = vmatpush1.msra.mxu0 0.0
  %14278 = vmatprep.subr.mxu0 0.0
  %14279 = vmatpush1.msra.mxu0 0.0
  %14280 = vmatprep.subr.mxu0 0.0
  %14281 = vmatpush1.msra.mxu0 0.0
  %14282 = vmatprep.subr.mxu0 0.0
  %14283 = vmatpush1.msra.mxu0 0.0
  %14284 = vmatprep.subr.mxu0 0.0
  %14285 = vmatpush1.msra.mxu0 0.0
  %14286 = vmatprep.subr.mxu0 0.0
  %14287 = vmatpush1.msra.mxu0 0.0
  %14288 = vmatprep.subr.mxu0 0.0
  %14289 = vmatpush1.msra.mxu0 %v14266
  %14290 = vmatprep.subr.mxu0 0.0
  %14291 = vmatpush1.msra.mxu0 %v14265
  %14292 = vmatprep.subr.mxu0 0.0
  %14293 = vmatpush1.msra.mxu0 %v14264
  %14294 = vmatprep.subr.mxu0 0.0
  %14295 = vmatpush1.msra.mxu0 %v14263
  %14296 = vmatprep.subr.mxu0 0.0
  %14297 = vmatpush1.msra.mxu0 %v14262
  %14298 = vmatprep.subr.mxu0 0.0
  %14299 = vmatpush1.msra.mxu0 %v14261
  %14300 = vmatprep.subr.mxu0 0.0
  %14301 = vmatpush1.msra.mxu0 %v14260
  %14302 = vmatprep.subr.mxu0 0.0
  %14303 = vmatpush1.msra.mxu0 %v14259
  %14304 = vmatprep.subr.mxu0 0.0
  %14305 = vmatpush2.msra.mxu0 0.0
  %14306 = vmatprep.subr.mxu0 0.0
  %14307 = vmatpush2.msra.mxu0 0.0
  %14308 = vmatprep.subr.mxu0 0.0
  %14309 = vmatpush2.msra.mxu0 0.0
  %14310 = vmatprep.subr.mxu0 0.0
  %14311 = vmatpush2.msra.mxu0 0.0
  %14312 = vmatprep.subr.mxu0 0.0
  %14313 = vmatpush2.msra.mxu0 0.0
  %14314 = vmatprep.subr.mxu0 0.0
  %14315 = vmatpush2.msra.mxu0 0.0
  %14316 = vmatprep.subr.mxu0 0.0
  %14317 = vmatpush2.msra.mxu0 0.0
  %14318 = vmatprep.subr.mxu0 0.0
  %14319 = vmatpush2.msra.mxu0 0.0
  %14320 = vmatprep.subr.mxu0 0.0
  %14321 = vmatpush2.msra.mxu0 0.0
  %14322 = vmatprep.subr.mxu0 0.0
  %14323 = vmatpush2.msra.mxu0 0.0
  %14324 = vmatprep.subr.mxu0 0.0
  %14325 = vmatpush2.msra.mxu0 0.0
  %14326 = vmatprep.subr.mxu0 0.0
  %14327 = vmatpush2.msra.mxu0 0.0
  %14328 = vmatprep.subr.mxu0 0.0
  %14329 = vmatpush2.msra.mxu0 0.0
  %14330 = vmatprep.subr.mxu0 0.0
  %14331 = vmatpush2.msra.mxu0 0.0
  %14332 = vmatprep.subr.mxu0 0.0
  %14333 = vmatpush2.msra.mxu0 0.0
  %14334 = vmatprep.subr.mxu0 0.0
  %14335 = vmatpush2.msra.mxu0 0.0
  %14336 = vmatprep.mubr.f32.mxu0 0.0
  %14337 = vmatmul.mubr.f32.gmra.mxu0 %v14270
  %v14338 = vpop.f32.mrf.mxu0
  %v14339 = vadd.f32 0.0, %v14338
  %v14340 = vpop.f32.mrf.mxu0
  %14341 = vdwg.mxu0
  %v14342 = vadd.f32 %v14257, %v14339
  %s14343 = scalar_lea.vmem %s7, 960
  %v14344 = vld [vmem:[%s14343] sm:$0xff]
  %v14345 = vld [vmem:[%s14343 + $0x8] sm:$0xff]
  %v14346 = vld [vmem:[%s14343 + $0x10] sm:$0xff]
  %v14347 = vld [vmem:[%s14343 + $0x18] sm:$0xff]
  %v14348 = vld [vmem:[%s14343 + $0x20] sm:$0xff]
  %v14349 = vld [vmem:[%s14343 + $0x28] sm:$0xff]
  %v14350 = vld [vmem:[%s14343 + $0x30] sm:$0xff]
  %v14351 = vld [vmem:[%s14343 + $0x38] sm:$0xff]
  %v14354 = vsel %vm5639, %v13069, %v12957
  %v14355 = vsel %vm13090, %v14354, 0
  %14357 = vmatprep.subr.mxu0 0.0
  %14358 = vmatpush1.msra.mxu0 0.0
  %14359 = vmatprep.subr.mxu0 0.0
  %14360 = vmatpush1.msra.mxu0 0.0
  %14361 = vmatprep.subr.mxu0 0.0
  %14362 = vmatpush1.msra.mxu0 0.0
  %14363 = vmatprep.subr.mxu0 0.0
  %14364 = vmatpush1.msra.mxu0 0.0
  %14365 = vmatprep.subr.mxu0 0.0
  %14366 = vmatpush1.msra.mxu0 0.0
  %14367 = vmatprep.subr.mxu0 0.0
  %14368 = vmatpush1.msra.mxu0 0.0
  %14369 = vmatprep.subr.mxu0 0.0
  %14370 = vmatpush1.msra.mxu0 0.0
  %14371 = vmatprep.subr.mxu0 0.0
  %14372 = vmatpush1.msra.mxu0 0.0
  %14373 = vmatprep.subr.mxu0 0.0
  %14374 = vmatpush1.msra.mxu0 %v14351
  %14375 = vmatprep.subr.mxu0 0.0
  %14376 = vmatpush1.msra.mxu0 %v14350
  %14377 = vmatprep.subr.mxu0 0.0
  %14378 = vmatpush1.msra.mxu0 %v14349
  %14379 = vmatprep.subr.mxu0 0.0
  %14380 = vmatpush1.msra.mxu0 %v14348
  %14381 = vmatprep.subr.mxu0 0.0
  %14382 = vmatpush1.msra.mxu0 %v14347
  %14383 = vmatprep.subr.mxu0 0.0
  %14384 = vmatpush1.msra.mxu0 %v14346
  %14385 = vmatprep.subr.mxu0 0.0
  %14386 = vmatpush1.msra.mxu0 %v14345
  %14387 = vmatprep.subr.mxu0 0.0
  %14388 = vmatpush1.msra.mxu0 %v14344
  %14389 = vmatprep.subr.mxu0 0.0
  %14390 = vmatpush2.msra.mxu0 0.0
  %14391 = vmatprep.subr.mxu0 0.0
  %14392 = vmatpush2.msra.mxu0 0.0
  %14393 = vmatprep.subr.mxu0 0.0
  %14394 = vmatpush2.msra.mxu0 0.0
  %14395 = vmatprep.subr.mxu0 0.0
  %14396 = vmatpush2.msra.mxu0 0.0
  %14397 = vmatprep.subr.mxu0 0.0
  %14398 = vmatpush2.msra.mxu0 0.0
  %14399 = vmatprep.subr.mxu0 0.0
  %14400 = vmatpush2.msra.mxu0 0.0
  %14401 = vmatprep.subr.mxu0 0.0
  %14402 = vmatpush2.msra.mxu0 0.0
  %14403 = vmatprep.subr.mxu0 0.0
  %14404 = vmatpush2.msra.mxu0 0.0
  %14405 = vmatprep.subr.mxu0 0.0
  %14406 = vmatpush2.msra.mxu0 0.0
  %14407 = vmatprep.subr.mxu0 0.0
  %14408 = vmatpush2.msra.mxu0 0.0
  %14409 = vmatprep.subr.mxu0 0.0
  %14410 = vmatpush2.msra.mxu0 0.0
  %14411 = vmatprep.subr.mxu0 0.0
  %14412 = vmatpush2.msra.mxu0 0.0
  %14413 = vmatprep.subr.mxu0 0.0
  %14414 = vmatpush2.msra.mxu0 0.0
  %14415 = vmatprep.subr.mxu0 0.0
  %14416 = vmatpush2.msra.mxu0 0.0
  %14417 = vmatprep.subr.mxu0 0.0
  %14418 = vmatpush2.msra.mxu0 0.0
  %14419 = vmatprep.subr.mxu0 0.0
  %14420 = vmatpush2.msra.mxu0 0.0
  %14421 = vmatprep.mubr.f32.mxu0 0.0
  %14422 = vmatmul.mubr.f32.gmra.mxu0 %v14355
  %v14423 = vpop.f32.mrf.mxu0
  %v14424 = vadd.f32 0.0, %v14423
  %v14425 = vpop.f32.mrf.mxu0
  %14426 = vdwg.mxu0
  %v14427 = vadd.f32 %v14342, %v14424
  %v14428 = vld [vmem:[%s8] sm:$0x1]
  %v14430 = vlaneseq
  %v14431 = vshrl.u32 %v14430, 7
  %v14432 = vsub.s32 0, %v14431
  %v14433 = vrot.slane %v14428, %v14432
  %v14435 = vadd.f32 %v14427, %v14433
  %v14436 = vmax.f32 %v14435, 0.0
  %v14437 = vld [vmem:[%s9] sm:$0xff]
  %v14438 = vld [vmem:[%s9 + $0x8] sm:$0xff]
  %v14439 = vld [vmem:[%s9 + $0x10] sm:$0xff]
  %v14440 = vld [vmem:[%s9 + $0x18] sm:$0xff]
  %v14441 = vld [vmem:[%s9 + $0x20] sm:$0xff]
  %v14442 = vld [vmem:[%s9 + $0x28] sm:$0xff]
  %v14443 = vld [vmem:[%s9 + $0x30] sm:$0x3]
  %v14444 = vld [vmem:[#allocation2] sm:$0x1]
  %v14446 = vlaneseq
  %v14447 = vshrl.u32 %v14446, 7
  %v14448 = vsub.s32 0, %v14447
  %v14449 = vrot.slane %v14444, %v14448
  %vm14451 = vcmask 408576
  %v14453 = vsel %vm14451, %v14436, 0
  %vm14455 = vcmask 1041408
  %v14457 = vsel %vm14455, %v14443, 0
  %14459 = vmatprep.subr.mxu0 0.0
  %14460 = vmatpush1.msra.mxu0 0.0
  %14461 = vmatprep.subr.mxu0 0.0
  %14462 = vmatpush1.msra.mxu0 0.0
  %14463 = vmatprep.subr.mxu0 0.0
  %14464 = vmatpush1.msra.mxu0 0.0
  %14465 = vmatprep.subr.mxu0 0.0
  %14466 = vmatpush1.msra.mxu0 0.0
  %14467 = vmatprep.subr.mxu0 0.0
  %14468 = vmatpush1.msra.mxu0 0.0
  %14469 = vmatprep.subr.mxu0 0.0
  %14470 = vmatpush1.msra.mxu0 0.0
  %14471 = vmatprep.subr.mxu0 0.0
  %14472 = vmatpush1.msra.mxu0 0.0
  %14473 = vmatprep.subr.mxu0 0.0
  %14474 = vmatpush1.msra.mxu0 0.0
  %14475 = vmatprep.subr.mxu0 0.0
  %14476 = vmatpush1.msra.mxu0 0.0
  %14477 = vmatprep.subr.mxu0 0.0
  %14478 = vmatpush1.msra.mxu0 %v14457
  %14479 = vmatprep.subr.mxu0 0.0
  %14480 = vmatpush1.msra.mxu0 %v14442
  %14481 = vmatprep.subr.mxu0 0.0
  %14482 = vmatpush1.msra.mxu0 %v14441
  %14483 = vmatprep.subr.mxu0 0.0
  %14484 = vmatpush1.msra.mxu0 %v14440
  %14485 = vmatprep.subr.mxu0 0.0
  %14486 = vmatpush1.msra.mxu0 %v14439
  %14487 = vmatprep.subr.mxu0 0.0
  %14488 = vmatpush1.msra.mxu0 %v14438
  %14489 = vmatprep.subr.mxu0 0.0
  %14490 = vmatpush1.msra.mxu0 %v14437
  %14491 = vmatprep.subr.mxu0 0.0
  %14492 = vmatpush2.msra.mxu0 0.0
  %14493 = vmatprep.subr.mxu0 0.0
  %14494 = vmatpush2.msra.mxu0 0.0
  %14495 = vmatprep.subr.mxu0 0.0
  %14496 = vmatpush2.msra.mxu0 0.0
  %14497 = vmatprep.subr.mxu0 0.0
  %14498 = vmatpush2.msra.mxu0 0.0
  %14499 = vmatprep.subr.mxu0 0.0
  %14500 = vmatpush2.msra.mxu0 0.0
  %14501 = vmatprep.subr.mxu0 0.0
  %14502 = vmatpush2.msra.mxu0 0.0
  %14503 = vmatprep.subr.mxu0 0.0
  %14504 = vmatpush2.msra.mxu0 0.0
  %14505 = vmatprep.subr.mxu0 0.0
  %14506 = vmatpush2.msra.mxu0 0.0
  %14507 = vmatprep.subr.mxu0 0.0
  %14508 = vmatpush2.msra.mxu0 0.0
  %14509 = vmatprep.subr.mxu0 0.0
  %14510 = vmatpush2.msra.mxu0 0.0
  %14511 = vmatprep.subr.mxu0 0.0
  %14512 = vmatpush2.msra.mxu0 0.0
  %14513 = vmatprep.subr.mxu0 0.0
  %14514 = vmatpush2.msra.mxu0 0.0
  %14515 = vmatprep.subr.mxu0 0.0
  %14516 = vmatpush2.msra.mxu0 0.0
  %14517 = vmatprep.subr.mxu0 0.0
  %14518 = vmatpush2.msra.mxu0 0.0
  %14519 = vmatprep.subr.mxu0 0.0
  %14520 = vmatpush2.msra.mxu0 0.0
  %14521 = vmatprep.subr.mxu0 0.0
  %14522 = vmatpush2.msra.mxu0 0.0
  %14523 = vmatprep.mubr.f32.mxu0 0.0
  %14524 = vmatmul.mubr.f32.gmra.mxu0 %v14453
  %v14525 = vpop.f32.mrf.mxu0
  %v14526 = vadd.f32 %v14449, %v14525
  %v14527 = vpop.f32.mrf.mxu0
  %14528 = vdwg.mxu0
  %v14529 = vsub.f32 0.0, %v14526
  %v14530 = vmul.f32 %v14529, 1.442695
  %v14531 = vpow.pop %v14530
  %v14532 = vadd.f32 %v14531, 1.0
  %v14533 = vrcp.pop %v14532
  %v14534 = vmul.f32 1.0, %v14533
  %vm14535 = vcmask 1024
  %14536 = vst.msk [vmem:[%s11] sm:$0x3] %vm14535, %v14534
  // Predicated region
  $region46: #{tpu_custom_call.1} parent=0 // pred_check
    _
  $region47: #{tpu_custom_call.1} parent=0 // pred_check_branch
    %14538 = sbr.rel (0) target = $region49
  $region48: #{tpu_custom_call.1} parent=0 // pred_region
    _
  $region49: #{tpu_custom_call.1} parent=0 // pred_fallthru
    _
  // Predicated region
  $region50: #{tpu_custom_call.1} parent=0 // pred_check
    _
  $region51: #{tpu_custom_call.1} parent=0 // pred_check_branch
    %14540 = sbr.rel (0) target = $region53
  $region52: #{tpu_custom_call.1} parent=0 // pred_region
    _
  $region53: #{tpu_custom_call.1} parent=0 // pred_fallthru
    _

</llo_original>
